<compile_context>
chip_gen: v5e
topology: v5e:2x2
jax: 0.10.0
libtpu: 0.0.40
codegen_flags: <defaults>
</compile_context>

<pallas_src>
import jax
import jax.numpy as jnp
from jax import lax
from jax.experimental import pallas as pl
from jax.experimental.pallas import tpu as pltpu


NUM_REAL_OUT = 9          # real output columns (2 regression + 7 softmax)
_N_NUM_LAYERS = 4         # numbers_fcn linear layers
_N_CHR_LAYERS = 4         # chars_fcn linear layers
_N_CMB_LAYERS = 6         # combined_fcn linear layers (layer 0 is split)


def _round_up(x, m):
    return (x + m - 1) // m * m


def _device_caps():
    """Best-effort TPU-generation sniff; conservative defaults otherwise."""
    try:
        kind = jax.devices()[0].device_kind.lower()
    except Exception:
        kind = ""
    is_v5 = "v5" in kind                                   # smaller tile cap, f32 VPU
    bf16_elem = ("v6" in kind) or ("v7" in kind) or ("7x" in kind)
    two_tc = ("v4" in kind) or ("v5p" in kind) or ("v7" in kind) or ("7x" in kind)
    return is_v5, bf16_elem, two_tc


# ----------------------------- fused Pallas kernel ---------------------------

def _make_fused_kernel(elem_dtype):
    """elem_dtype: dtype for hidden-layer bias/ReLU (bf16 on v6e/v7x, else f32)."""

    def _fused_kernel(pooled_ref, num_ref, chr_ref, *refs):
        out_ref = refs[-1]
        p = list(refs[:-1])

        def pop(n):
            nonlocal p
            chunk, p = p[:n], p[n:]
            return chunk

        def linear(h, w_ref, b_ref, relu=True):
            # bf16 MXU operands, f32 accumulation.
            y = jnp.dot(h.astype(jnp.bfloat16), w_ref[...],
                        preferred_element_type=jnp.float32)
            if not relu:
                return y + b_ref[...]                      # final layer stays f32
            y = y.astype(elem_dtype) + b_ref[...].astype(elem_dtype)
            return jnp.maximum(y, 0)

        num_wb = pop(2 * _N_NUM_LAYERS)
        chr_wb = pop(2 * _N_CHR_LAYERS)
        wp_ref, wn_ref, wc_ref, b0_ref = pop(4)
        cmb_wb = pop(2 * (_N_CMB_LAYERS - 1))

        # numbers_fcn: 4x (Linear -> ReLU); Dropout == identity (inference)
        h_n = num_ref[...]
        for i in range(_N_NUM_LAYERS):
            h_n = linear(h_n, num_wb[2 * i], num_wb[2 * i + 1])

        # chars_fcn: 4x (Linear -> ReLU)
        h_c = chr_ref[...]
        for i in range(_N_CHR_LAYERS):
            h_c = linear(h_c, chr_wb[2 * i], chr_wb[2 * i + 1])

        # combined_fcn layer 0 via split-weight sum (== Linear on the concat).
        # pooled_ref is already bf16 (host-side cast).
        h = (jnp.dot(pooled_ref[...], wp_ref[...], preferred_element_type=jnp.float32)
             + jnp.dot(h_n.astype(jnp.bfloat16), wn_ref[...],
                       preferred_element_type=jnp.float32)
             + jnp.dot(h_c.astype(jnp.bfloat16), wc_ref[...],
                       preferred_element_type=jnp.float32))
        h = h.astype(elem_dtype) + b0_ref[...].astype(elem_dtype)
        h = jnp.maximum(h, 0)

        # remaining combined_fcn layers; last layer has no ReLU and is f32.
        for i in range(_N_CMB_LAYERS - 1):
            h = linear(h, cmb_wb[2 * i], cmb_wb[2 * i + 1],
                       relu=(i < _N_CMB_LAYERS - 2))

        # Masked softmax over real columns [2, NUM_REAL_OUT); columns [0, 2)
        # pass through unchanged; padded columns (>= NUM_REAL_OUT) are zero.
        col = lax.broadcasted_iota(jnp.int32, h.shape, dimension=1)
        is_prob = (col >= 2) & (col < NUM_REAL_OUT)
        m = jnp.max(jnp.where(is_prob, h, -jnp.inf), axis=1, keepdims=True)
        e = jnp.exp(jnp.where(is_prob, h - m, -jnp.inf))   # single select; exp(-inf)=0
        s = jnp.sum(e, axis=1, keepdims=True)
        probs = e * pl.reciprocal(s)                       # exact (EUP slot)
        out_ref[...] = jnp.where(is_prob, probs, h)

    return _fused_kernel


# --------------------------- parameter construction --------------------------

def _init_linear(key, d_in, d_out, scale=0.05):
    kw, kb = jax.random.split(key)
    w = scale * jax.random.normal(kw, (d_in, d_out), jnp.float32)
    b = scale * jax.random.normal(kb, (d_out,), jnp.float32)
    return w, b


def _pad_w(w, in_pad, out_pad):
    # Cast first (half-size copy), then zero-pad into the bf16 MXU operand.
    # NOTE: on v7x the large first-layer weights could additionally be stored
    # as fp8 (native MXU dtype there) to halve the one-time weight DMA.
    wp = jnp.zeros((in_pad, out_pad), jnp.bfloat16)
    return wp.at[: w.shape[0], : w.shape[1]].set(w.astype(jnp.bfloat16))


def _pad_b(b, out_pad):
    bp = jnp.zeros((1, out_pad), jnp.float32)
    return bp.at[0, : b.shape[0]].set(b)    # kernel casts as needed


def init_params(key, hidden_size, num_numbers):
    pad = lambda d: _round_up(d, 128)

    def make_branch(key, dims):
        layers = []
        for d_in, d_out in zip(dims[:-1], dims[1:]):
            key, sub = jax.random.split(key)
            w, b = _init_linear(sub, d_in, d_out)
            layers.append((_pad_w(w, pad(d_in), pad(d_out)), _pad_b(b, pad(d_out))))
        return key, layers

    key, numbers = make_branch(key, [num_numbers, 512, 256, 128, 64])
    key, chars = make_branch(key, [5 * 26, 512, 256, 128, 64])

    # combined_fcn layer 0: logical Linear(hidden + 128, 256), split by rows.
    key, sub = jax.random.split(key)
    w0, b0 = _init_linear(sub, hidden_size + 128, 256)
    wp = _pad_w(w0[:hidden_size], pad(hidden_size), 256)
    wn = _pad_w(w0[hidden_size:hidden_size + 64], 128, 256)
    wc = _pad_w(w0[hidden_size + 64:], 128, 256)
    comb0 = (wp, wn, wc, _pad_b(b0, 256))

    key, combined = make_branch(key, [256, 128, 64, 32, 16, NUM_REAL_OUT])

    return {"numbers": numbers, "chars": chars, "comb0": comb0,
            "combined": combined}


# --------------------------------- forward -----------------------------------

def _prep_input(x, rows, cols):
    """Cast to bf16 and zero-pad in one step; skip the copy if already padded."""
    x = x.astype(jnp.bfloat16)
    if x.shape == (rows, cols):
        return x
    out = jnp.zeros((rows, cols), jnp.bfloat16)
    return out.at[: x.shape[0], : x.shape[1]].set(x)


def custom_net_v2_forward(pooled_output, input_numbers, input_chars, params):
    # TODO(synk): the frozen pretrained transformers.RobertaModel backbone (and
    # tokenizer) has no clean Pallas equivalent here; `pooled_output` stands in
    # for roberta(input_ids, attention_mask)[0][:, 0, :].
    B = pooled_output.shape[0]
    numbers_2d = input_numbers.reshape(B, -1)   # .squeeze(1)
    chars_2d = input_chars.reshape(B, -1)       # .squeeze(1)

    # Padded feature widths are encoded in the padded weight shapes.
    H_pad = params["comb0"][0].shape[0]
    N_pad = params["numbers"][0][0].shape[0]
    C_pad = params["chars"][0][0].shape[0]
    OUT_pad = params["combined"][-1][0].shape[1]

    is_v5, bf16_elem, two_tc = _device_caps()
    elem_dtype = jnp.bfloat16 if bf16_elem else jnp.float32

    # Batch tiling: large tiles amortize the ~0.35us per-grid-step overhead.
    B8 = _round_up(B, 8)
    cap = 256 if is_v5 else 512
    tb = min(B8, cap)
    if two_tc and B8 > 128:
        # Keep grid length >= 2 so the "parallel" axis spans both TensorCores.
        tb = min(tb, _round_up((B8 + 1) // 2, 8))
    B_pad = _round_up(B8, tb)
    grid = (B_pad // tb,)

    pooled_pad = _prep_input(pooled_output, B_pad, H_pad)
    numbers_pad = _prep_input(numbers_2d, B_pad, N_pad)
    chars_pad = _prep_input(chars_2d, B_pad, C_pad)

    flat_params = []
    for w, b in params["numbers"]:
        flat_params.extend([w, b])
    for w, b in params["chars"]:
        flat_params.extend([w, b])
    flat_params.extend(params["comb0"])
    for w, b in params["combined"]:
        flat_params.extend([w, b])

    # Explicit VMEM budget: weights (resident) + double-buffered bf16 inputs +
    # double-buffered f32 output + spill/intermediate headroom.
    weight_bytes = sum(int(a.nbytes) for a in flat_params)
    act_in_bytes = tb * (H_pad + N_pad + C_pad) * 2
    out_bytes = tb * OUT_pad * 4
    vmem_limit = int(2 * weight_bytes + 4 * act_in_bytes + 4 * out_bytes + (16 << 20))
    vmem_limit = min(vmem_limit, 64 << 20)

    act_specs = [
        pl.BlockSpec((tb, H_pad), lambda i: (i, 0)),
        pl.BlockSpec((tb, N_pad), lambda i: (i, 0)),
        pl.BlockSpec((tb, C_pad), lambda i: (i, 0)),
    ]

    def _run(single_buffer_weights):
        kw = {}
        if single_buffer_weights and hasattr(pl, "Buffered"):
            kw["pipeline_mode"] = pl.Buffered(1)     # constant index_map: 1 buffer
        w_specs = [pl.BlockSpec(a.shape, lambda i: (0, 0), **kw)
                   for a in flat_params]
        return pl.pallas_call(
            _make_fused_kernel(elem_dtype),
            out_shape=jax.ShapeDtypeStruct((B_pad, OUT_pad), jnp.float32),
            grid=grid,
            in_specs=act_specs + w_specs,
            out_specs=pl.BlockSpec((tb, OUT_pad), lambda i: (i, 0)),
            compiler_params=pltpu.CompilerParams(
                dimension_semantics=("parallel",),
                vmem_limit_bytes=vmem_limit),
        )(pooled_pad, numbers_pad, chars_pad, *flat_params)

    try:
        out_pad = _run(True)
    except Exception:
        # Fallback for JAX versions without BlockSpec pipeline_mode support.
        out_pad = _run(False)

    # Drop batch/lane padding: real output is (B, 9).
    return out_pad[:B, :NUM_REAL_OUT]


# ----------------------------------- main ------------------------------------

if __name__ == "__main__":
    B = 2
    HIDDEN = 64          # small stand-in for roberta.config.hidden_size
    NUM_NUMBERS = 8

    key = jax.random.PRNGKey(0)
    k_params, k_pool, k_nums, k_chars = jax.random.split(key, 4)

    params = init_params(k_params, HIDDEN, NUM_NUMBERS)
    pooled_output = jax.random.normal(k_pool, (B, HIDDEN), jnp.float32)
    input_numbers = jax.random.normal(k_nums, (B, 1, NUM_NUMBERS), jnp.float32)
    input_chars = jax.random.normal(k_chars, (B, 1, 5 * 26), jnp.float32)

    out = custom_net_v2_forward(pooled_output, input_numbers, input_chars, params)
    out = jax.block_until_ready(out)

    assert out.shape == (B, NUM_REAL_OUT), out.shape
    # sanity: the softmax tail (columns 2:) sums to ~1 per row
    assert jnp.allclose(jnp.sum(out[:, 2:], axis=1), 1.0, atol=1e-3)
    print("KERNEL_OK")
</pallas_src>

<mosaic_0001>
module attributes {stable_mosaic.version = 11 : i64} {
  func.func @_fused_kernel(%arg0: i32, %arg1: memref<8x128xbf16, #tpu.memory_space<vmem>>, %arg2: memref<8x128xbf16, #tpu.memory_space<vmem>>, %arg3: memref<8x256xbf16, #tpu.memory_space<vmem>>, %arg4: memref<128x512xbf16, #tpu.memory_space<vmem>>, %arg5: memref<1x512xf32, #tpu.memory_space<vmem>>, %arg6: memref<512x256xbf16, #tpu.memory_space<vmem>>, %arg7: memref<1x256xf32, #tpu.memory_space<vmem>>, %arg8: memref<256x128xbf16, #tpu.memory_space<vmem>>, %arg9: memref<1x128xf32, #tpu.memory_space<vmem>>, %arg10: memref<128x128xbf16, #tpu.memory_space<vmem>>, %arg11: memref<1x128xf32, #tpu.memory_space<vmem>>, %arg12: memref<256x512xbf16, #tpu.memory_space<vmem>>, %arg13: memref<1x512xf32, #tpu.memory_space<vmem>>, %arg14: memref<512x256xbf16, #tpu.memory_space<vmem>>, %arg15: memref<1x256xf32, #tpu.memory_space<vmem>>, %arg16: memref<256x128xbf16, #tpu.memory_space<vmem>>, %arg17: memref<1x128xf32, #tpu.memory_space<vmem>>, %arg18: memref<128x128xbf16, #tpu.memory_space<vmem>>, %arg19: memref<1x128xf32, #tpu.memory_space<vmem>>, %arg20: memref<128x256xbf16, #tpu.memory_space<vmem>>, %arg21: memref<128x256xbf16, #tpu.memory_space<vmem>>, %arg22: memref<128x256xbf16, #tpu.memory_space<vmem>>, %arg23: memref<1x256xf32, #tpu.memory_space<vmem>>, %arg24: memref<256x128xbf16, #tpu.memory_space<vmem>>, %arg25: memref<1x128xf32, #tpu.memory_space<vmem>>, %arg26: memref<128x128xbf16, #tpu.memory_space<vmem>>, %arg27: memref<1x128xf32, #tpu.memory_space<vmem>>, %arg28: memref<128x128xbf16, #tpu.memory_space<vmem>>, %arg29: memref<1x128xf32, #tpu.memory_space<vmem>>, %arg30: memref<128x128xbf16, #tpu.memory_space<vmem>>, %arg31: memref<1x128xf32, #tpu.memory_space<vmem>>, %arg32: memref<128x128xbf16, #tpu.memory_space<vmem>>, %arg33: memref<1x128xf32, #tpu.memory_space<vmem>>, %arg34: memref<8x128xf32, #tpu.memory_space<vmem>>) attributes {dimension_semantics = [#tpu.dimension_semantics<parallel>], iteration_bounds = array<i64: 1>, scalar_prefetch = 0 : i64, scratch_operands = 0 : i64, tpu.core_type = #tpu.core_type<tc>, window_params = [{transform_indices = @transform_0, window_bounds = array<i64: 8, 128>}, {transform_indices = @transform_1, window_bounds = array<i64: 8, 128>}, {transform_indices = @transform_2, window_bounds = array<i64: 8, 256>}, {pipeline_mode = #tpu.pipeline_mode<synchronous>, transform_indices = @transform_3, window_bounds = array<i64: 128, 512>}, {pipeline_mode = #tpu.pipeline_mode<synchronous>, transform_indices = @transform_4, window_bounds = array<i64: 1, 512>}, {pipeline_mode = #tpu.pipeline_mode<synchronous>, transform_indices = @transform_5, window_bounds = array<i64: 512, 256>}, {pipeline_mode = #tpu.pipeline_mode<synchronous>, transform_indices = @transform_6, window_bounds = array<i64: 1, 256>}, {pipeline_mode = #tpu.pipeline_mode<synchronous>, transform_indices = @transform_7, window_bounds = array<i64: 256, 128>}, {pipeline_mode = #tpu.pipeline_mode<synchronous>, transform_indices = @transform_8, window_bounds = array<i64: 1, 128>}, {pipeline_mode = #tpu.pipeline_mode<synchronous>, transform_indices = @transform_9, window_bounds = array<i64: 128, 128>}, {pipeline_mode = #tpu.pipeline_mode<synchronous>, transform_indices = @transform_10, window_bounds = array<i64: 1, 128>}, {pipeline_mode = #tpu.pipeline_mode<synchronous>, transform_indices = @transform_11, window_bounds = array<i64: 256, 512>}, {pipeline_mode = #tpu.pipeline_mode<synchronous>, transform_indices = @transform_12, window_bounds = array<i64: 1, 512>}, {pipeline_mode = #tpu.pipeline_mode<synchronous>, transform_indices = @transform_13, window_bounds = array<i64: 512, 256>}, {pipeline_mode = #tpu.pipeline_mode<synchronous>, transform_indices = @transform_14, window_bounds = array<i64: 1, 256>}, {pipeline_mode = #tpu.pipeline_mode<synchronous>, transform_indices = @transform_15, window_bounds = array<i64: 256, 128>}, {pipeline_mode = #tpu.pipeline_mode<synchronous>, transform_indices = @transform_16, window_bounds = array<i64: 1, 128>}, {pipeline_mode = #tpu.pipeline_mode<synchronous>, transform_indices = @transform_17, window_bounds = array<i64: 128, 128>}, {pipeline_mode = #tpu.pipeline_mode<synchronous>, transform_indices = @transform_18, window_bounds = array<i64: 1, 128>}, {pipeline_mode = #tpu.pipeline_mode<synchronous>, transform_indices = @transform_19, window_bounds = array<i64: 128, 256>}, {pipeline_mode = #tpu.pipeline_mode<synchronous>, transform_indices = @transform_20, window_bounds = array<i64: 128, 256>}, {pipeline_mode = #tpu.pipeline_mode<synchronous>, transform_indices = @transform_21, window_bounds = array<i64: 128, 256>}, {pipeline_mode = #tpu.pipeline_mode<synchronous>, transform_indices = @transform_22, window_bounds = array<i64: 1, 256>}, {pipeline_mode = #tpu.pipeline_mode<synchronous>, transform_indices = @transform_23, window_bounds = array<i64: 256, 128>}, {pipeline_mode = #tpu.pipeline_mode<synchronous>, transform_indices = @transform_24, window_bounds = array<i64: 1, 128>}, {pipeline_mode = #tpu.pipeline_mode<synchronous>, transform_indices = @transform_25, window_bounds = array<i64: 128, 128>}, {pipeline_mode = #tpu.pipeline_mode<synchronous>, transform_indices = @transform_26, window_bounds = array<i64: 1, 128>}, {pipeline_mode = #tpu.pipeline_mode<synchronous>, transform_indices = @transform_27, window_bounds = array<i64: 128, 128>}, {pipeline_mode = #tpu.pipeline_mode<synchronous>, transform_indices = @transform_28, window_bounds = array<i64: 1, 128>}, {pipeline_mode = #tpu.pipeline_mode<synchronous>, transform_indices = @transform_29, window_bounds = array<i64: 128, 128>}, {pipeline_mode = #tpu.pipeline_mode<synchronous>, transform_indices = @transform_30, window_bounds = array<i64: 1, 128>}, {pipeline_mode = #tpu.pipeline_mode<synchronous>, transform_indices = @transform_31, window_bounds = array<i64: 128, 128>}, {pipeline_mode = #tpu.pipeline_mode<synchronous>, transform_indices = @transform_32, window_bounds = array<i64: 1, 128>}, {transform_indices = @transform_33, window_bounds = array<i64: 8, 128>}]} {
    %c0 = arith.constant 0 : index
    %c0_0 = arith.constant 0 : index
    %0 = vector.load %arg2[%c0, %c0_0] : memref<8x128xbf16, #tpu.memory_space<vmem>>, vector<8x128xbf16>
    %c0_1 = arith.constant 0 : index
    %c0_2 = arith.constant 0 : index
    %1 = vector.load %arg4[%c0_1, %c0_2] : memref<128x512xbf16, #tpu.memory_space<vmem>>, vector<128x512xbf16>
    %cst = arith.constant dense<0.000000e+00> : vector<8x512xf32>
    %2 = tpu.matmul %0, %1, %cst {dimension_numbers = #tpu.dot_dimension_numbers<[1], [0], [0], [1], [0, 0, 1, 1], [], []>} : vector<8x128xbf16>, vector<128x512xbf16>, vector<8x512xf32> -> vector<8x512xf32>
    %c0_3 = arith.constant 0 : index
    %c0_4 = arith.constant 0 : index
    %3 = vector.load %arg5[%c0_3, %c0_4] : memref<1x512xf32, #tpu.memory_space<vmem>>, vector<1x512xf32>
    %4 = vector.broadcast %3 : vector<1x512xf32> to vector<8x512xf32>
    %5 = arith.addf %2, %4 : vector<8x512xf32>
    %cst_5 = arith.constant 0.000000e+00 : f32
    %6 = vector.broadcast %cst_5 : f32 to vector<8x512xf32>
    %7 = arith.maximumf %5, %6 : vector<8x512xf32>
    %8 = arith.truncf %7 : vector<8x512xf32> to vector<8x512xbf16>
    %c0_6 = arith.constant 0 : index
    %c0_7 = arith.constant 0 : index
    %9 = vector.load %arg6[%c0_6, %c0_7] : memref<512x256xbf16, #tpu.memory_space<vmem>>, vector<512x256xbf16>
    %cst_8 = arith.constant dense<0.000000e+00> : vector<8x256xf32>
    %10 = tpu.matmul %8, %9, %cst_8 {dimension_numbers = #tpu.dot_dimension_numbers<[1], [0], [0], [1], [0, 0, 1, 1], [], []>} : vector<8x512xbf16>, vector<512x256xbf16>, vector<8x256xf32> -> vector<8x256xf32>
    %c0_9 = arith.constant 0 : index
    %c0_10 = arith.constant 0 : index
    %11 = vector.load %arg7[%c0_9, %c0_10] : memref<1x256xf32, #tpu.memory_space<vmem>>, vector<1x256xf32>
    %12 = vector.broadcast %11 : vector<1x256xf32> to vector<8x256xf32>
    %13 = arith.addf %10, %12 : vector<8x256xf32>
    %cst_11 = arith.constant 0.000000e+00 : f32
    %14 = vector.broadcast %cst_11 : f32 to vector<8x256xf32>
    %15 = arith.maximumf %13, %14 : vector<8x256xf32>
    %16 = arith.truncf %15 : vector<8x256xf32> to vector<8x256xbf16>
    %c0_12 = arith.constant 0 : index
    %c0_13 = arith.constant 0 : index
    %17 = vector.load %arg8[%c0_12, %c0_13] : memref<256x128xbf16, #tpu.memory_space<vmem>>, vector<256x128xbf16>
    %cst_14 = arith.constant dense<0.000000e+00> : vector<8x128xf32>
    %18 = tpu.matmul %16, %17, %cst_14 {dimension_numbers = #tpu.dot_dimension_numbers<[1], [0], [0], [1], [0, 0, 1, 1], [], []>} : vector<8x256xbf16>, vector<256x128xbf16>, vector<8x128xf32> -> vector<8x128xf32>
    %c0_15 = arith.constant 0 : index
    %c0_16 = arith.constant 0 : index
    %19 = vector.load %arg9[%c0_15, %c0_16] : memref<1x128xf32, #tpu.memory_space<vmem>>, vector<1x128xf32>
    %20 = vector.broadcast %19 : vector<1x128xf32> to vector<8x128xf32>
    %21 = arith.addf %18, %20 : vector<8x128xf32>
    %cst_17 = arith.constant 0.000000e+00 : f32
    %22 = vector.broadcast %cst_17 : f32 to vector<8x128xf32>
    %23 = arith.maximumf %21, %22 : vector<8x128xf32>
    %24 = arith.truncf %23 : vector<8x128xf32> to vector<8x128xbf16>
    %c0_18 = arith.constant 0 : index
    %c0_19 = arith.constant 0 : index
    %25 = vector.load %arg10[%c0_18, %c0_19] : memref<128x128xbf16, #tpu.memory_space<vmem>>, vector<128x128xbf16>
    %cst_20 = arith.constant dense<0.000000e+00> : vector<8x128xf32>
    %26 = tpu.matmul %24, %25, %cst_20 {dimension_numbers = #tpu.dot_dimension_numbers<[1], [0], [0], [1], [0, 0, 1, 1], [], []>} : vector<8x128xbf16>, vector<128x128xbf16>, vector<8x128xf32> -> vector<8x128xf32>
    %c0_21 = arith.constant 0 : index
    %c0_22 = arith.constant 0 : index
    %27 = vector.load %arg11[%c0_21, %c0_22] : memref<1x128xf32, #tpu.memory_space<vmem>>, vector<1x128xf32>
    %28 = vector.broadcast %27 : vector<1x128xf32> to vector<8x128xf32>
    %29 = arith.addf %26, %28 : vector<8x128xf32>
    %cst_23 = arith.constant 0.000000e+00 : f32
    %30 = vector.broadcast %cst_23 : f32 to vector<8x128xf32>
    %31 = arith.maximumf %29, %30 : vector<8x128xf32>
    %c0_24 = arith.constant 0 : index
    %c0_25 = arith.constant 0 : index
    %32 = vector.load %arg3[%c0_24, %c0_25] : memref<8x256xbf16, #tpu.memory_space<vmem>>, vector<8x256xbf16>
    %c0_26 = arith.constant 0 : index
    %c0_27 = arith.constant 0 : index
    %33 = vector.load %arg12[%c0_26, %c0_27] : memref<256x512xbf16, #tpu.memory_space<vmem>>, vector<256x512xbf16>
    %cst_28 = arith.constant dense<0.000000e+00> : vector<8x512xf32>
    %34 = tpu.matmul %32, %33, %cst_28 {dimension_numbers = #tpu.dot_dimension_numbers<[1], [0], [0], [1], [0, 0, 1, 1], [], []>} : vector<8x256xbf16>, vector<256x512xbf16>, vector<8x512xf32> -> vector<8x512xf32>
    %c0_29 = arith.constant 0 : index
    %c0_30 = arith.constant 0 : index
    %35 = vector.load %arg13[%c0_29, %c0_30] : memref<1x512xf32, #tpu.memory_space<vmem>>, vector<1x512xf32>
    %36 = vector.broadcast %35 : vector<1x512xf32> to vector<8x512xf32>
    %37 = arith.addf %34, %36 : vector<8x512xf32>
    %cst_31 = arith.constant 0.000000e+00 : f32
    %38 = vector.broadcast %cst_31 : f32 to vector<8x512xf32>
    %39 = arith.maximumf %37, %38 : vector<8x512xf32>
    %40 = arith.truncf %39 : vector<8x512xf32> to vector<8x512xbf16>
    %c0_32 = arith.constant 0 : index
    %c0_33 = arith.constant 0 : index
    %41 = vector.load %arg14[%c0_32, %c0_33] : memref<512x256xbf16, #tpu.memory_space<vmem>>, vector<512x256xbf16>
    %cst_34 = arith.constant dense<0.000000e+00> : vector<8x256xf32>
    %42 = tpu.matmul %40, %41, %cst_34 {dimension_numbers = #tpu.dot_dimension_numbers<[1], [0], [0], [1], [0, 0, 1, 1], [], []>} : vector<8x512xbf16>, vector<512x256xbf16>, vector<8x256xf32> -> vector<8x256xf32>
    %c0_35 = arith.constant 0 : index
    %c0_36 = arith.constant 0 : index
    %43 = vector.load %arg15[%c0_35, %c0_36] : memref<1x256xf32, #tpu.memory_space<vmem>>, vector<1x256xf32>
    %44 = vector.broadcast %43 : vector<1x256xf32> to vector<8x256xf32>
    %45 = arith.addf %42, %44 : vector<8x256xf32>
    %cst_37 = arith.constant 0.000000e+00 : f32
    %46 = vector.broadcast %cst_37 : f32 to vector<8x256xf32>
    %47 = arith.maximumf %45, %46 : vector<8x256xf32>
    %48 = arith.truncf %47 : vector<8x256xf32> to vector<8x256xbf16>
    %c0_38 = arith.constant 0 : index
    %c0_39 = arith.constant 0 : index
    %49 = vector.load %arg16[%c0_38, %c0_39] : memref<256x128xbf16, #tpu.memory_space<vmem>>, vector<256x128xbf16>
    %cst_40 = arith.constant dense<0.000000e+00> : vector<8x128xf32>
    %50 = tpu.matmul %48, %49, %cst_40 {dimension_numbers = #tpu.dot_dimension_numbers<[1], [0], [0], [1], [0, 0, 1, 1], [], []>} : vector<8x256xbf16>, vector<256x128xbf16>, vector<8x128xf32> -> vector<8x128xf32>
    %c0_41 = arith.constant 0 : index
    %c0_42 = arith.constant 0 : index
    %51 = vector.load %arg17[%c0_41, %c0_42] : memref<1x128xf32, #tpu.memory_space<vmem>>, vector<1x128xf32>
    %52 = vector.broadcast %51 : vector<1x128xf32> to vector<8x128xf32>
    %53 = arith.addf %50, %52 : vector<8x128xf32>
    %cst_43 = arith.constant 0.000000e+00 : f32
    %54 = vector.broadcast %cst_43 : f32 to vector<8x128xf32>
    %55 = arith.maximumf %53, %54 : vector<8x128xf32>
    %56 = arith.truncf %55 : vector<8x128xf32> to vector<8x128xbf16>
    %c0_44 = arith.constant 0 : index
    %c0_45 = arith.constant 0 : index
    %57 = vector.load %arg18[%c0_44, %c0_45] : memref<128x128xbf16, #tpu.memory_space<vmem>>, vector<128x128xbf16>
    %cst_46 = arith.constant dense<0.000000e+00> : vector<8x128xf32>
    %58 = tpu.matmul %56, %57, %cst_46 {dimension_numbers = #tpu.dot_dimension_numbers<[1], [0], [0], [1], [0, 0, 1, 1], [], []>} : vector<8x128xbf16>, vector<128x128xbf16>, vector<8x128xf32> -> vector<8x128xf32>
    %c0_47 = arith.constant 0 : index
    %c0_48 = arith.constant 0 : index
    %59 = vector.load %arg19[%c0_47, %c0_48] : memref<1x128xf32, #tpu.memory_space<vmem>>, vector<1x128xf32>
    %60 = vector.broadcast %59 : vector<1x128xf32> to vector<8x128xf32>
    %61 = arith.addf %58, %60 : vector<8x128xf32>
    %cst_49 = arith.constant 0.000000e+00 : f32
    %62 = vector.broadcast %cst_49 : f32 to vector<8x128xf32>
    %63 = arith.maximumf %61, %62 : vector<8x128xf32>
    %c0_50 = arith.constant 0 : index
    %c0_51 = arith.constant 0 : index
    %64 = vector.load %arg1[%c0_50, %c0_51] : memref<8x128xbf16, #tpu.memory_space<vmem>>, vector<8x128xbf16>
    %c0_52 = arith.constant 0 : index
    %c0_53 = arith.constant 0 : index
    %65 = vector.load %arg20[%c0_52, %c0_53] : memref<128x256xbf16, #tpu.memory_space<vmem>>, vector<128x256xbf16>
    %cst_54 = arith.constant dense<0.000000e+00> : vector<8x256xf32>
    %66 = tpu.matmul %64, %65, %cst_54 {dimension_numbers = #tpu.dot_dimension_numbers<[1], [0], [0], [1], [0, 0, 1, 1], [], []>} : vector<8x128xbf16>, vector<128x256xbf16>, vector<8x256xf32> -> vector<8x256xf32>
    %67 = arith.truncf %31 : vector<8x128xf32> to vector<8x128xbf16>
    %c0_55 = arith.constant 0 : index
    %c0_56 = arith.constant 0 : index
    %68 = vector.load %arg21[%c0_55, %c0_56] : memref<128x256xbf16, #tpu.memory_space<vmem>>, vector<128x256xbf16>
    %cst_57 = arith.constant dense<0.000000e+00> : vector<8x256xf32>
    %69 = tpu.matmul %67, %68, %cst_57 {dimension_numbers = #tpu.dot_dimension_numbers<[1], [0], [0], [1], [0, 0, 1, 1], [], []>} : vector<8x128xbf16>, vector<128x256xbf16>, vector<8x256xf32> -> vector<8x256xf32>
    %70 = arith.addf %66, %69 : vector<8x256xf32>
    %71 = arith.truncf %63 : vector<8x128xf32> to vector<8x128xbf16>
    %c0_58 = arith.constant 0 : index
    %c0_59 = arith.constant 0 : index
    %72 = vector.load %arg22[%c0_58, %c0_59] : memref<128x256xbf16, #tpu.memory_space<vmem>>, vector<128x256xbf16>
    %cst_60 = arith.constant dense<0.000000e+00> : vector<8x256xf32>
    %73 = tpu.matmul %71, %72, %cst_60 {dimension_numbers = #tpu.dot_dimension_numbers<[1], [0], [0], [1], [0, 0, 1, 1], [], []>} : vector<8x128xbf16>, vector<128x256xbf16>, vector<8x256xf32> -> vector<8x256xf32>
    %74 = arith.addf %70, %73 : vector<8x256xf32>
    %c0_61 = arith.constant 0 : index
    %c0_62 = arith.constant 0 : index
    %75 = vector.load %arg23[%c0_61, %c0_62] : memref<1x256xf32, #tpu.memory_space<vmem>>, vector<1x256xf32>
    %76 = vector.broadcast %75 : vector<1x256xf32> to vector<8x256xf32>
    %77 = arith.addf %74, %76 : vector<8x256xf32>
    %cst_63 = arith.constant 0.000000e+00 : f32
    %78 = vector.broadcast %cst_63 : f32 to vector<8x256xf32>
    %79 = arith.maximumf %77, %78 : vector<8x256xf32>
    %80 = arith.truncf %79 : vector<8x256xf32> to vector<8x256xbf16>
    %c0_64 = arith.constant 0 : index
    %c0_65 = arith.constant 0 : index
    %81 = vector.load %arg24[%c0_64, %c0_65] : memref<256x128xbf16, #tpu.memory_space<vmem>>, vector<256x128xbf16>
    %cst_66 = arith.constant dense<0.000000e+00> : vector<8x128xf32>
    %82 = tpu.matmul %80, %81, %cst_66 {dimension_numbers = #tpu.dot_dimension_numbers<[1], [0], [0], [1], [0, 0, 1, 1], [], []>} : vector<8x256xbf16>, vector<256x128xbf16>, vector<8x128xf32> -> vector<8x128xf32>
    %c0_67 = arith.constant 0 : index
    %c0_68 = arith.constant 0 : index
    %83 = vector.load %arg25[%c0_67, %c0_68] : memref<1x128xf32, #tpu.memory_space<vmem>>, vector<1x128xf32>
    %84 = vector.broadcast %83 : vector<1x128xf32> to vector<8x128xf32>
    %85 = arith.addf %82, %84 : vector<8x128xf32>
    %cst_69 = arith.constant 0.000000e+00 : f32
    %86 = vector.broadcast %cst_69 : f32 to vector<8x128xf32>
    %87 = arith.maximumf %85, %86 : vector<8x128xf32>
    %88 = arith.truncf %87 : vector<8x128xf32> to vector<8x128xbf16>
    %c0_70 = arith.constant 0 : index
    %c0_71 = arith.constant 0 : index
    %89 = vector.load %arg26[%c0_70, %c0_71] : memref<128x128xbf16, #tpu.memory_space<vmem>>, vector<128x128xbf16>
    %cst_72 = arith.constant dense<0.000000e+00> : vector<8x128xf32>
    %90 = tpu.matmul %88, %89, %cst_72 {dimension_numbers = #tpu.dot_dimension_numbers<[1], [0], [0], [1], [0, 0, 1, 1], [], []>} : vector<8x128xbf16>, vector<128x128xbf16>, vector<8x128xf32> -> vector<8x128xf32>
    %c0_73 = arith.constant 0 : index
    %c0_74 = arith.constant 0 : index
    %91 = vector.load %arg27[%c0_73, %c0_74] : memref<1x128xf32, #tpu.memory_space<vmem>>, vector<1x128xf32>
    %92 = vector.broadcast %91 : vector<1x128xf32> to vector<8x128xf32>
    %93 = arith.addf %90, %92 : vector<8x128xf32>
    %cst_75 = arith.constant 0.000000e+00 : f32
    %94 = vector.broadcast %cst_75 : f32 to vector<8x128xf32>
    %95 = arith.maximumf %93, %94 : vector<8x128xf32>
    %96 = arith.truncf %95 : vector<8x128xf32> to vector<8x128xbf16>
    %c0_76 = arith.constant 0 : index
    %c0_77 = arith.constant 0 : index
    %97 = vector.load %arg28[%c0_76, %c0_77] : memref<128x128xbf16, #tpu.memory_space<vmem>>, vector<128x128xbf16>
    %cst_78 = arith.constant dense<0.000000e+00> : vector<8x128xf32>
    %98 = tpu.matmul %96, %97, %cst_78 {dimension_numbers = #tpu.dot_dimension_numbers<[1], [0], [0], [1], [0, 0, 1, 1], [], []>} : vector<8x128xbf16>, vector<128x128xbf16>, vector<8x128xf32> -> vector<8x128xf32>
    %c0_79 = arith.constant 0 : index
    %c0_80 = arith.constant 0 : index
    %99 = vector.load %arg29[%c0_79, %c0_80] : memref<1x128xf32, #tpu.memory_space<vmem>>, vector<1x128xf32>
    %100 = vector.broadcast %99 : vector<1x128xf32> to vector<8x128xf32>
    %101 = arith.addf %98, %100 : vector<8x128xf32>
    %cst_81 = arith.constant 0.000000e+00 : f32
    %102 = vector.broadcast %cst_81 : f32 to vector<8x128xf32>
    %103 = arith.maximumf %101, %102 : vector<8x128xf32>
    %104 = arith.truncf %103 : vector<8x128xf32> to vector<8x128xbf16>
    %c0_82 = arith.constant 0 : index
    %c0_83 = arith.constant 0 : index
    %105 = vector.load %arg30[%c0_82, %c0_83] : memref<128x128xbf16, #tpu.memory_space<vmem>>, vector<128x128xbf16>
    %cst_84 = arith.constant dense<0.000000e+00> : vector<8x128xf32>
    %106 = tpu.matmul %104, %105, %cst_84 {dimension_numbers = #tpu.dot_dimension_numbers<[1], [0], [0], [1], [0, 0, 1, 1], [], []>} : vector<8x128xbf16>, vector<128x128xbf16>, vector<8x128xf32> -> vector<8x128xf32>
    %c0_85 = arith.constant 0 : index
    %c0_86 = arith.constant 0 : index
    %107 = vector.load %arg31[%c0_85, %c0_86] : memref<1x128xf32, #tpu.memory_space<vmem>>, vector<1x128xf32>
    %108 = vector.broadcast %107 : vector<1x128xf32> to vector<8x128xf32>
    %109 = arith.addf %106, %108 : vector<8x128xf32>
    %cst_87 = arith.constant 0.000000e+00 : f32
    %110 = vector.broadcast %cst_87 : f32 to vector<8x128xf32>
    %111 = arith.maximumf %109, %110 : vector<8x128xf32>
    %112 = arith.truncf %111 : vector<8x128xf32> to vector<8x128xbf16>
    %c0_88 = arith.constant 0 : index
    %c0_89 = arith.constant 0 : index
    %113 = vector.load %arg32[%c0_88, %c0_89] : memref<128x128xbf16, #tpu.memory_space<vmem>>, vector<128x128xbf16>
    %cst_90 = arith.constant dense<0.000000e+00> : vector<8x128xf32>
    %114 = tpu.matmul %112, %113, %cst_90 {dimension_numbers = #tpu.dot_dimension_numbers<[1], [0], [0], [1], [0, 0, 1, 1], [], []>} : vector<8x128xbf16>, vector<128x128xbf16>, vector<8x128xf32> -> vector<8x128xf32>
    %c0_91 = arith.constant 0 : index
    %c0_92 = arith.constant 0 : index
    %115 = vector.load %arg33[%c0_91, %c0_92] : memref<1x128xf32, #tpu.memory_space<vmem>>, vector<1x128xf32>
    %116 = vector.broadcast %115 : vector<1x128xf32> to vector<8x128xf32>
    %117 = arith.addf %114, %116 : vector<8x128xf32>
    %118 = tpu.iota {dimensions = array<i32: 1>} : vector<8x128xi32>
    %c2_i32 = arith.constant 2 : i32
    %119 = vector.broadcast %c2_i32 : i32 to vector<8x128xi32>
    %120 = arith.cmpi sge, %118, %119 : vector<8x128xi32>
    %c9_i32 = arith.constant 9 : i32
    %121 = vector.broadcast %c9_i32 : i32 to vector<8x128xi32>
    %122 = arith.cmpi slt, %118, %121 : vector<8x128xi32>
    %123 = arith.andi %120, %122 : vector<8x128xi1>
    %cst_93 = arith.constant 0xFF800000 : f32
    %124 = vector.broadcast %cst_93 : f32 to vector<8x128xf32>
    %125 = arith.select %123, %117, %124 : vector<8x128xi1>, vector<8x128xf32>
    %cst_94 = arith.constant dense<0xFF800000> : vector<8xf32>
    %126 = vector.multi_reduction <maximumf>, %125, %cst_94 [1] : vector<8x128xf32> to vector<8xf32>
    %127 = vector.shape_cast %126 : vector<8xf32> to vector<8x1xf32>
    %128 = vector.broadcast %127 : vector<8x1xf32> to vector<8x128xf32>
    %129 = arith.subf %117, %128 : vector<8x128xf32>
    %cst_95 = arith.constant 0xFF800000 : f32
    %130 = vector.broadcast %cst_95 : f32 to vector<8x128xf32>
    %131 = arith.select %123, %129, %130 : vector<8x128xi1>, vector<8x128xf32>
    %132 = math.exp %131 : vector<8x128xf32>
    %cst_96 = arith.constant dense<0.000000e+00> : vector<8xf32>
    %133 = vector.multi_reduction <add>, %132, %cst_96 [1] : vector<8x128xf32> to vector<8xf32>
    %134 = vector.shape_cast %133 : vector<8xf32> to vector<8x1xf32>
    %135 = tpu.reciprocal %134 : vector<8x1xf32> -> vector<8x1xf32>
    %136 = vector.broadcast %135 : vector<8x1xf32> to vector<8x128xf32>
    %137 = arith.mulf %132, %136 : vector<8x128xf32>
    %138 = arith.select %123, %137, %117 : vector<8x128xi1>, vector<8x128xf32>
    %c0_97 = arith.constant 0 : index
    %c0_98 = arith.constant 0 : index
    %139 = vector.load %arg34[%c0_97, %c0_98] : memref<8x128xf32, #tpu.memory_space<vmem>>, vector<8x128xf32>
    tpu.vector_store %arg34[%c0_97, %c0_98], %138 {strides = array<i32>} : memref<8x128xf32, #tpu.memory_space<vmem>>, vector<8x128xf32>,
    return
  }
  func.func @transform_0(%arg0: i32) -> (i32, i32) {
    %c0_i32 = arith.constant 0 : i32
    %c0_i32_0 = arith.constant 0 : i32
    return %arg0, %c0_i32 : i32, i32
  }
  func.func @transform_1(%arg0: i32) -> (i32, i32) {
    %c0_i32 = arith.constant 0 : i32
    %c0_i32_0 = arith.constant 0 : i32
    return %arg0, %c0_i32 : i32, i32
  }
  func.func @transform_2(%arg0: i32) -> (i32, i32) {
    %c0_i32 = arith.constant 0 : i32
    %c0_i32_0 = arith.constant 0 : i32
    return %arg0, %c0_i32 : i32, i32
  }
  func.func @transform_3(%arg0: i32) -> (i32, i32) {
    %c0_i32 = arith.constant 0 : i32
    %c0_i32_0 = arith.constant 0 : i32
    %c0_i32_1 = arith.constant 0 : i32
    return %c0_i32, %c0_i32_0 : i32, i32
  }
  func.func @transform_4(%arg0: i32) -> (i32, i32) {
    %c0_i32 = arith.constant 0 : i32
    %c0_i32_0 = arith.constant 0 : i32
    %c0_i32_1 = arith.constant 0 : i32
    return %c0_i32, %c0_i32_0 : i32, i32
  }
  func.func @transform_5(%arg0: i32) -> (i32, i32) {
    %c0_i32 = arith.constant 0 : i32
    %c0_i32_0 = arith.constant 0 : i32
    %c0_i32_1 = arith.constant 0 : i32
    return %c0_i32, %c0_i32_0 : i32, i32
  }
  func.func @transform_6(%arg0: i32) -> (i32, i32) {
    %c0_i32 = arith.constant 0 : i32
    %c0_i32_0 = arith.constant 0 : i32
    %c0_i32_1 = arith.constant 0 : i32
    return %c0_i32, %c0_i32_0 : i32, i32
  }
  func.func @transform_7(%arg0: i32) -> (i32, i32) {
    %c0_i32 = arith.constant 0 : i32
    %c0_i32_0 = arith.constant 0 : i32
    %c0_i32_1 = arith.constant 0 : i32
    return %c0_i32, %c0_i32_0 : i32, i32
  }
  func.func @transform_8(%arg0: i32) -> (i32, i32) {
    %c0_i32 = arith.constant 0 : i32
    %c0_i32_0 = arith.constant 0 : i32
    %c0_i32_1 = arith.constant 0 : i32
    return %c0_i32, %c0_i32_0 : i32, i32
  }
  func.func @transform_9(%arg0: i32) -> (i32, i32) {
    %c0_i32 = arith.constant 0 : i32
    %c0_i32_0 = arith.constant 0 : i32
    %c0_i32_1 = arith.constant 0 : i32
    return %c0_i32, %c0_i32_0 : i32, i32
  }
  func.func @transform_10(%arg0: i32) -> (i32, i32) {
    %c0_i32 = arith.constant 0 : i32
    %c0_i32_0 = arith.constant 0 : i32
    %c0_i32_1 = arith.constant 0 : i32
    return %c0_i32, %c0_i32_0 : i32, i32
  }
  func.func @transform_11(%arg0: i32) -> (i32, i32) {
    %c0_i32 = arith.constant 0 : i32
    %c0_i32_0 = arith.constant 0 : i32
    %c0_i32_1 = arith.constant 0 : i32
    return %c0_i32, %c0_i32_0 : i32, i32
  }
  func.func @transform_12(%arg0: i32) -> (i32, i32) {
    %c0_i32 = arith.constant 0 : i32
    %c0_i32_0 = arith.constant 0 : i32
    %c0_i32_1 = arith.constant 0 : i32
    return %c0_i32, %c0_i32_0 : i32, i32
  }
  func.func @transform_13(%arg0: i32) -> (i32, i32) {
    %c0_i32 = arith.constant 0 : i32
    %c0_i32_0 = arith.constant 0 : i32
    %c0_i32_1 = arith.constant 0 : i32
    return %c0_i32, %c0_i32_0 : i32, i32
  }
  func.func @transform_14(%arg0: i32) -> (i32, i32) {
    %c0_i32 = arith.constant 0 : i32
    %c0_i32_0 = arith.constant 0 : i32
    %c0_i32_1 = arith.constant 0 : i32
    return %c0_i32, %c0_i32_0 : i32, i32
  }
  func.func @transform_15(%arg0: i32) -> (i32, i32) {
    %c0_i32 = arith.constant 0 : i32
    %c0_i32_0 = arith.constant 0 : i32
    %c0_i32_1 = arith.constant 0 : i32
    return %c0_i32, %c0_i32_0 : i32, i32
  }
  func.func @transform_16(%arg0: i32) -> (i32, i32) {
    %c0_i32 = arith.constant 0 : i32
    %c0_i32_0 = arith.constant 0 : i32
    %c0_i32_1 = arith.constant 0 : i32
    return %c0_i32, %c0_i32_0 : i32, i32
  }
  func.func @transform_17(%arg0: i32) -> (i32, i32) {
    %c0_i32 = arith.constant 0 : i32
    %c0_i32_0 = arith.constant 0 : i32
    %c0_i32_1 = arith.constant 0 : i32
    return %c0_i32, %c0_i32_0 : i32, i32
  }
  func.func @transform_18(%arg0: i32) -> (i32, i32) {
    %c0_i32 = arith.constant 0 : i32
    %c0_i32_0 = arith.constant 0 : i32
    %c0_i32_1 = arith.constant 0 : i32
    return %c0_i32, %c0_i32_0 : i32, i32
  }
  func.func @transform_19(%arg0: i32) -> (i32, i32) {
    %c0_i32 = arith.constant 0 : i32
    %c0_i32_0 = arith.constant 0 : i32
    %c0_i32_1 = arith.constant 0 : i32
    return %c0_i32, %c0_i32_0 : i32, i32
  }
  func.func @transform_20(%arg0: i32) -> (i32, i32) {
    %c0_i32 = arith.constant 0 : i32
    %c0_i32_0 = arith.constant 0 : i32
    %c0_i32_1 = arith.constant 0 : i32
    return %c0_i32, %c0_i32_0 : i32, i32
  }
  func.func @transform_21(%arg0: i32) -> (i32, i32) {
    %c0_i32 = arith.constant 0 : i32
    %c0_i32_0 = arith.constant 0 : i32
    %c0_i32_1 = arith.constant 0 : i32
    return %c0_i32, %c0_i32_0 : i32, i32
  }
  func.func @transform_22(%arg0: i32) -> (i32, i32) {
    %c0_i32 = arith.constant 0 : i32
    %c0_i32_0 = arith.constant 0 : i32
    %c0_i32_1 = arith.constant 0 : i32
    return %c0_i32, %c0_i32_0 : i32, i32
  }
  func.func @transform_23(%arg0: i32) -> (i32, i32) {
    %c0_i32 = arith.constant 0 : i32
    %c0_i32_0 = arith.constant 0 : i32
    %c0_i32_1 = arith.constant 0 : i32
    return %c0_i32, %c0_i32_0 : i32, i32
  }
  func.func @transform_24(%arg0: i32) -> (i32, i32) {
    %c0_i32 = arith.constant 0 : i32
    %c0_i32_0 = arith.constant 0 : i32
    %c0_i32_1 = arith.constant 0 : i32
    return %c0_i32, %c0_i32_0 : i32, i32
  }
  func.func @transform_25(%arg0: i32) -> (i32, i32) {
    %c0_i32 = arith.constant 0 : i32
    %c0_i32_0 = arith.constant 0 : i32
    %c0_i32_1 = arith.constant 0 : i32
    return %c0_i32, %c0_i32_0 : i32, i32
  }
  func.func @transform_26(%arg0: i32) -> (i32, i32) {
    %c0_i32 = arith.constant 0 : i32
    %c0_i32_0 = arith.constant 0 : i32
    %c0_i32_1 = arith.constant 0 : i32
    return %c0_i32, %c0_i32_0 : i32, i32
  }
  func.func @transform_27(%arg0: i32) -> (i32, i32) {
    %c0_i32 = arith.constant 0 : i32
    %c0_i32_0 = arith.constant 0 : i32
    %c0_i32_1 = arith.constant 0 : i32
    return %c0_i32, %c0_i32_0 : i32, i32
  }
  func.func @transform_28(%arg0: i32) -> (i32, i32) {
    %c0_i32 = arith.constant 0 : i32
    %c0_i32_0 = arith.constant 0 : i32
    %c0_i32_1 = arith.constant 0 : i32
    return %c0_i32, %c0_i32_0 : i32, i32
  }
  func.func @transform_29(%arg0: i32) -> (i32, i32) {
    %c0_i32 = arith.constant 0 : i32
    %c0_i32_0 = arith.constant 0 : i32
    %c0_i32_1 = arith.constant 0 : i32
    return %c0_i32, %c0_i32_0 : i32, i32
  }
  func.func @transform_30(%arg0: i32) -> (i32, i32) {
    %c0_i32 = arith.constant 0 : i32
    %c0_i32_0 = arith.constant 0 : i32
    %c0_i32_1 = arith.constant 0 : i32
    return %c0_i32, %c0_i32_0 : i32, i32
  }
  func.func @transform_31(%arg0: i32) -> (i32, i32) {
    %c0_i32 = arith.constant 0 : i32
    %c0_i32_0 = arith.constant 0 : i32
    %c0_i32_1 = arith.constant 0 : i32
    return %c0_i32, %c0_i32_0 : i32, i32
  }
  func.func @transform_32(%arg0: i32) -> (i32, i32) {
    %c0_i32 = arith.constant 0 : i32
    %c0_i32_0 = arith.constant 0 : i32
    %c0_i32_1 = arith.constant 0 : i32
    return %c0_i32, %c0_i32_0 : i32, i32
  }
  func.func @transform_33(%arg0: i32) -> (i32, i32) {
    %c0_i32 = arith.constant 0 : i32
    %c0_i32_0 = arith.constant 0 : i32
    return %arg0, %c0_i32 : i32, i32
  }
}

module attributes {stable_mosaic.version = 11 : i64} {
  func.func @_fused_kernel(%arg0: i32, %arg1: memref<8x128xbf16, #tpu.memory_space<vmem>>, %arg2: memref<8x128xbf16, #tpu.memory_space<vmem>>, %arg3: memref<8x256xbf16, #tpu.memory_space<vmem>>, %arg4: memref<128x512xbf16, #tpu.memory_space<vmem>>, %arg5: memref<1x512xf32, #tpu.memory_space<vmem>>, %arg6: memref<512x256xbf16, #tpu.memory_space<vmem>>, %arg7: memref<1x256xf32, #tpu.memory_space<vmem>>, %arg8: memref<256x128xbf16, #tpu.memory_space<vmem>>, %arg9: memref<1x128xf32, #tpu.memory_space<vmem>>, %arg10: memref<128x128xbf16, #tpu.memory_space<vmem>>, %arg11: memref<1x128xf32, #tpu.memory_space<vmem>>, %arg12: memref<256x512xbf16, #tpu.memory_space<vmem>>, %arg13: memref<1x512xf32, #tpu.memory_space<vmem>>, %arg14: memref<512x256xbf16, #tpu.memory_space<vmem>>, %arg15: memref<1x256xf32, #tpu.memory_space<vmem>>, %arg16: memref<256x128xbf16, #tpu.memory_space<vmem>>, %arg17: memref<1x128xf32, #tpu.memory_space<vmem>>, %arg18: memref<128x128xbf16, #tpu.memory_space<vmem>>, %arg19: memref<1x128xf32, #tpu.memory_space<vmem>>, %arg20: memref<128x256xbf16, #tpu.memory_space<vmem>>, %arg21: memref<128x256xbf16, #tpu.memory_space<vmem>>, %arg22: memref<128x256xbf16, #tpu.memory_space<vmem>>, %arg23: memref<1x256xf32, #tpu.memory_space<vmem>>, %arg24: memref<256x128xbf16, #tpu.memory_space<vmem>>, %arg25: memref<1x128xf32, #tpu.memory_space<vmem>>, %arg26: memref<128x128xbf16, #tpu.memory_space<vmem>>, %arg27: memref<1x128xf32, #tpu.memory_space<vmem>>, %arg28: memref<128x128xbf16, #tpu.memory_space<vmem>>, %arg29: memref<1x128xf32, #tpu.memory_space<vmem>>, %arg30: memref<128x128xbf16, #tpu.memory_space<vmem>>, %arg31: memref<1x128xf32, #tpu.memory_space<vmem>>, %arg32: memref<128x128xbf16, #tpu.memory_space<vmem>>, %arg33: memref<1x128xf32, #tpu.memory_space<vmem>>, %arg34: memref<8x128xf32, #tpu.memory_space<vmem>>) attributes {dimension_semantics = [#tpu.dimension_semantics<parallel>], iteration_bounds = array<i64: 1>, scalar_prefetch = 0 : i64, scratch_operands = 0 : i64, tpu.core_type = #tpu.core_type<tc>, window_params = [{transform_indices = @transform_0, window_bounds = array<i64: 8, 128>}, {transform_indices = @transform_1, window_bounds = array<i64: 8, 128>}, {transform_indices = @transform_2, window_bounds = array<i64: 8, 256>}, {pipeline_mode = #tpu.pipeline_mode<synchronous>, transform_indices = @transform_3, window_bounds = array<i64: 128, 512>}, {pipeline_mode = #tpu.pipeline_mode<synchronous>, transform_indices = @transform_4, window_bounds = array<i64: 1, 512>}, {pipeline_mode = #tpu.pipeline_mode<synchronous>, transform_indices = @transform_5, window_bounds = array<i64: 512, 256>}, {pipeline_mode = #tpu.pipeline_mode<synchronous>, transform_indices = @transform_6, window_bounds = array<i64: 1, 256>}, {pipeline_mode = #tpu.pipeline_mode<synchronous>, transform_indices = @transform_7, window_bounds = array<i64: 256, 128>}, {pipeline_mode = #tpu.pipeline_mode<synchronous>, transform_indices = @transform_8, window_bounds = array<i64: 1, 128>}, {pipeline_mode = #tpu.pipeline_mode<synchronous>, transform_indices = @transform_9, window_bounds = array<i64: 128, 128>}, {pipeline_mode = #tpu.pipeline_mode<synchronous>, transform_indices = @transform_10, window_bounds = array<i64: 1, 128>}, {pipeline_mode = #tpu.pipeline_mode<synchronous>, transform_indices = @transform_11, window_bounds = array<i64: 256, 512>}, {pipeline_mode = #tpu.pipeline_mode<synchronous>, transform_indices = @transform_12, window_bounds = array<i64: 1, 512>}, {pipeline_mode = #tpu.pipeline_mode<synchronous>, transform_indices = @transform_13, window_bounds = array<i64: 512, 256>}, {pipeline_mode = #tpu.pipeline_mode<synchronous>, transform_indices = @transform_14, window_bounds = array<i64: 1, 256>}, {pipeline_mode = #tpu.pipeline_mode<synchronous>, transform_indices = @transform_15, window_bounds = array<i64: 256, 128>}, {pipeline_mode = #tpu.pipeline_mode<synchronous>, transform_indices = @transform_16, window_bounds = array<i64: 1, 128>}, {pipeline_mode = #tpu.pipeline_mode<synchronous>, transform_indices = @transform_17, window_bounds = array<i64: 128, 128>}, {pipeline_mode = #tpu.pipeline_mode<synchronous>, transform_indices = @transform_18, window_bounds = array<i64: 1, 128>}, {pipeline_mode = #tpu.pipeline_mode<synchronous>, transform_indices = @transform_19, window_bounds = array<i64: 128, 256>}, {pipeline_mode = #tpu.pipeline_mode<synchronous>, transform_indices = @transform_20, window_bounds = array<i64: 128, 256>}, {pipeline_mode = #tpu.pipeline_mode<synchronous>, transform_indices = @transform_21, window_bounds = array<i64: 128, 256>}, {pipeline_mode = #tpu.pipeline_mode<synchronous>, transform_indices = @transform_22, window_bounds = array<i64: 1, 256>}, {pipeline_mode = #tpu.pipeline_mode<synchronous>, transform_indices = @transform_23, window_bounds = array<i64: 256, 128>}, {pipeline_mode = #tpu.pipeline_mode<synchronous>, transform_indices = @transform_24, window_bounds = array<i64: 1, 128>}, {pipeline_mode = #tpu.pipeline_mode<synchronous>, transform_indices = @transform_25, window_bounds = array<i64: 128, 128>}, {pipeline_mode = #tpu.pipeline_mode<synchronous>, transform_indices = @transform_26, window_bounds = array<i64: 1, 128>}, {pipeline_mode = #tpu.pipeline_mode<synchronous>, transform_indices = @transform_27, window_bounds = array<i64: 128, 128>}, {pipeline_mode = #tpu.pipeline_mode<synchronous>, transform_indices = @transform_28, window_bounds = array<i64: 1, 128>}, {pipeline_mode = #tpu.pipeline_mode<synchronous>, transform_indices = @transform_29, window_bounds = array<i64: 128, 128>}, {pipeline_mode = #tpu.pipeline_mode<synchronous>, transform_indices = @transform_30, window_bounds = array<i64: 1, 128>}, {pipeline_mode = #tpu.pipeline_mode<synchronous>, transform_indices = @transform_31, window_bounds = array<i64: 128, 128>}, {pipeline_mode = #tpu.pipeline_mode<synchronous>, transform_indices = @transform_32, window_bounds = array<i64: 1, 128>}, {transform_indices = @transform_33, window_bounds = array<i64: 8, 128>}]} {
    %c0 = arith.constant 0 : index
    %c0_0 = arith.constant 0 : index
    %0 = vector.load %arg2[%c0, %c0_0] : memref<8x128xbf16, #tpu.memory_space<vmem>>, vector<8x128xbf16>
    %c0_1 = arith.constant 0 : index
    %c0_2 = arith.constant 0 : index
    %1 = vector.load %arg4[%c0_1, %c0_2] : memref<128x512xbf16, #tpu.memory_space<vmem>>, vector<128x512xbf16>
    %cst = arith.constant dense<0.000000e+00> : vector<8x512xf32>
    %2 = tpu.matmul %0, %1, %cst {dimension_numbers = #tpu.dot_dimension_numbers<[1], [0], [0], [1], [0, 0, 1, 1], [], []>} : vector<8x128xbf16>, vector<128x512xbf16>, vector<8x512xf32> -> vector<8x512xf32>
    %c0_3 = arith.constant 0 : index
    %c0_4 = arith.constant 0 : index
    %3 = vector.load %arg5[%c0_3, %c0_4] : memref<1x512xf32, #tpu.memory_space<vmem>>, vector<1x512xf32>
    %4 = vector.broadcast %3 : vector<1x512xf32> to vector<8x512xf32>
    %5 = arith.addf %2, %4 : vector<8x512xf32>
    %cst_5 = arith.constant 0.000000e+00 : f32
    %6 = vector.broadcast %cst_5 : f32 to vector<8x512xf32>
    %7 = arith.maximumf %5, %6 : vector<8x512xf32>
    %8 = arith.truncf %7 : vector<8x512xf32> to vector<8x512xbf16>
    %c0_6 = arith.constant 0 : index
    %c0_7 = arith.constant 0 : index
    %9 = vector.load %arg6[%c0_6, %c0_7] : memref<512x256xbf16, #tpu.memory_space<vmem>>, vector<512x256xbf16>
    %cst_8 = arith.constant dense<0.000000e+00> : vector<8x256xf32>
    %10 = tpu.matmul %8, %9, %cst_8 {dimension_numbers = #tpu.dot_dimension_numbers<[1], [0], [0], [1], [0, 0, 1, 1], [], []>} : vector<8x512xbf16>, vector<512x256xbf16>, vector<8x256xf32> -> vector<8x256xf32>
    %c0_9 = arith.constant 0 : index
    %c0_10 = arith.constant 0 : index
    %11 = vector.load %arg7[%c0_9, %c0_10] : memref<1x256xf32, #tpu.memory_space<vmem>>, vector<1x256xf32>
    %12 = vector.broadcast %11 : vector<1x256xf32> to vector<8x256xf32>
    %13 = arith.addf %10, %12 : vector<8x256xf32>
    %cst_11 = arith.constant 0.000000e+00 : f32
    %14 = vector.broadcast %cst_11 : f32 to vector<8x256xf32>
    %15 = arith.maximumf %13, %14 : vector<8x256xf32>
    %16 = arith.truncf %15 : vector<8x256xf32> to vector<8x256xbf16>
    %c0_12 = arith.constant 0 : index
    %c0_13 = arith.constant 0 : index
    %17 = vector.load %arg8[%c0_12, %c0_13] : memref<256x128xbf16, #tpu.memory_space<vmem>>, vector<256x128xbf16>
    %cst_14 = arith.constant dense<0.000000e+00> : vector<8x128xf32>
    %18 = tpu.matmul %16, %17, %cst_14 {dimension_numbers = #tpu.dot_dimension_numbers<[1], [0], [0], [1], [0, 0, 1, 1], [], []>} : vector<8x256xbf16>, vector<256x128xbf16>, vector<8x128xf32> -> vector<8x128xf32>
    %c0_15 = arith.constant 0 : index
    %c0_16 = arith.constant 0 : index
    %19 = vector.load %arg9[%c0_15, %c0_16] : memref<1x128xf32, #tpu.memory_space<vmem>>, vector<1x128xf32>
    %20 = vector.broadcast %19 : vector<1x128xf32> to vector<8x128xf32>
    %21 = arith.addf %18, %20 : vector<8x128xf32>
    %cst_17 = arith.constant 0.000000e+00 : f32
    %22 = vector.broadcast %cst_17 : f32 to vector<8x128xf32>
    %23 = arith.maximumf %21, %22 : vector<8x128xf32>
    %24 = arith.truncf %23 : vector<8x128xf32> to vector<8x128xbf16>
    %c0_18 = arith.constant 0 : index
    %c0_19 = arith.constant 0 : index
    %25 = vector.load %arg10[%c0_18, %c0_19] : memref<128x128xbf16, #tpu.memory_space<vmem>>, vector<128x128xbf16>
    %cst_20 = arith.constant dense<0.000000e+00> : vector<8x128xf32>
    %26 = tpu.matmul %24, %25, %cst_20 {dimension_numbers = #tpu.dot_dimension_numbers<[1], [0], [0], [1], [0, 0, 1, 1], [], []>} : vector<8x128xbf16>, vector<128x128xbf16>, vector<8x128xf32> -> vector<8x128xf32>
    %c0_21 = arith.constant 0 : index
    %c0_22 = arith.constant 0 : index
    %27 = vector.load %arg11[%c0_21, %c0_22] : memref<1x128xf32, #tpu.memory_space<vmem>>, vector<1x128xf32>
    %28 = vector.broadcast %27 : vector<1x128xf32> to vector<8x128xf32>
    %29 = arith.addf %26, %28 : vector<8x128xf32>
    %cst_23 = arith.constant 0.000000e+00 : f32
    %30 = vector.broadcast %cst_23 : f32 to vector<8x128xf32>
    %31 = arith.maximumf %29, %30 : vector<8x128xf32>
    %c0_24 = arith.constant 0 : index
    %c0_25 = arith.constant 0 : index
    %32 = vector.load %arg3[%c0_24, %c0_25] : memref<8x256xbf16, #tpu.memory_space<vmem>>, vector<8x256xbf16>
    %c0_26 = arith.constant 0 : index
    %c0_27 = arith.constant 0 : index
    %33 = vector.load %arg12[%c0_26, %c0_27] : memref<256x512xbf16, #tpu.memory_space<vmem>>, vector<256x512xbf16>
    %cst_28 = arith.constant dense<0.000000e+00> : vector<8x512xf32>
    %34 = tpu.matmul %32, %33, %cst_28 {dimension_numbers = #tpu.dot_dimension_numbers<[1], [0], [0], [1], [0, 0, 1, 1], [], []>} : vector<8x256xbf16>, vector<256x512xbf16>, vector<8x512xf32> -> vector<8x512xf32>
    %c0_29 = arith.constant 0 : index
    %c0_30 = arith.constant 0 : index
    %35 = vector.load %arg13[%c0_29, %c0_30] : memref<1x512xf32, #tpu.memory_space<vmem>>, vector<1x512xf32>
    %36 = vector.broadcast %35 : vector<1x512xf32> to vector<8x512xf32>
    %37 = arith.addf %34, %36 : vector<8x512xf32>
    %cst_31 = arith.constant 0.000000e+00 : f32
    %38 = vector.broadcast %cst_31 : f32 to vector<8x512xf32>
    %39 = arith.maximumf %37, %38 : vector<8x512xf32>
    %40 = arith.truncf %39 : vector<8x512xf32> to vector<8x512xbf16>
    %c0_32 = arith.constant 0 : index
    %c0_33 = arith.constant 0 : index
    %41 = vector.load %arg14[%c0_32, %c0_33] : memref<512x256xbf16, #tpu.memory_space<vmem>>, vector<512x256xbf16>
    %cst_34 = arith.constant dense<0.000000e+00> : vector<8x256xf32>
    %42 = tpu.matmul %40, %41, %cst_34 {dimension_numbers = #tpu.dot_dimension_numbers<[1], [0], [0], [1], [0, 0, 1, 1], [], []>} : vector<8x512xbf16>, vector<512x256xbf16>, vector<8x256xf32> -> vector<8x256xf32>
    %c0_35 = arith.constant 0 : index
    %c0_36 = arith.constant 0 : index
    %43 = vector.load %arg15[%c0_35, %c0_36] : memref<1x256xf32, #tpu.memory_space<vmem>>, vector<1x256xf32>
    %44 = vector.broadcast %43 : vector<1x256xf32> to vector<8x256xf32>
    %45 = arith.addf %42, %44 : vector<8x256xf32>
    %cst_37 = arith.constant 0.000000e+00 : f32
    %46 = vector.broadcast %cst_37 : f32 to vector<8x256xf32>
    %47 = arith.maximumf %45, %46 : vector<8x256xf32>
    %48 = arith.truncf %47 : vector<8x256xf32> to vector<8x256xbf16>
    %c0_38 = arith.constant 0 : index
    %c0_39 = arith.constant 0 : index
    %49 = vector.load %arg16[%c0_38, %c0_39] : memref<256x128xbf16, #tpu.memory_space<vmem>>, vector<256x128xbf16>
    %cst_40 = arith.constant dense<0.000000e+00> : vector<8x128xf32>
    %50 = tpu.matmul %48, %49, %cst_40 {dimension_numbers = #tpu.dot_dimension_numbers<[1], [0], [0], [1], [0, 0, 1, 1], [], []>} : vector<8x256xbf16>, vector<256x128xbf16>, vector<8x128xf32> -> vector<8x128xf32>
    %c0_41 = arith.constant 0 : index
    %c0_42 = arith.constant 0 : index
    %51 = vector.load %arg17[%c0_41, %c0_42] : memref<1x128xf32, #tpu.memory_space<vmem>>, vector<1x128xf32>
    %52 = vector.broadcast %51 : vector<1x128xf32> to vector<8x128xf32>
    %53 = arith.addf %50, %52 : vector<8x128xf32>
    %cst_43 = arith.constant 0.000000e+00 : f32
    %54 = vector.broadcast %cst_43 : f32 to vector<8x128xf32>
    %55 = arith.maximumf %53, %54 : vector<8x128xf32>
    %56 = arith.truncf %55 : vector<8x128xf32> to vector<8x128xbf16>
    %c0_44 = arith.constant 0 : index
    %c0_45 = arith.constant 0 : index
    %57 = vector.load %arg18[%c0_44, %c0_45] : memref<128x128xbf16, #tpu.memory_space<vmem>>, vector<128x128xbf16>
    %cst_46 = arith.constant dense<0.000000e+00> : vector<8x128xf32>
    %58 = tpu.matmul %56, %57, %cst_46 {dimension_numbers = #tpu.dot_dimension_numbers<[1], [0], [0], [1], [0, 0, 1, 1], [], []>} : vector<8x128xbf16>, vector<128x128xbf16>, vector<8x128xf32> -> vector<8x128xf32>
    %c0_47 = arith.constant 0 : index
    %c0_48 = arith.constant 0 : index
    %59 = vector.load %arg19[%c0_47, %c0_48] : memref<1x128xf32, #tpu.memory_space<vmem>>, vector<1x128xf32>
    %60 = vector.broadcast %59 : vector<1x128xf32> to vector<8x128xf32>
    %61 = arith.addf %58, %60 : vector<8x128xf32>
    %cst_49 = arith.constant 0.000000e+00 : f32
    %62 = vector.broadcast %cst_49 : f32 to vector<8x128xf32>
    %63 = arith.maximumf %61, %62 : vector<8x128xf32>
    %c0_50 = arith.constant 0 : index
    %c0_51 = arith.constant 0 : index
    %64 = vector.load %arg1[%c0_50, %c0_51] : memref<8x128xbf16, #tpu.memory_space<vmem>>, vector<8x128xbf16>
    %c0_52 = arith.constant 0 : index
    %c0_53 = arith.constant 0 : index
    %65 = vector.load %arg20[%c0_52, %c0_53] : memref<128x256xbf16, #tpu.memory_space<vmem>>, vector<128x256xbf16>
    %cst_54 = arith.constant dense<0.000000e+00> : vector<8x256xf32>
    %66 = tpu.matmul %64, %65, %cst_54 {dimension_numbers = #tpu.dot_dimension_numbers<[1], [0], [0], [1], [0, 0, 1, 1], [], []>} : vector<8x128xbf16>, vector<128x256xbf16>, vector<8x256xf32> -> vector<8x256xf32>
    %67 = arith.truncf %31 : vector<8x128xf32> to vector<8x128xbf16>
    %c0_55 = arith.constant 0 : index
    %c0_56 = arith.constant 0 : index
    %68 = vector.load %arg21[%c0_55, %c0_56] : memref<128x256xbf16, #tpu.memory_space<vmem>>, vector<128x256xbf16>
    %cst_57 = arith.constant dense<0.000000e+00> : vector<8x256xf32>
    %69 = tpu.matmul %67, %68, %cst_57 {dimension_numbers = #tpu.dot_dimension_numbers<[1], [0], [0], [1], [0, 0, 1, 1], [], []>} : vector<8x128xbf16>, vector<128x256xbf16>, vector<8x256xf32> -> vector<8x256xf32>
    %70 = arith.addf %66, %69 : vector<8x256xf32>
    %71 = arith.truncf %63 : vector<8x128xf32> to vector<8x128xbf16>
    %c0_58 = arith.constant 0 : index
    %c0_59 = arith.constant 0 : index
    %72 = vector.load %arg22[%c0_58, %c0_59] : memref<128x256xbf16, #tpu.memory_space<vmem>>, vector<128x256xbf16>
    %cst_60 = arith.constant dense<0.000000e+00> : vector<8x256xf32>
    %73 = tpu.matmul %71, %72, %cst_60 {dimension_numbers = #tpu.dot_dimension_numbers<[1], [0], [0], [1], [0, 0, 1, 1], [], []>} : vector<8x128xbf16>, vector<128x256xbf16>, vector<8x256xf32> -> vector<8x256xf32>
    %74 = arith.addf %70, %73 : vector<8x256xf32>
    %c0_61 = arith.constant 0 : index
    %c0_62 = arith.constant 0 : index
    %75 = vector.load %arg23[%c0_61, %c0_62] : memref<1x256xf32, #tpu.memory_space<vmem>>, vector<1x256xf32>
    %76 = vector.broadcast %75 : vector<1x256xf32> to vector<8x256xf32>
    %77 = arith.addf %74, %76 : vector<8x256xf32>
    %cst_63 = arith.constant 0.000000e+00 : f32
    %78 = vector.broadcast %cst_63 : f32 to vector<8x256xf32>
    %79 = arith.maximumf %77, %78 : vector<8x256xf32>
    %80 = arith.truncf %79 : vector<8x256xf32> to vector<8x256xbf16>
    %c0_64 = arith.constant 0 : index
    %c0_65 = arith.constant 0 : index
    %81 = vector.load %arg24[%c0_64, %c0_65] : memref<256x128xbf16, #tpu.memory_space<vmem>>, vector<256x128xbf16>
    %cst_66 = arith.constant dense<0.000000e+00> : vector<8x128xf32>
    %82 = tpu.matmul %80, %81, %cst_66 {dimension_numbers = #tpu.dot_dimension_numbers<[1], [0], [0], [1], [0, 0, 1, 1], [], []>} : vector<8x256xbf16>, vector<256x128xbf16>, vector<8x128xf32> -> vector<8x128xf32>
    %c0_67 = arith.constant 0 : index
    %c0_68 = arith.constant 0 : index
    %83 = vector.load %arg25[%c0_67, %c0_68] : memref<1x128xf32, #tpu.memory_space<vmem>>, vector<1x128xf32>
    %84 = vector.broadcast %83 : vector<1x128xf32> to vector<8x128xf32>
    %85 = arith.addf %82, %84 : vector<8x128xf32>
    %cst_69 = arith.constant 0.000000e+00 : f32
    %86 = vector.broadcast %cst_69 : f32 to vector<8x128xf32>
    %87 = arith.maximumf %85, %86 : vector<8x128xf32>
    %88 = arith.truncf %87 : vector<8x128xf32> to vector<8x128xbf16>
    %c0_70 = arith.constant 0 : index
    %c0_71 = arith.constant 0 : index
    %89 = vector.load %arg26[%c0_70, %c0_71] : memref<128x128xbf16, #tpu.memory_space<vmem>>, vector<128x128xbf16>
    %cst_72 = arith.constant dense<0.000000e+00> : vector<8x128xf32>
    %90 = tpu.matmul %88, %89, %cst_72 {dimension_numbers = #tpu.dot_dimension_numbers<[1], [0], [0], [1], [0, 0, 1, 1], [], []>} : vector<8x128xbf16>, vector<128x128xbf16>, vector<8x128xf32> -> vector<8x128xf32>
    %c0_73 = arith.constant 0 : index
    %c0_74 = arith.constant 0 : index
    %91 = vector.load %arg27[%c0_73, %c0_74] : memref<1x128xf32, #tpu.memory_space<vmem>>, vector<1x128xf32>
    %92 = vector.broadcast %91 : vector<1x128xf32> to vector<8x128xf32>
    %93 = arith.addf %90, %92 : vector<8x128xf32>
    %cst_75 = arith.constant 0.000000e+00 : f32
    %94 = vector.broadcast %cst_75 : f32 to vector<8x128xf32>
    %95 = arith.maximumf %93, %94 : vector<8x128xf32>
    %96 = arith.truncf %95 : vector<8x128xf32> to vector<8x128xbf16>
    %c0_76 = arith.constant 0 : index
    %c0_77 = arith.constant 0 : index
    %97 = vector.load %arg28[%c0_76, %c0_77] : memref<128x128xbf16, #tpu.memory_space<vmem>>, vector<128x128xbf16>
    %cst_78 = arith.constant dense<0.000000e+00> : vector<8x128xf32>
    %98 = tpu.matmul %96, %97, %cst_78 {dimension_numbers = #tpu.dot_dimension_numbers<[1], [0], [0], [1], [0, 0, 1, 1], [], []>} : vector<8x128xbf16>, vector<128x128xbf16>, vector<8x128xf32> -> vector<8x128xf32>
    %c0_79 = arith.constant 0 : index
    %c0_80 = arith.constant 0 : index
    %99 = vector.load %arg29[%c0_79, %c0_80] : memref<1x128xf32, #tpu.memory_space<vmem>>, vector<1x128xf32>
    %100 = vector.broadcast %99 : vector<1x128xf32> to vector<8x128xf32>
    %101 = arith.addf %98, %100 : vector<8x128xf32>
    %cst_81 = arith.constant 0.000000e+00 : f32
    %102 = vector.broadcast %cst_81 : f32 to vector<8x128xf32>
    %103 = arith.maximumf %101, %102 : vector<8x128xf32>
    %104 = arith.truncf %103 : vector<8x128xf32> to vector<8x128xbf16>
    %c0_82 = arith.constant 0 : index
    %c0_83 = arith.constant 0 : index
    %105 = vector.load %arg30[%c0_82, %c0_83] : memref<128x128xbf16, #tpu.memory_space<vmem>>, vector<128x128xbf16>
    %cst_84 = arith.constant dense<0.000000e+00> : vector<8x128xf32>
    %106 = tpu.matmul %104, %105, %cst_84 {dimension_numbers = #tpu.dot_dimension_numbers<[1], [0], [0], [1], [0, 0, 1, 1], [], []>} : vector<8x128xbf16>, vector<128x128xbf16>, vector<8x128xf32> -> vector<8x128xf32>
    %c0_85 = arith.constant 0 : index
    %c0_86 = arith.constant 0 : index
    %107 = vector.load %arg31[%c0_85, %c0_86] : memref<1x128xf32, #tpu.memory_space<vmem>>, vector<1x128xf32>
    %108 = vector.broadcast %107 : vector<1x128xf32> to vector<8x128xf32>
    %109 = arith.addf %106, %108 : vector<8x128xf32>
    %cst_87 = arith.constant 0.000000e+00 : f32
    %110 = vector.broadcast %cst_87 : f32 to vector<8x128xf32>
    %111 = arith.maximumf %109, %110 : vector<8x128xf32>
    %112 = arith.truncf %111 : vector<8x128xf32> to vector<8x128xbf16>
    %c0_88 = arith.constant 0 : index
    %c0_89 = arith.constant 0 : index
    %113 = vector.load %arg32[%c0_88, %c0_89] : memref<128x128xbf16, #tpu.memory_space<vmem>>, vector<128x128xbf16>
    %cst_90 = arith.constant dense<0.000000e+00> : vector<8x128xf32>
    %114 = tpu.matmul %112, %113, %cst_90 {dimension_numbers = #tpu.dot_dimension_numbers<[1], [0], [0], [1], [0, 0, 1, 1], [], []>} : vector<8x128xbf16>, vector<128x128xbf16>, vector<8x128xf32> -> vector<8x128xf32>
    %c0_91 = arith.constant 0 : index
    %c0_92 = arith.constant 0 : index
    %115 = vector.load %arg33[%c0_91, %c0_92] : memref<1x128xf32, #tpu.memory_space<vmem>>, vector<1x128xf32>
    %116 = vector.broadcast %115 : vector<1x128xf32> to vector<8x128xf32>
    %117 = arith.addf %114, %116 : vector<8x128xf32>
    %118 = tpu.iota {dimensions = array<i32: 1>} : vector<8x128xi32>
    %c2_i32 = arith.constant 2 : i32
    %119 = vector.broadcast %c2_i32 : i32 to vector<8x128xi32>
    %120 = arith.cmpi sge, %118, %119 : vector<8x128xi32>
    %c9_i32 = arith.constant 9 : i32
    %121 = vector.broadcast %c9_i32 : i32 to vector<8x128xi32>
    %122 = arith.cmpi slt, %118, %121 : vector<8x128xi32>
    %123 = arith.andi %120, %122 : vector<8x128xi1>
    %cst_93 = arith.constant 0xFF800000 : f32
    %124 = vector.broadcast %cst_93 : f32 to vector<8x128xf32>
    %125 = arith.select %123, %117, %124 : vector<8x128xi1>, vector<8x128xf32>
    %cst_94 = arith.constant dense<0xFF800000> : vector<8xf32>
    %126 = vector.multi_reduction <maximumf>, %125, %cst_94 [1] : vector<8x128xf32> to vector<8xf32>
    %127 = vector.shape_cast %126 : vector<8xf32> to vector<8x1xf32>
    %128 = vector.broadcast %127 : vector<8x1xf32> to vector<8x128xf32>
    %129 = arith.subf %117, %128 : vector<8x128xf32>
    %cst_95 = arith.constant 0xFF800000 : f32
    %130 = vector.broadcast %cst_95 : f32 to vector<8x128xf32>
    %131 = arith.select %123, %129, %130 : vector<8x128xi1>, vector<8x128xf32>
    %132 = math.exp %131 : vector<8x128xf32>
    %cst_96 = arith.constant dense<0.000000e+00> : vector<8xf32>
    %133 = vector.multi_reduction <add>, %132, %cst_96 [1] : vector<8x128xf32> to vector<8xf32>
    %134 = vector.shape_cast %133 : vector<8xf32> to vector<8x1xf32>
    %135 = tpu.reciprocal %134 : vector<8x1xf32> -> vector<8x1xf32>
    %136 = vector.broadcast %135 : vector<8x1xf32> to vector<8x128xf32>
    %137 = arith.mulf %132, %136 : vector<8x128xf32>
    %138 = arith.select %123, %137, %117 : vector<8x128xi1>, vector<8x128xf32>
    %c0_97 = arith.constant 0 : index
    %c0_98 = arith.constant 0 : index
    %139 = vector.load %arg34[%c0_97, %c0_98] : memref<8x128xf32, #tpu.memory_space<vmem>>, vector<8x128xf32>
    tpu.vector_store %arg34[%c0_97, %c0_98], %138 {strides = array<i32>} : memref<8x128xf32, #tpu.memory_space<vmem>>, vector<8x128xf32>,
    return
  }
  func.func @transform_0(%arg0: i32) -> (i32, i32) {
    %c0_i32 = arith.constant 0 : i32
    %c0_i32_0 = arith.constant 0 : i32
    return %arg0, %c0_i32 : i32, i32
  }
  func.func @transform_1(%arg0: i32) -> (i32, i32) {
    %c0_i32 = arith.constant 0 : i32
    %c0_i32_0 = arith.constant 0 : i32
    return %arg0, %c0_i32 : i32, i32
  }
  func.func @transform_2(%arg0: i32) -> (i32, i32) {
    %c0_i32 = arith.constant 0 : i32
    %c0_i32_0 = arith.constant 0 : i32
    return %arg0, %c0_i32 : i32, i32
  }
  func.func @transform_3(%arg0: i32) -> (i32, i32) {
    %c0_i32 = arith.constant 0 : i32
    %c0_i32_0 = arith.constant 0 : i32
    %c0_i32_1 = arith.constant 0 : i32
    return %c0_i32, %c0_i32_0 : i32, i32
  }
  func.func @transform_4(%arg0: i32) -> (i32, i32) {
    %c0_i32 = arith.constant 0 : i32
    %c0_i32_0 = arith.constant 0 : i32
    %c0_i32_1 = arith.constant 0 : i32
    return %c0_i32, %c0_i32_0 : i32, i32
  }
  func.func @transform_5(%arg0: i32) -> (i32, i32) {
    %c0_i32 = arith.constant 0 : i32
    %c0_i32_0 = arith.constant 0 : i32
    %c0_i32_1 = arith.constant 0 : i32
    return %c0_i32, %c0_i32_0 : i32, i32
  }
  func.func @transform_6(%arg0: i32) -> (i32, i32) {
    %c0_i32 = arith.constant 0 : i32
    %c0_i32_0 = arith.constant 0 : i32
    %c0_i32_1 = arith.constant 0 : i32
    return %c0_i32, %c0_i32_0 : i32, i32
  }
  func.func @transform_7(%arg0: i32) -> (i32, i32) {
    %c0_i32 = arith.constant 0 : i32
    %c0_i32_0 = arith.constant 0 : i32
    %c0_i32_1 = arith.constant 0 : i32
    return %c0_i32, %c0_i32_0 : i32, i32
  }
  func.func @transform_8(%arg0: i32) -> (i32, i32) {
    %c0_i32 = arith.constant 0 : i32
    %c0_i32_0 = arith.constant 0 : i32
    %c0_i32_1 = arith.constant 0 : i32
    return %c0_i32, %c0_i32_0 : i32, i32
  }
  func.func @transform_9(%arg0: i32) -> (i32, i32) {
    %c0_i32 = arith.constant 0 : i32
    %c0_i32_0 = arith.constant 0 : i32
    %c0_i32_1 = arith.constant 0 : i32
    return %c0_i32, %c0_i32_0 : i32, i32
  }
  func.func @transform_10(%arg0: i32) -> (i32, i32) {
    %c0_i32 = arith.constant 0 : i32
    %c0_i32_0 = arith.constant 0 : i32
    %c0_i32_1 = arith.constant 0 : i32
    return %c0_i32, %c0_i32_0 : i32, i32
  }
  func.func @transform_11(%arg0: i32) -> (i32, i32) {
    %c0_i32 = arith.constant 0 : i32
    %c0_i32_0 = arith.constant 0 : i32
    %c0_i32_1 = arith.constant 0 : i32
    return %c0_i32, %c0_i32_0 : i32, i32
  }
  func.func @transform_12(%arg0: i32) -> (i32, i32) {
    %c0_i32 = arith.constant 0 : i32
    %c0_i32_0 = arith.constant 0 : i32
    %c0_i32_1 = arith.constant 0 : i32
    return %c0_i32, %c0_i32_0 : i32, i32
  }
  func.func @transform_13(%arg0: i32) -> (i32, i32) {
    %c0_i32 = arith.constant 0 : i32
    %c0_i32_0 = arith.constant 0 : i32
    %c0_i32_1 = arith.constant 0 : i32
    return %c0_i32, %c0_i32_0 : i32, i32
  }
  func.func @transform_14(%arg0: i32) -> (i32, i32) {
    %c0_i32 = arith.constant 0 : i32
    %c0_i32_0 = arith.constant 0 : i32
    %c0_i32_1 = arith.constant 0 : i32
    return %c0_i32, %c0_i32_0 : i32, i32
  }
  func.func @transform_15(%arg0: i32) -> (i32, i32) {
    %c0_i32 = arith.constant 0 : i32
    %c0_i32_0 = arith.constant 0 : i32
    %c0_i32_1 = arith.constant 0 : i32
    return %c0_i32, %c0_i32_0 : i32, i32
  }
  func.func @transform_16(%arg0: i32) -> (i32, i32) {
    %c0_i32 = arith.constant 0 : i32
    %c0_i32_0 = arith.constant 0 : i32
    %c0_i32_1 = arith.constant 0 : i32
    return %c0_i32, %c0_i32_0 : i32, i32
  }
  func.func @transform_17(%arg0: i32) -> (i32, i32) {
    %c0_i32 = arith.constant 0 : i32
    %c0_i32_0 = arith.constant 0 : i32
    %c0_i32_1 = arith.constant 0 : i32
    return %c0_i32, %c0_i32_0 : i32, i32
  }
  func.func @transform_18(%arg0: i32) -> (i32, i32) {
    %c0_i32 = arith.constant 0 : i32
    %c0_i32_0 = arith.constant 0 : i32
    %c0_i32_1 = arith.constant 0 : i32
    return %c0_i32, %c0_i32_0 : i32, i32
  }
  func.func @transform_19(%arg0: i32) -> (i32, i32) {
    %c0_i32 = arith.constant 0 : i32
    %c0_i32_0 = arith.constant 0 : i32
    %c0_i32_1 = arith.constant 0 : i32
    return %c0_i32, %c0_i32_0 : i32, i32
  }
  func.func @transform_20(%arg0: i32) -> (i32, i32) {
    %c0_i32 = arith.constant 0 : i32
    %c0_i32_0 = arith.constant 0 : i32
    %c0_i32_1 = arith.constant 0 : i32
    return %c0_i32, %c0_i32_0 : i32, i32
  }
  func.func @transform_21(%arg0: i32) -> (i32, i32) {
    %c0_i32 = arith.constant 0 : i32
    %c0_i32_0 = arith.constant 0 : i32
    %c0_i32_1 = arith.constant 0 : i32
    return %c0_i32, %c0_i32_0 : i32, i32
  }
  func.func @transform_22(%arg0: i32) -> (i32, i32) {
    %c0_i32 = arith.constant 0 : i32
    %c0_i32_0 = arith.constant 0 : i32
    %c0_i32_1 = arith.constant 0 : i32
    return %c0_i32, %c0_i32_0 : i32, i32
  }
  func.func @transform_23(%arg0: i32) -> (i32, i32) {
    %c0_i32 = arith.constant 0 : i32
    %c0_i32_0 = arith.constant 0 : i32
    %c0_i32_1 = arith.constant 0 : i32
    return %c0_i32, %c0_i32_0 : i32, i32
  }
  func.func @transform_24(%arg0: i32) -> (i32, i32) {
    %c0_i32 = arith.constant 0 : i32
    %c0_i32_0 = arith.constant 0 : i32
    %c0_i32_1 = arith.constant 0 : i32
    return %c0_i32, %c0_i32_0 : i32, i32
  }
  func.func @transform_25(%arg0: i32) -> (i32, i32) {
    %c0_i32 = arith.constant 0 : i32
    %c0_i32_0 = arith.constant 0 : i32
    %c0_i32_1 = arith.constant 0 : i32
    return %c0_i32, %c0_i32_0 : i32, i32
  }
  func.func @transform_26(%arg0: i32) -> (i32, i32) {
    %c0_i32 = arith.constant 0 : i32
    %c0_i32_0 = arith.constant 0 : i32
    %c0_i32_1 = arith.constant 0 : i32
    return %c0_i32, %c0_i32_0 : i32, i32
  }
  func.func @transform_27(%arg0: i32) -> (i32, i32) {
    %c0_i32 = arith.constant 0 : i32
    %c0_i32_0 = arith.constant 0 : i32
    %c0_i32_1 = arith.constant 0 : i32
    return %c0_i32, %c0_i32_0 : i32, i32
  }
  func.func @transform_28(%arg0: i32) -> (i32, i32) {
    %c0_i32 = arith.constant 0 : i32
    %c0_i32_0 = arith.constant 0 : i32
    %c0_i32_1 = arith.constant 0 : i32
    return %c0_i32, %c0_i32_0 : i32, i32
  }
  func.func @transform_29(%arg0: i32) -> (i32, i32) {
    %c0_i32 = arith.constant 0 : i32
    %c0_i32_0 = arith.constant 0 : i32
    %c0_i32_1 = arith.constant 0 : i32
    return %c0_i32, %c0_i32_0 : i32, i32
  }
  func.func @transform_30(%arg0: i32) -> (i32, i32) {
    %c0_i32 = arith.constant 0 : i32
    %c0_i32_0 = arith.constant 0 : i32
    %c0_i32_1 = arith.constant 0 : i32
    return %c0_i32, %c0_i32_0 : i32, i32
  }
  func.func @transform_31(%arg0: i32) -> (i32, i32) {
    %c0_i32 = arith.constant 0 : i32
    %c0_i32_0 = arith.constant 0 : i32
    %c0_i32_1 = arith.constant 0 : i32
    return %c0_i32, %c0_i32_0 : i32, i32
  }
  func.func @transform_32(%arg0: i32) -> (i32, i32) {
    %c0_i32 = arith.constant 0 : i32
    %c0_i32_0 = arith.constant 0 : i32
    %c0_i32_1 = arith.constant 0 : i32
    return %c0_i32, %c0_i32_0 : i32, i32
  }
  func.func @transform_33(%arg0: i32) -> (i32, i32) {
    %c0_i32 = arith.constant 0 : i32
    %c0_i32_0 = arith.constant 0 : i32
    return %arg0, %c0_i32 : i32, i32
  }
}

</mosaic_0001>

<llo_original>
// kernel: tpu_custom_call.1
$region0: #{tpu_custom_call.1}
  #allocation0 [shape = 'u32[]', space=smem, size = 0x4, offset = 0x4, fixed_abs, tag = 'smem constant byte address 0x4 - core index']
  #allocation1 [shape = 'u32[72,128]{1,0:T(1,128)}', space=vmem, size = 0x9000, scoped, tag = 'internal scratch']
  %s0 = inlined_call_operand.smem [shape: u32[34], index: -1, kind: input, shape index: {}]
  %s1 = sld [smem:[%s0]]
  %s2 = scalar_lea.smem %s0, 1
  %s3 = sld [smem:[%s2]]
  %s4 = scalar_lea.smem %s0, 2
  %s5 = sld [smem:[%s4]]
  %s6 = scalar_lea.smem %s0, 3
  %s7 = sld [smem:[%s6]]
  %s8 = scalar_lea.smem %s0, 4
  %s9 = sld [smem:[%s8]]
  %s10 = scalar_lea.smem %s0, 5
  %s11 = sld [smem:[%s10]]
  %s12 = scalar_lea.smem %s0, 6
  %s13 = sld [smem:[%s12]]
  %s14 = scalar_lea.smem %s0, 7
  %s15 = sld [smem:[%s14]]
  %s16 = scalar_lea.smem %s0, 8
  %s17 = sld [smem:[%s16]]
  %s18 = scalar_lea.smem %s0, 9
  %s19 = sld [smem:[%s18]]
  %s20 = scalar_lea.smem %s0, 10
  %s21 = sld [smem:[%s20]]
  %s22 = scalar_lea.smem %s0, 11
  %s23 = sld [smem:[%s22]]
  %s24 = scalar_lea.smem %s0, 12
  %s25 = sld [smem:[%s24]]
  %s26 = scalar_lea.smem %s0, 13
  %s27 = sld [smem:[%s26]]
  %s28 = scalar_lea.smem %s0, 14
  %s29 = sld [smem:[%s28]]
  %s30 = scalar_lea.smem %s0, 15
  %s31 = sld [smem:[%s30]]
  %s32 = scalar_lea.smem %s0, 16
  %s33 = sld [smem:[%s32]]
  %s34 = scalar_lea.smem %s0, 17
  %s35 = sld [smem:[%s34]]
  %s36 = scalar_lea.smem %s0, 18
  %s37 = sld [smem:[%s36]]
  %s38 = scalar_lea.smem %s0, 19
  %s39 = sld [smem:[%s38]]
  %s40 = scalar_lea.smem %s0, 20
  %s41 = sld [smem:[%s40]]
  %s42 = scalar_lea.smem %s0, 21
  %s43 = sld [smem:[%s42]]
  %s44 = scalar_lea.smem %s0, 22
  %s45 = sld [smem:[%s44]]
  %s46 = scalar_lea.smem %s0, 23
  %s47 = sld [smem:[%s46]]
  %s48 = scalar_lea.smem %s0, 24
  %s49 = sld [smem:[%s48]]
  %s50 = scalar_lea.smem %s0, 25
  %s51 = sld [smem:[%s50]]
  %s52 = scalar_lea.smem %s0, 26
  %s53 = sld [smem:[%s52]]
  %s54 = scalar_lea.smem %s0, 27
  %s55 = sld [smem:[%s54]]
  %s56 = scalar_lea.smem %s0, 28
  %s57 = sld [smem:[%s56]]
  %s58 = scalar_lea.smem %s0, 29
  %s59 = sld [smem:[%s58]]
  %s60 = scalar_lea.smem %s0, 30
  %s61 = sld [smem:[%s60]]
  %s62 = scalar_lea.smem %s0, 31
  %s63 = sld [smem:[%s62]]
  %s64 = scalar_lea.smem %s0, 32
  %s65 = sld [smem:[%s64]]
  %s66 = scalar_lea.smem %s0, 33
  %s67 = sld [smem:[%s66]]
  %s68 = sld [smem:[#allocation0]]
  $region230: #{tpu_custom_call.1} parent=0
    _
  %s70 = ssub.s32 1, %s68
  %s71 = scalar_select 0, %s70, %s68
  $region1: #{tpu_custom_call.1} parent=0
    #allocation2 [shape = 'u8[2048]{0}', space=vmem, size = 0x800, scoped, tag = 'input window, operand 0, single buffered']
    #allocation3 [shape = 's32[1]{0}', space=sflag, size = 0x4, scoped, tag = 'scoped memory for tpu_custom_call.1']
    #allocation4 [shape = 's32[1]{0}', space=sflag, size = 0x4, scoped, tag = 'scoped memory for tpu_custom_call.1']
    #allocation5 [shape = 'u8[2048]{0}', space=vmem, size = 0x800, scoped, tag = 'input window, operand 1, single buffered']
    #allocation6 [shape = 's32[1]{0}', space=sflag, size = 0x4, scoped, tag = 'scoped memory for tpu_custom_call.1']
    #allocation7 [shape = 'u8[4096]{0}', space=vmem, size = 0x1000, scoped, tag = 'input window, operand 2, single buffered']
    #allocation8 [shape = 'u8[131072]{0}', space=vmem, size = 0x20000, scoped, tag = 'input window, operand 3, single buffered']
    #allocation9 [shape = 's32[1]{0}', space=sflag, size = 0x4, scoped, tag = 'scoped memory for tpu_custom_call.1']
    #allocation10 [shape = 'u8[2048]{0}', space=vmem, size = 0x800, scoped, tag = 'input window, operand 4, single buffered']
    #allocation11 [shape = 'u8[262144]{0}', space=vmem, size = 0x40000, scoped, tag = 'input window, operand 5, single buffered']
    #allocation12 [shape = 's32[1]{0}', space=sflag, size = 0x4, scoped, tag = 'scoped memory for tpu_custom_call.1']
    #allocation13 [shape = 'u8[65536]{0}', space=vmem, size = 0x10000, scoped, tag = 'input window, operand 7, single buffered']
    #allocation14 [shape = 'u8[512]{0}', space=vmem, size = 0x400, scoped, tag = 'input window, operand 8, single buffered']
    #allocation15 [shape = 's32[1]{0}', space=sflag, size = 0x4, scoped, tag = 'scoped memory for tpu_custom_call.1']
    #allocation16 [shape = 'u8[32768]{0}', space=vmem, size = 0x8000, scoped, tag = 'input window, operand 9, single buffered']
    #allocation17 [shape = 'u8[512]{0}', space=vmem, size = 0x400, scoped, tag = 'input window, operand 10, single buffered']
    #allocation18 [shape = 's32[1]{0}', space=sflag, size = 0x4, scoped, tag = 'scoped memory for tpu_custom_call.1']
    #allocation19 [shape = 'u8[262144]{0}', space=vmem, size = 0x40000, scoped, tag = 'input window, operand 11, single buffered']
    #allocation20 [shape = 'u8[262144]{0}', space=vmem, size = 0x40000, scoped, tag = 'input window, operand 13, single buffered']
    #allocation21 [shape = 's32[1]{0}', space=sflag, size = 0x4, scoped, tag = 'scoped memory for tpu_custom_call.1']
    #allocation22 [shape = 'u8[65536]{0}', space=vmem, size = 0x10000, scoped, tag = 'input window, operand 15, single buffered']
    #allocation23 [shape = 'u8[32768]{0}', space=vmem, size = 0x8000, scoped, tag = 'input window, operand 17, single buffered']
    #allocation24 [shape = 's32[1]{0}', space=sflag, size = 0x4, scoped, tag = 'scoped memory for tpu_custom_call.1']
    #allocation25 [shape = 'u8[65536]{0}', space=vmem, size = 0x10000, scoped, tag = 'input window, operand 19, single buffered']
    #allocation26 [shape = 'u8[65536]{0}', space=vmem, size = 0x10000, scoped, tag = 'input window, operand 20, single buffered']
    #allocation27 [shape = 's32[1]{0}', space=sflag, size = 0x4, scoped, tag = 'scoped memory for tpu_custom_call.1']
    #allocation28 [shape = 'u8[65536]{0}', space=vmem, size = 0x10000, scoped, tag = 'input window, operand 21, single buffered']
    #allocation29 [shape = 'u8[65536]{0}', space=vmem, size = 0x10000, scoped, tag = 'input window, operand 23, single buffered']
    #allocation30 [shape = 's32[1]{0}', space=sflag, size = 0x4, scoped, tag = 'scoped memory for tpu_custom_call.1']
    #allocation31 [shape = 'u8[32768]{0}', space=vmem, size = 0x8000, scoped, tag = 'input window, operand 25, single buffered']
    #allocation32 [shape = 'u8[32768]{0}', space=vmem, size = 0x8000, scoped, tag = 'input window, operand 27, single buffered']
    #allocation33 [shape = 's32[1]{0}', space=sflag, size = 0x4, scoped, tag = 'scoped memory for tpu_custom_call.1']
    #allocation34 [shape = 'u8[32768]{0}', space=vmem, size = 0x8000, scoped, tag = 'input window, operand 29, single buffered']
    #allocation35 [shape = 'u8[32768]{0}', space=vmem, size = 0x8000, scoped, tag = 'input window, operand 31, single buffered']
    #allocation36 [shape = 's32[1]{0}', space=sflag, size = 0x4, scoped, tag = 'scoped memory for tpu_custom_call.1']
    #allocation37 [shape = 'u8[4096]{0}', space=vmem, size = 0x1000, scoped, tag = 'output window, operand 0, single buffered']
    %72 = vsyncpa [#allocation3], 0
    %73 = vsyncpa [#allocation6], 0
    %74 = vsyncpa [#allocation9], 0
    %75 = vsyncpa [#allocation12], 0
    %76 = vsyncpa [#allocation15], 0
    %77 = vsyncpa [#allocation18], 0
    %78 = vsyncpa [#allocation21], 0
    %79 = vsyncpa [#allocation24], 0
    %80 = vsyncpa [#allocation27], 0
    %81 = vsyncpa [#allocation30], 0
    %82 = vsyncpa [#allocation33], 0
    %83 = vsyncpa [#allocation36], 0
    %84 = vsyncpa [#allocation4], 0
    // Predicated region
    $region2: #{tpu_custom_call.1} parent=1 // pred_check
      _
    $region3: #{tpu_custom_call.1} parent=1 // pred_check_branch
      %86 = sbr.rel (0) target = $region5
    $region4: #{tpu_custom_call.1} parent=1 // pred_region
      %88 = vsyncadd [#allocation3], 0
      %s90 = sshll.u32 %s1, 4
      %s91 = int_to_ptr.hbm [resolvable:$true] %s90
      %s92 = sshll.u32 [#allocation2], 4
      %s93 = int_to_ptr.vmem [resolvable:$true] %s92
      %95 = dma.hbm_to_vmem [thread:$0]  %s91, 64, %s93, [#allocation3]
    $region5: #{tpu_custom_call.1} parent=1 // pred_fallthru
      _
    // Predicated region
    $region6: #{tpu_custom_call.1} parent=1 // pred_check
      _
    $region7: #{tpu_custom_call.1} parent=1 // pred_check_branch
      %97 = sbr.rel (0) target = $region9
    $region8: #{tpu_custom_call.1} parent=1 // pred_region
      %99 = vsyncadd [#allocation6], 0
      %s101 = sshll.u32 %s3, 4
      %s102 = int_to_ptr.hbm [resolvable:$true] %s101
      %s103 = sshll.u32 [#allocation5], 4
      %s104 = int_to_ptr.vmem [resolvable:$true] %s103
      %106 = dma.hbm_to_vmem [thread:$0]  %s102, 64, %s104, [#allocation6]
    $region9: #{tpu_custom_call.1} parent=1 // pred_fallthru
      _
    // Predicated region
    $region10: #{tpu_custom_call.1} parent=1 // pred_check
      _
    $region11: #{tpu_custom_call.1} parent=1 // pred_check_branch
      %108 = sbr.rel (0) target = $region13
    $region12: #{tpu_custom_call.1} parent=1 // pred_region
      %110 = vsyncadd [#allocation6], 0
      %s112 = sshll.u32 %s5, 4
      %s113 = int_to_ptr.hbm [resolvable:$true] %s112
      %s114 = sshll.u32 [#allocation7], 4
      %s115 = int_to_ptr.vmem [resolvable:$true] %s114
      %117 = dma.hbm_to_vmem [thread:$0]  %s113, 128, %s115, [#allocation6]
    $region13: #{tpu_custom_call.1} parent=1 // pred_fallthru
      _
    // Predicated region
    $region14: #{tpu_custom_call.1} parent=1 // pred_check
      _
    $region15: #{tpu_custom_call.1} parent=1 // pred_check_branch
      %119 = sbr.rel (0) target = $region17
    $region16: #{tpu_custom_call.1} parent=1 // pred_region
      %121 = vsyncadd [#allocation9], 0
      %s122 = sshll.u32 %s7, 4
      %s123 = int_to_ptr.hbm [resolvable:$true] %s122
      %s124 = sshll.u32 [#allocation8], 4
      %s125 = int_to_ptr.vmem [resolvable:$true] %s124
      %130 = dma.hbm_to_vmem [thread:$0]  %s123, 4096, %s125, [#allocation9], 256, 256, 16
    $region17: #{tpu_custom_call.1} parent=1 // pred_fallthru
      _
    // Predicated region
    $region18: #{tpu_custom_call.1} parent=1 // pred_check
      _
    $region19: #{tpu_custom_call.1} parent=1 // pred_check_branch
      %132 = sbr.rel (0) target = $region21
    $region20: #{tpu_custom_call.1} parent=1 // pred_region
      %134 = vsyncadd [#allocation9], 0
      %s136 = sshll.u32 %s9, 4
      %s137 = int_to_ptr.hbm [resolvable:$true] %s136
      %s138 = sshll.u32 [#allocation10], 4
      %s139 = int_to_ptr.vmem [resolvable:$true] %s138
      %141 = dma.hbm_to_vmem [thread:$0]  %s137, 64, %s139, [#allocation9]
    $region21: #{tpu_custom_call.1} parent=1 // pred_fallthru
      _
    // Predicated region
    $region22: #{tpu_custom_call.1} parent=1 // pred_check
      _
    $region23: #{tpu_custom_call.1} parent=1 // pred_check_branch
      %143 = sbr.rel (0) target = $region25
    $region24: #{tpu_custom_call.1} parent=1 // pred_region
      %145 = vsyncadd [#allocation12], 0
      %s146 = sshll.u32 %s11, 4
      %s147 = int_to_ptr.hbm [resolvable:$true] %s146
      %s148 = sshll.u32 [#allocation11], 4
      %s149 = int_to_ptr.vmem [resolvable:$true] %s148
      %154 = dma.hbm_to_vmem [thread:$0]  %s147, 8192, %s149, [#allocation12], 128, 128, 8
    $region25: #{tpu_custom_call.1} parent=1 // pred_fallthru
      _
    // Predicated region
    $region26: #{tpu_custom_call.1} parent=1 // pred_check
      _
    $region27: #{tpu_custom_call.1} parent=1 // pred_check_branch
      %156 = sbr.rel (0) target = $region29
    $region28: #{tpu_custom_call.1} parent=1 // pred_region
      _
    $region29: #{tpu_custom_call.1} parent=1 // pred_fallthru
      _
    // Predicated region
    $region30: #{tpu_custom_call.1} parent=1 // pred_check
      _
    $region31: #{tpu_custom_call.1} parent=1 // pred_check_branch
      %158 = sbr.rel (0) target = $region33
    $region32: #{tpu_custom_call.1} parent=1 // pred_region
      %160 = vsyncadd [#allocation12], 0
      %s161 = sshll.u32 %s15, 4
      %s162 = int_to_ptr.hbm [resolvable:$true] %s161
      %s163 = sshll.u32 [#allocation13], 4
      %s164 = int_to_ptr.vmem [resolvable:$true] %s163
      %169 = dma.hbm_to_vmem [thread:$0]  %s162, 2048, %s164, [#allocation12], 64, 64, 4
    $region33: #{tpu_custom_call.1} parent=1 // pred_fallthru
      _
    // Predicated region
    $region34: #{tpu_custom_call.1} parent=1 // pred_check
      _
    $region35: #{tpu_custom_call.1} parent=1 // pred_check_branch
      %171 = sbr.rel (0) target = $region37
    $region36: #{tpu_custom_call.1} parent=1 // pred_region
      %173 = vsyncadd [#allocation15], 0
      %s175 = sshll.u32 %s17, 4
      %s176 = int_to_ptr.hbm [resolvable:$true] %s175
      %s177 = sshll.u32 [#allocation14], 4
      %s178 = int_to_ptr.vmem [resolvable:$true] %s177
      %180 = dma.hbm_to_vmem [thread:$0]  %s176, 16, %s178, [#allocation15]
    $region37: #{tpu_custom_call.1} parent=1 // pred_fallthru
      _
    // Predicated region
    $region38: #{tpu_custom_call.1} parent=1 // pred_check
      _
    $region39: #{tpu_custom_call.1} parent=1 // pred_check_branch
      %182 = sbr.rel (0) target = $region41
    $region40: #{tpu_custom_call.1} parent=1 // pred_region
      %184 = vsyncadd [#allocation15], 0
      %s185 = sshll.u32 %s19, 4
      %s186 = int_to_ptr.hbm [resolvable:$true] %s185
      %s187 = sshll.u32 [#allocation16], 4
      %s188 = int_to_ptr.vmem [resolvable:$true] %s187
      %193 = dma.hbm_to_vmem [thread:$0]  %s186, 1024, %s188, [#allocation15], 64, 64, 4
    $region41: #{tpu_custom_call.1} parent=1 // pred_fallthru
      _
    // Predicated region
    $region42: #{tpu_custom_call.1} parent=1 // pred_check
      _
    $region43: #{tpu_custom_call.1} parent=1 // pred_check_branch
      %195 = sbr.rel (0) target = $region45
    $region44: #{tpu_custom_call.1} parent=1 // pred_region
      %197 = vsyncadd [#allocation18], 0
      %s199 = sshll.u32 %s21, 4
      %s200 = int_to_ptr.hbm [resolvable:$true] %s199
      %s201 = sshll.u32 [#allocation17], 4
      %s202 = int_to_ptr.vmem [resolvable:$true] %s201
      %204 = dma.hbm_to_vmem [thread:$0]  %s200, 16, %s202, [#allocation18]
    $region45: #{tpu_custom_call.1} parent=1 // pred_fallthru
      _
    // Predicated region
    $region46: #{tpu_custom_call.1} parent=1 // pred_check
      _
    $region47: #{tpu_custom_call.1} parent=1 // pred_check_branch
      %206 = sbr.rel (0) target = $region49
    $region48: #{tpu_custom_call.1} parent=1 // pred_region
      %208 = vsyncadd [#allocation18], 0
      %s209 = sshll.u32 %s23, 4
      %s210 = int_to_ptr.hbm [resolvable:$true] %s209
      %s211 = sshll.u32 [#allocation19], 4
      %s212 = int_to_ptr.vmem [resolvable:$true] %s211
      %217 = dma.hbm_to_vmem [thread:$0]  %s210, 8192, %s212, [#allocation18], 256, 256, 16
    $region49: #{tpu_custom_call.1} parent=1 // pred_fallthru
      _
    // Predicated region
    $region50: #{tpu_custom_call.1} parent=1 // pred_check
      _
    $region51: #{tpu_custom_call.1} parent=1 // pred_check_branch
      %219 = sbr.rel (0) target = $region53
    $region52: #{tpu_custom_call.1} parent=1 // pred_region
      _
    $region53: #{tpu_custom_call.1} parent=1 // pred_fallthru
      _
    // Predicated region
    $region54: #{tpu_custom_call.1} parent=1 // pred_check
      _
    $region55: #{tpu_custom_call.1} parent=1 // pred_check_branch
      %221 = sbr.rel (0) target = $region57
    $region56: #{tpu_custom_call.1} parent=1 // pred_region
      %223 = vsyncadd [#allocation21], 0
      %s224 = sshll.u32 %s27, 4
      %s225 = int_to_ptr.hbm [resolvable:$true] %s224
      %s226 = sshll.u32 [#allocation20], 4
      %s227 = int_to_ptr.vmem [resolvable:$true] %s226
      %232 = dma.hbm_to_vmem [thread:$0]  %s225, 8192, %s227, [#allocation21], 128, 128, 8
    $region57: #{tpu_custom_call.1} parent=1 // pred_fallthru
      _
    // Predicated region
    $region58: #{tpu_custom_call.1} parent=1 // pred_check
      _
    $region59: #{tpu_custom_call.1} parent=1 // pred_check_branch
      %234 = sbr.rel (0) target = $region61
    $region60: #{tpu_custom_call.1} parent=1 // pred_region
      _
    $region61: #{tpu_custom_call.1} parent=1 // pred_fallthru
      _
    // Predicated region
    $region62: #{tpu_custom_call.1} parent=1 // pred_check
      _
    $region63: #{tpu_custom_call.1} parent=1 // pred_check_branch
      %236 = sbr.rel (0) target = $region65
    $region64: #{tpu_custom_call.1} parent=1 // pred_region
      %238 = vsyncadd [#allocation21], 0
      %s239 = sshll.u32 %s31, 4
      %s240 = int_to_ptr.hbm [resolvable:$true] %s239
      %s241 = sshll.u32 [#allocation22], 4
      %s242 = int_to_ptr.vmem [resolvable:$true] %s241
      %247 = dma.hbm_to_vmem [thread:$0]  %s240, 2048, %s242, [#allocation21], 64, 64, 4
    $region65: #{tpu_custom_call.1} parent=1 // pred_fallthru
      _
    // Predicated region
    $region66: #{tpu_custom_call.1} parent=1 // pred_check
      _
    $region67: #{tpu_custom_call.1} parent=1 // pred_check_branch
      %249 = sbr.rel (0) target = $region69
    $region68: #{tpu_custom_call.1} parent=1 // pred_region
      _
    $region69: #{tpu_custom_call.1} parent=1 // pred_fallthru
      _
    // Predicated region
    $region70: #{tpu_custom_call.1} parent=1 // pred_check
      _
    $region71: #{tpu_custom_call.1} parent=1 // pred_check_branch
      %251 = sbr.rel (0) target = $region73
    $region72: #{tpu_custom_call.1} parent=1 // pred_region
      %253 = vsyncadd [#allocation24], 0
      %s254 = sshll.u32 %s35, 4
      %s255 = int_to_ptr.hbm [resolvable:$true] %s254
      %s256 = sshll.u32 [#allocation23], 4
      %s257 = int_to_ptr.vmem [resolvable:$true] %s256
      %262 = dma.hbm_to_vmem [thread:$0]  %s255, 1024, %s257, [#allocation24], 64, 64, 4
    $region73: #{tpu_custom_call.1} parent=1 // pred_fallthru
      _
    // Predicated region
    $region74: #{tpu_custom_call.1} parent=1 // pred_check
      _
    $region75: #{tpu_custom_call.1} parent=1 // pred_check_branch
      %264 = sbr.rel (0) target = $region77
    $region76: #{tpu_custom_call.1} parent=1 // pred_region
      _
    $region77: #{tpu_custom_call.1} parent=1 // pred_fallthru
      _
    // Predicated region
    $region78: #{tpu_custom_call.1} parent=1 // pred_check
      _
    $region79: #{tpu_custom_call.1} parent=1 // pred_check_branch
      %266 = sbr.rel (0) target = $region81
    $region80: #{tpu_custom_call.1} parent=1 // pred_region
      %268 = vsyncadd [#allocation24], 0
      %s269 = sshll.u32 %s39, 4
      %s270 = int_to_ptr.hbm [resolvable:$true] %s269
      %s271 = sshll.u32 [#allocation25], 4
      %s272 = int_to_ptr.vmem [resolvable:$true] %s271
      %277 = dma.hbm_to_vmem [thread:$0]  %s270, 2048, %s272, [#allocation24], 128, 128, 8
    $region81: #{tpu_custom_call.1} parent=1 // pred_fallthru
      _
    // Predicated region
    $region82: #{tpu_custom_call.1} parent=1 // pred_check
      _
    $region83: #{tpu_custom_call.1} parent=1 // pred_check_branch
      %279 = sbr.rel (0) target = $region85
    $region84: #{tpu_custom_call.1} parent=1 // pred_region
      %281 = vsyncadd [#allocation27], 0
      %s282 = sshll.u32 %s41, 4
      %s283 = int_to_ptr.hbm [resolvable:$true] %s282
      %s284 = sshll.u32 [#allocation26], 4
      %s285 = int_to_ptr.vmem [resolvable:$true] %s284
      %290 = dma.hbm_to_vmem [thread:$0]  %s283, 2048, %s285, [#allocation27], 128, 128, 8
    $region85: #{tpu_custom_call.1} parent=1 // pred_fallthru
      _
    // Predicated region
    $region86: #{tpu_custom_call.1} parent=1 // pred_check
      _
    $region87: #{tpu_custom_call.1} parent=1 // pred_check_branch
      %292 = sbr.rel (0) target = $region89
    $region88: #{tpu_custom_call.1} parent=1 // pred_region
      %294 = vsyncadd [#allocation27], 0
      %s295 = sshll.u32 %s43, 4
      %s296 = int_to_ptr.hbm [resolvable:$true] %s295
      %s297 = sshll.u32 [#allocation28], 4
      %s298 = int_to_ptr.vmem [resolvable:$true] %s297
      %303 = dma.hbm_to_vmem [thread:$0]  %s296, 2048, %s298, [#allocation27], 128, 128, 8
    $region89: #{tpu_custom_call.1} parent=1 // pred_fallthru
      _
    // Predicated region
    $region90: #{tpu_custom_call.1} parent=1 // pred_check
      _
    $region91: #{tpu_custom_call.1} parent=1 // pred_check_branch
      %305 = sbr.rel (0) target = $region93
    $region92: #{tpu_custom_call.1} parent=1 // pred_region
      _
    $region93: #{tpu_custom_call.1} parent=1 // pred_fallthru
      _
    // Predicated region
    $region94: #{tpu_custom_call.1} parent=1 // pred_check
      _
    $region95: #{tpu_custom_call.1} parent=1 // pred_check_branch
      %307 = sbr.rel (0) target = $region97
    $region96: #{tpu_custom_call.1} parent=1 // pred_region
      %309 = vsyncadd [#allocation30], 0
      %s310 = sshll.u32 %s47, 4
      %s311 = int_to_ptr.hbm [resolvable:$true] %s310
      %s312 = sshll.u32 [#allocation29], 4
      %s313 = int_to_ptr.vmem [resolvable:$true] %s312
      %318 = dma.hbm_to_vmem [thread:$0]  %s311, 2048, %s313, [#allocation30], 64, 64, 4
    $region97: #{tpu_custom_call.1} parent=1 // pred_fallthru
      _
    // Predicated region
    $region98: #{tpu_custom_call.1} parent=1 // pred_check
      _
    $region99: #{tpu_custom_call.1} parent=1 // pred_check_branch
      %320 = sbr.rel (0) target = $region101
    $region100: #{tpu_custom_call.1} parent=1 // pred_region
      _
    $region101: #{tpu_custom_call.1} parent=1 // pred_fallthru
      _
    // Predicated region
    $region102: #{tpu_custom_call.1} parent=1 // pred_check
      _
    $region103: #{tpu_custom_call.1} parent=1 // pred_check_branch
      %322 = sbr.rel (0) target = $region105
    $region104: #{tpu_custom_call.1} parent=1 // pred_region
      %324 = vsyncadd [#allocation30], 0
      %s325 = sshll.u32 %s51, 4
      %s326 = int_to_ptr.hbm [resolvable:$true] %s325
      %s327 = sshll.u32 [#allocation31], 4
      %s328 = int_to_ptr.vmem [resolvable:$true] %s327
      %333 = dma.hbm_to_vmem [thread:$0]  %s326, 1024, %s328, [#allocation30], 64, 64, 4
    $region105: #{tpu_custom_call.1} parent=1 // pred_fallthru
      _
    // Predicated region
    $region106: #{tpu_custom_call.1} parent=1 // pred_check
      _
    $region107: #{tpu_custom_call.1} parent=1 // pred_check_branch
      %335 = sbr.rel (0) target = $region109
    $region108: #{tpu_custom_call.1} parent=1 // pred_region
      _
    $region109: #{tpu_custom_call.1} parent=1 // pred_fallthru
      _
    // Predicated region
    $region110: #{tpu_custom_call.1} parent=1 // pred_check
      _
    $region111: #{tpu_custom_call.1} parent=1 // pred_check_branch
      %337 = sbr.rel (0) target = $region113
    $region112: #{tpu_custom_call.1} parent=1 // pred_region
      %339 = vsyncadd [#allocation33], 0
      %s340 = sshll.u32 %s55, 4
      %s341 = int_to_ptr.hbm [resolvable:$true] %s340
      %s342 = sshll.u32 [#allocation32], 4
      %s343 = int_to_ptr.vmem [resolvable:$true] %s342
      %348 = dma.hbm_to_vmem [thread:$0]  %s341, 1024, %s343, [#allocation33], 64, 64, 4
    $region113: #{tpu_custom_call.1} parent=1 // pred_fallthru
      _
    // Predicated region
    $region114: #{tpu_custom_call.1} parent=1 // pred_check
      _
    $region115: #{tpu_custom_call.1} parent=1 // pred_check_branch
      %350 = sbr.rel (0) target = $region117
    $region116: #{tpu_custom_call.1} parent=1 // pred_region
      _
    $region117: #{tpu_custom_call.1} parent=1 // pred_fallthru
      _
    // Predicated region
    $region118: #{tpu_custom_call.1} parent=1 // pred_check
      _
    $region119: #{tpu_custom_call.1} parent=1 // pred_check_branch
      %352 = sbr.rel (0) target = $region121
    $region120: #{tpu_custom_call.1} parent=1 // pred_region
      %354 = vsyncadd [#allocation33], 0
      %s355 = sshll.u32 %s59, 4
      %s356 = int_to_ptr.hbm [resolvable:$true] %s355
      %s357 = sshll.u32 [#allocation34], 4
      %s358 = int_to_ptr.vmem [resolvable:$true] %s357
      %363 = dma.hbm_to_vmem [thread:$0]  %s356, 1024, %s358, [#allocation33], 64, 64, 4
    $region121: #{tpu_custom_call.1} parent=1 // pred_fallthru
      _
    // Predicated region
    $region122: #{tpu_custom_call.1} parent=1 // pred_check
      _
    $region123: #{tpu_custom_call.1} parent=1 // pred_check_branch
      %365 = sbr.rel (0) target = $region125
    $region124: #{tpu_custom_call.1} parent=1 // pred_region
      _
    $region125: #{tpu_custom_call.1} parent=1 // pred_fallthru
      _
    // Predicated region
    $region126: #{tpu_custom_call.1} parent=1 // pred_check
      _
    $region127: #{tpu_custom_call.1} parent=1 // pred_check_branch
      %367 = sbr.rel (0) target = $region129
    $region128: #{tpu_custom_call.1} parent=1 // pred_region
      %369 = vsyncadd [#allocation36], 0
      %s370 = sshll.u32 %s63, 4
      %s371 = int_to_ptr.hbm [resolvable:$true] %s370
      %s372 = sshll.u32 [#allocation35], 4
      %s373 = int_to_ptr.vmem [resolvable:$true] %s372
      %378 = dma.hbm_to_vmem [thread:$0]  %s371, 1024, %s373, [#allocation36], 64, 64, 4
    $region129: #{tpu_custom_call.1} parent=1 // pred_fallthru
      _
    // Predicated region
    $region130: #{tpu_custom_call.1} parent=1 // pred_check
      _
    $region131: #{tpu_custom_call.1} parent=1 // pred_check_branch
      %380 = sbr.rel (0) target = $region133
    $region132: #{tpu_custom_call.1} parent=1 // pred_region
      _
    $region133: #{tpu_custom_call.1} parent=1 // pred_fallthru
      _
    // Predicated region
    $region134: #{tpu_custom_call.1} parent=1 // pred_check
      _
    $region135: #{tpu_custom_call.1} parent=1 // pred_check_branch
      %382 = sbr.rel (0) target = $region137
    $region136: #{tpu_custom_call.1} parent=1 // pred_region
      %384 = dma.done [#allocation3], 64
    $region137: #{tpu_custom_call.1} parent=1 // pred_fallthru
      _
    // Predicated region
    $region138: #{tpu_custom_call.1} parent=1 // pred_check
      _
    $region139: #{tpu_custom_call.1} parent=1 // pred_check_branch
      %386 = sbr.rel (0) target = $region141
    $region140: #{tpu_custom_call.1} parent=1 // pred_region
      %388 = dma.done [#allocation6], 64
    $region141: #{tpu_custom_call.1} parent=1 // pred_fallthru
      _
    // Predicated region
    $region142: #{tpu_custom_call.1} parent=1 // pred_check
      _
    $region143: #{tpu_custom_call.1} parent=1 // pred_check_branch
      %390 = sbr.rel (0) target = $region145
    $region144: #{tpu_custom_call.1} parent=1 // pred_region
      %392 = dma.done [#allocation6], 128
    $region145: #{tpu_custom_call.1} parent=1 // pred_fallthru
      _
    // Predicated region
    $region146: #{tpu_custom_call.1} parent=1 // pred_check
      _
    $region147: #{tpu_custom_call.1} parent=1 // pred_check_branch
      %394 = sbr.rel (0) target = $region149
    $region148: #{tpu_custom_call.1} parent=1 // pred_region
      %396 = dma.done [#allocation9], 4096
    $region149: #{tpu_custom_call.1} parent=1 // pred_fallthru
      _
    // Predicated region
    $region150: #{tpu_custom_call.1} parent=1 // pred_check
      _
    $region151: #{tpu_custom_call.1} parent=1 // pred_check_branch
      %398 = sbr.rel (0) target = $region153
    $region152: #{tpu_custom_call.1} parent=1 // pred_region
      %400 = dma.done [#allocation9], 64
    $region153: #{tpu_custom_call.1} parent=1 // pred_fallthru
      _
    // Predicated region
    $region154: #{tpu_custom_call.1} parent=1 // pred_check
      _
    $region155: #{tpu_custom_call.1} parent=1 // pred_check_branch
      %402 = sbr.rel (0) target = $region157
    $region156: #{tpu_custom_call.1} parent=1 // pred_region
      %404 = dma.done [#allocation12], 8192
    $region157: #{tpu_custom_call.1} parent=1 // pred_fallthru
      _
    // Predicated region
    $region158: #{tpu_custom_call.1} parent=1 // pred_check
      _
    $region159: #{tpu_custom_call.1} parent=1 // pred_check_branch
      %406 = sbr.rel (0) target = $region161
    $region160: #{tpu_custom_call.1} parent=1 // pred_region
      %408 = dma.done [#allocation12], 2048
    $region161: #{tpu_custom_call.1} parent=1 // pred_fallthru
      _
    // Predicated region
    $region162: #{tpu_custom_call.1} parent=1 // pred_check
      _
    $region163: #{tpu_custom_call.1} parent=1 // pred_check_branch
      %410 = sbr.rel (0) target = $region165
    $region164: #{tpu_custom_call.1} parent=1 // pred_region
      %412 = dma.done [#allocation15], 16
    $region165: #{tpu_custom_call.1} parent=1 // pred_fallthru
      _
    // Predicated region
    $region166: #{tpu_custom_call.1} parent=1 // pred_check
      _
    $region167: #{tpu_custom_call.1} parent=1 // pred_check_branch
      %414 = sbr.rel (0) target = $region169
    $region168: #{tpu_custom_call.1} parent=1 // pred_region
      %416 = dma.done [#allocation15], 1024
    $region169: #{tpu_custom_call.1} parent=1 // pred_fallthru
      _
    // Predicated region
    $region170: #{tpu_custom_call.1} parent=1 // pred_check
      _
    $region171: #{tpu_custom_call.1} parent=1 // pred_check_branch
      %418 = sbr.rel (0) target = $region173
    $region172: #{tpu_custom_call.1} parent=1 // pred_region
      %420 = dma.done [#allocation18], 16
    $region173: #{tpu_custom_call.1} parent=1 // pred_fallthru
      _
    // Predicated region
    $region174: #{tpu_custom_call.1} parent=1 // pred_check
      _
    $region175: #{tpu_custom_call.1} parent=1 // pred_check_branch
      %422 = sbr.rel (0) target = $region177
    $region176: #{tpu_custom_call.1} parent=1 // pred_region
      %424 = dma.done [#allocation18], 8192
    $region177: #{tpu_custom_call.1} parent=1 // pred_fallthru
      _
    // Predicated region
    $region178: #{tpu_custom_call.1} parent=1 // pred_check
      _
    $region179: #{tpu_custom_call.1} parent=1 // pred_check_branch
      %426 = sbr.rel (0) target = $region181
    $region180: #{tpu_custom_call.1} parent=1 // pred_region
      %428 = dma.done [#allocation21], 8192
    $region181: #{tpu_custom_call.1} parent=1 // pred_fallthru
      _
    // Predicated region
    $region182: #{tpu_custom_call.1} parent=1 // pred_check
      _
    $region183: #{tpu_custom_call.1} parent=1 // pred_check_branch
      %430 = sbr.rel (0) target = $region185
    $region184: #{tpu_custom_call.1} parent=1 // pred_region
      %432 = dma.done [#allocation21], 2048
    $region185: #{tpu_custom_call.1} parent=1 // pred_fallthru
      _
    // Predicated region
    $region186: #{tpu_custom_call.1} parent=1 // pred_check
      _
    $region187: #{tpu_custom_call.1} parent=1 // pred_check_branch
      %434 = sbr.rel (0) target = $region189
    $region188: #{tpu_custom_call.1} parent=1 // pred_region
      %436 = dma.done [#allocation24], 1024
    $region189: #{tpu_custom_call.1} parent=1 // pred_fallthru
      _
    // Predicated region
    $region190: #{tpu_custom_call.1} parent=1 // pred_check
      _
    $region191: #{tpu_custom_call.1} parent=1 // pred_check_branch
      %438 = sbr.rel (0) target = $region193
    $region192: #{tpu_custom_call.1} parent=1 // pred_region
      %440 = dma.done [#allocation24], 2048
    $region193: #{tpu_custom_call.1} parent=1 // pred_fallthru
      _
    // Predicated region
    $region194: #{tpu_custom_call.1} parent=1 // pred_check
      _
    $region195: #{tpu_custom_call.1} parent=1 // pred_check_branch
      %442 = sbr.rel (0) target = $region197
    $region196: #{tpu_custom_call.1} parent=1 // pred_region
      %444 = dma.done [#allocation27], 2048
    $region197: #{tpu_custom_call.1} parent=1 // pred_fallthru
      _
    // Predicated region
    $region198: #{tpu_custom_call.1} parent=1 // pred_check
      _
    $region199: #{tpu_custom_call.1} parent=1 // pred_check_branch
      %446 = sbr.rel (0) target = $region201
    $region200: #{tpu_custom_call.1} parent=1 // pred_region
      %448 = dma.done [#allocation27], 2048
    $region201: #{tpu_custom_call.1} parent=1 // pred_fallthru
      _
    // Predicated region
    $region202: #{tpu_custom_call.1} parent=1 // pred_check
      _
    $region203: #{tpu_custom_call.1} parent=1 // pred_check_branch
      %450 = sbr.rel (0) target = $region205
    $region204: #{tpu_custom_call.1} parent=1 // pred_region
      %452 = dma.done [#allocation30], 2048
    $region205: #{tpu_custom_call.1} parent=1 // pred_fallthru
      _
    // Predicated region
    $region206: #{tpu_custom_call.1} parent=1 // pred_check
      _
    $region207: #{tpu_custom_call.1} parent=1 // pred_check_branch
      %454 = sbr.rel (0) target = $region209
    $region208: #{tpu_custom_call.1} parent=1 // pred_region
      %456 = dma.done [#allocation30], 1024
    $region209: #{tpu_custom_call.1} parent=1 // pred_fallthru
      _
    // Predicated region
    $region210: #{tpu_custom_call.1} parent=1 // pred_check
      _
    $region211: #{tpu_custom_call.1} parent=1 // pred_check_branch
      %458 = sbr.rel (0) target = $region213
    $region212: #{tpu_custom_call.1} parent=1 // pred_region
      %460 = dma.done [#allocation33], 1024
    $region213: #{tpu_custom_call.1} parent=1 // pred_fallthru
      _
    // Predicated region
    $region214: #{tpu_custom_call.1} parent=1 // pred_check
      _
    $region215: #{tpu_custom_call.1} parent=1 // pred_check_branch
      %462 = sbr.rel (0) target = $region217
    $region216: #{tpu_custom_call.1} parent=1 // pred_region
      %464 = dma.done [#allocation33], 1024
    $region217: #{tpu_custom_call.1} parent=1 // pred_fallthru
      _
    // Predicated region
    $region218: #{tpu_custom_call.1} parent=1 // pred_check
      _
    $region219: #{tpu_custom_call.1} parent=1 // pred_check_branch
      %466 = sbr.rel (0) target = $region221
    $region220: #{tpu_custom_call.1} parent=1 // pred_region
      %468 = dma.done [#allocation36], 1024
    $region221: #{tpu_custom_call.1} parent=1 // pred_fallthru
      _
    %v469 = vld [vmem:[#allocation5] sm:$0xf]
    %v470 = vld [vmem:[#allocation8] sm:$0xff]
    %v471 = vld [vmem:[#allocation8 + $0x8] sm:$0xff]
    %v472 = vld [vmem:[#allocation8 + $0x10] sm:$0xff]
    %v473 = vld [vmem:[#allocation8 + $0x18] sm:$0xff]
    %v474 = vld [vmem:[#allocation8 + $0x20] sm:$0xff]
    %v475 = vld [vmem:[#allocation8 + $0x28] sm:$0xff]
    %v476 = vld [vmem:[#allocation8 + $0x30] sm:$0xff]
    %v477 = vld [vmem:[#allocation8 + $0x38] sm:$0xff]
    %v478 = vld [vmem:[#allocation8 + $0x40] sm:$0xff]
    %v479 = vld [vmem:[#allocation8 + $0x48] sm:$0xff]
    %v480 = vld [vmem:[#allocation8 + $0x50] sm:$0xff]
    %v481 = vld [vmem:[#allocation8 + $0x58] sm:$0xff]
    %v482 = vld [vmem:[#allocation8 + $0x60] sm:$0xff]
    %v483 = vld [vmem:[#allocation8 + $0x68] sm:$0xff]
    %v484 = vld [vmem:[#allocation8 + $0x70] sm:$0xff]
    %v485 = vld [vmem:[#allocation8 + $0x78] sm:$0xff]
    %v486 = vld [vmem:[#allocation8 + $0x80] sm:$0xff]
    %v487 = vld [vmem:[#allocation8 + $0x88] sm:$0xff]
    %v488 = vld [vmem:[#allocation8 + $0x90] sm:$0xff]
    %v489 = vld [vmem:[#allocation8 + $0x98] sm:$0xff]
    %v490 = vld [vmem:[#allocation8 + $0xa0] sm:$0xff]
    %v491 = vld [vmem:[#allocation8 + $0xa8] sm:$0xff]
    %v492 = vld [vmem:[#allocation8 + $0xb0] sm:$0xff]
    %v493 = vld [vmem:[#allocation8 + $0xb8] sm:$0xff]
    %v494 = vld [vmem:[#allocation8 + $0xc0] sm:$0xff]
    %v495 = vld [vmem:[#allocation8 + $0xc8] sm:$0xff]
    %v496 = vld [vmem:[#allocation8 + $0xd0] sm:$0xff]
    %v497 = vld [vmem:[#allocation8 + $0xd8] sm:$0xff]
    %v498 = vld [vmem:[#allocation8 + $0xe0] sm:$0xff]
    %v499 = vld [vmem:[#allocation8 + $0xe8] sm:$0xff]
    %v500 = vld [vmem:[#allocation8 + $0xf0] sm:$0xff]
    %v501 = vld [vmem:[#allocation8 + $0xf8] sm:$0xff]
    %v502 = vld [vmem:[#allocation10] sm:$0xf]
    %v504 = vperm.slane %v502, 0
    %v505 = vperm.slane %v502, 1
    %v506 = vperm.slane %v502, 2
    %v507 = vperm.slane %v502, 3
    %v544 = vunpack.c.l.b16 %v470
    %v545 = vunpack.c.h.b16 %v470
    %v546 = vunpack.c.l.b16 %v471
    %v547 = vunpack.c.h.b16 %v471
    %v548 = vunpack.c.l.b16 %v472
    %v549 = vunpack.c.h.b16 %v472
    %v550 = vunpack.c.l.b16 %v473
    %v551 = vunpack.c.h.b16 %v473
    %v552 = vunpack.c.l.b16 %v474
    %v553 = vunpack.c.h.b16 %v474
    %v554 = vunpack.c.l.b16 %v475
    %v555 = vunpack.c.h.b16 %v475
    %v556 = vunpack.c.l.b16 %v476
    %v557 = vunpack.c.h.b16 %v476
    %v558 = vunpack.c.l.b16 %v477
    %v559 = vunpack.c.h.b16 %v477
    %v560 = vunpack.c.l.b16 %v478
    %v561 = vunpack.c.h.b16 %v478
    %v562 = vunpack.c.l.b16 %v479
    %v563 = vunpack.c.h.b16 %v479
    %v564 = vunpack.c.l.b16 %v480
    %v565 = vunpack.c.h.b16 %v480
    %v566 = vunpack.c.l.b16 %v481
    %v567 = vunpack.c.h.b16 %v481
    %v568 = vunpack.c.l.b16 %v482
    %v569 = vunpack.c.h.b16 %v482
    %v570 = vunpack.c.l.b16 %v483
    %v571 = vunpack.c.h.b16 %v483
    %v572 = vunpack.c.l.b16 %v484
    %v573 = vunpack.c.h.b16 %v484
    %v574 = vunpack.c.l.b16 %v485
    %v575 = vunpack.c.h.b16 %v485
    %v576 = vunpack.c.l.b16 %v486
    %v577 = vunpack.c.h.b16 %v486
    %v578 = vunpack.c.l.b16 %v487
    %v579 = vunpack.c.h.b16 %v487
    %v580 = vunpack.c.l.b16 %v488
    %v581 = vunpack.c.h.b16 %v488
    %v582 = vunpack.c.l.b16 %v489
    %v583 = vunpack.c.h.b16 %v489
    %v584 = vunpack.c.l.b16 %v490
    %v585 = vunpack.c.h.b16 %v490
    %v586 = vunpack.c.l.b16 %v491
    %v587 = vunpack.c.h.b16 %v491
    %v588 = vunpack.c.l.b16 %v492
    %v589 = vunpack.c.h.b16 %v492
    %v590 = vunpack.c.l.b16 %v493
    %v591 = vunpack.c.h.b16 %v493
    %v592 = vunpack.c.l.b16 %v494
    %v593 = vunpack.c.h.b16 %v494
    %v594 = vunpack.c.l.b16 %v495
    %v595 = vunpack.c.h.b16 %v495
    %v596 = vunpack.c.l.b16 %v496
    %v597 = vunpack.c.h.b16 %v496
    %v598 = vunpack.c.l.b16 %v497
    %v599 = vunpack.c.h.b16 %v497
    %v600 = vunpack.c.l.b16 %v498
    %v601 = vunpack.c.h.b16 %v498
    %v602 = vunpack.c.l.b16 %v499
    %v603 = vunpack.c.h.b16 %v499
    %v604 = vunpack.c.l.b16 %v500
    %v605 = vunpack.c.h.b16 %v500
    %v606 = vunpack.c.l.b16 %v501
    %v607 = vunpack.c.h.b16 %v501
    %v608 = vpack.c.b16 %v548, %v544
    %v609 = vpack.c.b16 %v549, %v545
    %v610 = vpack.c.b16 %v550, %v546
    %v611 = vpack.c.b16 %v551, %v547
    %v612 = vpack.c.b16 %v556, %v552
    %v613 = vpack.c.b16 %v557, %v553
    %v614 = vpack.c.b16 %v558, %v554
    %v615 = vpack.c.b16 %v559, %v555
    %v616 = vpack.c.b16 %v564, %v560
    %v617 = vpack.c.b16 %v565, %v561
    %v618 = vpack.c.b16 %v566, %v562
    %v619 = vpack.c.b16 %v567, %v563
    %v620 = vpack.c.b16 %v572, %v568
    %v621 = vpack.c.b16 %v573, %v569
    %v622 = vpack.c.b16 %v574, %v570
    %v623 = vpack.c.b16 %v575, %v571
    %v624 = vpack.c.b16 %v580, %v576
    %v625 = vpack.c.b16 %v581, %v577
    %v626 = vpack.c.b16 %v582, %v578
    %v627 = vpack.c.b16 %v583, %v579
    %v628 = vpack.c.b16 %v588, %v584
    %v629 = vpack.c.b16 %v589, %v585
    %v630 = vpack.c.b16 %v590, %v586
    %v631 = vpack.c.b16 %v591, %v587
    %v632 = vpack.c.b16 %v596, %v592
    %v633 = vpack.c.b16 %v597, %v593
    %v634 = vpack.c.b16 %v598, %v594
    %v635 = vpack.c.b16 %v599, %v595
    %v636 = vpack.c.b16 %v604, %v600
    %v637 = vpack.c.b16 %v605, %v601
    %v638 = vpack.c.b16 %v606, %v602
    %v639 = vpack.c.b16 %v607, %v603
    %672 = vmatpush.bf16.msra.mxu0 %v636
    %673 = vmatpush.bf16.msra.mxu0 %v632
    %674 = vmatpush.bf16.msra.mxu0 %v628
    %675 = vmatpush.bf16.msra.mxu0 %v624
    %676 = vmatpush.bf16.msra.mxu0 %v620
    %677 = vmatpush.bf16.msra.mxu0 %v616
    %678 = vmatpush.bf16.msra.mxu0 %v612
    %679 = vmatpush.bf16.msra.mxu0 %v608
    %680 = vmatmul.bf16.gmra.mxu0 %v469
    %v681 = vpop.f32.mrf.mxu0
    %v682 = vadd.f32 %v504, %v681
    %v683 = vpop.f32.mrf.mxu0
    %684 = vdwg.mxu0
    %685 = vmatpush.bf16.msra.mxu0 %v637
    %686 = vmatpush.bf16.msra.mxu0 %v633
    %687 = vmatpush.bf16.msra.mxu0 %v629
    %688 = vmatpush.bf16.msra.mxu0 %v625
    %689 = vmatpush.bf16.msra.mxu0 %v621
    %690 = vmatpush.bf16.msra.mxu0 %v617
    %691 = vmatpush.bf16.msra.mxu0 %v613
    %692 = vmatpush.bf16.msra.mxu0 %v609
    %693 = vmatmul.bf16.gmra.mxu0 %v469
    %v694 = vpop.f32.mrf.mxu0
    %v695 = vadd.f32 %v505, %v694
    %v696 = vpop.f32.mrf.mxu0
    %697 = vdwg.mxu0
    %698 = vmatpush.bf16.msra.mxu0 %v638
    %699 = vmatpush.bf16.msra.mxu0 %v634
    %700 = vmatpush.bf16.msra.mxu0 %v630
    %701 = vmatpush.bf16.msra.mxu0 %v626
    %702 = vmatpush.bf16.msra.mxu0 %v622
    %703 = vmatpush.bf16.msra.mxu0 %v618
    %704 = vmatpush.bf16.msra.mxu0 %v614
    %705 = vmatpush.bf16.msra.mxu0 %v610
    %706 = vmatmul.bf16.gmra.mxu0 %v469
    %v707 = vpop.f32.mrf.mxu0
    %v708 = vadd.f32 %v506, %v707
    %v709 = vpop.f32.mrf.mxu0
    %710 = vdwg.mxu0
    %711 = vmatpush.bf16.msra.mxu0 %v639
    %712 = vmatpush.bf16.msra.mxu0 %v635
    %713 = vmatpush.bf16.msra.mxu0 %v631
    %714 = vmatpush.bf16.msra.mxu0 %v627
    %715 = vmatpush.bf16.msra.mxu0 %v623
    %716 = vmatpush.bf16.msra.mxu0 %v619
    %717 = vmatpush.bf16.msra.mxu0 %v615
    %718 = vmatpush.bf16.msra.mxu0 %v611
    %719 = vmatmul.bf16.gmra.mxu0 %v469
    %v720 = vpop.f32.mrf.mxu0
    %v721 = vadd.f32 %v507, %v720
    %v722 = vpop.f32.mrf.mxu0
    %723 = vdwg.mxu0
    %v724 = vmax.f32 %v682, 0.0
    %v725 = vmax.f32 %v695, 0.0
    %v726 = vmax.f32 %v708, 0.0
    %v727 = vmax.f32 %v721, 0.0
    %v728 = vpack.c.bf16 %v724, %v724
    %v729 = vpack.c.bf16 %v725, %v725
    %v730 = vpack.c.bf16 %v726, %v726
    %v731 = vpack.c.bf16 %v727, %v727
    %v732 = vld [vmem:[#allocation11] sm:$0xff]
    %v733 = vld [vmem:[#allocation11 + $0x8] sm:$0xff]
    %v734 = vld [vmem:[#allocation11 + $0x10] sm:$0xff]
    %v735 = vld [vmem:[#allocation11 + $0x18] sm:$0xff]
    %v736 = vld [vmem:[#allocation11 + $0x20] sm:$0xff]
    %v737 = vld [vmem:[#allocation11 + $0x28] sm:$0xff]
    %v738 = vld [vmem:[#allocation11 + $0x30] sm:$0xff]
    %v739 = vld [vmem:[#allocation11 + $0x38] sm:$0xff]
    %v740 = vld [vmem:[#allocation11 + $0x40] sm:$0xff]
    %v741 = vld [vmem:[#allocation11 + $0x48] sm:$0xff]
    %v742 = vld [vmem:[#allocation11 + $0x50] sm:$0xff]
    %v743 = vld [vmem:[#allocation11 + $0x58] sm:$0xff]
    %v744 = vld [vmem:[#allocation11 + $0x60] sm:$0xff]
    %v745 = vld [vmem:[#allocation11 + $0x68] sm:$0xff]
    %v746 = vld [vmem:[#allocation11 + $0x70] sm:$0xff]
    %v747 = vld [vmem:[#allocation11 + $0x78] sm:$0xff]
    %v748 = vld [vmem:[#allocation11 + $0x80] sm:$0xff]
    %v749 = vld [vmem:[#allocation11 + $0x88] sm:$0xff]
    %v750 = vld [vmem:[#allocation11 + $0x90] sm:$0xff]
    %v751 = vld [vmem:[#allocation11 + $0x98] sm:$0xff]
    %v752 = vld [vmem:[#allocation11 + $0xa0] sm:$0xff]
    %v753 = vld [vmem:[#allocation11 + $0xa8] sm:$0xff]
    %v754 = vld [vmem:[#allocation11 + $0xb0] sm:$0xff]
    %v755 = vld [vmem:[#allocation11 + $0xb8] sm:$0xff]
    %v756 = vld [vmem:[#allocation11 + $0xc0] sm:$0xff]
    %v757 = vld [vmem:[#allocation11 + $0xc8] sm:$0xff]
    %v758 = vld [vmem:[#allocation11 + $0xd0] sm:$0xff]
    %v759 = vld [vmem:[#allocation11 + $0xd8] sm:$0xff]
    %v760 = vld [vmem:[#allocation11 + $0xe0] sm:$0xff]
    %v761 = vld [vmem:[#allocation11 + $0xe8] sm:$0xff]
    %v762 = vld [vmem:[#allocation11 + $0xf0] sm:$0xff]
    %v763 = vld [vmem:[#allocation11 + $0xf8] sm:$0xff]
    %v764 = vld [vmem:[#allocation11 + $0x100] sm:$0xff]
    %v765 = vld [vmem:[#allocation11 + $0x108] sm:$0xff]
    %v766 = vld [vmem:[#allocation11 + $0x110] sm:$0xff]
    %v767 = vld [vmem:[#allocation11 + $0x118] sm:$0xff]
    %v768 = vld [vmem:[#allocation11 + $0x120] sm:$0xff]
    %v769 = vld [vmem:[#allocation11 + $0x128] sm:$0xff]
    %v770 = vld [vmem:[#allocation11 + $0x130] sm:$0xff]
    %v771 = vld [vmem:[#allocation11 + $0x138] sm:$0xff]
    %v772 = vld [vmem:[#allocation11 + $0x140] sm:$0xff]
    %v773 = vld [vmem:[#allocation11 + $0x148] sm:$0xff]
    %v774 = vld [vmem:[#allocation11 + $0x150] sm:$0xff]
    %v775 = vld [vmem:[#allocation11 + $0x158] sm:$0xff]
    %v776 = vld [vmem:[#allocation11 + $0x160] sm:$0xff]
    %v777 = vld [vmem:[#allocation11 + $0x168] sm:$0xff]
    %v778 = vld [vmem:[#allocation11 + $0x170] sm:$0xff]
    %v779 = vld [vmem:[#allocation11 + $0x178] sm:$0xff]
    %v780 = vld [vmem:[#allocation11 + $0x180] sm:$0xff]
    %v781 = vld [vmem:[#allocation11 + $0x188] sm:$0xff]
    %v782 = vld [vmem:[#allocation11 + $0x190] sm:$0xff]
    %v783 = vld [vmem:[#allocation11 + $0x198] sm:$0xff]
    %v784 = vld [vmem:[#allocation11 + $0x1a0] sm:$0xff]
    %v785 = vld [vmem:[#allocation11 + $0x1a8] sm:$0xff]
    %v786 = vld [vmem:[#allocation11 + $0x1b0] sm:$0xff]
    %v787 = vld [vmem:[#allocation11 + $0x1b8] sm:$0xff]
    %v788 = vld [vmem:[#allocation11 + $0x1c0] sm:$0xff]
    %v789 = vld [vmem:[#allocation11 + $0x1c8] sm:$0xff]
    %v790 = vld [vmem:[#allocation11 + $0x1d0] sm:$0xff]
    %v791 = vld [vmem:[#allocation11 + $0x1d8] sm:$0xff]
    %v792 = vld [vmem:[#allocation11 + $0x1e0] sm:$0xff]
    %v793 = vld [vmem:[#allocation11 + $0x1e8] sm:$0xff]
    %v794 = vld [vmem:[#allocation11 + $0x1f0] sm:$0xff]
    %v795 = vld [vmem:[#allocation11 + $0x1f8] sm:$0xff]
    %v796 = vld [vmem:[%s13] sm:$0x3]
    %v798 = vperm.slane %v796, 0
    %v799 = vperm.slane %v796, 1
    %v866 = vunpack.c.l.b16 %v732
    %v867 = vunpack.c.h.b16 %v732
    %v868 = vunpack.c.l.b16 %v733
    %v869 = vunpack.c.h.b16 %v733
    %v870 = vunpack.c.l.b16 %v734
    %v871 = vunpack.c.h.b16 %v734
    %v872 = vunpack.c.l.b16 %v735
    %v873 = vunpack.c.h.b16 %v735
    %v874 = vunpack.c.l.b16 %v736
    %v875 = vunpack.c.h.b16 %v736
    %v876 = vunpack.c.l.b16 %v737
    %v877 = vunpack.c.h.b16 %v737
    %v878 = vunpack.c.l.b16 %v738
    %v879 = vunpack.c.h.b16 %v738
    %v880 = vunpack.c.l.b16 %v739
    %v881 = vunpack.c.h.b16 %v739
    %v882 = vunpack.c.l.b16 %v740
    %v883 = vunpack.c.h.b16 %v740
    %v884 = vunpack.c.l.b16 %v741
    %v885 = vunpack.c.h.b16 %v741
    %v886 = vunpack.c.l.b16 %v742
    %v887 = vunpack.c.h.b16 %v742
    %v888 = vunpack.c.l.b16 %v743
    %v889 = vunpack.c.h.b16 %v743
    %v890 = vunpack.c.l.b16 %v744
    %v891 = vunpack.c.h.b16 %v744
    %v892 = vunpack.c.l.b16 %v745
    %v893 = vunpack.c.h.b16 %v745
    %v894 = vunpack.c.l.b16 %v746
    %v895 = vunpack.c.h.b16 %v746
    %v896 = vunpack.c.l.b16 %v747
    %v897 = vunpack.c.h.b16 %v747
    %v898 = vunpack.c.l.b16 %v748
    %v899 = vunpack.c.h.b16 %v748
    %v900 = vunpack.c.l.b16 %v749
    %v901 = vunpack.c.h.b16 %v749
    %v902 = vunpack.c.l.b16 %v750
    %v903 = vunpack.c.h.b16 %v750
    %v904 = vunpack.c.l.b16 %v751
    %v905 = vunpack.c.h.b16 %v751
    %v906 = vunpack.c.l.b16 %v752
    %v907 = vunpack.c.h.b16 %v752
    %v908 = vunpack.c.l.b16 %v753
    %v909 = vunpack.c.h.b16 %v753
    %v910 = vunpack.c.l.b16 %v754
    %v911 = vunpack.c.h.b16 %v754
    %v912 = vunpack.c.l.b16 %v755
    %v913 = vunpack.c.h.b16 %v755
    %v914 = vunpack.c.l.b16 %v756
    %v915 = vunpack.c.h.b16 %v756
    %v916 = vunpack.c.l.b16 %v757
    %v917 = vunpack.c.h.b16 %v757
    %v918 = vunpack.c.l.b16 %v758
    %v919 = vunpack.c.h.b16 %v758
    %v920 = vunpack.c.l.b16 %v759
    %v921 = vunpack.c.h.b16 %v759
    %v922 = vunpack.c.l.b16 %v760
    %v923 = vunpack.c.h.b16 %v760
    %v924 = vunpack.c.l.b16 %v761
    %v925 = vunpack.c.h.b16 %v761
    %v926 = vunpack.c.l.b16 %v762
    %v927 = vunpack.c.h.b16 %v762
    %v928 = vunpack.c.l.b16 %v763
    %v929 = vunpack.c.h.b16 %v763
    %v930 = vunpack.c.l.b16 %v764
    %v931 = vunpack.c.h.b16 %v764
    %v932 = vunpack.c.l.b16 %v765
    %v933 = vunpack.c.h.b16 %v765
    %v934 = vunpack.c.l.b16 %v766
    %v935 = vunpack.c.h.b16 %v766
    %v936 = vunpack.c.l.b16 %v767
    %v937 = vunpack.c.h.b16 %v767
    %v938 = vunpack.c.l.b16 %v768
    %v939 = vunpack.c.h.b16 %v768
    %v940 = vunpack.c.l.b16 %v769
    %v941 = vunpack.c.h.b16 %v769
    %v942 = vunpack.c.l.b16 %v770
    %v943 = vunpack.c.h.b16 %v770
    %v944 = vunpack.c.l.b16 %v771
    %v945 = vunpack.c.h.b16 %v771
    %v946 = vunpack.c.l.b16 %v772
    %v947 = vunpack.c.h.b16 %v772
    %v948 = vunpack.c.l.b16 %v773
    %v949 = vunpack.c.h.b16 %v773
    %v950 = vunpack.c.l.b16 %v774
    %v951 = vunpack.c.h.b16 %v774
    %v952 = vunpack.c.l.b16 %v775
    %v953 = vunpack.c.h.b16 %v775
    %v954 = vunpack.c.l.b16 %v776
    %v955 = vunpack.c.h.b16 %v776
    %v956 = vunpack.c.l.b16 %v777
    %v957 = vunpack.c.h.b16 %v777
    %v958 = vunpack.c.l.b16 %v778
    %v959 = vunpack.c.h.b16 %v778
    %v960 = vunpack.c.l.b16 %v779
    %v961 = vunpack.c.h.b16 %v779
    %v962 = vunpack.c.l.b16 %v780
    %v963 = vunpack.c.h.b16 %v780
    %v964 = vunpack.c.l.b16 %v781
    %v965 = vunpack.c.h.b16 %v781
    %v966 = vunpack.c.l.b16 %v782
    %v967 = vunpack.c.h.b16 %v782
    %v968 = vunpack.c.l.b16 %v783
    %v969 = vunpack.c.h.b16 %v783
    %v970 = vunpack.c.l.b16 %v784
    %v971 = vunpack.c.h.b16 %v784
    %v972 = vunpack.c.l.b16 %v785
    %v973 = vunpack.c.h.b16 %v785
    %v974 = vunpack.c.l.b16 %v786
    %v975 = vunpack.c.h.b16 %v786
    %v976 = vunpack.c.l.b16 %v787
    %v977 = vunpack.c.h.b16 %v787
    %v978 = vunpack.c.l.b16 %v788
    %v979 = vunpack.c.h.b16 %v788
    %v980 = vunpack.c.l.b16 %v789
    %v981 = vunpack.c.h.b16 %v789
    %v982 = vunpack.c.l.b16 %v790
    %v983 = vunpack.c.h.b16 %v790
    %v984 = vunpack.c.l.b16 %v791
    %v985 = vunpack.c.h.b16 %v791
    %v986 = vunpack.c.l.b16 %v792
    %v987 = vunpack.c.h.b16 %v792
    %v988 = vunpack.c.l.b16 %v793
    %v989 = vunpack.c.h.b16 %v793
    %v990 = vunpack.c.l.b16 %v794
    %v991 = vunpack.c.h.b16 %v794
    %v992 = vunpack.c.l.b16 %v795
    %v993 = vunpack.c.h.b16 %v795
    %v994 = vpack.c.b16 %v868, %v866
    %v995 = vpack.c.b16 %v869, %v867
    %v996 = vpack.c.b16 %v872, %v870
    %v997 = vpack.c.b16 %v873, %v871
    %v998 = vpack.c.b16 %v876, %v874
    %v999 = vpack.c.b16 %v877, %v875
    %v1000 = vpack.c.b16 %v880, %v878
    %v1001 = vpack.c.b16 %v881, %v879
    %v1002 = vpack.c.b16 %v884, %v882
    %v1003 = vpack.c.b16 %v885, %v883
    %v1004 = vpack.c.b16 %v888, %v886
    %v1005 = vpack.c.b16 %v889, %v887
    %v1006 = vpack.c.b16 %v892, %v890
    %v1007 = vpack.c.b16 %v893, %v891
    %v1008 = vpack.c.b16 %v896, %v894
    %v1009 = vpack.c.b16 %v897, %v895
    %v1010 = vpack.c.b16 %v900, %v898
    %v1011 = vpack.c.b16 %v901, %v899
    %v1012 = vpack.c.b16 %v904, %v902
    %v1013 = vpack.c.b16 %v905, %v903
    %v1014 = vpack.c.b16 %v908, %v906
    %v1015 = vpack.c.b16 %v909, %v907
    %v1016 = vpack.c.b16 %v912, %v910
    %v1017 = vpack.c.b16 %v913, %v911
    %v1018 = vpack.c.b16 %v916, %v914
    %v1019 = vpack.c.b16 %v917, %v915
    %v1020 = vpack.c.b16 %v920, %v918
    %v1021 = vpack.c.b16 %v921, %v919
    %v1022 = vpack.c.b16 %v924, %v922
    %v1023 = vpack.c.b16 %v925, %v923
    %v1024 = vpack.c.b16 %v928, %v926
    %v1025 = vpack.c.b16 %v929, %v927
    %v1026 = vpack.c.b16 %v932, %v930
    %v1027 = vpack.c.b16 %v933, %v931
    %v1028 = vpack.c.b16 %v936, %v934
    %v1029 = vpack.c.b16 %v937, %v935
    %v1030 = vpack.c.b16 %v940, %v938
    %v1031 = vpack.c.b16 %v941, %v939
    %v1032 = vpack.c.b16 %v944, %v942
    %v1033 = vpack.c.b16 %v945, %v943
    %v1034 = vpack.c.b16 %v948, %v946
    %v1035 = vpack.c.b16 %v949, %v947
    %v1036 = vpack.c.b16 %v952, %v950
    %v1037 = vpack.c.b16 %v953, %v951
    %v1038 = vpack.c.b16 %v956, %v954
    %v1039 = vpack.c.b16 %v957, %v955
    %v1040 = vpack.c.b16 %v960, %v958
    %v1041 = vpack.c.b16 %v961, %v959
    %v1042 = vpack.c.b16 %v964, %v962
    %v1043 = vpack.c.b16 %v965, %v963
    %v1044 = vpack.c.b16 %v968, %v966
    %v1045 = vpack.c.b16 %v969, %v967
    %v1046 = vpack.c.b16 %v972, %v970
    %v1047 = vpack.c.b16 %v973, %v971
    %v1048 = vpack.c.b16 %v976, %v974
    %v1049 = vpack.c.b16 %v977, %v975
    %v1050 = vpack.c.b16 %v980, %v978
    %v1051 = vpack.c.b16 %v981, %v979
    %v1052 = vpack.c.b16 %v984, %v982
    %v1053 = vpack.c.b16 %v985, %v983
    %v1054 = vpack.c.b16 %v988, %v986
    %v1055 = vpack.c.b16 %v989, %v987
    %v1056 = vpack.c.b16 %v992, %v990
    %v1057 = vpack.c.b16 %v993, %v991
    %1122 = vmatpush.bf16.msra.mxu0 %v1008
    %1123 = vmatpush.bf16.msra.mxu0 %v1006
    %1124 = vmatpush.bf16.msra.mxu0 %v1004
    %1125 = vmatpush.bf16.msra.mxu0 %v1002
    %1126 = vmatpush.bf16.msra.mxu0 %v1000
    %1127 = vmatpush.bf16.msra.mxu0 %v998
    %1128 = vmatpush.bf16.msra.mxu0 %v996
    %1129 = vmatpush.bf16.msra.mxu0 %v994
    %1130 = vmatmul.bf16.gmra.mxu0 %v728
    %v1131 = vpop.f32.mrf.mxu0
    %v1132 = vadd.f32 %v798, %v1131
    %v1133 = vpop.f32.mrf.mxu0
    %1134 = vdwg.mxu0
    %1135 = vmatpush.bf16.msra.mxu0 %v1024
    %1136 = vmatpush.bf16.msra.mxu0 %v1022
    %1137 = vmatpush.bf16.msra.mxu0 %v1020
    %1138 = vmatpush.bf16.msra.mxu0 %v1018
    %1139 = vmatpush.bf16.msra.mxu0 %v1016
    %1140 = vmatpush.bf16.msra.mxu0 %v1014
    %1141 = vmatpush.bf16.msra.mxu0 %v1012
    %1142 = vmatpush.bf16.msra.mxu0 %v1010
    %1143 = vmatmul.bf16.gmra.mxu0 %v729
    %v1144 = vpop.f32.mrf.mxu0
    %v1145 = vadd.f32 %v1132, %v1144
    %v1146 = vpop.f32.mrf.mxu0
    %1147 = vdwg.mxu0
    %1148 = vmatpush.bf16.msra.mxu0 %v1040
    %1149 = vmatpush.bf16.msra.mxu0 %v1038
    %1150 = vmatpush.bf16.msra.mxu0 %v1036
    %1151 = vmatpush.bf16.msra.mxu0 %v1034
    %1152 = vmatpush.bf16.msra.mxu0 %v1032
    %1153 = vmatpush.bf16.msra.mxu0 %v1030
    %1154 = vmatpush.bf16.msra.mxu0 %v1028
    %1155 = vmatpush.bf16.msra.mxu0 %v1026
    %1156 = vmatmul.bf16.gmra.mxu0 %v730
    %v1157 = vpop.f32.mrf.mxu0
    %v1158 = vadd.f32 %v1145, %v1157
    %v1159 = vpop.f32.mrf.mxu0
    %1160 = vdwg.mxu0
    %1161 = vmatpush.bf16.msra.mxu0 %v1056
    %1162 = vmatpush.bf16.msra.mxu0 %v1054
    %1163 = vmatpush.bf16.msra.mxu0 %v1052
    %1164 = vmatpush.bf16.msra.mxu0 %v1050
    %1165 = vmatpush.bf16.msra.mxu0 %v1048
    %1166 = vmatpush.bf16.msra.mxu0 %v1046
    %1167 = vmatpush.bf16.msra.mxu0 %v1044
    %1168 = vmatpush.bf16.msra.mxu0 %v1042
    %1169 = vmatmul.bf16.gmra.mxu0 %v731
    %v1170 = vpop.f32.mrf.mxu0
    %v1171 = vadd.f32 %v1158, %v1170
    %v1172 = vpop.f32.mrf.mxu0
    %1173 = vdwg.mxu0
    %1174 = vmatpush.bf16.msra.mxu0 %v1009
    %1175 = vmatpush.bf16.msra.mxu0 %v1007
    %1176 = vmatpush.bf16.msra.mxu0 %v1005
    %1177 = vmatpush.bf16.msra.mxu0 %v1003
    %1178 = vmatpush.bf16.msra.mxu0 %v1001
    %1179 = vmatpush.bf16.msra.mxu0 %v999
    %1180 = vmatpush.bf16.msra.mxu0 %v997
    %1181 = vmatpush.bf16.msra.mxu0 %v995
    %1182 = vmatmul.bf16.gmra.mxu0 %v728
    %v1183 = vpop.f32.mrf.mxu0
    %v1184 = vadd.f32 %v799, %v1183
    %v1185 = vpop.f32.mrf.mxu0
    %1186 = vdwg.mxu0
    %1187 = vmatpush.bf16.msra.mxu0 %v1025
    %1188 = vmatpush.bf16.msra.mxu0 %v1023
    %1189 = vmatpush.bf16.msra.mxu0 %v1021
    %1190 = vmatpush.bf16.msra.mxu0 %v1019
    %1191 = vmatpush.bf16.msra.mxu0 %v1017
    %1192 = vmatpush.bf16.msra.mxu0 %v1015
    %1193 = vmatpush.bf16.msra.mxu0 %v1013
    %1194 = vmatpush.bf16.msra.mxu0 %v1011
    %1195 = vmatmul.bf16.gmra.mxu0 %v729
    %v1196 = vpop.f32.mrf.mxu0
    %v1197 = vadd.f32 %v1184, %v1196
    %v1198 = vpop.f32.mrf.mxu0
    %1199 = vdwg.mxu0
    %1200 = vmatpush.bf16.msra.mxu0 %v1041
    %1201 = vmatpush.bf16.msra.mxu0 %v1039
    %1202 = vmatpush.bf16.msra.mxu0 %v1037
    %1203 = vmatpush.bf16.msra.mxu0 %v1035
    %1204 = vmatpush.bf16.msra.mxu0 %v1033
    %1205 = vmatpush.bf16.msra.mxu0 %v1031
    %1206 = vmatpush.bf16.msra.mxu0 %v1029
    %1207 = vmatpush.bf16.msra.mxu0 %v1027
    %1208 = vmatmul.bf16.gmra.mxu0 %v730
    %v1209 = vpop.f32.mrf.mxu0
    %v1210 = vadd.f32 %v1197, %v1209
    %v1211 = vpop.f32.mrf.mxu0
    %1212 = vdwg.mxu0
    %1213 = vmatpush.bf16.msra.mxu0 %v1057
    %1214 = vmatpush.bf16.msra.mxu0 %v1055
    %1215 = vmatpush.bf16.msra.mxu0 %v1053
    %1216 = vmatpush.bf16.msra.mxu0 %v1051
    %1217 = vmatpush.bf16.msra.mxu0 %v1049
    %1218 = vmatpush.bf16.msra.mxu0 %v1047
    %1219 = vmatpush.bf16.msra.mxu0 %v1045
    %1220 = vmatpush.bf16.msra.mxu0 %v1043
    %1221 = vmatmul.bf16.gmra.mxu0 %v731
    %v1222 = vpop.f32.mrf.mxu0
    %v1223 = vadd.f32 %v1210, %v1222
    %v1224 = vpop.f32.mrf.mxu0
    %1225 = vdwg.mxu0
    %v1226 = vmax.f32 %v1171, 0.0
    %v1227 = vmax.f32 %v1223, 0.0
    %v1228 = vpack.c.bf16 %v1226, %v1226
    %v1229 = vpack.c.bf16 %v1227, %v1227
    %v1230 = vld [vmem:[#allocation13] sm:$0xf]
    %v1231 = vld [vmem:[#allocation13 + $0x4] sm:$0xf]
    %v1232 = vld [vmem:[#allocation13 + $0x8] sm:$0xf]
    %v1233 = vld [vmem:[#allocation13 + $0xc] sm:$0xf]
    %v1234 = vld [vmem:[#allocation13 + $0x10] sm:$0xf]
    %v1235 = vld [vmem:[#allocation13 + $0x14] sm:$0xf]
    %v1236 = vld [vmem:[#allocation13 + $0x18] sm:$0xf]
    %v1237 = vld [vmem:[#allocation13 + $0x1c] sm:$0xf]
    %v1238 = vld [vmem:[#allocation13 + $0x20] sm:$0xf]
    %v1239 = vld [vmem:[#allocation13 + $0x24] sm:$0xf]
    %v1240 = vld [vmem:[#allocation13 + $0x28] sm:$0xf]
    %v1241 = vld [vmem:[#allocation13 + $0x2c] sm:$0xf]
    %v1242 = vld [vmem:[#allocation13 + $0x30] sm:$0xf]
    %v1243 = vld [vmem:[#allocation13 + $0x34] sm:$0xf]
    %v1244 = vld [vmem:[#allocation13 + $0x38] sm:$0xf]
    %v1245 = vld [vmem:[#allocation13 + $0x3c] sm:$0xf]
    %v1246 = vld [vmem:[#allocation13 + $0x40] sm:$0xf]
    %v1247 = vld [vmem:[#allocation13 + $0x44] sm:$0xf]
    %v1248 = vld [vmem:[#allocation13 + $0x48] sm:$0xf]
    %v1249 = vld [vmem:[#allocation13 + $0x4c] sm:$0xf]
    %v1250 = vld [vmem:[#allocation13 + $0x50] sm:$0xf]
    %v1251 = vld [vmem:[#allocation13 + $0x54] sm:$0xf]
    %v1252 = vld [vmem:[#allocation13 + $0x58] sm:$0xf]
    %v1253 = vld [vmem:[#allocation13 + $0x5c] sm:$0xf]
    %v1254 = vld [vmem:[#allocation13 + $0x60] sm:$0xf]
    %v1255 = vld [vmem:[#allocation13 + $0x64] sm:$0xf]
    %v1256 = vld [vmem:[#allocation13 + $0x68] sm:$0xf]
    %v1257 = vld [vmem:[#allocation13 + $0x6c] sm:$0xf]
    %v1258 = vld [vmem:[#allocation13 + $0x70] sm:$0xf]
    %v1259 = vld [vmem:[#allocation13 + $0x74] sm:$0xf]
    %v1260 = vld [vmem:[#allocation13 + $0x78] sm:$0xf]
    %v1261 = vld [vmem:[#allocation13 + $0x7c] sm:$0xf]
    %v1262 = vld [vmem:[#allocation14] sm:$0x1]
    %v1264 = vperm.slane %v1262, 0
    %v1298 = vunpack.c.l.b16 %v1230
    %v1299 = vunpack.c.l.b16 %v1231
    %v1300 = vunpack.c.l.b16 %v1232
    %v1301 = vunpack.c.l.b16 %v1233
    %v1302 = vunpack.c.l.b16 %v1234
    %v1303 = vunpack.c.l.b16 %v1235
    %v1304 = vunpack.c.l.b16 %v1236
    %v1305 = vunpack.c.l.b16 %v1237
    %v1306 = vunpack.c.l.b16 %v1238
    %v1307 = vunpack.c.l.b16 %v1239
    %v1308 = vunpack.c.l.b16 %v1240
    %v1309 = vunpack.c.l.b16 %v1241
    %v1310 = vunpack.c.l.b16 %v1242
    %v1311 = vunpack.c.l.b16 %v1243
    %v1312 = vunpack.c.l.b16 %v1244
    %v1313 = vunpack.c.l.b16 %v1245
    %v1314 = vunpack.c.l.b16 %v1246
    %v1315 = vunpack.c.l.b16 %v1247
    %v1316 = vunpack.c.l.b16 %v1248
    %v1317 = vunpack.c.l.b16 %v1249
    %v1318 = vunpack.c.l.b16 %v1250
    %v1319 = vunpack.c.l.b16 %v1251
    %v1320 = vunpack.c.l.b16 %v1252
    %v1321 = vunpack.c.l.b16 %v1253
    %v1322 = vunpack.c.l.b16 %v1254
    %v1323 = vunpack.c.l.b16 %v1255
    %v1324 = vunpack.c.l.b16 %v1256
    %v1325 = vunpack.c.l.b16 %v1257
    %v1326 = vunpack.c.l.b16 %v1258
    %v1327 = vunpack.c.l.b16 %v1259
    %v1328 = vunpack.c.l.b16 %v1260
    %v1329 = vunpack.c.l.b16 %v1261
    %v1330 = vpack.c.b16 %v1299, %v1298
    %v1331 = vpack.c.b16 %v1301, %v1300
    %v1332 = vpack.c.b16 %v1303, %v1302
    %v1333 = vpack.c.b16 %v1305, %v1304
    %v1334 = vpack.c.b16 %v1307, %v1306
    %v1335 = vpack.c.b16 %v1309, %v1308
    %v1336 = vpack.c.b16 %v1311, %v1310
    %v1337 = vpack.c.b16 %v1313, %v1312
    %v1338 = vpack.c.b16 %v1315, %v1314
    %v1339 = vpack.c.b16 %v1317, %v1316
    %v1340 = vpack.c.b16 %v1319, %v1318
    %v1341 = vpack.c.b16 %v1321, %v1320
    %v1342 = vpack.c.b16 %v1323, %v1322
    %v1343 = vpack.c.b16 %v1325, %v1324
    %v1344 = vpack.c.b16 %v1327, %v1326
    %v1345 = vpack.c.b16 %v1329, %v1328
    %1362 = vmatpush.bf16.msra.mxu0 %v1337
    %1363 = vmatpush.bf16.msra.mxu0 %v1336
    %1364 = vmatpush.bf16.msra.mxu0 %v1335
    %1365 = vmatpush.bf16.msra.mxu0 %v1334
    %1366 = vmatpush.bf16.msra.mxu0 %v1333
    %1367 = vmatpush.bf16.msra.mxu0 %v1332
    %1368 = vmatpush.bf16.msra.mxu0 %v1331
    %1369 = vmatpush.bf16.msra.mxu0 %v1330
    %1370 = vmatmul.bf16.gmra.mxu0 %v1228
    %v1371 = vpop.f32.mrf.mxu0
    %v1372 = vadd.f32 %v1264, %v1371
    %v1373 = vpop.f32.mrf.mxu0
    %1374 = vdwg.mxu0
    %1375 = vmatpush.bf16.msra.mxu0 %v1345
    %1376 = vmatpush.bf16.msra.mxu0 %v1344
    %1377 = vmatpush.bf16.msra.mxu0 %v1343
    %1378 = vmatpush.bf16.msra.mxu0 %v1342
    %1379 = vmatpush.bf16.msra.mxu0 %v1341
    %1380 = vmatpush.bf16.msra.mxu0 %v1340
    %1381 = vmatpush.bf16.msra.mxu0 %v1339
    %1382 = vmatpush.bf16.msra.mxu0 %v1338
    %1383 = vmatmul.bf16.gmra.mxu0 %v1229
    %v1384 = vpop.f32.mrf.mxu0
    %v1385 = vadd.f32 %v1372, %v1384
    %v1386 = vpop.f32.mrf.mxu0
    %1387 = vdwg.mxu0
    %v1388 = vmax.f32 %v1385, 0.0
    %v1389 = vpack.c.bf16 %v1388, %v1388
    %v1390 = vld [vmem:[#allocation16] sm:$0xf]
    %v1391 = vld [vmem:[#allocation16 + $0x4] sm:$0xf]
    %v1392 = vld [vmem:[#allocation16 + $0x8] sm:$0xf]
    %v1393 = vld [vmem:[#allocation16 + $0xc] sm:$0xf]
    %v1394 = vld [vmem:[#allocation16 + $0x10] sm:$0xf]
    %v1395 = vld [vmem:[#allocation16 + $0x14] sm:$0xf]
    %v1396 = vld [vmem:[#allocation16 + $0x18] sm:$0xf]
    %v1397 = vld [vmem:[#allocation16 + $0x1c] sm:$0xf]
    %v1398 = vld [vmem:[#allocation16 + $0x20] sm:$0xf]
    %v1399 = vld [vmem:[#allocation16 + $0x24] sm:$0xf]
    %v1400 = vld [vmem:[#allocation16 + $0x28] sm:$0xf]
    %v1401 = vld [vmem:[#allocation16 + $0x2c] sm:$0xf]
    %v1402 = vld [vmem:[#allocation16 + $0x30] sm:$0xf]
    %v1403 = vld [vmem:[#allocation16 + $0x34] sm:$0xf]
    %v1404 = vld [vmem:[#allocation16 + $0x38] sm:$0xf]
    %v1405 = vld [vmem:[#allocation16 + $0x3c] sm:$0xf]
    %v1406 = vld [vmem:[#allocation17] sm:$0x1]
    %v1408 = vperm.slane %v1406, 0
    %v1426 = vunpack.c.l.b16 %v1390
    %v1427 = vunpack.c.l.b16 %v1391
    %v1428 = vunpack.c.l.b16 %v1392
    %v1429 = vunpack.c.l.b16 %v1393
    %v1430 = vunpack.c.l.b16 %v1394
    %v1431 = vunpack.c.l.b16 %v1395
    %v1432 = vunpack.c.l.b16 %v1396
    %v1433 = vunpack.c.l.b16 %v1397
    %v1434 = vunpack.c.l.b16 %v1398
    %v1435 = vunpack.c.l.b16 %v1399
    %v1436 = vunpack.c.l.b16 %v1400
    %v1437 = vunpack.c.l.b16 %v1401
    %v1438 = vunpack.c.l.b16 %v1402
    %v1439 = vunpack.c.l.b16 %v1403
    %v1440 = vunpack.c.l.b16 %v1404
    %v1441 = vunpack.c.l.b16 %v1405
    %v1442 = vpack.c.b16 %v1427, %v1426
    %v1443 = vpack.c.b16 %v1429, %v1428
    %v1444 = vpack.c.b16 %v1431, %v1430
    %v1445 = vpack.c.b16 %v1433, %v1432
    %v1446 = vpack.c.b16 %v1435, %v1434
    %v1447 = vpack.c.b16 %v1437, %v1436
    %v1448 = vpack.c.b16 %v1439, %v1438
    %v1449 = vpack.c.b16 %v1441, %v1440
    %1458 = vmatpush.bf16.msra.mxu0 %v1449
    %1459 = vmatpush.bf16.msra.mxu0 %v1448
    %1460 = vmatpush.bf16.msra.mxu0 %v1447
    %1461 = vmatpush.bf16.msra.mxu0 %v1446
    %1462 = vmatpush.bf16.msra.mxu0 %v1445
    %1463 = vmatpush.bf16.msra.mxu0 %v1444
    %1464 = vmatpush.bf16.msra.mxu0 %v1443
    %1465 = vmatpush.bf16.msra.mxu0 %v1442
    %1466 = vmatmul.bf16.gmra.mxu0 %v1389
    %v1467 = vpop.f32.mrf.mxu0
    %v1468 = vadd.f32 %v1408, %v1467
    %v1469 = vpop.f32.mrf.mxu0
    %1470 = vdwg.mxu0
    %v1471 = vmax.f32 %v1468, 0.0
    %v1472 = vld [vmem:[#allocation7] sm:$0xff]
    %v1473 = vld [vmem:[#allocation19] sm:$0xff]
    %v1474 = vld [vmem:[#allocation19 + $0x8] sm:$0xff]
    %v1475 = vld [vmem:[#allocation19 + $0x10] sm:$0xff]
    %v1476 = vld [vmem:[#allocation19 + $0x18] sm:$0xff]
    %v1477 = vld [vmem:[#allocation19 + $0x20] sm:$0xff]
    %v1478 = vld [vmem:[#allocation19 + $0x28] sm:$0xff]
    %v1479 = vld [vmem:[#allocation19 + $0x30] sm:$0xff]
    %v1480 = vld [vmem:[#allocation19 + $0x38] sm:$0xff]
    %v1481 = vld [vmem:[#allocation19 + $0x40] sm:$0xff]
    %v1482 = vld [vmem:[#allocation19 + $0x48] sm:$0xff]
    %v1483 = vld [vmem:[#allocation19 + $0x50] sm:$0xff]
    %v1484 = vld [vmem:[#allocation19 + $0x58] sm:$0xff]
    %v1485 = vld [vmem:[#allocation19 + $0x60] sm:$0xff]
    %v1486 = vld [vmem:[#allocation19 + $0x68] sm:$0xff]
    %v1487 = vld [vmem:[#allocation19 + $0x70] sm:$0xff]
    %v1488 = vld [vmem:[#allocation19 + $0x78] sm:$0xff]
    %v1489 = vld [vmem:[#allocation19 + $0x80] sm:$0xff]
    %v1490 = vld [vmem:[#allocation19 + $0x88] sm:$0xff]
    %v1491 = vld [vmem:[#allocation19 + $0x90] sm:$0xff]
    %v1492 = vld [vmem:[#allocation19 + $0x98] sm:$0xff]
    %v1493 = vld [vmem:[#allocation19 + $0xa0] sm:$0xff]
    %v1494 = vld [vmem:[#allocation19 + $0xa8] sm:$0xff]
    %v1495 = vld [vmem:[#allocation19 + $0xb0] sm:$0xff]
    %v1496 = vld [vmem:[#allocation19 + $0xb8] sm:$0xff]
    %v1497 = vld [vmem:[#allocation19 + $0xc0] sm:$0xff]
    %v1498 = vld [vmem:[#allocation19 + $0xc8] sm:$0xff]
    %v1499 = vld [vmem:[#allocation19 + $0xd0] sm:$0xff]
    %v1500 = vld [vmem:[#allocation19 + $0xd8] sm:$0xff]
    %v1501 = vld [vmem:[#allocation19 + $0xe0] sm:$0xff]
    %v1502 = vld [vmem:[#allocation19 + $0xe8] sm:$0xff]
    %v1503 = vld [vmem:[#allocation19 + $0xf0] sm:$0xff]
    %v1504 = vld [vmem:[#allocation19 + $0xf8] sm:$0xff]
    %v1505 = vld [vmem:[#allocation19 + $0x100] sm:$0xff]
    %v1506 = vld [vmem:[#allocation19 + $0x108] sm:$0xff]
    %v1507 = vld [vmem:[#allocation19 + $0x110] sm:$0xff]
    %v1508 = vld [vmem:[#allocation19 + $0x118] sm:$0xff]
    %v1509 = vld [vmem:[#allocation19 + $0x120] sm:$0xff]
    %v1510 = vld [vmem:[#allocation19 + $0x128] sm:$0xff]
    %v1511 = vld [vmem:[#allocation19 + $0x130] sm:$0xff]
    %v1512 = vld [vmem:[#allocation19 + $0x138] sm:$0xff]
    %v1513 = vld [vmem:[#allocation19 + $0x140] sm:$0xff]
    %v1514 = vld [vmem:[#allocation19 + $0x148] sm:$0xff]
    %v1515 = vld [vmem:[#allocation19 + $0x150] sm:$0xff]
    %v1516 = vld [vmem:[#allocation19 + $0x158] sm:$0xff]
    %v1517 = vld [vmem:[#allocation19 + $0x160] sm:$0xff]
    %v1518 = vld [vmem:[#allocation19 + $0x168] sm:$0xff]
    %v1519 = vld [vmem:[#allocation19 + $0x170] sm:$0xff]
    %v1520 = vld [vmem:[#allocation19 + $0x178] sm:$0xff]
    %v1521 = vld [vmem:[#allocation19 + $0x180] sm:$0xff]
    %v1522 = vld [vmem:[#allocation19 + $0x188] sm:$0xff]
    %v1523 = vld [vmem:[#allocation19 + $0x190] sm:$0xff]
    %v1524 = vld [vmem:[#allocation19 + $0x198] sm:$0xff]
    %v1525 = vld [vmem:[#allocation19 + $0x1a0] sm:$0xff]
    %v1526 = vld [vmem:[#allocation19 + $0x1a8] sm:$0xff]
    %v1527 = vld [vmem:[#allocation19 + $0x1b0] sm:$0xff]
    %v1528 = vld [vmem:[#allocation19 + $0x1b8] sm:$0xff]
    %v1529 = vld [vmem:[#allocation19 + $0x1c0] sm:$0xff]
    %v1530 = vld [vmem:[#allocation19 + $0x1c8] sm:$0xff]
    %v1531 = vld [vmem:[#allocation19 + $0x1d0] sm:$0xff]
    %v1532 = vld [vmem:[#allocation19 + $0x1d8] sm:$0xff]
    %v1533 = vld [vmem:[#allocation19 + $0x1e0] sm:$0xff]
    %v1534 = vld [vmem:[#allocation19 + $0x1e8] sm:$0xff]
    %v1535 = vld [vmem:[#allocation19 + $0x1f0] sm:$0xff]
    %v1536 = vld [vmem:[#allocation19 + $0x1f8] sm:$0xff]
    %v1537 = vld [vmem:[%s25] sm:$0xf]
    %v1539 = vperm.slane %v1537, 0
    %v1540 = vperm.slane %v1537, 1
    %v1541 = vperm.slane %v1537, 2
    %v1542 = vperm.slane %v1537, 3
    %v1548 = vunpack.c.l.b16 %v1472
    %v1549 = vunpack.c.h.b16 %v1472
    %v1550 = vpack.c.b16 %v1548, %v1548
    %v1551 = vpack.c.b16 %v1549, %v1549
    %v1618 = vunpack.c.l.b16 %v1473
    %v1619 = vunpack.c.h.b16 %v1473
    %v1620 = vunpack.c.l.b16 %v1474
    %v1621 = vunpack.c.h.b16 %v1474
    %v1622 = vunpack.c.l.b16 %v1475
    %v1623 = vunpack.c.h.b16 %v1475
    %v1624 = vunpack.c.l.b16 %v1476
    %v1625 = vunpack.c.h.b16 %v1476
    %v1626 = vunpack.c.l.b16 %v1477
    %v1627 = vunpack.c.h.b16 %v1477
    %v1628 = vunpack.c.l.b16 %v1478
    %v1629 = vunpack.c.h.b16 %v1478
    %v1630 = vunpack.c.l.b16 %v1479
    %v1631 = vunpack.c.h.b16 %v1479
    %v1632 = vunpack.c.l.b16 %v1480
    %v1633 = vunpack.c.h.b16 %v1480
    %v1634 = vunpack.c.l.b16 %v1481
    %v1635 = vunpack.c.h.b16 %v1481
    %v1636 = vunpack.c.l.b16 %v1482
    %v1637 = vunpack.c.h.b16 %v1482
    %v1638 = vunpack.c.l.b16 %v1483
    %v1639 = vunpack.c.h.b16 %v1483
    %v1640 = vunpack.c.l.b16 %v1484
    %v1641 = vunpack.c.h.b16 %v1484
    %v1642 = vunpack.c.l.b16 %v1485
    %v1643 = vunpack.c.h.b16 %v1485
    %v1644 = vunpack.c.l.b16 %v1486
    %v1645 = vunpack.c.h.b16 %v1486
    %v1646 = vunpack.c.l.b16 %v1487
    %v1647 = vunpack.c.h.b16 %v1487
    %v1648 = vunpack.c.l.b16 %v1488
    %v1649 = vunpack.c.h.b16 %v1488
    %v1650 = vunpack.c.l.b16 %v1489
    %v1651 = vunpack.c.h.b16 %v1489
    %v1652 = vunpack.c.l.b16 %v1490
    %v1653 = vunpack.c.h.b16 %v1490
    %v1654 = vunpack.c.l.b16 %v1491
    %v1655 = vunpack.c.h.b16 %v1491
    %v1656 = vunpack.c.l.b16 %v1492
    %v1657 = vunpack.c.h.b16 %v1492
    %v1658 = vunpack.c.l.b16 %v1493
    %v1659 = vunpack.c.h.b16 %v1493
    %v1660 = vunpack.c.l.b16 %v1494
    %v1661 = vunpack.c.h.b16 %v1494
    %v1662 = vunpack.c.l.b16 %v1495
    %v1663 = vunpack.c.h.b16 %v1495
    %v1664 = vunpack.c.l.b16 %v1496
    %v1665 = vunpack.c.h.b16 %v1496
    %v1666 = vunpack.c.l.b16 %v1497
    %v1667 = vunpack.c.h.b16 %v1497
    %v1668 = vunpack.c.l.b16 %v1498
    %v1669 = vunpack.c.h.b16 %v1498
    %v1670 = vunpack.c.l.b16 %v1499
    %v1671 = vunpack.c.h.b16 %v1499
    %v1672 = vunpack.c.l.b16 %v1500
    %v1673 = vunpack.c.h.b16 %v1500
    %v1674 = vunpack.c.l.b16 %v1501
    %v1675 = vunpack.c.h.b16 %v1501
    %v1676 = vunpack.c.l.b16 %v1502
    %v1677 = vunpack.c.h.b16 %v1502
    %v1678 = vunpack.c.l.b16 %v1503
    %v1679 = vunpack.c.h.b16 %v1503
    %v1680 = vunpack.c.l.b16 %v1504
    %v1681 = vunpack.c.h.b16 %v1504
    %v1682 = vunpack.c.l.b16 %v1505
    %v1683 = vunpack.c.h.b16 %v1505
    %v1684 = vunpack.c.l.b16 %v1506
    %v1685 = vunpack.c.h.b16 %v1506
    %v1686 = vunpack.c.l.b16 %v1507
    %v1687 = vunpack.c.h.b16 %v1507
    %v1688 = vunpack.c.l.b16 %v1508
    %v1689 = vunpack.c.h.b16 %v1508
    %v1690 = vunpack.c.l.b16 %v1509
    %v1691 = vunpack.c.h.b16 %v1509
    %v1692 = vunpack.c.l.b16 %v1510
    %v1693 = vunpack.c.h.b16 %v1510
    %v1694 = vunpack.c.l.b16 %v1511
    %v1695 = vunpack.c.h.b16 %v1511
    %v1696 = vunpack.c.l.b16 %v1512
    %v1697 = vunpack.c.h.b16 %v1512
    %v1698 = vunpack.c.l.b16 %v1513
    %v1699 = vunpack.c.h.b16 %v1513
    %v1700 = vunpack.c.l.b16 %v1514
    %v1701 = vunpack.c.h.b16 %v1514
    %v1702 = vunpack.c.l.b16 %v1515
    %v1703 = vunpack.c.h.b16 %v1515
    %v1704 = vunpack.c.l.b16 %v1516
    %v1705 = vunpack.c.h.b16 %v1516
    %v1706 = vunpack.c.l.b16 %v1517
    %v1707 = vunpack.c.h.b16 %v1517
    %v1708 = vunpack.c.l.b16 %v1518
    %v1709 = vunpack.c.h.b16 %v1518
    %v1710 = vunpack.c.l.b16 %v1519
    %v1711 = vunpack.c.h.b16 %v1519
    %v1712 = vunpack.c.l.b16 %v1520
    %v1713 = vunpack.c.h.b16 %v1520
    %v1714 = vunpack.c.l.b16 %v1521
    %v1715 = vunpack.c.h.b16 %v1521
    %v1716 = vunpack.c.l.b16 %v1522
    %v1717 = vunpack.c.h.b16 %v1522
    %v1718 = vunpack.c.l.b16 %v1523
    %v1719 = vunpack.c.h.b16 %v1523
    %v1720 = vunpack.c.l.b16 %v1524
    %v1721 = vunpack.c.h.b16 %v1524
    %v1722 = vunpack.c.l.b16 %v1525
    %v1723 = vunpack.c.h.b16 %v1525
    %v1724 = vunpack.c.l.b16 %v1526
    %v1725 = vunpack.c.h.b16 %v1526
    %v1726 = vunpack.c.l.b16 %v1527
    %v1727 = vunpack.c.h.b16 %v1527
    %v1728 = vunpack.c.l.b16 %v1528
    %v1729 = vunpack.c.h.b16 %v1528
    %v1730 = vunpack.c.l.b16 %v1529
    %v1731 = vunpack.c.h.b16 %v1529
    %v1732 = vunpack.c.l.b16 %v1530
    %v1733 = vunpack.c.h.b16 %v1530
    %v1734 = vunpack.c.l.b16 %v1531
    %v1735 = vunpack.c.h.b16 %v1531
    %v1736 = vunpack.c.l.b16 %v1532
    %v1737 = vunpack.c.h.b16 %v1532
    %v1738 = vunpack.c.l.b16 %v1533
    %v1739 = vunpack.c.h.b16 %v1533
    %v1740 = vunpack.c.l.b16 %v1534
    %v1741 = vunpack.c.h.b16 %v1534
    %v1742 = vunpack.c.l.b16 %v1535
    %v1743 = vunpack.c.h.b16 %v1535
    %v1744 = vunpack.c.l.b16 %v1536
    %v1745 = vunpack.c.h.b16 %v1536
    %v1746 = vpack.c.b16 %v1622, %v1618
    %v1747 = vpack.c.b16 %v1623, %v1619
    %v1748 = vpack.c.b16 %v1624, %v1620
    %v1749 = vpack.c.b16 %v1625, %v1621
    %v1750 = vpack.c.b16 %v1630, %v1626
    %v1751 = vpack.c.b16 %v1631, %v1627
    %v1752 = vpack.c.b16 %v1632, %v1628
    %v1753 = vpack.c.b16 %v1633, %v1629
    %v1754 = vpack.c.b16 %v1638, %v1634
    %v1755 = vpack.c.b16 %v1639, %v1635
    %v1756 = vpack.c.b16 %v1640, %v1636
    %v1757 = vpack.c.b16 %v1641, %v1637
    %v1758 = vpack.c.b16 %v1646, %v1642
    %v1759 = vpack.c.b16 %v1647, %v1643
    %v1760 = vpack.c.b16 %v1648, %v1644
    %v1761 = vpack.c.b16 %v1649, %v1645
    %v1762 = vpack.c.b16 %v1654, %v1650
    %v1763 = vpack.c.b16 %v1655, %v1651
    %v1764 = vpack.c.b16 %v1656, %v1652
    %v1765 = vpack.c.b16 %v1657, %v1653
    %v1766 = vpack.c.b16 %v1662, %v1658
    %v1767 = vpack.c.b16 %v1663, %v1659
    %v1768 = vpack.c.b16 %v1664, %v1660
    %v1769 = vpack.c.b16 %v1665, %v1661
    %v1770 = vpack.c.b16 %v1670, %v1666
    %v1771 = vpack.c.b16 %v1671, %v1667
    %v1772 = vpack.c.b16 %v1672, %v1668
    %v1773 = vpack.c.b16 %v1673, %v1669
    %v1774 = vpack.c.b16 %v1678, %v1674
    %v1775 = vpack.c.b16 %v1679, %v1675
    %v1776 = vpack.c.b16 %v1680, %v1676
    %v1777 = vpack.c.b16 %v1681, %v1677
    %v1778 = vpack.c.b16 %v1686, %v1682
    %v1779 = vpack.c.b16 %v1687, %v1683
    %v1780 = vpack.c.b16 %v1688, %v1684
    %v1781 = vpack.c.b16 %v1689, %v1685
    %v1782 = vpack.c.b16 %v1694, %v1690
    %v1783 = vpack.c.b16 %v1695, %v1691
    %v1784 = vpack.c.b16 %v1696, %v1692
    %v1785 = vpack.c.b16 %v1697, %v1693
    %v1786 = vpack.c.b16 %v1702, %v1698
    %v1787 = vpack.c.b16 %v1703, %v1699
    %v1788 = vpack.c.b16 %v1704, %v1700
    %v1789 = vpack.c.b16 %v1705, %v1701
    %v1790 = vpack.c.b16 %v1710, %v1706
    %v1791 = vpack.c.b16 %v1711, %v1707
    %v1792 = vpack.c.b16 %v1712, %v1708
    %v1793 = vpack.c.b16 %v1713, %v1709
    %v1794 = vpack.c.b16 %v1718, %v1714
    %v1795 = vpack.c.b16 %v1719, %v1715
    %v1796 = vpack.c.b16 %v1720, %v1716
    %v1797 = vpack.c.b16 %v1721, %v1717
    %v1798 = vpack.c.b16 %v1726, %v1722
    %v1799 = vpack.c.b16 %v1727, %v1723
    %v1800 = vpack.c.b16 %v1728, %v1724
    %v1801 = vpack.c.b16 %v1729, %v1725
    %v1802 = vpack.c.b16 %v1734, %v1730
    %v1803 = vpack.c.b16 %v1735, %v1731
    %v1804 = vpack.c.b16 %v1736, %v1732
    %v1805 = vpack.c.b16 %v1737, %v1733
    %v1806 = vpack.c.b16 %v1742, %v1738
    %v1807 = vpack.c.b16 %v1743, %v1739
    %v1808 = vpack.c.b16 %v1744, %v1740
    %v1809 = vpack.c.b16 %v1745, %v1741
    %1874 = vmatpush.bf16.msra.mxu0 %v1774
    %1875 = vmatpush.bf16.msra.mxu0 %v1770
    %1876 = vmatpush.bf16.msra.mxu0 %v1766
    %1877 = vmatpush.bf16.msra.mxu0 %v1762
    %1878 = vmatpush.bf16.msra.mxu0 %v1758
    %1879 = vmatpush.bf16.msra.mxu0 %v1754
    %1880 = vmatpush.bf16.msra.mxu0 %v1750
    %1881 = vmatpush.bf16.msra.mxu0 %v1746
    %1882 = vmatmul.bf16.gmra.mxu0 %v1550
    %v1883 = vpop.f32.mrf.mxu0
    %v1884 = vadd.f32 %v1539, %v1883
    %v1885 = vpop.f32.mrf.mxu0
    %1886 = vdwg.mxu0
    %1887 = vmatpush.bf16.msra.mxu0 %v1806
    %1888 = vmatpush.bf16.msra.mxu0 %v1802
    %1889 = vmatpush.bf16.msra.mxu0 %v1798
    %1890 = vmatpush.bf16.msra.mxu0 %v1794
    %1891 = vmatpush.bf16.msra.mxu0 %v1790
    %1892 = vmatpush.bf16.msra.mxu0 %v1786
    %1893 = vmatpush.bf16.msra.mxu0 %v1782
    %1894 = vmatpush.bf16.msra.mxu0 %v1778
    %1895 = vmatmul.bf16.gmra.mxu0 %v1551
    %v1896 = vpop.f32.mrf.mxu0
    %v1897 = vadd.f32 %v1884, %v1896
    %v1898 = vpop.f32.mrf.mxu0
    %1899 = vdwg.mxu0
    %1900 = vmatpush.bf16.msra.mxu0 %v1775
    %1901 = vmatpush.bf16.msra.mxu0 %v1771
    %1902 = vmatpush.bf16.msra.mxu0 %v1767
    %1903 = vmatpush.bf16.msra.mxu0 %v1763
    %1904 = vmatpush.bf16.msra.mxu0 %v1759
    %1905 = vmatpush.bf16.msra.mxu0 %v1755
    %1906 = vmatpush.bf16.msra.mxu0 %v1751
    %1907 = vmatpush.bf16.msra.mxu0 %v1747
    %1908 = vmatmul.bf16.gmra.mxu0 %v1550
    %v1909 = vpop.f32.mrf.mxu0
    %v1910 = vadd.f32 %v1540, %v1909
    %v1911 = vpop.f32.mrf.mxu0
    %1912 = vdwg.mxu0
    %1913 = vmatpush.bf16.msra.mxu0 %v1807
    %1914 = vmatpush.bf16.msra.mxu0 %v1803
    %1915 = vmatpush.bf16.msra.mxu0 %v1799
    %1916 = vmatpush.bf16.msra.mxu0 %v1795
    %1917 = vmatpush.bf16.msra.mxu0 %v1791
    %1918 = vmatpush.bf16.msra.mxu0 %v1787
    %1919 = vmatpush.bf16.msra.mxu0 %v1783
    %1920 = vmatpush.bf16.msra.mxu0 %v1779
    %1921 = vmatmul.bf16.gmra.mxu0 %v1551
    %v1922 = vpop.f32.mrf.mxu0
    %v1923 = vadd.f32 %v1910, %v1922
    %v1924 = vpop.f32.mrf.mxu0
    %1925 = vdwg.mxu0
    %1926 = vmatpush.bf16.msra.mxu0 %v1776
    %1927 = vmatpush.bf16.msra.mxu0 %v1772
    %1928 = vmatpush.bf16.msra.mxu0 %v1768
    %1929 = vmatpush.bf16.msra.mxu0 %v1764
    %1930 = vmatpush.bf16.msra.mxu0 %v1760
    %1931 = vmatpush.bf16.msra.mxu0 %v1756
    %1932 = vmatpush.bf16.msra.mxu0 %v1752
    %1933 = vmatpush.bf16.msra.mxu0 %v1748
    %1934 = vmatmul.bf16.gmra.mxu0 %v1550
    %v1935 = vpop.f32.mrf.mxu0
    %v1936 = vadd.f32 %v1541, %v1935
    %v1937 = vpop.f32.mrf.mxu0
    %1938 = vdwg.mxu0
    %1939 = vmatpush.bf16.msra.mxu0 %v1808
    %1940 = vmatpush.bf16.msra.mxu0 %v1804
    %1941 = vmatpush.bf16.msra.mxu0 %v1800
    %1942 = vmatpush.bf16.msra.mxu0 %v1796
    %1943 = vmatpush.bf16.msra.mxu0 %v1792
    %1944 = vmatpush.bf16.msra.mxu0 %v1788
    %1945 = vmatpush.bf16.msra.mxu0 %v1784
    %1946 = vmatpush.bf16.msra.mxu0 %v1780
    %1947 = vmatmul.bf16.gmra.mxu0 %v1551
    %v1948 = vpop.f32.mrf.mxu0
    %v1949 = vadd.f32 %v1936, %v1948
    %v1950 = vpop.f32.mrf.mxu0
    %1951 = vdwg.mxu0
    %1952 = vmatpush.bf16.msra.mxu0 %v1777
    %1953 = vmatpush.bf16.msra.mxu0 %v1773
    %1954 = vmatpush.bf16.msra.mxu0 %v1769
    %1955 = vmatpush.bf16.msra.mxu0 %v1765
    %1956 = vmatpush.bf16.msra.mxu0 %v1761
    %1957 = vmatpush.bf16.msra.mxu0 %v1757
    %1958 = vmatpush.bf16.msra.mxu0 %v1753
    %1959 = vmatpush.bf16.msra.mxu0 %v1749
    %1960 = vmatmul.bf16.gmra.mxu0 %v1550
    %v1961 = vpop.f32.mrf.mxu0
    %v1962 = vadd.f32 %v1542, %v1961
    %v1963 = vpop.f32.mrf.mxu0
    %1964 = vdwg.mxu0
    %1965 = vmatpush.bf16.msra.mxu0 %v1809
    %1966 = vmatpush.bf16.msra.mxu0 %v1805
    %1967 = vmatpush.bf16.msra.mxu0 %v1801
    %1968 = vmatpush.bf16.msra.mxu0 %v1797
    %1969 = vmatpush.bf16.msra.mxu0 %v1793
    %1970 = vmatpush.bf16.msra.mxu0 %v1789
    %1971 = vmatpush.bf16.msra.mxu0 %v1785
    %1972 = vmatpush.bf16.msra.mxu0 %v1781
    %1973 = vmatmul.bf16.gmra.mxu0 %v1551
    %v1974 = vpop.f32.mrf.mxu0
    %v1975 = vadd.f32 %v1962, %v1974
    %v1976 = vpop.f32.mrf.mxu0
    %1977 = vdwg.mxu0
    %v1978 = vmax.f32 %v1897, 0.0
    %v1979 = vmax.f32 %v1923, 0.0
    %v1980 = vmax.f32 %v1949, 0.0
    %v1981 = vmax.f32 %v1975, 0.0
    %v1982 = vpack.c.bf16 %v1978, %v1978
    %v1983 = vpack.c.bf16 %v1979, %v1979
    %v1984 = vpack.c.bf16 %v1980, %v1980
    %v1985 = vpack.c.bf16 %v1981, %v1981
    %v1986 = vld [vmem:[#allocation20] sm:$0xff]
    %v1987 = vld [vmem:[#allocation20 + $0x8] sm:$0xff]
    %v1988 = vld [vmem:[#allocation20 + $0x10] sm:$0xff]
    %v1989 = vld [vmem:[#allocation20 + $0x18] sm:$0xff]
    %v1990 = vld [vmem:[#allocation20 + $0x20] sm:$0xff]
    %v1991 = vld [vmem:[#allocation20 + $0x28] sm:$0xff]
    %v1992 = vld [vmem:[#allocation20 + $0x30] sm:$0xff]
    %v1993 = vld [vmem:[#allocation20 + $0x38] sm:$0xff]
    %v1994 = vld [vmem:[#allocation20 + $0x40] sm:$0xff]
    %v1995 = vld [vmem:[#allocation20 + $0x48] sm:$0xff]
    %v1996 = vld [vmem:[#allocation20 + $0x50] sm:$0xff]
    %v1997 = vld [vmem:[#allocation20 + $0x58] sm:$0xff]
    %v1998 = vld [vmem:[#allocation20 + $0x60] sm:$0xff]
    %v1999 = vld [vmem:[#allocation20 + $0x68] sm:$0xff]
    %v2000 = vld [vmem:[#allocation20 + $0x70] sm:$0xff]
    %v2001 = vld [vmem:[#allocation20 + $0x78] sm:$0xff]
    %v2002 = vld [vmem:[#allocation20 + $0x80] sm:$0xff]
    %v2003 = vld [vmem:[#allocation20 + $0x88] sm:$0xff]
    %v2004 = vld [vmem:[#allocation20 + $0x90] sm:$0xff]
    %v2005 = vld [vmem:[#allocation20 + $0x98] sm:$0xff]
    %v2006 = vld [vmem:[#allocation20 + $0xa0] sm:$0xff]
    %v2007 = vld [vmem:[#allocation20 + $0xa8] sm:$0xff]
    %v2008 = vld [vmem:[#allocation20 + $0xb0] sm:$0xff]
    %v2009 = vld [vmem:[#allocation20 + $0xb8] sm:$0xff]
    %v2010 = vld [vmem:[#allocation20 + $0xc0] sm:$0xff]
    %v2011 = vld [vmem:[#allocation20 + $0xc8] sm:$0xff]
    %v2012 = vld [vmem:[#allocation20 + $0xd0] sm:$0xff]
    %v2013 = vld [vmem:[#allocation20 + $0xd8] sm:$0xff]
    %v2014 = vld [vmem:[#allocation20 + $0xe0] sm:$0xff]
    %v2015 = vld [vmem:[#allocation20 + $0xe8] sm:$0xff]
    %v2016 = vld [vmem:[#allocation20 + $0xf0] sm:$0xff]
    %v2017 = vld [vmem:[#allocation20 + $0xf8] sm:$0xff]
    %v2018 = vld [vmem:[#allocation20 + $0x100] sm:$0xff]
    %v2019 = vld [vmem:[#allocation20 + $0x108] sm:$0xff]
    %v2020 = vld [vmem:[#allocation20 + $0x110] sm:$0xff]
    %v2021 = vld [vmem:[#allocation20 + $0x118] sm:$0xff]
    %v2022 = vld [vmem:[#allocation20 + $0x120] sm:$0xff]
    %v2023 = vld [vmem:[#allocation20 + $0x128] sm:$0xff]
    %v2024 = vld [vmem:[#allocation20 + $0x130] sm:$0xff]
    %v2025 = vld [vmem:[#allocation20 + $0x138] sm:$0xff]
    %v2026 = vld [vmem:[#allocation20 + $0x140] sm:$0xff]
    %v2027 = vld [vmem:[#allocation20 + $0x148] sm:$0xff]
    %v2028 = vld [vmem:[#allocation20 + $0x150] sm:$0xff]
    %v2029 = vld [vmem:[#allocation20 + $0x158] sm:$0xff]
    %v2030 = vld [vmem:[#allocation20 + $0x160] sm:$0xff]
    %v2031 = vld [vmem:[#allocation20 + $0x168] sm:$0xff]
    %v2032 = vld [vmem:[#allocation20 + $0x170] sm:$0xff]
    %v2033 = vld [vmem:[#allocation20 + $0x178] sm:$0xff]
    %v2034 = vld [vmem:[#allocation20 + $0x180] sm:$0xff]
    %v2035 = vld [vmem:[#allocation20 + $0x188] sm:$0xff]
    %v2036 = vld [vmem:[#allocation20 + $0x190] sm:$0xff]
    %v2037 = vld [vmem:[#allocation20 + $0x198] sm:$0xff]
    %v2038 = vld [vmem:[#allocation20 + $0x1a0] sm:$0xff]
    %v2039 = vld [vmem:[#allocation20 + $0x1a8] sm:$0xff]
    %v2040 = vld [vmem:[#allocation20 + $0x1b0] sm:$0xff]
    %v2041 = vld [vmem:[#allocation20 + $0x1b8] sm:$0xff]
    %v2042 = vld [vmem:[#allocation20 + $0x1c0] sm:$0xff]
    %v2043 = vld [vmem:[#allocation20 + $0x1c8] sm:$0xff]
    %v2044 = vld [vmem:[#allocation20 + $0x1d0] sm:$0xff]
    %v2045 = vld [vmem:[#allocation20 + $0x1d8] sm:$0xff]
    %v2046 = vld [vmem:[#allocation20 + $0x1e0] sm:$0xff]
    %v2047 = vld [vmem:[#allocation20 + $0x1e8] sm:$0xff]
    %v2048 = vld [vmem:[#allocation20 + $0x1f0] sm:$0xff]
    %v2049 = vld [vmem:[#allocation20 + $0x1f8] sm:$0xff]
    %v2050 = vld [vmem:[%s29] sm:$0x3]
    %v2052 = vperm.slane %v2050, 0
    %v2053 = vperm.slane %v2050, 1
    %v2120 = vunpack.c.l.b16 %v1986
    %v2121 = vunpack.c.h.b16 %v1986
    %v2122 = vunpack.c.l.b16 %v1987
    %v2123 = vunpack.c.h.b16 %v1987
    %v2124 = vunpack.c.l.b16 %v1988
    %v2125 = vunpack.c.h.b16 %v1988
    %v2126 = vunpack.c.l.b16 %v1989
    %v2127 = vunpack.c.h.b16 %v1989
    %v2128 = vunpack.c.l.b16 %v1990
    %v2129 = vunpack.c.h.b16 %v1990
    %v2130 = vunpack.c.l.b16 %v1991
    %v2131 = vunpack.c.h.b16 %v1991
    %v2132 = vunpack.c.l.b16 %v1992
    %v2133 = vunpack.c.h.b16 %v1992
    %v2134 = vunpack.c.l.b16 %v1993
    %v2135 = vunpack.c.h.b16 %v1993
    %v2136 = vunpack.c.l.b16 %v1994
    %v2137 = vunpack.c.h.b16 %v1994
    %v2138 = vunpack.c.l.b16 %v1995
    %v2139 = vunpack.c.h.b16 %v1995
    %v2140 = vunpack.c.l.b16 %v1996
    %v2141 = vunpack.c.h.b16 %v1996
    %v2142 = vunpack.c.l.b16 %v1997
    %v2143 = vunpack.c.h.b16 %v1997
    %v2144 = vunpack.c.l.b16 %v1998
    %v2145 = vunpack.c.h.b16 %v1998
    %v2146 = vunpack.c.l.b16 %v1999
    %v2147 = vunpack.c.h.b16 %v1999
    %v2148 = vunpack.c.l.b16 %v2000
    %v2149 = vunpack.c.h.b16 %v2000
    %v2150 = vunpack.c.l.b16 %v2001
    %v2151 = vunpack.c.h.b16 %v2001
    %v2152 = vunpack.c.l.b16 %v2002
    %v2153 = vunpack.c.h.b16 %v2002
    %v2154 = vunpack.c.l.b16 %v2003
    %v2155 = vunpack.c.h.b16 %v2003
    %v2156 = vunpack.c.l.b16 %v2004
    %v2157 = vunpack.c.h.b16 %v2004
    %v2158 = vunpack.c.l.b16 %v2005
    %v2159 = vunpack.c.h.b16 %v2005
    %v2160 = vunpack.c.l.b16 %v2006
    %v2161 = vunpack.c.h.b16 %v2006
    %v2162 = vunpack.c.l.b16 %v2007
    %v2163 = vunpack.c.h.b16 %v2007
    %v2164 = vunpack.c.l.b16 %v2008
    %v2165 = vunpack.c.h.b16 %v2008
    %v2166 = vunpack.c.l.b16 %v2009
    %v2167 = vunpack.c.h.b16 %v2009
    %v2168 = vunpack.c.l.b16 %v2010
    %v2169 = vunpack.c.h.b16 %v2010
    %v2170 = vunpack.c.l.b16 %v2011
    %v2171 = vunpack.c.h.b16 %v2011
    %v2172 = vunpack.c.l.b16 %v2012
    %v2173 = vunpack.c.h.b16 %v2012
    %v2174 = vunpack.c.l.b16 %v2013
    %v2175 = vunpack.c.h.b16 %v2013
    %v2176 = vunpack.c.l.b16 %v2014
    %v2177 = vunpack.c.h.b16 %v2014
    %v2178 = vunpack.c.l.b16 %v2015
    %v2179 = vunpack.c.h.b16 %v2015
    %v2180 = vunpack.c.l.b16 %v2016
    %v2181 = vunpack.c.h.b16 %v2016
    %v2182 = vunpack.c.l.b16 %v2017
    %v2183 = vunpack.c.h.b16 %v2017
    %v2184 = vunpack.c.l.b16 %v2018
    %v2185 = vunpack.c.h.b16 %v2018
    %v2186 = vunpack.c.l.b16 %v2019
    %v2187 = vunpack.c.h.b16 %v2019
    %v2188 = vunpack.c.l.b16 %v2020
    %v2189 = vunpack.c.h.b16 %v2020
    %v2190 = vunpack.c.l.b16 %v2021
    %v2191 = vunpack.c.h.b16 %v2021
    %v2192 = vunpack.c.l.b16 %v2022
    %v2193 = vunpack.c.h.b16 %v2022
    %v2194 = vunpack.c.l.b16 %v2023
    %v2195 = vunpack.c.h.b16 %v2023
    %v2196 = vunpack.c.l.b16 %v2024
    %v2197 = vunpack.c.h.b16 %v2024
    %v2198 = vunpack.c.l.b16 %v2025
    %v2199 = vunpack.c.h.b16 %v2025
    %v2200 = vunpack.c.l.b16 %v2026
    %v2201 = vunpack.c.h.b16 %v2026
    %v2202 = vunpack.c.l.b16 %v2027
    %v2203 = vunpack.c.h.b16 %v2027
    %v2204 = vunpack.c.l.b16 %v2028
    %v2205 = vunpack.c.h.b16 %v2028
    %v2206 = vunpack.c.l.b16 %v2029
    %v2207 = vunpack.c.h.b16 %v2029
    %v2208 = vunpack.c.l.b16 %v2030
    %v2209 = vunpack.c.h.b16 %v2030
    %v2210 = vunpack.c.l.b16 %v2031
    %v2211 = vunpack.c.h.b16 %v2031
    %v2212 = vunpack.c.l.b16 %v2032
    %v2213 = vunpack.c.h.b16 %v2032
    %v2214 = vunpack.c.l.b16 %v2033
    %v2215 = vunpack.c.h.b16 %v2033
    %v2216 = vunpack.c.l.b16 %v2034
    %v2217 = vunpack.c.h.b16 %v2034
    %v2218 = vunpack.c.l.b16 %v2035
    %v2219 = vunpack.c.h.b16 %v2035
    %v2220 = vunpack.c.l.b16 %v2036
    %v2221 = vunpack.c.h.b16 %v2036
    %v2222 = vunpack.c.l.b16 %v2037
    %v2223 = vunpack.c.h.b16 %v2037
    %v2224 = vunpack.c.l.b16 %v2038
    %v2225 = vunpack.c.h.b16 %v2038
    %v2226 = vunpack.c.l.b16 %v2039
    %v2227 = vunpack.c.h.b16 %v2039
    %v2228 = vunpack.c.l.b16 %v2040
    %v2229 = vunpack.c.h.b16 %v2040
    %v2230 = vunpack.c.l.b16 %v2041
    %v2231 = vunpack.c.h.b16 %v2041
    %v2232 = vunpack.c.l.b16 %v2042
    %v2233 = vunpack.c.h.b16 %v2042
    %v2234 = vunpack.c.l.b16 %v2043
    %v2235 = vunpack.c.h.b16 %v2043
    %v2236 = vunpack.c.l.b16 %v2044
    %v2237 = vunpack.c.h.b16 %v2044
    %v2238 = vunpack.c.l.b16 %v2045
    %v2239 = vunpack.c.h.b16 %v2045
    %v2240 = vunpack.c.l.b16 %v2046
    %v2241 = vunpack.c.h.b16 %v2046
    %v2242 = vunpack.c.l.b16 %v2047
    %v2243 = vunpack.c.h.b16 %v2047
    %v2244 = vunpack.c.l.b16 %v2048
    %v2245 = vunpack.c.h.b16 %v2048
    %v2246 = vunpack.c.l.b16 %v2049
    %v2247 = vunpack.c.h.b16 %v2049
    %v2248 = vpack.c.b16 %v2122, %v2120
    %v2249 = vpack.c.b16 %v2123, %v2121
    %v2250 = vpack.c.b16 %v2126, %v2124
    %v2251 = vpack.c.b16 %v2127, %v2125
    %v2252 = vpack.c.b16 %v2130, %v2128
    %v2253 = vpack.c.b16 %v2131, %v2129
    %v2254 = vpack.c.b16 %v2134, %v2132
    %v2255 = vpack.c.b16 %v2135, %v2133
    %v2256 = vpack.c.b16 %v2138, %v2136
    %v2257 = vpack.c.b16 %v2139, %v2137
    %v2258 = vpack.c.b16 %v2142, %v2140
    %v2259 = vpack.c.b16 %v2143, %v2141
    %v2260 = vpack.c.b16 %v2146, %v2144
    %v2261 = vpack.c.b16 %v2147, %v2145
    %v2262 = vpack.c.b16 %v2150, %v2148
    %v2263 = vpack.c.b16 %v2151, %v2149
    %v2264 = vpack.c.b16 %v2154, %v2152
    %v2265 = vpack.c.b16 %v2155, %v2153
    %v2266 = vpack.c.b16 %v2158, %v2156
    %v2267 = vpack.c.b16 %v2159, %v2157
    %v2268 = vpack.c.b16 %v2162, %v2160
    %v2269 = vpack.c.b16 %v2163, %v2161
    %v2270 = vpack.c.b16 %v2166, %v2164
    %v2271 = vpack.c.b16 %v2167, %v2165
    %v2272 = vpack.c.b16 %v2170, %v2168
    %v2273 = vpack.c.b16 %v2171, %v2169
    %v2274 = vpack.c.b16 %v2174, %v2172
    %v2275 = vpack.c.b16 %v2175, %v2173
    %v2276 = vpack.c.b16 %v2178, %v2176
    %v2277 = vpack.c.b16 %v2179, %v2177
    %v2278 = vpack.c.b16 %v2182, %v2180
    %v2279 = vpack.c.b16 %v2183, %v2181
    %v2280 = vpack.c.b16 %v2186, %v2184
    %v2281 = vpack.c.b16 %v2187, %v2185
    %v2282 = vpack.c.b16 %v2190, %v2188
    %v2283 = vpack.c.b16 %v2191, %v2189
    %v2284 = vpack.c.b16 %v2194, %v2192
    %v2285 = vpack.c.b16 %v2195, %v2193
    %v2286 = vpack.c.b16 %v2198, %v2196
    %v2287 = vpack.c.b16 %v2199, %v2197
    %v2288 = vpack.c.b16 %v2202, %v2200
    %v2289 = vpack.c.b16 %v2203, %v2201
    %v2290 = vpack.c.b16 %v2206, %v2204
    %v2291 = vpack.c.b16 %v2207, %v2205
    %v2292 = vpack.c.b16 %v2210, %v2208
    %v2293 = vpack.c.b16 %v2211, %v2209
    %v2294 = vpack.c.b16 %v2214, %v2212
    %v2295 = vpack.c.b16 %v2215, %v2213
    %v2296 = vpack.c.b16 %v2218, %v2216
    %v2297 = vpack.c.b16 %v2219, %v2217
    %v2298 = vpack.c.b16 %v2222, %v2220
    %v2299 = vpack.c.b16 %v2223, %v2221
    %v2300 = vpack.c.b16 %v2226, %v2224
    %v2301 = vpack.c.b16 %v2227, %v2225
    %v2302 = vpack.c.b16 %v2230, %v2228
    %v2303 = vpack.c.b16 %v2231, %v2229
    %v2304 = vpack.c.b16 %v2234, %v2232
    %v2305 = vpack.c.b16 %v2235, %v2233
    %v2306 = vpack.c.b16 %v2238, %v2236
    %v2307 = vpack.c.b16 %v2239, %v2237
    %v2308 = vpack.c.b16 %v2242, %v2240
    %v2309 = vpack.c.b16 %v2243, %v2241
    %v2310 = vpack.c.b16 %v2246, %v2244
    %v2311 = vpack.c.b16 %v2247, %v2245
    %2376 = vmatpush.bf16.msra.mxu0 %v2262
    %2377 = vmatpush.bf16.msra.mxu0 %v2260
    %2378 = vmatpush.bf16.msra.mxu0 %v2258
    %2379 = vmatpush.bf16.msra.mxu0 %v2256
    %2380 = vmatpush.bf16.msra.mxu0 %v2254
    %2381 = vmatpush.bf16.msra.mxu0 %v2252
    %2382 = vmatpush.bf16.msra.mxu0 %v2250
    %2383 = vmatpush.bf16.msra.mxu0 %v2248
    %2384 = vmatmul.bf16.gmra.mxu0 %v1982
    %v2385 = vpop.f32.mrf.mxu0
    %v2386 = vadd.f32 %v2052, %v2385
    %v2387 = vpop.f32.mrf.mxu0
    %2388 = vdwg.mxu0
    %2389 = vmatpush.bf16.msra.mxu0 %v2278
    %2390 = vmatpush.bf16.msra.mxu0 %v2276
    %2391 = vmatpush.bf16.msra.mxu0 %v2274
    %2392 = vmatpush.bf16.msra.mxu0 %v2272
    %2393 = vmatpush.bf16.msra.mxu0 %v2270
    %2394 = vmatpush.bf16.msra.mxu0 %v2268
    %2395 = vmatpush.bf16.msra.mxu0 %v2266
    %2396 = vmatpush.bf16.msra.mxu0 %v2264
    %2397 = vmatmul.bf16.gmra.mxu0 %v1983
    %v2398 = vpop.f32.mrf.mxu0
    %v2399 = vadd.f32 %v2386, %v2398
    %v2400 = vpop.f32.mrf.mxu0
    %2401 = vdwg.mxu0
    %2402 = vmatpush.bf16.msra.mxu0 %v2294
    %2403 = vmatpush.bf16.msra.mxu0 %v2292
    %2404 = vmatpush.bf16.msra.mxu0 %v2290
    %2405 = vmatpush.bf16.msra.mxu0 %v2288
    %2406 = vmatpush.bf16.msra.mxu0 %v2286
    %2407 = vmatpush.bf16.msra.mxu0 %v2284
    %2408 = vmatpush.bf16.msra.mxu0 %v2282
    %2409 = vmatpush.bf16.msra.mxu0 %v2280
    %2410 = vmatmul.bf16.gmra.mxu0 %v1984
    %v2411 = vpop.f32.mrf.mxu0
    %v2412 = vadd.f32 %v2399, %v2411
    %v2413 = vpop.f32.mrf.mxu0
    %2414 = vdwg.mxu0
    %2415 = vmatpush.bf16.msra.mxu0 %v2310
    %2416 = vmatpush.bf16.msra.mxu0 %v2308
    %2417 = vmatpush.bf16.msra.mxu0 %v2306
    %2418 = vmatpush.bf16.msra.mxu0 %v2304
    %2419 = vmatpush.bf16.msra.mxu0 %v2302
    %2420 = vmatpush.bf16.msra.mxu0 %v2300
    %2421 = vmatpush.bf16.msra.mxu0 %v2298
    %2422 = vmatpush.bf16.msra.mxu0 %v2296
    %2423 = vmatmul.bf16.gmra.mxu0 %v1985
    %v2424 = vpop.f32.mrf.mxu0
    %v2425 = vadd.f32 %v2412, %v2424
    %v2426 = vpop.f32.mrf.mxu0
    %2427 = vdwg.mxu0
    %2428 = vmatpush.bf16.msra.mxu0 %v2263
    %2429 = vmatpush.bf16.msra.mxu0 %v2261
    %2430 = vmatpush.bf16.msra.mxu0 %v2259
    %2431 = vmatpush.bf16.msra.mxu0 %v2257
    %2432 = vmatpush.bf16.msra.mxu0 %v2255
    %2433 = vmatpush.bf16.msra.mxu0 %v2253
    %2434 = vmatpush.bf16.msra.mxu0 %v2251
    %2435 = vmatpush.bf16.msra.mxu0 %v2249
    %2436 = vmatmul.bf16.gmra.mxu0 %v1982
    %v2437 = vpop.f32.mrf.mxu0
    %v2438 = vadd.f32 %v2053, %v2437
    %v2439 = vpop.f32.mrf.mxu0
    %2440 = vdwg.mxu0
    %2441 = vmatpush.bf16.msra.mxu0 %v2279
    %2442 = vmatpush.bf16.msra.mxu0 %v2277
    %2443 = vmatpush.bf16.msra.mxu0 %v2275
    %2444 = vmatpush.bf16.msra.mxu0 %v2273
    %2445 = vmatpush.bf16.msra.mxu0 %v2271
    %2446 = vmatpush.bf16.msra.mxu0 %v2269
    %2447 = vmatpush.bf16.msra.mxu0 %v2267
    %2448 = vmatpush.bf16.msra.mxu0 %v2265
    %2449 = vmatmul.bf16.gmra.mxu0 %v1983
    %v2450 = vpop.f32.mrf.mxu0
    %v2451 = vadd.f32 %v2438, %v2450
    %v2452 = vpop.f32.mrf.mxu0
    %2453 = vdwg.mxu0
    %2454 = vmatpush.bf16.msra.mxu0 %v2295
    %2455 = vmatpush.bf16.msra.mxu0 %v2293
    %2456 = vmatpush.bf16.msra.mxu0 %v2291
    %2457 = vmatpush.bf16.msra.mxu0 %v2289
    %2458 = vmatpush.bf16.msra.mxu0 %v2287
    %2459 = vmatpush.bf16.msra.mxu0 %v2285
    %2460 = vmatpush.bf16.msra.mxu0 %v2283
    %2461 = vmatpush.bf16.msra.mxu0 %v2281
    %2462 = vmatmul.bf16.gmra.mxu0 %v1984
    %v2463 = vpop.f32.mrf.mxu0
    %v2464 = vadd.f32 %v2451, %v2463
    %v2465 = vpop.f32.mrf.mxu0
    %2466 = vdwg.mxu0
    %2467 = vmatpush.bf16.msra.mxu0 %v2311
    %2468 = vmatpush.bf16.msra.mxu0 %v2309
    %2469 = vmatpush.bf16.msra.mxu0 %v2307
    %2470 = vmatpush.bf16.msra.mxu0 %v2305
    %2471 = vmatpush.bf16.msra.mxu0 %v2303
    %2472 = vmatpush.bf16.msra.mxu0 %v2301
    %2473 = vmatpush.bf16.msra.mxu0 %v2299
    %2474 = vmatpush.bf16.msra.mxu0 %v2297
    %2475 = vmatmul.bf16.gmra.mxu0 %v1985
    %v2476 = vpop.f32.mrf.mxu0
    %v2477 = vadd.f32 %v2464, %v2476
    %v2478 = vpop.f32.mrf.mxu0
    %2479 = vdwg.mxu0
    %v2480 = vmax.f32 %v2425, 0.0
    %v2481 = vmax.f32 %v2477, 0.0
    %v2482 = vpack.c.bf16 %v2480, %v2480
    %v2483 = vpack.c.bf16 %v2481, %v2481
    %v2484 = vld [vmem:[#allocation22] sm:$0xf]
    %v2485 = vld [vmem:[#allocation22 + $0x4] sm:$0xf]
    %v2486 = vld [vmem:[#allocation22 + $0x8] sm:$0xf]
    %v2487 = vld [vmem:[#allocation22 + $0xc] sm:$0xf]
    %v2488 = vld [vmem:[#allocation22 + $0x10] sm:$0xf]
    %v2489 = vld [vmem:[#allocation22 + $0x14] sm:$0xf]
    %v2490 = vld [vmem:[#allocation22 + $0x18] sm:$0xf]
    %v2491 = vld [vmem:[#allocation22 + $0x1c] sm:$0xf]
    %v2492 = vld [vmem:[#allocation22 + $0x20] sm:$0xf]
    %v2493 = vld [vmem:[#allocation22 + $0x24] sm:$0xf]
    %v2494 = vld [vmem:[#allocation22 + $0x28] sm:$0xf]
    %v2495 = vld [vmem:[#allocation22 + $0x2c] sm:$0xf]
    %v2496 = vld [vmem:[#allocation22 + $0x30] sm:$0xf]
    %v2497 = vld [vmem:[#allocation22 + $0x34] sm:$0xf]
    %v2498 = vld [vmem:[#allocation22 + $0x38] sm:$0xf]
    %v2499 = vld [vmem:[#allocation22 + $0x3c] sm:$0xf]
    %v2500 = vld [vmem:[#allocation22 + $0x40] sm:$0xf]
    %v2501 = vld [vmem:[#allocation22 + $0x44] sm:$0xf]
    %v2502 = vld [vmem:[#allocation22 + $0x48] sm:$0xf]
    %v2503 = vld [vmem:[#allocation22 + $0x4c] sm:$0xf]
    %v2504 = vld [vmem:[#allocation22 + $0x50] sm:$0xf]
    %v2505 = vld [vmem:[#allocation22 + $0x54] sm:$0xf]
    %v2506 = vld [vmem:[#allocation22 + $0x58] sm:$0xf]
    %v2507 = vld [vmem:[#allocation22 + $0x5c] sm:$0xf]
    %v2508 = vld [vmem:[#allocation22 + $0x60] sm:$0xf]
    %v2509 = vld [vmem:[#allocation22 + $0x64] sm:$0xf]
    %v2510 = vld [vmem:[#allocation22 + $0x68] sm:$0xf]
    %v2511 = vld [vmem:[#allocation22 + $0x6c] sm:$0xf]
    %v2512 = vld [vmem:[#allocation22 + $0x70] sm:$0xf]
    %v2513 = vld [vmem:[#allocation22 + $0x74] sm:$0xf]
    %v2514 = vld [vmem:[#allocation22 + $0x78] sm:$0xf]
    %v2515 = vld [vmem:[#allocation22 + $0x7c] sm:$0xf]
    %v2516 = vld [vmem:[%s33] sm:$0x1]
    %v2518 = vperm.slane %v2516, 0
    %v2552 = vunpack.c.l.b16 %v2484
    %v2553 = vunpack.c.l.b16 %v2485
    %v2554 = vunpack.c.l.b16 %v2486
    %v2555 = vunpack.c.l.b16 %v2487
    %v2556 = vunpack.c.l.b16 %v2488
    %v2557 = vunpack.c.l.b16 %v2489
    %v2558 = vunpack.c.l.b16 %v2490
    %v2559 = vunpack.c.l.b16 %v2491
    %v2560 = vunpack.c.l.b16 %v2492
    %v2561 = vunpack.c.l.b16 %v2493
    %v2562 = vunpack.c.l.b16 %v2494
    %v2563 = vunpack.c.l.b16 %v2495
    %v2564 = vunpack.c.l.b16 %v2496
    %v2565 = vunpack.c.l.b16 %v2497
    %v2566 = vunpack.c.l.b16 %v2498
    %v2567 = vunpack.c.l.b16 %v2499
    %v2568 = vunpack.c.l.b16 %v2500
    %v2569 = vunpack.c.l.b16 %v2501
    %v2570 = vunpack.c.l.b16 %v2502
    %v2571 = vunpack.c.l.b16 %v2503
    %v2572 = vunpack.c.l.b16 %v2504
    %v2573 = vunpack.c.l.b16 %v2505
    %v2574 = vunpack.c.l.b16 %v2506
    %v2575 = vunpack.c.l.b16 %v2507
    %v2576 = vunpack.c.l.b16 %v2508
    %v2577 = vunpack.c.l.b16 %v2509
    %v2578 = vunpack.c.l.b16 %v2510
    %v2579 = vunpack.c.l.b16 %v2511
    %v2580 = vunpack.c.l.b16 %v2512
    %v2581 = vunpack.c.l.b16 %v2513
    %v2582 = vunpack.c.l.b16 %v2514
    %v2583 = vunpack.c.l.b16 %v2515
    %v2584 = vpack.c.b16 %v2553, %v2552
    %v2585 = vpack.c.b16 %v2555, %v2554
    %v2586 = vpack.c.b16 %v2557, %v2556
    %v2587 = vpack.c.b16 %v2559, %v2558
    %v2588 = vpack.c.b16 %v2561, %v2560
    %v2589 = vpack.c.b16 %v2563, %v2562
    %v2590 = vpack.c.b16 %v2565, %v2564
    %v2591 = vpack.c.b16 %v2567, %v2566
    %v2592 = vpack.c.b16 %v2569, %v2568
    %v2593 = vpack.c.b16 %v2571, %v2570
    %v2594 = vpack.c.b16 %v2573, %v2572
    %v2595 = vpack.c.b16 %v2575, %v2574
    %v2596 = vpack.c.b16 %v2577, %v2576
    %v2597 = vpack.c.b16 %v2579, %v2578
    %v2598 = vpack.c.b16 %v2581, %v2580
    %v2599 = vpack.c.b16 %v2583, %v2582
    %2616 = vmatpush.bf16.msra.mxu0 %v2591
    %2617 = vmatpush.bf16.msra.mxu0 %v2590
    %2618 = vmatpush.bf16.msra.mxu0 %v2589
    %2619 = vmatpush.bf16.msra.mxu0 %v2588
    %2620 = vmatpush.bf16.msra.mxu0 %v2587
    %2621 = vmatpush.bf16.msra.mxu0 %v2586
    %2622 = vmatpush.bf16.msra.mxu0 %v2585
    %2623 = vmatpush.bf16.msra.mxu0 %v2584
    %2624 = vmatmul.bf16.gmra.mxu0 %v2482
    %v2625 = vpop.f32.mrf.mxu0
    %v2626 = vadd.f32 %v2518, %v2625
    %v2627 = vpop.f32.mrf.mxu0
    %2628 = vdwg.mxu0
    %2629 = vmatpush.bf16.msra.mxu0 %v2599
    %2630 = vmatpush.bf16.msra.mxu0 %v2598
    %2631 = vmatpush.bf16.msra.mxu0 %v2597
    %2632 = vmatpush.bf16.msra.mxu0 %v2596
    %2633 = vmatpush.bf16.msra.mxu0 %v2595
    %2634 = vmatpush.bf16.msra.mxu0 %v2594
    %2635 = vmatpush.bf16.msra.mxu0 %v2593
    %2636 = vmatpush.bf16.msra.mxu0 %v2592
    %2637 = vmatmul.bf16.gmra.mxu0 %v2483
    %v2638 = vpop.f32.mrf.mxu0
    %v2639 = vadd.f32 %v2626, %v2638
    %v2640 = vpop.f32.mrf.mxu0
    %2641 = vdwg.mxu0
    %v2642 = vmax.f32 %v2639, 0.0
    %v2643 = vpack.c.bf16 %v2642, %v2642
    %v2644 = vld [vmem:[#allocation23] sm:$0xf]
    %v2645 = vld [vmem:[#allocation23 + $0x4] sm:$0xf]
    %v2646 = vld [vmem:[#allocation23 + $0x8] sm:$0xf]
    %v2647 = vld [vmem:[#allocation23 + $0xc] sm:$0xf]
    %v2648 = vld [vmem:[#allocation23 + $0x10] sm:$0xf]
    %v2649 = vld [vmem:[#allocation23 + $0x14] sm:$0xf]
    %v2650 = vld [vmem:[#allocation23 + $0x18] sm:$0xf]
    %v2651 = vld [vmem:[#allocation23 + $0x1c] sm:$0xf]
    %v2652 = vld [vmem:[#allocation23 + $0x20] sm:$0xf]
    %v2653 = vld [vmem:[#allocation23 + $0x24] sm:$0xf]
    %v2654 = vld [vmem:[#allocation23 + $0x28] sm:$0xf]
    %v2655 = vld [vmem:[#allocation23 + $0x2c] sm:$0xf]
    %v2656 = vld [vmem:[#allocation23 + $0x30] sm:$0xf]
    %v2657 = vld [vmem:[#allocation23 + $0x34] sm:$0xf]
    %v2658 = vld [vmem:[#allocation23 + $0x38] sm:$0xf]
    %v2659 = vld [vmem:[#allocation23 + $0x3c] sm:$0xf]
    %v2660 = vld [vmem:[%s37] sm:$0x1]
    %v2662 = vperm.slane %v2660, 0
    %v2680 = vunpack.c.l.b16 %v2644
    %v2681 = vunpack.c.l.b16 %v2645
    %v2682 = vunpack.c.l.b16 %v2646
    %v2683 = vunpack.c.l.b16 %v2647
    %v2684 = vunpack.c.l.b16 %v2648
    %v2685 = vunpack.c.l.b16 %v2649
    %v2686 = vunpack.c.l.b16 %v2650
    %v2687 = vunpack.c.l.b16 %v2651
    %v2688 = vunpack.c.l.b16 %v2652
    %v2689 = vunpack.c.l.b16 %v2653
    %v2690 = vunpack.c.l.b16 %v2654
    %v2691 = vunpack.c.l.b16 %v2655
    %v2692 = vunpack.c.l.b16 %v2656
    %v2693 = vunpack.c.l.b16 %v2657
    %v2694 = vunpack.c.l.b16 %v2658
    %v2695 = vunpack.c.l.b16 %v2659
    %v2696 = vpack.c.b16 %v2681, %v2680
    %v2697 = vpack.c.b16 %v2683, %v2682
    %v2698 = vpack.c.b16 %v2685, %v2684
    %v2699 = vpack.c.b16 %v2687, %v2686
    %v2700 = vpack.c.b16 %v2689, %v2688
    %v2701 = vpack.c.b16 %v2691, %v2690
    %v2702 = vpack.c.b16 %v2693, %v2692
    %v2703 = vpack.c.b16 %v2695, %v2694
    %2712 = vmatpush.bf16.msra.mxu0 %v2703
    %2713 = vmatpush.bf16.msra.mxu0 %v2702
    %2714 = vmatpush.bf16.msra.mxu0 %v2701
    %2715 = vmatpush.bf16.msra.mxu0 %v2700
    %2716 = vmatpush.bf16.msra.mxu0 %v2699
    %2717 = vmatpush.bf16.msra.mxu0 %v2698
    %2718 = vmatpush.bf16.msra.mxu0 %v2697
    %2719 = vmatpush.bf16.msra.mxu0 %v2696
    %2720 = vmatmul.bf16.gmra.mxu0 %v2643
    %v2721 = vpop.f32.mrf.mxu0
    %v2722 = vadd.f32 %v2662, %v2721
    %v2723 = vpop.f32.mrf.mxu0
    %2724 = vdwg.mxu0
    %v2725 = vmax.f32 %v2722, 0.0
    %v2726 = vld [vmem:[#allocation2] sm:$0xf]
    %v2727 = vld [vmem:[#allocation25] sm:$0xff]
    %v2728 = vld [vmem:[#allocation25 + $0x8] sm:$0xff]
    %v2729 = vld [vmem:[#allocation25 + $0x10] sm:$0xff]
    %v2730 = vld [vmem:[#allocation25 + $0x18] sm:$0xff]
    %v2731 = vld [vmem:[#allocation25 + $0x20] sm:$0xff]
    %v2732 = vld [vmem:[#allocation25 + $0x28] sm:$0xff]
    %v2733 = vld [vmem:[#allocation25 + $0x30] sm:$0xff]
    %v2734 = vld [vmem:[#allocation25 + $0x38] sm:$0xff]
    %v2735 = vld [vmem:[#allocation25 + $0x40] sm:$0xff]
    %v2736 = vld [vmem:[#allocation25 + $0x48] sm:$0xff]
    %v2737 = vld [vmem:[#allocation25 + $0x50] sm:$0xff]
    %v2738 = vld [vmem:[#allocation25 + $0x58] sm:$0xff]
    %v2739 = vld [vmem:[#allocation25 + $0x60] sm:$0xff]
    %v2740 = vld [vmem:[#allocation25 + $0x68] sm:$0xff]
    %v2741 = vld [vmem:[#allocation25 + $0x70] sm:$0xff]
    %v2742 = vld [vmem:[#allocation25 + $0x78] sm:$0xff]
    %v2743 = vpack.c.bf16 %v1471, %v1471
    %v2744 = vld [vmem:[#allocation26] sm:$0xff]
    %v2745 = vld [vmem:[#allocation26 + $0x8] sm:$0xff]
    %v2746 = vld [vmem:[#allocation26 + $0x10] sm:$0xff]
    %v2747 = vld [vmem:[#allocation26 + $0x18] sm:$0xff]
    %v2748 = vld [vmem:[#allocation26 + $0x20] sm:$0xff]
    %v2749 = vld [vmem:[#allocation26 + $0x28] sm:$0xff]
    %v2750 = vld [vmem:[#allocation26 + $0x30] sm:$0xff]
    %v2751 = vld [vmem:[#allocation26 + $0x38] sm:$0xff]
    %v2752 = vld [vmem:[#allocation26 + $0x40] sm:$0xff]
    %v2753 = vld [vmem:[#allocation26 + $0x48] sm:$0xff]
    %v2754 = vld [vmem:[#allocation26 + $0x50] sm:$0xff]
    %v2755 = vld [vmem:[#allocation26 + $0x58] sm:$0xff]
    %v2756 = vld [vmem:[#allocation26 + $0x60] sm:$0xff]
    %v2757 = vld [vmem:[#allocation26 + $0x68] sm:$0xff]
    %v2758 = vld [vmem:[#allocation26 + $0x70] sm:$0xff]
    %v2759 = vld [vmem:[#allocation26 + $0x78] sm:$0xff]
    %v2776 = vunpack.c.l.b16 %v2744
    %v2777 = vunpack.c.h.b16 %v2744
    %v2778 = vunpack.c.l.b16 %v2745
    %v2779 = vunpack.c.h.b16 %v2745
    %v2780 = vunpack.c.l.b16 %v2746
    %v2781 = vunpack.c.h.b16 %v2746
    %v2782 = vunpack.c.l.b16 %v2747
    %v2783 = vunpack.c.h.b16 %v2747
    %v2784 = vunpack.c.l.b16 %v2748
    %v2785 = vunpack.c.h.b16 %v2748
    %v2786 = vunpack.c.l.b16 %v2749
    %v2787 = vunpack.c.h.b16 %v2749
    %v2788 = vunpack.c.l.b16 %v2750
    %v2789 = vunpack.c.h.b16 %v2750
    %v2790 = vunpack.c.l.b16 %v2751
    %v2791 = vunpack.c.h.b16 %v2751
    %v2792 = vunpack.c.l.b16 %v2752
    %v2793 = vunpack.c.h.b16 %v2752
    %v2794 = vunpack.c.l.b16 %v2753
    %v2795 = vunpack.c.h.b16 %v2753
    %v2796 = vunpack.c.l.b16 %v2754
    %v2797 = vunpack.c.h.b16 %v2754
    %v2798 = vunpack.c.l.b16 %v2755
    %v2799 = vunpack.c.h.b16 %v2755
    %v2800 = vunpack.c.l.b16 %v2756
    %v2801 = vunpack.c.h.b16 %v2756
    %v2802 = vunpack.c.l.b16 %v2757
    %v2803 = vunpack.c.h.b16 %v2757
    %v2804 = vunpack.c.l.b16 %v2758
    %v2805 = vunpack.c.h.b16 %v2758
    %v2806 = vunpack.c.l.b16 %v2759
    %v2807 = vunpack.c.h.b16 %v2759
    %v2808 = vpack.c.b16 %v2778, %v2776
    %v2809 = vpack.c.b16 %v2779, %v2777
    %v2810 = vpack.c.b16 %v2782, %v2780
    %v2811 = vpack.c.b16 %v2783, %v2781
    %v2812 = vpack.c.b16 %v2786, %v2784
    %v2813 = vpack.c.b16 %v2787, %v2785
    %v2814 = vpack.c.b16 %v2790, %v2788
    %v2815 = vpack.c.b16 %v2791, %v2789
    %v2816 = vpack.c.b16 %v2794, %v2792
    %v2817 = vpack.c.b16 %v2795, %v2793
    %v2818 = vpack.c.b16 %v2798, %v2796
    %v2819 = vpack.c.b16 %v2799, %v2797
    %v2820 = vpack.c.b16 %v2802, %v2800
    %v2821 = vpack.c.b16 %v2803, %v2801
    %v2822 = vpack.c.b16 %v2806, %v2804
    %v2823 = vpack.c.b16 %v2807, %v2805
    %2840 = vmatpush.bf16.msra.mxu0 %v2822
    %2841 = vmatpush.bf16.msra.mxu0 %v2820
    %2842 = vmatpush.bf16.msra.mxu0 %v2818
    %2843 = vmatpush.bf16.msra.mxu0 %v2816
    %2844 = vmatpush.bf16.msra.mxu0 %v2814
    %2845 = vmatpush.bf16.msra.mxu0 %v2812
    %2846 = vmatpush.bf16.msra.mxu0 %v2810
    %2847 = vmatpush.bf16.msra.mxu0 %v2808
    %2848 = vmatmul.bf16.gmra.mxu0 %v2743
    %v2849 = vpop.f32.mrf.mxu0
    %v2850 = vadd.f32 0.0, %v2849
    %v2851 = vpop.f32.mrf.mxu0
    %2852 = vdwg.mxu0
    %2853 = vmatpush.bf16.msra.mxu0 %v2823
    %2854 = vmatpush.bf16.msra.mxu0 %v2821
    %2855 = vmatpush.bf16.msra.mxu0 %v2819
    %2856 = vmatpush.bf16.msra.mxu0 %v2817
    %2857 = vmatpush.bf16.msra.mxu0 %v2815
    %2858 = vmatpush.bf16.msra.mxu0 %v2813
    %2859 = vmatpush.bf16.msra.mxu0 %v2811
    %2860 = vmatpush.bf16.msra.mxu0 %v2809
    %2861 = vmatmul.bf16.gmra.mxu0 %v2743
    %v2862 = vpop.f32.mrf.mxu0
    %v2863 = vadd.f32 0.0, %v2862
    %v2864 = vpop.f32.mrf.mxu0
    %2865 = vdwg.mxu0
    %v2882 = vunpack.c.l.b16 %v2727
    %v2883 = vunpack.c.h.b16 %v2727
    %v2884 = vunpack.c.l.b16 %v2728
    %v2885 = vunpack.c.h.b16 %v2728
    %v2886 = vunpack.c.l.b16 %v2729
    %v2887 = vunpack.c.h.b16 %v2729
    %v2888 = vunpack.c.l.b16 %v2730
    %v2889 = vunpack.c.h.b16 %v2730
    %v2890 = vunpack.c.l.b16 %v2731
    %v2891 = vunpack.c.h.b16 %v2731
    %v2892 = vunpack.c.l.b16 %v2732
    %v2893 = vunpack.c.h.b16 %v2732
    %v2894 = vunpack.c.l.b16 %v2733
    %v2895 = vunpack.c.h.b16 %v2733
    %v2896 = vunpack.c.l.b16 %v2734
    %v2897 = vunpack.c.h.b16 %v2734
    %v2898 = vunpack.c.l.b16 %v2735
    %v2899 = vunpack.c.h.b16 %v2735
    %v2900 = vunpack.c.l.b16 %v2736
    %v2901 = vunpack.c.h.b16 %v2736
    %v2902 = vunpack.c.l.b16 %v2737
    %v2903 = vunpack.c.h.b16 %v2737
    %v2904 = vunpack.c.l.b16 %v2738
    %v2905 = vunpack.c.h.b16 %v2738
    %v2906 = vunpack.c.l.b16 %v2739
    %v2907 = vunpack.c.h.b16 %v2739
    %v2908 = vunpack.c.l.b16 %v2740
    %v2909 = vunpack.c.h.b16 %v2740
    %v2910 = vunpack.c.l.b16 %v2741
    %v2911 = vunpack.c.h.b16 %v2741
    %v2912 = vunpack.c.l.b16 %v2742
    %v2913 = vunpack.c.h.b16 %v2742
    %v2914 = vpack.c.b16 %v2884, %v2882
    %v2915 = vpack.c.b16 %v2885, %v2883
    %v2916 = vpack.c.b16 %v2888, %v2886
    %v2917 = vpack.c.b16 %v2889, %v2887
    %v2918 = vpack.c.b16 %v2892, %v2890
    %v2919 = vpack.c.b16 %v2893, %v2891
    %v2920 = vpack.c.b16 %v2896, %v2894
    %v2921 = vpack.c.b16 %v2897, %v2895
    %v2922 = vpack.c.b16 %v2900, %v2898
    %v2923 = vpack.c.b16 %v2901, %v2899
    %v2924 = vpack.c.b16 %v2904, %v2902
    %v2925 = vpack.c.b16 %v2905, %v2903
    %v2926 = vpack.c.b16 %v2908, %v2906
    %v2927 = vpack.c.b16 %v2909, %v2907
    %v2928 = vpack.c.b16 %v2912, %v2910
    %v2929 = vpack.c.b16 %v2913, %v2911
    %2946 = vmatpush.bf16.msra.mxu0 %v2928
    %2947 = vmatpush.bf16.msra.mxu0 %v2926
    %2948 = vmatpush.bf16.msra.mxu0 %v2924
    %2949 = vmatpush.bf16.msra.mxu0 %v2922
    %2950 = vmatpush.bf16.msra.mxu0 %v2920
    %2951 = vmatpush.bf16.msra.mxu0 %v2918
    %2952 = vmatpush.bf16.msra.mxu0 %v2916
    %2953 = vmatpush.bf16.msra.mxu0 %v2914
    %2954 = vmatmul.bf16.gmra.mxu0 %v2726
    %v2955 = vpop.f32.mrf.mxu0
    %v2956 = vadd.f32 %v2850, %v2955
    %v2957 = vpop.f32.mrf.mxu0
    %2958 = vdwg.mxu0
    %2959 = vmatpush.bf16.msra.mxu0 %v2929
    %2960 = vmatpush.bf16.msra.mxu0 %v2927
    %2961 = vmatpush.bf16.msra.mxu0 %v2925
    %2962 = vmatpush.bf16.msra.mxu0 %v2923
    %2963 = vmatpush.bf16.msra.mxu0 %v2921
    %2964 = vmatpush.bf16.msra.mxu0 %v2919
    %2965 = vmatpush.bf16.msra.mxu0 %v2917
    %2966 = vmatpush.bf16.msra.mxu0 %v2915
    %2967 = vmatmul.bf16.gmra.mxu0 %v2726
    %v2968 = vpop.f32.mrf.mxu0
    %v2969 = vadd.f32 %v2863, %v2968
    %v2970 = vpop.f32.mrf.mxu0
    %2971 = vdwg.mxu0
    %v2972 = vpack.c.bf16 %v2725, %v2725
    %v2973 = vld [vmem:[#allocation28] sm:$0xff]
    %v2974 = vld [vmem:[#allocation28 + $0x8] sm:$0xff]
    %v2975 = vld [vmem:[#allocation28 + $0x10] sm:$0xff]
    %v2976 = vld [vmem:[#allocation28 + $0x18] sm:$0xff]
    %v2977 = vld [vmem:[#allocation28 + $0x20] sm:$0xff]
    %v2978 = vld [vmem:[#allocation28 + $0x28] sm:$0xff]
    %v2979 = vld [vmem:[#allocation28 + $0x30] sm:$0xff]
    %v2980 = vld [vmem:[#allocation28 + $0x38] sm:$0xff]
    %v2981 = vld [vmem:[#allocation28 + $0x40] sm:$0xff]
    %v2982 = vld [vmem:[#allocation28 + $0x48] sm:$0xff]
    %v2983 = vld [vmem:[#allocation28 + $0x50] sm:$0xff]
    %v2984 = vld [vmem:[#allocation28 + $0x58] sm:$0xff]
    %v2985 = vld [vmem:[#allocation28 + $0x60] sm:$0xff]
    %v2986 = vld [vmem:[#allocation28 + $0x68] sm:$0xff]
    %v2987 = vld [vmem:[#allocation28 + $0x70] sm:$0xff]
    %v2988 = vld [vmem:[#allocation28 + $0x78] sm:$0xff]
    %v3005 = vunpack.c.l.b16 %v2973
    %v3006 = vunpack.c.h.b16 %v2973
    %v3007 = vunpack.c.l.b16 %v2974
    %v3008 = vunpack.c.h.b16 %v2974
    %v3009 = vunpack.c.l.b16 %v2975
    %v3010 = vunpack.c.h.b16 %v2975
    %v3011 = vunpack.c.l.b16 %v2976
    %v3012 = vunpack.c.h.b16 %v2976
    %v3013 = vunpack.c.l.b16 %v2977
    %v3014 = vunpack.c.h.b16 %v2977
    %v3015 = vunpack.c.l.b16 %v2978
    %v3016 = vunpack.c.h.b16 %v2978
    %v3017 = vunpack.c.l.b16 %v2979
    %v3018 = vunpack.c.h.b16 %v2979
    %v3019 = vunpack.c.l.b16 %v2980
    %v3020 = vunpack.c.h.b16 %v2980
    %v3021 = vunpack.c.l.b16 %v2981
    %v3022 = vunpack.c.h.b16 %v2981
    %v3023 = vunpack.c.l.b16 %v2982
    %v3024 = vunpack.c.h.b16 %v2982
    %v3025 = vunpack.c.l.b16 %v2983
    %v3026 = vunpack.c.h.b16 %v2983
    %v3027 = vunpack.c.l.b16 %v2984
    %v3028 = vunpack.c.h.b16 %v2984
    %v3029 = vunpack.c.l.b16 %v2985
    %v3030 = vunpack.c.h.b16 %v2985
    %v3031 = vunpack.c.l.b16 %v2986
    %v3032 = vunpack.c.h.b16 %v2986
    %v3033 = vunpack.c.l.b16 %v2987
    %v3034 = vunpack.c.h.b16 %v2987
    %v3035 = vunpack.c.l.b16 %v2988
    %v3036 = vunpack.c.h.b16 %v2988
    %v3037 = vpack.c.b16 %v3007, %v3005
    %v3038 = vpack.c.b16 %v3008, %v3006
    %v3039 = vpack.c.b16 %v3011, %v3009
    %v3040 = vpack.c.b16 %v3012, %v3010
    %v3041 = vpack.c.b16 %v3015, %v3013
    %v3042 = vpack.c.b16 %v3016, %v3014
    %v3043 = vpack.c.b16 %v3019, %v3017
    %v3044 = vpack.c.b16 %v3020, %v3018
    %v3045 = vpack.c.b16 %v3023, %v3021
    %v3046 = vpack.c.b16 %v3024, %v3022
    %v3047 = vpack.c.b16 %v3027, %v3025
    %v3048 = vpack.c.b16 %v3028, %v3026
    %v3049 = vpack.c.b16 %v3031, %v3029
    %v3050 = vpack.c.b16 %v3032, %v3030
    %v3051 = vpack.c.b16 %v3035, %v3033
    %v3052 = vpack.c.b16 %v3036, %v3034
    %3069 = vmatpush.bf16.msra.mxu0 %v3051
    %3070 = vmatpush.bf16.msra.mxu0 %v3049
    %3071 = vmatpush.bf16.msra.mxu0 %v3047
    %3072 = vmatpush.bf16.msra.mxu0 %v3045
    %3073 = vmatpush.bf16.msra.mxu0 %v3043
    %3074 = vmatpush.bf16.msra.mxu0 %v3041
    %3075 = vmatpush.bf16.msra.mxu0 %v3039
    %3076 = vmatpush.bf16.msra.mxu0 %v3037
    %3077 = vmatmul.bf16.gmra.mxu0 %v2972
    %v3078 = vpop.f32.mrf.mxu0
    %v3079 = vadd.f32 0.0, %v3078
    %v3080 = vpop.f32.mrf.mxu0
    %3081 = vdwg.mxu0
    %3082 = vmatpush.bf16.msra.mxu0 %v3052
    %3083 = vmatpush.bf16.msra.mxu0 %v3050
    %3084 = vmatpush.bf16.msra.mxu0 %v3048
    %3085 = vmatpush.bf16.msra.mxu0 %v3046
    %3086 = vmatpush.bf16.msra.mxu0 %v3044
    %3087 = vmatpush.bf16.msra.mxu0 %v3042
    %3088 = vmatpush.bf16.msra.mxu0 %v3040
    %3089 = vmatpush.bf16.msra.mxu0 %v3038
    %3090 = vmatmul.bf16.gmra.mxu0 %v2972
    %v3091 = vpop.f32.mrf.mxu0
    %v3092 = vadd.f32 0.0, %v3091
    %v3093 = vpop.f32.mrf.mxu0
    %3094 = vdwg.mxu0
    %v3095 = vadd.f32 %v2956, %v3079
    %v3096 = vadd.f32 %v2969, %v3092
    %v3097 = vld [vmem:[%s45] sm:$0x3]
    %v3099 = vperm.slane %v3097, 0
    %v3100 = vperm.slane %v3097, 1
    %v3103 = vadd.f32 %v3095, %v3099
    %v3104 = vadd.f32 %v3096, %v3100
    %v3105 = vmax.f32 %v3103, 0.0
    %v3106 = vmax.f32 %v3104, 0.0
    %v3107 = vpack.c.bf16 %v3105, %v3105
    %v3108 = vpack.c.bf16 %v3106, %v3106
    %v3109 = vld [vmem:[#allocation29] sm:$0xf]
    %v3110 = vld [vmem:[#allocation29 + $0x4] sm:$0xf]
    %v3111 = vld [vmem:[#allocation29 + $0x8] sm:$0xf]
    %v3112 = vld [vmem:[#allocation29 + $0xc] sm:$0xf]
    %v3113 = vld [vmem:[#allocation29 + $0x10] sm:$0xf]
    %v3114 = vld [vmem:[#allocation29 + $0x14] sm:$0xf]
    %v3115 = vld [vmem:[#allocation29 + $0x18] sm:$0xf]
    %v3116 = vld [vmem:[#allocation29 + $0x1c] sm:$0xf]
    %v3117 = vld [vmem:[#allocation29 + $0x20] sm:$0xf]
    %v3118 = vld [vmem:[#allocation29 + $0x24] sm:$0xf]
    %v3119 = vld [vmem:[#allocation29 + $0x28] sm:$0xf]
    %v3120 = vld [vmem:[#allocation29 + $0x2c] sm:$0xf]
    %v3121 = vld [vmem:[#allocation29 + $0x30] sm:$0xf]
    %v3122 = vld [vmem:[#allocation29 + $0x34] sm:$0xf]
    %v3123 = vld [vmem:[#allocation29 + $0x38] sm:$0xf]
    %v3124 = vld [vmem:[#allocation29 + $0x3c] sm:$0xf]
    %v3125 = vld [vmem:[#allocation29 + $0x40] sm:$0xf]
    %v3126 = vld [vmem:[#allocation29 + $0x44] sm:$0xf]
    %v3127 = vld [vmem:[#allocation29 + $0x48] sm:$0xf]
    %v3128 = vld [vmem:[#allocation29 + $0x4c] sm:$0xf]
    %v3129 = vld [vmem:[#allocation29 + $0x50] sm:$0xf]
    %v3130 = vld [vmem:[#allocation29 + $0x54] sm:$0xf]
    %v3131 = vld [vmem:[#allocation29 + $0x58] sm:$0xf]
    %v3132 = vld [vmem:[#allocation29 + $0x5c] sm:$0xf]
    %v3133 = vld [vmem:[#allocation29 + $0x60] sm:$0xf]
    %v3134 = vld [vmem:[#allocation29 + $0x64] sm:$0xf]
    %v3135 = vld [vmem:[#allocation29 + $0x68] sm:$0xf]
    %v3136 = vld [vmem:[#allocation29 + $0x6c] sm:$0xf]
    %v3137 = vld [vmem:[#allocation29 + $0x70] sm:$0xf]
    %v3138 = vld [vmem:[#allocation29 + $0x74] sm:$0xf]
    %v3139 = vld [vmem:[#allocation29 + $0x78] sm:$0xf]
    %v3140 = vld [vmem:[#allocation29 + $0x7c] sm:$0xf]
    %v3141 = vld [vmem:[%s49] sm:$0x1]
    %v3143 = vperm.slane %v3141, 0
    %v3177 = vunpack.c.l.b16 %v3109
    %v3178 = vunpack.c.l.b16 %v3110
    %v3179 = vunpack.c.l.b16 %v3111
    %v3180 = vunpack.c.l.b16 %v3112
    %v3181 = vunpack.c.l.b16 %v3113
    %v3182 = vunpack.c.l.b16 %v3114
    %v3183 = vunpack.c.l.b16 %v3115
    %v3184 = vunpack.c.l.b16 %v3116
    %v3185 = vunpack.c.l.b16 %v3117
    %v3186 = vunpack.c.l.b16 %v3118
    %v3187 = vunpack.c.l.b16 %v3119
    %v3188 = vunpack.c.l.b16 %v3120
    %v3189 = vunpack.c.l.b16 %v3121
    %v3190 = vunpack.c.l.b16 %v3122
    %v3191 = vunpack.c.l.b16 %v3123
    %v3192 = vunpack.c.l.b16 %v3124
    %v3193 = vunpack.c.l.b16 %v3125
    %v3194 = vunpack.c.l.b16 %v3126
    %v3195 = vunpack.c.l.b16 %v3127
    %v3196 = vunpack.c.l.b16 %v3128
    %v3197 = vunpack.c.l.b16 %v3129
    %v3198 = vunpack.c.l.b16 %v3130
    %v3199 = vunpack.c.l.b16 %v3131
    %v3200 = vunpack.c.l.b16 %v3132
    %v3201 = vunpack.c.l.b16 %v3133
    %v3202 = vunpack.c.l.b16 %v3134
    %v3203 = vunpack.c.l.b16 %v3135
    %v3204 = vunpack.c.l.b16 %v3136
    %v3205 = vunpack.c.l.b16 %v3137
    %v3206 = vunpack.c.l.b16 %v3138
    %v3207 = vunpack.c.l.b16 %v3139
    %v3208 = vunpack.c.l.b16 %v3140
    %v3209 = vpack.c.b16 %v3178, %v3177
    %v3210 = vpack.c.b16 %v3180, %v3179
    %v3211 = vpack.c.b16 %v3182, %v3181
    %v3212 = vpack.c.b16 %v3184, %v3183
    %v3213 = vpack.c.b16 %v3186, %v3185
    %v3214 = vpack.c.b16 %v3188, %v3187
    %v3215 = vpack.c.b16 %v3190, %v3189
    %v3216 = vpack.c.b16 %v3192, %v3191
    %v3217 = vpack.c.b16 %v3194, %v3193
    %v3218 = vpack.c.b16 %v3196, %v3195
    %v3219 = vpack.c.b16 %v3198, %v3197
    %v3220 = vpack.c.b16 %v3200, %v3199
    %v3221 = vpack.c.b16 %v3202, %v3201
    %v3222 = vpack.c.b16 %v3204, %v3203
    %v3223 = vpack.c.b16 %v3206, %v3205
    %v3224 = vpack.c.b16 %v3208, %v3207
    %3241 = vmatpush.bf16.msra.mxu0 %v3216
    %3242 = vmatpush.bf16.msra.mxu0 %v3215
    %3243 = vmatpush.bf16.msra.mxu0 %v3214
    %3244 = vmatpush.bf16.msra.mxu0 %v3213
    %3245 = vmatpush.bf16.msra.mxu0 %v3212
    %3246 = vmatpush.bf16.msra.mxu0 %v3211
    %3247 = vmatpush.bf16.msra.mxu0 %v3210
    %3248 = vmatpush.bf16.msra.mxu0 %v3209
    %3249 = vmatmul.bf16.gmra.mxu0 %v3107
    %v3250 = vpop.f32.mrf.mxu0
    %v3251 = vadd.f32 %v3143, %v3250
    %v3252 = vpop.f32.mrf.mxu0
    %3253 = vdwg.mxu0
    %3254 = vmatpush.bf16.msra.mxu0 %v3224
    %3255 = vmatpush.bf16.msra.mxu0 %v3223
    %3256 = vmatpush.bf16.msra.mxu0 %v3222
    %3257 = vmatpush.bf16.msra.mxu0 %v3221
    %3258 = vmatpush.bf16.msra.mxu0 %v3220
    %3259 = vmatpush.bf16.msra.mxu0 %v3219
    %3260 = vmatpush.bf16.msra.mxu0 %v3218
    %3261 = vmatpush.bf16.msra.mxu0 %v3217
    %3262 = vmatmul.bf16.gmra.mxu0 %v3108
    %v3263 = vpop.f32.mrf.mxu0
    %v3264 = vadd.f32 %v3251, %v3263
    %v3265 = vpop.f32.mrf.mxu0
    %3266 = vdwg.mxu0
    %v3267 = vmax.f32 %v3264, 0.0
    %v3268 = vpack.c.bf16 %v3267, %v3267
    %v3269 = vld [vmem:[#allocation31] sm:$0xf]
    %v3270 = vld [vmem:[#allocation31 + $0x4] sm:$0xf]
    %v3271 = vld [vmem:[#allocation31 + $0x8] sm:$0xf]
    %v3272 = vld [vmem:[#allocation31 + $0xc] sm:$0xf]
    %v3273 = vld [vmem:[#allocation31 + $0x10] sm:$0xf]
    %v3274 = vld [vmem:[#allocation31 + $0x14] sm:$0xf]
    %v3275 = vld [vmem:[#allocation31 + $0x18] sm:$0xf]
    %v3276 = vld [vmem:[#allocation31 + $0x1c] sm:$0xf]
    %v3277 = vld [vmem:[#allocation31 + $0x20] sm:$0xf]
    %v3278 = vld [vmem:[#allocation31 + $0x24] sm:$0xf]
    %v3279 = vld [vmem:[#allocation31 + $0x28] sm:$0xf]
    %v3280 = vld [vmem:[#allocation31 + $0x2c] sm:$0xf]
    %v3281 = vld [vmem:[#allocation31 + $0x30] sm:$0xf]
    %v3282 = vld [vmem:[#allocation31 + $0x34] sm:$0xf]
    %v3283 = vld [vmem:[#allocation31 + $0x38] sm:$0xf]
    %v3284 = vld [vmem:[#allocation31 + $0x3c] sm:$0xf]
    %v3285 = vld [vmem:[%s53] sm:$0x1]
    %v3287 = vperm.slane %v3285, 0
    %v3305 = vunpack.c.l.b16 %v3269
    %v3306 = vunpack.c.l.b16 %v3270
    %v3307 = vunpack.c.l.b16 %v3271
    %v3308 = vunpack.c.l.b16 %v3272
    %v3309 = vunpack.c.l.b16 %v3273
    %v3310 = vunpack.c.l.b16 %v3274
    %v3311 = vunpack.c.l.b16 %v3275
    %v3312 = vunpack.c.l.b16 %v3276
    %v3313 = vunpack.c.l.b16 %v3277
    %v3314 = vunpack.c.l.b16 %v3278
    %v3315 = vunpack.c.l.b16 %v3279
    %v3316 = vunpack.c.l.b16 %v3280
    %v3317 = vunpack.c.l.b16 %v3281
    %v3318 = vunpack.c.l.b16 %v3282
    %v3319 = vunpack.c.l.b16 %v3283
    %v3320 = vunpack.c.l.b16 %v3284
    %v3321 = vpack.c.b16 %v3306, %v3305
    %v3322 = vpack.c.b16 %v3308, %v3307
    %v3323 = vpack.c.b16 %v3310, %v3309
    %v3324 = vpack.c.b16 %v3312, %v3311
    %v3325 = vpack.c.b16 %v3314, %v3313
    %v3326 = vpack.c.b16 %v3316, %v3315
    %v3327 = vpack.c.b16 %v3318, %v3317
    %v3328 = vpack.c.b16 %v3320, %v3319
    %3337 = vmatpush.bf16.msra.mxu0 %v3328
    %3338 = vmatpush.bf16.msra.mxu0 %v3327
    %3339 = vmatpush.bf16.msra.mxu0 %v3326
    %3340 = vmatpush.bf16.msra.mxu0 %v3325
    %3341 = vmatpush.bf16.msra.mxu0 %v3324
    %3342 = vmatpush.bf16.msra.mxu0 %v3323
    %3343 = vmatpush.bf16.msra.mxu0 %v3322
    %3344 = vmatpush.bf16.msra.mxu0 %v3321
    %3345 = vmatmul.bf16.gmra.mxu0 %v3268
    %v3346 = vpop.f32.mrf.mxu0
    %v3347 = vadd.f32 %v3287, %v3346
    %v3348 = vpop.f32.mrf.mxu0
    %3349 = vdwg.mxu0
    %v3350 = vmax.f32 %v3347, 0.0
    %v3351 = vpack.c.bf16 %v3350, %v3350
    %v3352 = vld [vmem:[#allocation32] sm:$0xf]
    %v3353 = vld [vmem:[#allocation32 + $0x4] sm:$0xf]
    %v3354 = vld [vmem:[#allocation32 + $0x8] sm:$0xf]
    %v3355 = vld [vmem:[#allocation32 + $0xc] sm:$0xf]
    %v3356 = vld [vmem:[#allocation32 + $0x10] sm:$0xf]
    %v3357 = vld [vmem:[#allocation32 + $0x14] sm:$0xf]
    %v3358 = vld [vmem:[#allocation32 + $0x18] sm:$0xf]
    %v3359 = vld [vmem:[#allocation32 + $0x1c] sm:$0xf]
    %v3360 = vld [vmem:[#allocation32 + $0x20] sm:$0xf]
    %v3361 = vld [vmem:[#allocation32 + $0x24] sm:$0xf]
    %v3362 = vld [vmem:[#allocation32 + $0x28] sm:$0xf]
    %v3363 = vld [vmem:[#allocation32 + $0x2c] sm:$0xf]
    %v3364 = vld [vmem:[#allocation32 + $0x30] sm:$0xf]
    %v3365 = vld [vmem:[#allocation32 + $0x34] sm:$0xf]
    %v3366 = vld [vmem:[#allocation32 + $0x38] sm:$0xf]
    %v3367 = vld [vmem:[#allocation32 + $0x3c] sm:$0xf]
    %v3368 = vld [vmem:[%s57] sm:$0x1]
    %v3370 = vperm.slane %v3368, 0
    %v3388 = vunpack.c.l.b16 %v3352
    %v3389 = vunpack.c.l.b16 %v3353
    %v3390 = vunpack.c.l.b16 %v3354
    %v3391 = vunpack.c.l.b16 %v3355
    %v3392 = vunpack.c.l.b16 %v3356
    %v3393 = vunpack.c.l.b16 %v3357
    %v3394 = vunpack.c.l.b16 %v3358
    %v3395 = vunpack.c.l.b16 %v3359
    %v3396 = vunpack.c.l.b16 %v3360
    %v3397 = vunpack.c.l.b16 %v3361
    %v3398 = vunpack.c.l.b16 %v3362
    %v3399 = vunpack.c.l.b16 %v3363
    %v3400 = vunpack.c.l.b16 %v3364
    %v3401 = vunpack.c.l.b16 %v3365
    %v3402 = vunpack.c.l.b16 %v3366
    %v3403 = vunpack.c.l.b16 %v3367
    %v3404 = vpack.c.b16 %v3389, %v3388
    %v3405 = vpack.c.b16 %v3391, %v3390
    %v3406 = vpack.c.b16 %v3393, %v3392
    %v3407 = vpack.c.b16 %v3395, %v3394
    %v3408 = vpack.c.b16 %v3397, %v3396
    %v3409 = vpack.c.b16 %v3399, %v3398
    %v3410 = vpack.c.b16 %v3401, %v3400
    %v3411 = vpack.c.b16 %v3403, %v3402
    %3420 = vmatpush.bf16.msra.mxu0 %v3411
    %3421 = vmatpush.bf16.msra.mxu0 %v3410
    %3422 = vmatpush.bf16.msra.mxu0 %v3409
    %3423 = vmatpush.bf16.msra.mxu0 %v3408
    %3424 = vmatpush.bf16.msra.mxu0 %v3407
    %3425 = vmatpush.bf16.msra.mxu0 %v3406
    %3426 = vmatpush.bf16.msra.mxu0 %v3405
    %3427 = vmatpush.bf16.msra.mxu0 %v3404
    %3428 = vmatmul.bf16.gmra.mxu0 %v3351
    %v3429 = vpop.f32.mrf.mxu0
    %v3430 = vadd.f32 %v3370, %v3429
    %v3431 = vpop.f32.mrf.mxu0
    %3432 = vdwg.mxu0
    %v3433 = vmax.f32 %v3430, 0.0
    %v3434 = vpack.c.bf16 %v3433, %v3433
    %v3435 = vld [vmem:[#allocation34] sm:$0xf]
    %v3436 = vld [vmem:[#allocation34 + $0x4] sm:$0xf]
    %v3437 = vld [vmem:[#allocation34 + $0x8] sm:$0xf]
    %v3438 = vld [vmem:[#allocation34 + $0xc] sm:$0xf]
    %v3439 = vld [vmem:[#allocation34 + $0x10] sm:$0xf]
    %v3440 = vld [vmem:[#allocation34 + $0x14] sm:$0xf]
    %v3441 = vld [vmem:[#allocation34 + $0x18] sm:$0xf]
    %v3442 = vld [vmem:[#allocation34 + $0x1c] sm:$0xf]
    %v3443 = vld [vmem:[#allocation34 + $0x20] sm:$0xf]
    %v3444 = vld [vmem:[#allocation34 + $0x24] sm:$0xf]
    %v3445 = vld [vmem:[#allocation34 + $0x28] sm:$0xf]
    %v3446 = vld [vmem:[#allocation34 + $0x2c] sm:$0xf]
    %v3447 = vld [vmem:[#allocation34 + $0x30] sm:$0xf]
    %v3448 = vld [vmem:[#allocation34 + $0x34] sm:$0xf]
    %v3449 = vld [vmem:[#allocation34 + $0x38] sm:$0xf]
    %v3450 = vld [vmem:[#allocation34 + $0x3c] sm:$0xf]
    %v3451 = vld [vmem:[%s61] sm:$0x1]
    %v3453 = vperm.slane %v3451, 0
    %v3471 = vunpack.c.l.b16 %v3435
    %v3472 = vunpack.c.l.b16 %v3436
    %v3473 = vunpack.c.l.b16 %v3437
    %v3474 = vunpack.c.l.b16 %v3438
    %v3475 = vunpack.c.l.b16 %v3439
    %v3476 = vunpack.c.l.b16 %v3440
    %v3477 = vunpack.c.l.b16 %v3441
    %v3478 = vunpack.c.l.b16 %v3442
    %v3479 = vunpack.c.l.b16 %v3443
    %v3480 = vunpack.c.l.b16 %v3444
    %v3481 = vunpack.c.l.b16 %v3445
    %v3482 = vunpack.c.l.b16 %v3446
    %v3483 = vunpack.c.l.b16 %v3447
    %v3484 = vunpack.c.l.b16 %v3448
    %v3485 = vunpack.c.l.b16 %v3449
    %v3486 = vunpack.c.l.b16 %v3450
    %v3487 = vpack.c.b16 %v3472, %v3471
    %v3488 = vpack.c.b16 %v3474, %v3473
    %v3489 = vpack.c.b16 %v3476, %v3475
    %v3490 = vpack.c.b16 %v3478, %v3477
    %v3491 = vpack.c.b16 %v3480, %v3479
    %v3492 = vpack.c.b16 %v3482, %v3481
    %v3493 = vpack.c.b16 %v3484, %v3483
    %v3494 = vpack.c.b16 %v3486, %v3485
    %3503 = vmatpush.bf16.msra.mxu0 %v3494
    %3504 = vmatpush.bf16.msra.mxu0 %v3493
    %3505 = vmatpush.bf16.msra.mxu0 %v3492
    %3506 = vmatpush.bf16.msra.mxu0 %v3491
    %3507 = vmatpush.bf16.msra.mxu0 %v3490
    %3508 = vmatpush.bf16.msra.mxu0 %v3489
    %3509 = vmatpush.bf16.msra.mxu0 %v3488
    %3510 = vmatpush.bf16.msra.mxu0 %v3487
    %3511 = vmatmul.bf16.gmra.mxu0 %v3434
    %v3512 = vpop.f32.mrf.mxu0
    %v3513 = vadd.f32 %v3453, %v3512
    %v3514 = vpop.f32.mrf.mxu0
    %3515 = vdwg.mxu0
    %v3516 = vmax.f32 %v3513, 0.0
    %v3517 = vpack.c.bf16 %v3516, %v3516
    %v3518 = vld [vmem:[#allocation35] sm:$0xf]
    %v3519 = vld [vmem:[#allocation35 + $0x4] sm:$0xf]
    %v3520 = vld [vmem:[#allocation35 + $0x8] sm:$0xf]
    %v3521 = vld [vmem:[#allocation35 + $0xc] sm:$0xf]
    %v3522 = vld [vmem:[#allocation35 + $0x10] sm:$0xf]
    %v3523 = vld [vmem:[#allocation35 + $0x14] sm:$0xf]
    %v3524 = vld [vmem:[#allocation35 + $0x18] sm:$0xf]
    %v3525 = vld [vmem:[#allocation35 + $0x1c] sm:$0xf]
    %v3526 = vld [vmem:[#allocation35 + $0x20] sm:$0xf]
    %v3527 = vld [vmem:[#allocation35 + $0x24] sm:$0xf]
    %v3528 = vld [vmem:[#allocation35 + $0x28] sm:$0xf]
    %v3529 = vld [vmem:[#allocation35 + $0x2c] sm:$0xf]
    %v3530 = vld [vmem:[#allocation35 + $0x30] sm:$0xf]
    %v3531 = vld [vmem:[#allocation35 + $0x34] sm:$0xf]
    %v3532 = vld [vmem:[#allocation35 + $0x38] sm:$0xf]
    %v3533 = vld [vmem:[#allocation35 + $0x3c] sm:$0xf]
    %v3534 = vld [vmem:[%s65] sm:$0x1]
    %v3536 = vperm.slane %v3534, 0
    %v3554 = vunpack.c.l.b16 %v3518
    %v3555 = vunpack.c.l.b16 %v3519
    %v3556 = vunpack.c.l.b16 %v3520
    %v3557 = vunpack.c.l.b16 %v3521
    %v3558 = vunpack.c.l.b16 %v3522
    %v3559 = vunpack.c.l.b16 %v3523
    %v3560 = vunpack.c.l.b16 %v3524
    %v3561 = vunpack.c.l.b16 %v3525
    %v3562 = vunpack.c.l.b16 %v3526
    %v3563 = vunpack.c.l.b16 %v3527
    %v3564 = vunpack.c.l.b16 %v3528
    %v3565 = vunpack.c.l.b16 %v3529
    %v3566 = vunpack.c.l.b16 %v3530
    %v3567 = vunpack.c.l.b16 %v3531
    %v3568 = vunpack.c.l.b16 %v3532
    %v3569 = vunpack.c.l.b16 %v3533
    %v3570 = vpack.c.b16 %v3555, %v3554
    %v3571 = vpack.c.b16 %v3557, %v3556
    %v3572 = vpack.c.b16 %v3559, %v3558
    %v3573 = vpack.c.b16 %v3561, %v3560
    %v3574 = vpack.c.b16 %v3563, %v3562
    %v3575 = vpack.c.b16 %v3565, %v3564
    %v3576 = vpack.c.b16 %v3567, %v3566
    %v3577 = vpack.c.b16 %v3569, %v3568
    %3586 = vmatpush.bf16.msra.mxu0 %v3577
    %3587 = vmatpush.bf16.msra.mxu0 %v3576
    %3588 = vmatpush.bf16.msra.mxu0 %v3575
    %3589 = vmatpush.bf16.msra.mxu0 %v3574
    %3590 = vmatpush.bf16.msra.mxu0 %v3573
    %3591 = vmatpush.bf16.msra.mxu0 %v3572
    %3592 = vmatpush.bf16.msra.mxu0 %v3571
    %3593 = vmatpush.bf16.msra.mxu0 %v3570
    %3594 = vmatmul.bf16.gmra.mxu0 %v3517
    %v3595 = vpop.f32.mrf.mxu0
    %v3596 = vadd.f32 %v3536, %v3595
    %v3597 = vpop.f32.mrf.mxu0
    %3598 = vdwg.mxu0
    %v3599 = vlaneseq
    %v3600 = vand.u32 %v3599, 127
    %vm3601 = vcmp.ge.s32.totalorder %v3600, 2
    %vm3602 = vcmp.lt.s32.totalorder %v3600, 9
    %vm3603 = vmand %vm3601, %vm3602
    %v3604 = vsel %vm3603, %v3596, -inf
    %3605 = vmax.xlane.f32.xlu0 %v3604
    %v3606 = vpop.xlane.xlu0 %3605
    %v3607 = vsub.f32 %v3596, %v3606
    %v3608 = vsel %vm3603, %v3607, -inf
    %v3609 = vmul.f32 %v3608, 1.442695
    %v3610 = vpow.pop %v3609
    %3611 = vadd.xlane.f32.xlu0 %v3610
    %v3612 = vpop.xlane.xlu0 %3611
    %v3613 = vrcp.pop %v3612
    %v3614 = vmul.f32 %v3612, %v3613
    %v3615 = vsub.f32 1.0, %v3614
    %v3616 = vmul.f32 %v3613, %v3615
    %v3617 = vadd.f32 %v3613, %v3616
    %vm3618 = vweird.f32 %v3612
    %vm3619 = vweird.f32 %v3613
    %vm3620 = vmor %vm3618, %vm3619
    %v3621 = vsel %vm3620, %v3613, %v3617
    %v3622 = vand.u32 2147483647, %v3612
    %vm3623 = vcmp.eq.f32.partialorder %v3622, 8.507059e+37
    %v3624 = vand.u32 %v3612, 2147483648
    %v3625 = vor.u32 1.1754944e-38, %v3624
    %v3626 = vsel %vm3623, %v3625, %v3621
    %v3627 = vmul.f32 %v3610, %v3626
    %v3628 = vsel %vm3603, %v3627, %v3596
    %3629 = vst [vmem:[#allocation37] sm:$0xff] %v3628
    // Predicated region
    $region222: #{tpu_custom_call.1} parent=1 // pred_check
      _
    $region223: #{tpu_custom_call.1} parent=1 // pred_check_branch
      %3631 = sbr.rel (0) target = $region225
    $region224: #{tpu_custom_call.1} parent=1 // pred_region
      %3633 = vsyncadd [#allocation4], 0
      %s3635 = sshll.u32 [#allocation37], 4
      %s3636 = int_to_ptr.vmem [resolvable:$true] %s3635
      %s3637 = sshll.u32 %s67, 4
      %s3638 = int_to_ptr.hbm [resolvable:$true] %s3637
      %3640 = dma.vmem_to_hbm [thread:$0]  %s3636, 128, %s3638, [#allocation4]
    $region225: #{tpu_custom_call.1} parent=1 // pred_fallthru
      _
    // Predicated region
    $region226: #{tpu_custom_call.1} parent=1 // pred_check
      _
    $region227: #{tpu_custom_call.1} parent=1 // pred_check_branch
      %3642 = sbr.rel (0) target = $region229
    $region228: #{tpu_custom_call.1} parent=1 // pred_region
      %3644 = dma.done [#allocation4], 128
    $region229: #{tpu_custom_call.1} parent=1 // pred_fallthru
      _
    %3645 = vsyncpa [#allocation3], 1
    %3646 = vsyncpa [#allocation6], 1
    %3647 = vsyncpa [#allocation9], 1
    %3648 = vsyncpa [#allocation12], 1
    %3649 = vsyncpa [#allocation15], 1
    %3650 = vsyncpa [#allocation18], 1
    %3651 = vsyncpa [#allocation21], 1
    %3652 = vsyncpa [#allocation24], 1
    %3653 = vsyncpa [#allocation27], 1
    %3654 = vsyncpa [#allocation30], 1
    %3655 = vsyncpa [#allocation33], 1
    %3656 = vsyncpa [#allocation36], 1
    %3657 = vsyncpa [#allocation4], 1

// kernel: tpu_custom_call.1
$region0: #{tpu_custom_call.1}
  #allocation0 [shape = 'u32[]', space=smem, size = 0x4, offset = 0x4, fixed_abs, tag = 'smem constant byte address 0x4 - core index']
  #allocation1 [shape = 'u32[72,128]{1,0:T(1,128)}', space=vmem, size = 0x9000, scoped, tag = 'internal scratch']
  %s0 = inlined_call_operand.smem [shape: u32[34], index: -1, kind: input, shape index: {}]
  %s1 = sld [smem:[%s0]]
  %s2 = scalar_lea.smem %s0, 1
  %s3 = sld [smem:[%s2]]
  %s4 = scalar_lea.smem %s0, 2
  %s5 = sld [smem:[%s4]]
  %s6 = scalar_lea.smem %s0, 3
  %s7 = sld [smem:[%s6]]
  %s8 = scalar_lea.smem %s0, 4
  %s9 = sld [smem:[%s8]]
  %s10 = scalar_lea.smem %s0, 5
  %s11 = sld [smem:[%s10]]
  %s12 = scalar_lea.smem %s0, 6
  %s13 = sld [smem:[%s12]]
  %s14 = scalar_lea.smem %s0, 7
  %s15 = sld [smem:[%s14]]
  %s16 = scalar_lea.smem %s0, 8
  %s17 = sld [smem:[%s16]]
  %s18 = scalar_lea.smem %s0, 9
  %s19 = sld [smem:[%s18]]
  %s20 = scalar_lea.smem %s0, 10
  %s21 = sld [smem:[%s20]]
  %s22 = scalar_lea.smem %s0, 11
  %s23 = sld [smem:[%s22]]
  %s24 = scalar_lea.smem %s0, 12
  %s25 = sld [smem:[%s24]]
  %s26 = scalar_lea.smem %s0, 13
  %s27 = sld [smem:[%s26]]
  %s28 = scalar_lea.smem %s0, 14
  %s29 = sld [smem:[%s28]]
  %s30 = scalar_lea.smem %s0, 15
  %s31 = sld [smem:[%s30]]
  %s32 = scalar_lea.smem %s0, 16
  %s33 = sld [smem:[%s32]]
  %s34 = scalar_lea.smem %s0, 17
  %s35 = sld [smem:[%s34]]
  %s36 = scalar_lea.smem %s0, 18
  %s37 = sld [smem:[%s36]]
  %s38 = scalar_lea.smem %s0, 19
  %s39 = sld [smem:[%s38]]
  %s40 = scalar_lea.smem %s0, 20
  %s41 = sld [smem:[%s40]]
  %s42 = scalar_lea.smem %s0, 21
  %s43 = sld [smem:[%s42]]
  %s44 = scalar_lea.smem %s0, 22
  %s45 = sld [smem:[%s44]]
  %s46 = scalar_lea.smem %s0, 23
  %s47 = sld [smem:[%s46]]
  %s48 = scalar_lea.smem %s0, 24
  %s49 = sld [smem:[%s48]]
  %s50 = scalar_lea.smem %s0, 25
  %s51 = sld [smem:[%s50]]
  %s52 = scalar_lea.smem %s0, 26
  %s53 = sld [smem:[%s52]]
  %s54 = scalar_lea.smem %s0, 27
  %s55 = sld [smem:[%s54]]
  %s56 = scalar_lea.smem %s0, 28
  %s57 = sld [smem:[%s56]]
  %s58 = scalar_lea.smem %s0, 29
  %s59 = sld [smem:[%s58]]
  %s60 = scalar_lea.smem %s0, 30
  %s61 = sld [smem:[%s60]]
  %s62 = scalar_lea.smem %s0, 31
  %s63 = sld [smem:[%s62]]
  %s64 = scalar_lea.smem %s0, 32
  %s65 = sld [smem:[%s64]]
  %s66 = scalar_lea.smem %s0, 33
  %s67 = sld [smem:[%s66]]
  %s68 = sld [smem:[#allocation0]]
  $region230: #{tpu_custom_call.1} parent=0
    _
  %s70 = ssub.s32 1, %s68
  %s71 = scalar_select 0, %s70, %s68
  $region1: #{tpu_custom_call.1} parent=0
    #allocation2 [shape = 'u8[2048]{0}', space=vmem, size = 0x800, scoped, tag = 'input window, operand 0, single buffered']
    #allocation3 [shape = 's32[1]{0}', space=sflag, size = 0x4, scoped, tag = 'scoped memory for tpu_custom_call.1']
    #allocation4 [shape = 's32[1]{0}', space=sflag, size = 0x4, scoped, tag = 'scoped memory for tpu_custom_call.1']
    #allocation5 [shape = 'u8[2048]{0}', space=vmem, size = 0x800, scoped, tag = 'input window, operand 1, single buffered']
    #allocation6 [shape = 's32[1]{0}', space=sflag, size = 0x4, scoped, tag = 'scoped memory for tpu_custom_call.1']
    #allocation7 [shape = 'u8[4096]{0}', space=vmem, size = 0x1000, scoped, tag = 'input window, operand 2, single buffered']
    #allocation8 [shape = 'u8[131072]{0}', space=vmem, size = 0x20000, scoped, tag = 'input window, operand 3, single buffered']
    #allocation9 [shape = 's32[1]{0}', space=sflag, size = 0x4, scoped, tag = 'scoped memory for tpu_custom_call.1']
    #allocation10 [shape = 'u8[2048]{0}', space=vmem, size = 0x800, scoped, tag = 'input window, operand 4, single buffered']
    #allocation11 [shape = 'u8[262144]{0}', space=vmem, size = 0x40000, scoped, tag = 'input window, operand 5, single buffered']
    #allocation12 [shape = 's32[1]{0}', space=sflag, size = 0x4, scoped, tag = 'scoped memory for tpu_custom_call.1']
    #allocation13 [shape = 'u8[65536]{0}', space=vmem, size = 0x10000, scoped, tag = 'input window, operand 7, single buffered']
    #allocation14 [shape = 'u8[512]{0}', space=vmem, size = 0x400, scoped, tag = 'input window, operand 8, single buffered']
    #allocation15 [shape = 's32[1]{0}', space=sflag, size = 0x4, scoped, tag = 'scoped memory for tpu_custom_call.1']
    #allocation16 [shape = 'u8[32768]{0}', space=vmem, size = 0x8000, scoped, tag = 'input window, operand 9, single buffered']
    #allocation17 [shape = 'u8[512]{0}', space=vmem, size = 0x400, scoped, tag = 'input window, operand 10, single buffered']
    #allocation18 [shape = 's32[1]{0}', space=sflag, size = 0x4, scoped, tag = 'scoped memory for tpu_custom_call.1']
    #allocation19 [shape = 'u8[262144]{0}', space=vmem, size = 0x40000, scoped, tag = 'input window, operand 11, single buffered']
    #allocation20 [shape = 'u8[262144]{0}', space=vmem, size = 0x40000, scoped, tag = 'input window, operand 13, single buffered']
    #allocation21 [shape = 's32[1]{0}', space=sflag, size = 0x4, scoped, tag = 'scoped memory for tpu_custom_call.1']
    #allocation22 [shape = 'u8[65536]{0}', space=vmem, size = 0x10000, scoped, tag = 'input window, operand 15, single buffered']
    #allocation23 [shape = 'u8[32768]{0}', space=vmem, size = 0x8000, scoped, tag = 'input window, operand 17, single buffered']
    #allocation24 [shape = 's32[1]{0}', space=sflag, size = 0x4, scoped, tag = 'scoped memory for tpu_custom_call.1']
    #allocation25 [shape = 'u8[65536]{0}', space=vmem, size = 0x10000, scoped, tag = 'input window, operand 19, single buffered']
    #allocation26 [shape = 'u8[65536]{0}', space=vmem, size = 0x10000, scoped, tag = 'input window, operand 20, single buffered']
    #allocation27 [shape = 's32[1]{0}', space=sflag, size = 0x4, scoped, tag = 'scoped memory for tpu_custom_call.1']
    #allocation28 [shape = 'u8[65536]{0}', space=vmem, size = 0x10000, scoped, tag = 'input window, operand 21, single buffered']
    #allocation29 [shape = 'u8[65536]{0}', space=vmem, size = 0x10000, scoped, tag = 'input window, operand 23, single buffered']
    #allocation30 [shape = 's32[1]{0}', space=sflag, size = 0x4, scoped, tag = 'scoped memory for tpu_custom_call.1']
    #allocation31 [shape = 'u8[32768]{0}', space=vmem, size = 0x8000, scoped, tag = 'input window, operand 25, single buffered']
    #allocation32 [shape = 'u8[32768]{0}', space=vmem, size = 0x8000, scoped, tag = 'input window, operand 27, single buffered']
    #allocation33 [shape = 's32[1]{0}', space=sflag, size = 0x4, scoped, tag = 'scoped memory for tpu_custom_call.1']
    #allocation34 [shape = 'u8[32768]{0}', space=vmem, size = 0x8000, scoped, tag = 'input window, operand 29, single buffered']
    #allocation35 [shape = 'u8[32768]{0}', space=vmem, size = 0x8000, scoped, tag = 'input window, operand 31, single buffered']
    #allocation36 [shape = 's32[1]{0}', space=sflag, size = 0x4, scoped, tag = 'scoped memory for tpu_custom_call.1']
    #allocation37 [shape = 'u8[4096]{0}', space=vmem, size = 0x1000, scoped, tag = 'output window, operand 0, single buffered']
    %72 = vsyncpa [#allocation3], 0
    %73 = vsyncpa [#allocation6], 0
    %74 = vsyncpa [#allocation9], 0
    %75 = vsyncpa [#allocation12], 0
    %76 = vsyncpa [#allocation15], 0
    %77 = vsyncpa [#allocation18], 0
    %78 = vsyncpa [#allocation21], 0
    %79 = vsyncpa [#allocation24], 0
    %80 = vsyncpa [#allocation27], 0
    %81 = vsyncpa [#allocation30], 0
    %82 = vsyncpa [#allocation33], 0
    %83 = vsyncpa [#allocation36], 0
    %84 = vsyncpa [#allocation4], 0
    // Predicated region
    $region2: #{tpu_custom_call.1} parent=1 // pred_check
      _
    $region3: #{tpu_custom_call.1} parent=1 // pred_check_branch
      %86 = sbr.rel (0) target = $region5
    $region4: #{tpu_custom_call.1} parent=1 // pred_region
      %88 = vsyncadd [#allocation3], 0
      %s90 = sshll.u32 %s1, 4
      %s91 = int_to_ptr.hbm [resolvable:$true] %s90
      %s92 = sshll.u32 [#allocation2], 4
      %s93 = int_to_ptr.vmem [resolvable:$true] %s92
      %95 = dma.hbm_to_vmem [thread:$0]  %s91, 64, %s93, [#allocation3]
    $region5: #{tpu_custom_call.1} parent=1 // pred_fallthru
      _
    // Predicated region
    $region6: #{tpu_custom_call.1} parent=1 // pred_check
      _
    $region7: #{tpu_custom_call.1} parent=1 // pred_check_branch
      %97 = sbr.rel (0) target = $region9
    $region8: #{tpu_custom_call.1} parent=1 // pred_region
      %99 = vsyncadd [#allocation6], 0
      %s101 = sshll.u32 %s3, 4
      %s102 = int_to_ptr.hbm [resolvable:$true] %s101
      %s103 = sshll.u32 [#allocation5], 4
      %s104 = int_to_ptr.vmem [resolvable:$true] %s103
      %106 = dma.hbm_to_vmem [thread:$0]  %s102, 64, %s104, [#allocation6]
    $region9: #{tpu_custom_call.1} parent=1 // pred_fallthru
      _
    // Predicated region
    $region10: #{tpu_custom_call.1} parent=1 // pred_check
      _
    $region11: #{tpu_custom_call.1} parent=1 // pred_check_branch
      %108 = sbr.rel (0) target = $region13
    $region12: #{tpu_custom_call.1} parent=1 // pred_region
      %110 = vsyncadd [#allocation6], 0
      %s112 = sshll.u32 %s5, 4
      %s113 = int_to_ptr.hbm [resolvable:$true] %s112
      %s114 = sshll.u32 [#allocation7], 4
      %s115 = int_to_ptr.vmem [resolvable:$true] %s114
      %117 = dma.hbm_to_vmem [thread:$0]  %s113, 128, %s115, [#allocation6]
    $region13: #{tpu_custom_call.1} parent=1 // pred_fallthru
      _
    // Predicated region
    $region14: #{tpu_custom_call.1} parent=1 // pred_check
      _
    $region15: #{tpu_custom_call.1} parent=1 // pred_check_branch
      %119 = sbr.rel (0) target = $region17
    $region16: #{tpu_custom_call.1} parent=1 // pred_region
      %121 = vsyncadd [#allocation9], 0
      %s122 = sshll.u32 %s7, 4
      %s123 = int_to_ptr.hbm [resolvable:$true] %s122
      %s124 = sshll.u32 [#allocation8], 4
      %s125 = int_to_ptr.vmem [resolvable:$true] %s124
      %130 = dma.hbm_to_vmem [thread:$0]  %s123, 4096, %s125, [#allocation9], 256, 256, 16
    $region17: #{tpu_custom_call.1} parent=1 // pred_fallthru
      _
    // Predicated region
    $region18: #{tpu_custom_call.1} parent=1 // pred_check
      _
    $region19: #{tpu_custom_call.1} parent=1 // pred_check_branch
      %132 = sbr.rel (0) target = $region21
    $region20: #{tpu_custom_call.1} parent=1 // pred_region
      %134 = vsyncadd [#allocation9], 0
      %s136 = sshll.u32 %s9, 4
      %s137 = int_to_ptr.hbm [resolvable:$true] %s136
      %s138 = sshll.u32 [#allocation10], 4
      %s139 = int_to_ptr.vmem [resolvable:$true] %s138
      %141 = dma.hbm_to_vmem [thread:$0]  %s137, 64, %s139, [#allocation9]
    $region21: #{tpu_custom_call.1} parent=1 // pred_fallthru
      _
    // Predicated region
    $region22: #{tpu_custom_call.1} parent=1 // pred_check
      _
    $region23: #{tpu_custom_call.1} parent=1 // pred_check_branch
      %143 = sbr.rel (0) target = $region25
    $region24: #{tpu_custom_call.1} parent=1 // pred_region
      %145 = vsyncadd [#allocation12], 0
      %s146 = sshll.u32 %s11, 4
      %s147 = int_to_ptr.hbm [resolvable:$true] %s146
      %s148 = sshll.u32 [#allocation11], 4
      %s149 = int_to_ptr.vmem [resolvable:$true] %s148
      %154 = dma.hbm_to_vmem [thread:$0]  %s147, 8192, %s149, [#allocation12], 128, 128, 8
    $region25: #{tpu_custom_call.1} parent=1 // pred_fallthru
      _
    // Predicated region
    $region26: #{tpu_custom_call.1} parent=1 // pred_check
      _
    $region27: #{tpu_custom_call.1} parent=1 // pred_check_branch
      %156 = sbr.rel (0) target = $region29
    $region28: #{tpu_custom_call.1} parent=1 // pred_region
      _
    $region29: #{tpu_custom_call.1} parent=1 // pred_fallthru
      _
    // Predicated region
    $region30: #{tpu_custom_call.1} parent=1 // pred_check
      _
    $region31: #{tpu_custom_call.1} parent=1 // pred_check_branch
      %158 = sbr.rel (0) target = $region33
    $region32: #{tpu_custom_call.1} parent=1 // pred_region
      %160 = vsyncadd [#allocation12], 0
      %s161 = sshll.u32 %s15, 4
      %s162 = int_to_ptr.hbm [resolvable:$true] %s161
      %s163 = sshll.u32 [#allocation13], 4
      %s164 = int_to_ptr.vmem [resolvable:$true] %s163
      %169 = dma.hbm_to_vmem [thread:$0]  %s162, 2048, %s164, [#allocation12], 64, 64, 4
    $region33: #{tpu_custom_call.1} parent=1 // pred_fallthru
      _
    // Predicated region
    $region34: #{tpu_custom_call.1} parent=1 // pred_check
      _
    $region35: #{tpu_custom_call.1} parent=1 // pred_check_branch
      %171 = sbr.rel (0) target = $region37
    $region36: #{tpu_custom_call.1} parent=1 // pred_region
      %173 = vsyncadd [#allocation15], 0
      %s175 = sshll.u32 %s17, 4
      %s176 = int_to_ptr.hbm [resolvable:$true] %s175
      %s177 = sshll.u32 [#allocation14], 4
      %s178 = int_to_ptr.vmem [resolvable:$true] %s177
      %180 = dma.hbm_to_vmem [thread:$0]  %s176, 16, %s178, [#allocation15]
    $region37: #{tpu_custom_call.1} parent=1 // pred_fallthru
      _
    // Predicated region
    $region38: #{tpu_custom_call.1} parent=1 // pred_check
      _
    $region39: #{tpu_custom_call.1} parent=1 // pred_check_branch
      %182 = sbr.rel (0) target = $region41
    $region40: #{tpu_custom_call.1} parent=1 // pred_region
      %184 = vsyncadd [#allocation15], 0
      %s185 = sshll.u32 %s19, 4
      %s186 = int_to_ptr.hbm [resolvable:$true] %s185
      %s187 = sshll.u32 [#allocation16], 4
      %s188 = int_to_ptr.vmem [resolvable:$true] %s187
      %193 = dma.hbm_to_vmem [thread:$0]  %s186, 1024, %s188, [#allocation15], 64, 64, 4
    $region41: #{tpu_custom_call.1} parent=1 // pred_fallthru
      _
    // Predicated region
    $region42: #{tpu_custom_call.1} parent=1 // pred_check
      _
    $region43: #{tpu_custom_call.1} parent=1 // pred_check_branch
      %195 = sbr.rel (0) target = $region45
    $region44: #{tpu_custom_call.1} parent=1 // pred_region
      %197 = vsyncadd [#allocation18], 0
      %s199 = sshll.u32 %s21, 4
      %s200 = int_to_ptr.hbm [resolvable:$true] %s199
      %s201 = sshll.u32 [#allocation17], 4
      %s202 = int_to_ptr.vmem [resolvable:$true] %s201
      %204 = dma.hbm_to_vmem [thread:$0]  %s200, 16, %s202, [#allocation18]
    $region45: #{tpu_custom_call.1} parent=1 // pred_fallthru
      _
    // Predicated region
    $region46: #{tpu_custom_call.1} parent=1 // pred_check
      _
    $region47: #{tpu_custom_call.1} parent=1 // pred_check_branch
      %206 = sbr.rel (0) target = $region49
    $region48: #{tpu_custom_call.1} parent=1 // pred_region
      %208 = vsyncadd [#allocation18], 0
      %s209 = sshll.u32 %s23, 4
      %s210 = int_to_ptr.hbm [resolvable:$true] %s209
      %s211 = sshll.u32 [#allocation19], 4
      %s212 = int_to_ptr.vmem [resolvable:$true] %s211
      %217 = dma.hbm_to_vmem [thread:$0]  %s210, 8192, %s212, [#allocation18], 256, 256, 16
    $region49: #{tpu_custom_call.1} parent=1 // pred_fallthru
      _
    // Predicated region
    $region50: #{tpu_custom_call.1} parent=1 // pred_check
      _
    $region51: #{tpu_custom_call.1} parent=1 // pred_check_branch
      %219 = sbr.rel (0) target = $region53
    $region52: #{tpu_custom_call.1} parent=1 // pred_region
      _
    $region53: #{tpu_custom_call.1} parent=1 // pred_fallthru
      _
    // Predicated region
    $region54: #{tpu_custom_call.1} parent=1 // pred_check
      _
    $region55: #{tpu_custom_call.1} parent=1 // pred_check_branch
      %221 = sbr.rel (0) target = $region57
    $region56: #{tpu_custom_call.1} parent=1 // pred_region
      %223 = vsyncadd [#allocation21], 0
      %s224 = sshll.u32 %s27, 4
      %s225 = int_to_ptr.hbm [resolvable:$true] %s224
      %s226 = sshll.u32 [#allocation20], 4
      %s227 = int_to_ptr.vmem [resolvable:$true] %s226
      %232 = dma.hbm_to_vmem [thread:$0]  %s225, 8192, %s227, [#allocation21], 128, 128, 8
    $region57: #{tpu_custom_call.1} parent=1 // pred_fallthru
      _
    // Predicated region
    $region58: #{tpu_custom_call.1} parent=1 // pred_check
      _
    $region59: #{tpu_custom_call.1} parent=1 // pred_check_branch
      %234 = sbr.rel (0) target = $region61
    $region60: #{tpu_custom_call.1} parent=1 // pred_region
      _
    $region61: #{tpu_custom_call.1} parent=1 // pred_fallthru
      _
    // Predicated region
    $region62: #{tpu_custom_call.1} parent=1 // pred_check
      _
    $region63: #{tpu_custom_call.1} parent=1 // pred_check_branch
      %236 = sbr.rel (0) target = $region65
    $region64: #{tpu_custom_call.1} parent=1 // pred_region
      %238 = vsyncadd [#allocation21], 0
      %s239 = sshll.u32 %s31, 4
      %s240 = int_to_ptr.hbm [resolvable:$true] %s239
      %s241 = sshll.u32 [#allocation22], 4
      %s242 = int_to_ptr.vmem [resolvable:$true] %s241
      %247 = dma.hbm_to_vmem [thread:$0]  %s240, 2048, %s242, [#allocation21], 64, 64, 4
    $region65: #{tpu_custom_call.1} parent=1 // pred_fallthru
      _
    // Predicated region
    $region66: #{tpu_custom_call.1} parent=1 // pred_check
      _
    $region67: #{tpu_custom_call.1} parent=1 // pred_check_branch
      %249 = sbr.rel (0) target = $region69
    $region68: #{tpu_custom_call.1} parent=1 // pred_region
      _
    $region69: #{tpu_custom_call.1} parent=1 // pred_fallthru
      _
    // Predicated region
    $region70: #{tpu_custom_call.1} parent=1 // pred_check
      _
    $region71: #{tpu_custom_call.1} parent=1 // pred_check_branch
      %251 = sbr.rel (0) target = $region73
    $region72: #{tpu_custom_call.1} parent=1 // pred_region
      %253 = vsyncadd [#allocation24], 0
      %s254 = sshll.u32 %s35, 4
      %s255 = int_to_ptr.hbm [resolvable:$true] %s254
      %s256 = sshll.u32 [#allocation23], 4
      %s257 = int_to_ptr.vmem [resolvable:$true] %s256
      %262 = dma.hbm_to_vmem [thread:$0]  %s255, 1024, %s257, [#allocation24], 64, 64, 4
    $region73: #{tpu_custom_call.1} parent=1 // pred_fallthru
      _
    // Predicated region
    $region74: #{tpu_custom_call.1} parent=1 // pred_check
      _
    $region75: #{tpu_custom_call.1} parent=1 // pred_check_branch
      %264 = sbr.rel (0) target = $region77
    $region76: #{tpu_custom_call.1} parent=1 // pred_region
      _
    $region77: #{tpu_custom_call.1} parent=1 // pred_fallthru
      _
    // Predicated region
    $region78: #{tpu_custom_call.1} parent=1 // pred_check
      _
    $region79: #{tpu_custom_call.1} parent=1 // pred_check_branch
      %266 = sbr.rel (0) target = $region81
    $region80: #{tpu_custom_call.1} parent=1 // pred_region
      %268 = vsyncadd [#allocation24], 0
      %s269 = sshll.u32 %s39, 4
      %s270 = int_to_ptr.hbm [resolvable:$true] %s269
      %s271 = sshll.u32 [#allocation25], 4
      %s272 = int_to_ptr.vmem [resolvable:$true] %s271
      %277 = dma.hbm_to_vmem [thread:$0]  %s270, 2048, %s272, [#allocation24], 128, 128, 8
    $region81: #{tpu_custom_call.1} parent=1 // pred_fallthru
      _
    // Predicated region
    $region82: #{tpu_custom_call.1} parent=1 // pred_check
      _
    $region83: #{tpu_custom_call.1} parent=1 // pred_check_branch
      %279 = sbr.rel (0) target = $region85
    $region84: #{tpu_custom_call.1} parent=1 // pred_region
      %281 = vsyncadd [#allocation27], 0
      %s282 = sshll.u32 %s41, 4
      %s283 = int_to_ptr.hbm [resolvable:$true] %s282
      %s284 = sshll.u32 [#allocation26], 4
      %s285 = int_to_ptr.vmem [resolvable:$true] %s284
      %290 = dma.hbm_to_vmem [thread:$0]  %s283, 2048, %s285, [#allocation27], 128, 128, 8
    $region85: #{tpu_custom_call.1} parent=1 // pred_fallthru
      _
    // Predicated region
    $region86: #{tpu_custom_call.1} parent=1 // pred_check
      _
    $region87: #{tpu_custom_call.1} parent=1 // pred_check_branch
      %292 = sbr.rel (0) target = $region89
    $region88: #{tpu_custom_call.1} parent=1 // pred_region
      %294 = vsyncadd [#allocation27], 0
      %s295 = sshll.u32 %s43, 4
      %s296 = int_to_ptr.hbm [resolvable:$true] %s295
      %s297 = sshll.u32 [#allocation28], 4
      %s298 = int_to_ptr.vmem [resolvable:$true] %s297
      %303 = dma.hbm_to_vmem [thread:$0]  %s296, 2048, %s298, [#allocation27], 128, 128, 8
    $region89: #{tpu_custom_call.1} parent=1 // pred_fallthru
      _
    // Predicated region
    $region90: #{tpu_custom_call.1} parent=1 // pred_check
      _
    $region91: #{tpu_custom_call.1} parent=1 // pred_check_branch
      %305 = sbr.rel (0) target = $region93
    $region92: #{tpu_custom_call.1} parent=1 // pred_region
      _
    $region93: #{tpu_custom_call.1} parent=1 // pred_fallthru
      _
    // Predicated region
    $region94: #{tpu_custom_call.1} parent=1 // pred_check
      _
    $region95: #{tpu_custom_call.1} parent=1 // pred_check_branch
      %307 = sbr.rel (0) target = $region97
    $region96: #{tpu_custom_call.1} parent=1 // pred_region
      %309 = vsyncadd [#allocation30], 0
      %s310 = sshll.u32 %s47, 4
      %s311 = int_to_ptr.hbm [resolvable:$true] %s310
      %s312 = sshll.u32 [#allocation29], 4
      %s313 = int_to_ptr.vmem [resolvable:$true] %s312
      %318 = dma.hbm_to_vmem [thread:$0]  %s311, 2048, %s313, [#allocation30], 64, 64, 4
    $region97: #{tpu_custom_call.1} parent=1 // pred_fallthru
      _
    // Predicated region
    $region98: #{tpu_custom_call.1} parent=1 // pred_check
      _
    $region99: #{tpu_custom_call.1} parent=1 // pred_check_branch
      %320 = sbr.rel (0) target = $region101
    $region100: #{tpu_custom_call.1} parent=1 // pred_region
      _
    $region101: #{tpu_custom_call.1} parent=1 // pred_fallthru
      _
    // Predicated region
    $region102: #{tpu_custom_call.1} parent=1 // pred_check
      _
    $region103: #{tpu_custom_call.1} parent=1 // pred_check_branch
      %322 = sbr.rel (0) target = $region105
    $region104: #{tpu_custom_call.1} parent=1 // pred_region
      %324 = vsyncadd [#allocation30], 0
      %s325 = sshll.u32 %s51, 4
      %s326 = int_to_ptr.hbm [resolvable:$true] %s325
      %s327 = sshll.u32 [#allocation31], 4
      %s328 = int_to_ptr.vmem [resolvable:$true] %s327
      %333 = dma.hbm_to_vmem [thread:$0]  %s326, 1024, %s328, [#allocation30], 64, 64, 4
    $region105: #{tpu_custom_call.1} parent=1 // pred_fallthru
      _
    // Predicated region
    $region106: #{tpu_custom_call.1} parent=1 // pred_check
      _
    $region107: #{tpu_custom_call.1} parent=1 // pred_check_branch
      %335 = sbr.rel (0) target = $region109
    $region108: #{tpu_custom_call.1} parent=1 // pred_region
      _
    $region109: #{tpu_custom_call.1} parent=1 // pred_fallthru
      _
    // Predicated region
    $region110: #{tpu_custom_call.1} parent=1 // pred_check
      _
    $region111: #{tpu_custom_call.1} parent=1 // pred_check_branch
      %337 = sbr.rel (0) target = $region113
    $region112: #{tpu_custom_call.1} parent=1 // pred_region
      %339 = vsyncadd [#allocation33], 0
      %s340 = sshll.u32 %s55, 4
      %s341 = int_to_ptr.hbm [resolvable:$true] %s340
      %s342 = sshll.u32 [#allocation32], 4
      %s343 = int_to_ptr.vmem [resolvable:$true] %s342
      %348 = dma.hbm_to_vmem [thread:$0]  %s341, 1024, %s343, [#allocation33], 64, 64, 4
    $region113: #{tpu_custom_call.1} parent=1 // pred_fallthru
      _
    // Predicated region
    $region114: #{tpu_custom_call.1} parent=1 // pred_check
      _
    $region115: #{tpu_custom_call.1} parent=1 // pred_check_branch
      %350 = sbr.rel (0) target = $region117
    $region116: #{tpu_custom_call.1} parent=1 // pred_region
      _
    $region117: #{tpu_custom_call.1} parent=1 // pred_fallthru
      _
    // Predicated region
    $region118: #{tpu_custom_call.1} parent=1 // pred_check
      _
    $region119: #{tpu_custom_call.1} parent=1 // pred_check_branch
      %352 = sbr.rel (0) target = $region121
    $region120: #{tpu_custom_call.1} parent=1 // pred_region
      %354 = vsyncadd [#allocation33], 0
      %s355 = sshll.u32 %s59, 4
      %s356 = int_to_ptr.hbm [resolvable:$true] %s355
      %s357 = sshll.u32 [#allocation34], 4
      %s358 = int_to_ptr.vmem [resolvable:$true] %s357
      %363 = dma.hbm_to_vmem [thread:$0]  %s356, 1024, %s358, [#allocation33], 64, 64, 4
    $region121: #{tpu_custom_call.1} parent=1 // pred_fallthru
      _
    // Predicated region
    $region122: #{tpu_custom_call.1} parent=1 // pred_check
      _
    $region123: #{tpu_custom_call.1} parent=1 // pred_check_branch
      %365 = sbr.rel (0) target = $region125
    $region124: #{tpu_custom_call.1} parent=1 // pred_region
      _
    $region125: #{tpu_custom_call.1} parent=1 // pred_fallthru
      _
    // Predicated region
    $region126: #{tpu_custom_call.1} parent=1 // pred_check
      _
    $region127: #{tpu_custom_call.1} parent=1 // pred_check_branch
      %367 = sbr.rel (0) target = $region129
    $region128: #{tpu_custom_call.1} parent=1 // pred_region
      %369 = vsyncadd [#allocation36], 0
      %s370 = sshll.u32 %s63, 4
      %s371 = int_to_ptr.hbm [resolvable:$true] %s370
      %s372 = sshll.u32 [#allocation35], 4
      %s373 = int_to_ptr.vmem [resolvable:$true] %s372
      %378 = dma.hbm_to_vmem [thread:$0]  %s371, 1024, %s373, [#allocation36], 64, 64, 4
    $region129: #{tpu_custom_call.1} parent=1 // pred_fallthru
      _
    // Predicated region
    $region130: #{tpu_custom_call.1} parent=1 // pred_check
      _
    $region131: #{tpu_custom_call.1} parent=1 // pred_check_branch
      %380 = sbr.rel (0) target = $region133
    $region132: #{tpu_custom_call.1} parent=1 // pred_region
      _
    $region133: #{tpu_custom_call.1} parent=1 // pred_fallthru
      _
    // Predicated region
    $region134: #{tpu_custom_call.1} parent=1 // pred_check
      _
    $region135: #{tpu_custom_call.1} parent=1 // pred_check_branch
      %382 = sbr.rel (0) target = $region137
    $region136: #{tpu_custom_call.1} parent=1 // pred_region
      %384 = dma.done [#allocation3], 64
    $region137: #{tpu_custom_call.1} parent=1 // pred_fallthru
      _
    // Predicated region
    $region138: #{tpu_custom_call.1} parent=1 // pred_check
      _
    $region139: #{tpu_custom_call.1} parent=1 // pred_check_branch
      %386 = sbr.rel (0) target = $region141
    $region140: #{tpu_custom_call.1} parent=1 // pred_region
      %388 = dma.done [#allocation6], 64
    $region141: #{tpu_custom_call.1} parent=1 // pred_fallthru
      _
    // Predicated region
    $region142: #{tpu_custom_call.1} parent=1 // pred_check
      _
    $region143: #{tpu_custom_call.1} parent=1 // pred_check_branch
      %390 = sbr.rel (0) target = $region145
    $region144: #{tpu_custom_call.1} parent=1 // pred_region
      %392 = dma.done [#allocation6], 128
    $region145: #{tpu_custom_call.1} parent=1 // pred_fallthru
      _
    // Predicated region
    $region146: #{tpu_custom_call.1} parent=1 // pred_check
      _
    $region147: #{tpu_custom_call.1} parent=1 // pred_check_branch
      %394 = sbr.rel (0) target = $region149
    $region148: #{tpu_custom_call.1} parent=1 // pred_region
      %396 = dma.done [#allocation9], 4096
    $region149: #{tpu_custom_call.1} parent=1 // pred_fallthru
      _
    // Predicated region
    $region150: #{tpu_custom_call.1} parent=1 // pred_check
      _
    $region151: #{tpu_custom_call.1} parent=1 // pred_check_branch
      %398 = sbr.rel (0) target = $region153
    $region152: #{tpu_custom_call.1} parent=1 // pred_region
      %400 = dma.done [#allocation9], 64
    $region153: #{tpu_custom_call.1} parent=1 // pred_fallthru
      _
    // Predicated region
    $region154: #{tpu_custom_call.1} parent=1 // pred_check
      _
    $region155: #{tpu_custom_call.1} parent=1 // pred_check_branch
      %402 = sbr.rel (0) target = $region157
    $region156: #{tpu_custom_call.1} parent=1 // pred_region
      %404 = dma.done [#allocation12], 8192
    $region157: #{tpu_custom_call.1} parent=1 // pred_fallthru
      _
    // Predicated region
    $region158: #{tpu_custom_call.1} parent=1 // pred_check
      _
    $region159: #{tpu_custom_call.1} parent=1 // pred_check_branch
      %406 = sbr.rel (0) target = $region161
    $region160: #{tpu_custom_call.1} parent=1 // pred_region
      %408 = dma.done [#allocation12], 2048
    $region161: #{tpu_custom_call.1} parent=1 // pred_fallthru
      _
    // Predicated region
    $region162: #{tpu_custom_call.1} parent=1 // pred_check
      _
    $region163: #{tpu_custom_call.1} parent=1 // pred_check_branch
      %410 = sbr.rel (0) target = $region165
    $region164: #{tpu_custom_call.1} parent=1 // pred_region
      %412 = dma.done [#allocation15], 16
    $region165: #{tpu_custom_call.1} parent=1 // pred_fallthru
      _
    // Predicated region
    $region166: #{tpu_custom_call.1} parent=1 // pred_check
      _
    $region167: #{tpu_custom_call.1} parent=1 // pred_check_branch
      %414 = sbr.rel (0) target = $region169
    $region168: #{tpu_custom_call.1} parent=1 // pred_region
      %416 = dma.done [#allocation15], 1024
    $region169: #{tpu_custom_call.1} parent=1 // pred_fallthru
      _
    // Predicated region
    $region170: #{tpu_custom_call.1} parent=1 // pred_check
      _
    $region171: #{tpu_custom_call.1} parent=1 // pred_check_branch
      %418 = sbr.rel (0) target = $region173
    $region172: #{tpu_custom_call.1} parent=1 // pred_region
      %420 = dma.done [#allocation18], 16
    $region173: #{tpu_custom_call.1} parent=1 // pred_fallthru
      _
    // Predicated region
    $region174: #{tpu_custom_call.1} parent=1 // pred_check
      _
    $region175: #{tpu_custom_call.1} parent=1 // pred_check_branch
      %422 = sbr.rel (0) target = $region177
    $region176: #{tpu_custom_call.1} parent=1 // pred_region
      %424 = dma.done [#allocation18], 8192
    $region177: #{tpu_custom_call.1} parent=1 // pred_fallthru
      _
    // Predicated region
    $region178: #{tpu_custom_call.1} parent=1 // pred_check
      _
    $region179: #{tpu_custom_call.1} parent=1 // pred_check_branch
      %426 = sbr.rel (0) target = $region181
    $region180: #{tpu_custom_call.1} parent=1 // pred_region
      %428 = dma.done [#allocation21], 8192
    $region181: #{tpu_custom_call.1} parent=1 // pred_fallthru
      _
    // Predicated region
    $region182: #{tpu_custom_call.1} parent=1 // pred_check
      _
    $region183: #{tpu_custom_call.1} parent=1 // pred_check_branch
      %430 = sbr.rel (0) target = $region185
    $region184: #{tpu_custom_call.1} parent=1 // pred_region
      %432 = dma.done [#allocation21], 2048
    $region185: #{tpu_custom_call.1} parent=1 // pred_fallthru
      _
    // Predicated region
    $region186: #{tpu_custom_call.1} parent=1 // pred_check
      _
    $region187: #{tpu_custom_call.1} parent=1 // pred_check_branch
      %434 = sbr.rel (0) target = $region189
    $region188: #{tpu_custom_call.1} parent=1 // pred_region
      %436 = dma.done [#allocation24], 1024
    $region189: #{tpu_custom_call.1} parent=1 // pred_fallthru
      _
    // Predicated region
    $region190: #{tpu_custom_call.1} parent=1 // pred_check
      _
    $region191: #{tpu_custom_call.1} parent=1 // pred_check_branch
      %438 = sbr.rel (0) target = $region193
    $region192: #{tpu_custom_call.1} parent=1 // pred_region
      %440 = dma.done [#allocation24], 2048
    $region193: #{tpu_custom_call.1} parent=1 // pred_fallthru
      _
    // Predicated region
    $region194: #{tpu_custom_call.1} parent=1 // pred_check
      _
    $region195: #{tpu_custom_call.1} parent=1 // pred_check_branch
      %442 = sbr.rel (0) target = $region197
    $region196: #{tpu_custom_call.1} parent=1 // pred_region
      %444 = dma.done [#allocation27], 2048
    $region197: #{tpu_custom_call.1} parent=1 // pred_fallthru
      _
    // Predicated region
    $region198: #{tpu_custom_call.1} parent=1 // pred_check
      _
    $region199: #{tpu_custom_call.1} parent=1 // pred_check_branch
      %446 = sbr.rel (0) target = $region201
    $region200: #{tpu_custom_call.1} parent=1 // pred_region
      %448 = dma.done [#allocation27], 2048
    $region201: #{tpu_custom_call.1} parent=1 // pred_fallthru
      _
    // Predicated region
    $region202: #{tpu_custom_call.1} parent=1 // pred_check
      _
    $region203: #{tpu_custom_call.1} parent=1 // pred_check_branch
      %450 = sbr.rel (0) target = $region205
    $region204: #{tpu_custom_call.1} parent=1 // pred_region
      %452 = dma.done [#allocation30], 2048
    $region205: #{tpu_custom_call.1} parent=1 // pred_fallthru
      _
    // Predicated region
    $region206: #{tpu_custom_call.1} parent=1 // pred_check
      _
    $region207: #{tpu_custom_call.1} parent=1 // pred_check_branch
      %454 = sbr.rel (0) target = $region209
    $region208: #{tpu_custom_call.1} parent=1 // pred_region
      %456 = dma.done [#allocation30], 1024
    $region209: #{tpu_custom_call.1} parent=1 // pred_fallthru
      _
    // Predicated region
    $region210: #{tpu_custom_call.1} parent=1 // pred_check
      _
    $region211: #{tpu_custom_call.1} parent=1 // pred_check_branch
      %458 = sbr.rel (0) target = $region213
    $region212: #{tpu_custom_call.1} parent=1 // pred_region
      %460 = dma.done [#allocation33], 1024
    $region213: #{tpu_custom_call.1} parent=1 // pred_fallthru
      _
    // Predicated region
    $region214: #{tpu_custom_call.1} parent=1 // pred_check
      _
    $region215: #{tpu_custom_call.1} parent=1 // pred_check_branch
      %462 = sbr.rel (0) target = $region217
    $region216: #{tpu_custom_call.1} parent=1 // pred_region
      %464 = dma.done [#allocation33], 1024
    $region217: #{tpu_custom_call.1} parent=1 // pred_fallthru
      _
    // Predicated region
    $region218: #{tpu_custom_call.1} parent=1 // pred_check
      _
    $region219: #{tpu_custom_call.1} parent=1 // pred_check_branch
      %466 = sbr.rel (0) target = $region221
    $region220: #{tpu_custom_call.1} parent=1 // pred_region
      %468 = dma.done [#allocation36], 1024
    $region221: #{tpu_custom_call.1} parent=1 // pred_fallthru
      _
    %v469 = vld [vmem:[#allocation5] sm:$0xf]
    %v470 = vld [vmem:[#allocation8] sm:$0xff]
    %v471 = vld [vmem:[#allocation8 + $0x8] sm:$0xff]
    %v472 = vld [vmem:[#allocation8 + $0x10] sm:$0xff]
    %v473 = vld [vmem:[#allocation8 + $0x18] sm:$0xff]
    %v474 = vld [vmem:[#allocation8 + $0x20] sm:$0xff]
    %v475 = vld [vmem:[#allocation8 + $0x28] sm:$0xff]
    %v476 = vld [vmem:[#allocation8 + $0x30] sm:$0xff]
    %v477 = vld [vmem:[#allocation8 + $0x38] sm:$0xff]
    %v478 = vld [vmem:[#allocation8 + $0x40] sm:$0xff]
    %v479 = vld [vmem:[#allocation8 + $0x48] sm:$0xff]
    %v480 = vld [vmem:[#allocation8 + $0x50] sm:$0xff]
    %v481 = vld [vmem:[#allocation8 + $0x58] sm:$0xff]
    %v482 = vld [vmem:[#allocation8 + $0x60] sm:$0xff]
    %v483 = vld [vmem:[#allocation8 + $0x68] sm:$0xff]
    %v484 = vld [vmem:[#allocation8 + $0x70] sm:$0xff]
    %v485 = vld [vmem:[#allocation8 + $0x78] sm:$0xff]
    %v486 = vld [vmem:[#allocation8 + $0x80] sm:$0xff]
    %v487 = vld [vmem:[#allocation8 + $0x88] sm:$0xff]
    %v488 = vld [vmem:[#allocation8 + $0x90] sm:$0xff]
    %v489 = vld [vmem:[#allocation8 + $0x98] sm:$0xff]
    %v490 = vld [vmem:[#allocation8 + $0xa0] sm:$0xff]
    %v491 = vld [vmem:[#allocation8 + $0xa8] sm:$0xff]
    %v492 = vld [vmem:[#allocation8 + $0xb0] sm:$0xff]
    %v493 = vld [vmem:[#allocation8 + $0xb8] sm:$0xff]
    %v494 = vld [vmem:[#allocation8 + $0xc0] sm:$0xff]
    %v495 = vld [vmem:[#allocation8 + $0xc8] sm:$0xff]
    %v496 = vld [vmem:[#allocation8 + $0xd0] sm:$0xff]
    %v497 = vld [vmem:[#allocation8 + $0xd8] sm:$0xff]
    %v498 = vld [vmem:[#allocation8 + $0xe0] sm:$0xff]
    %v499 = vld [vmem:[#allocation8 + $0xe8] sm:$0xff]
    %v500 = vld [vmem:[#allocation8 + $0xf0] sm:$0xff]
    %v501 = vld [vmem:[#allocation8 + $0xf8] sm:$0xff]
    %v502 = vld [vmem:[#allocation10] sm:$0xf]
    %v504 = vperm.slane %v502, 0
    %v505 = vperm.slane %v502, 1
    %v506 = vperm.slane %v502, 2
    %v507 = vperm.slane %v502, 3
    %v544 = vunpack.c.l.b16 %v470
    %v545 = vunpack.c.h.b16 %v470
    %v546 = vunpack.c.l.b16 %v471
    %v547 = vunpack.c.h.b16 %v471
    %v548 = vunpack.c.l.b16 %v472
    %v549 = vunpack.c.h.b16 %v472
    %v550 = vunpack.c.l.b16 %v473
    %v551 = vunpack.c.h.b16 %v473
    %v552 = vunpack.c.l.b16 %v474
    %v553 = vunpack.c.h.b16 %v474
    %v554 = vunpack.c.l.b16 %v475
    %v555 = vunpack.c.h.b16 %v475
    %v556 = vunpack.c.l.b16 %v476
    %v557 = vunpack.c.h.b16 %v476
    %v558 = vunpack.c.l.b16 %v477
    %v559 = vunpack.c.h.b16 %v477
    %v560 = vunpack.c.l.b16 %v478
    %v561 = vunpack.c.h.b16 %v478
    %v562 = vunpack.c.l.b16 %v479
    %v563 = vunpack.c.h.b16 %v479
    %v564 = vunpack.c.l.b16 %v480
    %v565 = vunpack.c.h.b16 %v480
    %v566 = vunpack.c.l.b16 %v481
    %v567 = vunpack.c.h.b16 %v481
    %v568 = vunpack.c.l.b16 %v482
    %v569 = vunpack.c.h.b16 %v482
    %v570 = vunpack.c.l.b16 %v483
    %v571 = vunpack.c.h.b16 %v483
    %v572 = vunpack.c.l.b16 %v484
    %v573 = vunpack.c.h.b16 %v484
    %v574 = vunpack.c.l.b16 %v485
    %v575 = vunpack.c.h.b16 %v485
    %v576 = vunpack.c.l.b16 %v486
    %v577 = vunpack.c.h.b16 %v486
    %v578 = vunpack.c.l.b16 %v487
    %v579 = vunpack.c.h.b16 %v487
    %v580 = vunpack.c.l.b16 %v488
    %v581 = vunpack.c.h.b16 %v488
    %v582 = vunpack.c.l.b16 %v489
    %v583 = vunpack.c.h.b16 %v489
    %v584 = vunpack.c.l.b16 %v490
    %v585 = vunpack.c.h.b16 %v490
    %v586 = vunpack.c.l.b16 %v491
    %v587 = vunpack.c.h.b16 %v491
    %v588 = vunpack.c.l.b16 %v492
    %v589 = vunpack.c.h.b16 %v492
    %v590 = vunpack.c.l.b16 %v493
    %v591 = vunpack.c.h.b16 %v493
    %v592 = vunpack.c.l.b16 %v494
    %v593 = vunpack.c.h.b16 %v494
    %v594 = vunpack.c.l.b16 %v495
    %v595 = vunpack.c.h.b16 %v495
    %v596 = vunpack.c.l.b16 %v496
    %v597 = vunpack.c.h.b16 %v496
    %v598 = vunpack.c.l.b16 %v497
    %v599 = vunpack.c.h.b16 %v497
    %v600 = vunpack.c.l.b16 %v498
    %v601 = vunpack.c.h.b16 %v498
    %v602 = vunpack.c.l.b16 %v499
    %v603 = vunpack.c.h.b16 %v499
    %v604 = vunpack.c.l.b16 %v500
    %v605 = vunpack.c.h.b16 %v500
    %v606 = vunpack.c.l.b16 %v501
    %v607 = vunpack.c.h.b16 %v501
    %v608 = vpack.c.b16 %v548, %v544
    %v609 = vpack.c.b16 %v549, %v545
    %v610 = vpack.c.b16 %v550, %v546
    %v611 = vpack.c.b16 %v551, %v547
    %v612 = vpack.c.b16 %v556, %v552
    %v613 = vpack.c.b16 %v557, %v553
    %v614 = vpack.c.b16 %v558, %v554
    %v615 = vpack.c.b16 %v559, %v555
    %v616 = vpack.c.b16 %v564, %v560
    %v617 = vpack.c.b16 %v565, %v561
    %v618 = vpack.c.b16 %v566, %v562
    %v619 = vpack.c.b16 %v567, %v563
    %v620 = vpack.c.b16 %v572, %v568
    %v621 = vpack.c.b16 %v573, %v569
    %v622 = vpack.c.b16 %v574, %v570
    %v623 = vpack.c.b16 %v575, %v571
    %v624 = vpack.c.b16 %v580, %v576
    %v625 = vpack.c.b16 %v581, %v577
    %v626 = vpack.c.b16 %v582, %v578
    %v627 = vpack.c.b16 %v583, %v579
    %v628 = vpack.c.b16 %v588, %v584
    %v629 = vpack.c.b16 %v589, %v585
    %v630 = vpack.c.b16 %v590, %v586
    %v631 = vpack.c.b16 %v591, %v587
    %v632 = vpack.c.b16 %v596, %v592
    %v633 = vpack.c.b16 %v597, %v593
    %v634 = vpack.c.b16 %v598, %v594
    %v635 = vpack.c.b16 %v599, %v595
    %v636 = vpack.c.b16 %v604, %v600
    %v637 = vpack.c.b16 %v605, %v601
    %v638 = vpack.c.b16 %v606, %v602
    %v639 = vpack.c.b16 %v607, %v603
    %672 = vmatpush.bf16.msra.mxu0 %v636
    %673 = vmatpush.bf16.msra.mxu0 %v632
    %674 = vmatpush.bf16.msra.mxu0 %v628
    %675 = vmatpush.bf16.msra.mxu0 %v624
    %676 = vmatpush.bf16.msra.mxu0 %v620
    %677 = vmatpush.bf16.msra.mxu0 %v616
    %678 = vmatpush.bf16.msra.mxu0 %v612
    %679 = vmatpush.bf16.msra.mxu0 %v608
    %680 = vmatmul.bf16.gmra.mxu0 %v469
    %v681 = vpop.f32.mrf.mxu0
    %v682 = vadd.f32 %v504, %v681
    %v683 = vpop.f32.mrf.mxu0
    %684 = vdwg.mxu0
    %685 = vmatpush.bf16.msra.mxu0 %v637
    %686 = vmatpush.bf16.msra.mxu0 %v633
    %687 = vmatpush.bf16.msra.mxu0 %v629
    %688 = vmatpush.bf16.msra.mxu0 %v625
    %689 = vmatpush.bf16.msra.mxu0 %v621
    %690 = vmatpush.bf16.msra.mxu0 %v617
    %691 = vmatpush.bf16.msra.mxu0 %v613
    %692 = vmatpush.bf16.msra.mxu0 %v609
    %693 = vmatmul.bf16.gmra.mxu0 %v469
    %v694 = vpop.f32.mrf.mxu0
    %v695 = vadd.f32 %v505, %v694
    %v696 = vpop.f32.mrf.mxu0
    %697 = vdwg.mxu0
    %698 = vmatpush.bf16.msra.mxu0 %v638
    %699 = vmatpush.bf16.msra.mxu0 %v634
    %700 = vmatpush.bf16.msra.mxu0 %v630
    %701 = vmatpush.bf16.msra.mxu0 %v626
    %702 = vmatpush.bf16.msra.mxu0 %v622
    %703 = vmatpush.bf16.msra.mxu0 %v618
    %704 = vmatpush.bf16.msra.mxu0 %v614
    %705 = vmatpush.bf16.msra.mxu0 %v610
    %706 = vmatmul.bf16.gmra.mxu0 %v469
    %v707 = vpop.f32.mrf.mxu0
    %v708 = vadd.f32 %v506, %v707
    %v709 = vpop.f32.mrf.mxu0
    %710 = vdwg.mxu0
    %711 = vmatpush.bf16.msra.mxu0 %v639
    %712 = vmatpush.bf16.msra.mxu0 %v635
    %713 = vmatpush.bf16.msra.mxu0 %v631
    %714 = vmatpush.bf16.msra.mxu0 %v627
    %715 = vmatpush.bf16.msra.mxu0 %v623
    %716 = vmatpush.bf16.msra.mxu0 %v619
    %717 = vmatpush.bf16.msra.mxu0 %v615
    %718 = vmatpush.bf16.msra.mxu0 %v611
    %719 = vmatmul.bf16.gmra.mxu0 %v469
    %v720 = vpop.f32.mrf.mxu0
    %v721 = vadd.f32 %v507, %v720
    %v722 = vpop.f32.mrf.mxu0
    %723 = vdwg.mxu0
    %v724 = vmax.f32 %v682, 0.0
    %v725 = vmax.f32 %v695, 0.0
    %v726 = vmax.f32 %v708, 0.0
    %v727 = vmax.f32 %v721, 0.0
    %v728 = vpack.c.bf16 %v724, %v724
    %v729 = vpack.c.bf16 %v725, %v725
    %v730 = vpack.c.bf16 %v726, %v726
    %v731 = vpack.c.bf16 %v727, %v727
    %v732 = vld [vmem:[#allocation11] sm:$0xff]
    %v733 = vld [vmem:[#allocation11 + $0x8] sm:$0xff]
    %v734 = vld [vmem:[#allocation11 + $0x10] sm:$0xff]
    %v735 = vld [vmem:[#allocation11 + $0x18] sm:$0xff]
    %v736 = vld [vmem:[#allocation11 + $0x20] sm:$0xff]
    %v737 = vld [vmem:[#allocation11 + $0x28] sm:$0xff]
    %v738 = vld [vmem:[#allocation11 + $0x30] sm:$0xff]
    %v739 = vld [vmem:[#allocation11 + $0x38] sm:$0xff]
    %v740 = vld [vmem:[#allocation11 + $0x40] sm:$0xff]
    %v741 = vld [vmem:[#allocation11 + $0x48] sm:$0xff]
    %v742 = vld [vmem:[#allocation11 + $0x50] sm:$0xff]
    %v743 = vld [vmem:[#allocation11 + $0x58] sm:$0xff]
    %v744 = vld [vmem:[#allocation11 + $0x60] sm:$0xff]
    %v745 = vld [vmem:[#allocation11 + $0x68] sm:$0xff]
    %v746 = vld [vmem:[#allocation11 + $0x70] sm:$0xff]
    %v747 = vld [vmem:[#allocation11 + $0x78] sm:$0xff]
    %v748 = vld [vmem:[#allocation11 + $0x80] sm:$0xff]
    %v749 = vld [vmem:[#allocation11 + $0x88] sm:$0xff]
    %v750 = vld [vmem:[#allocation11 + $0x90] sm:$0xff]
    %v751 = vld [vmem:[#allocation11 + $0x98] sm:$0xff]
    %v752 = vld [vmem:[#allocation11 + $0xa0] sm:$0xff]
    %v753 = vld [vmem:[#allocation11 + $0xa8] sm:$0xff]
    %v754 = vld [vmem:[#allocation11 + $0xb0] sm:$0xff]
    %v755 = vld [vmem:[#allocation11 + $0xb8] sm:$0xff]
    %v756 = vld [vmem:[#allocation11 + $0xc0] sm:$0xff]
    %v757 = vld [vmem:[#allocation11 + $0xc8] sm:$0xff]
    %v758 = vld [vmem:[#allocation11 + $0xd0] sm:$0xff]
    %v759 = vld [vmem:[#allocation11 + $0xd8] sm:$0xff]
    %v760 = vld [vmem:[#allocation11 + $0xe0] sm:$0xff]
    %v761 = vld [vmem:[#allocation11 + $0xe8] sm:$0xff]
    %v762 = vld [vmem:[#allocation11 + $0xf0] sm:$0xff]
    %v763 = vld [vmem:[#allocation11 + $0xf8] sm:$0xff]
    %v764 = vld [vmem:[#allocation11 + $0x100] sm:$0xff]
    %v765 = vld [vmem:[#allocation11 + $0x108] sm:$0xff]
    %v766 = vld [vmem:[#allocation11 + $0x110] sm:$0xff]
    %v767 = vld [vmem:[#allocation11 + $0x118] sm:$0xff]
    %v768 = vld [vmem:[#allocation11 + $0x120] sm:$0xff]
    %v769 = vld [vmem:[#allocation11 + $0x128] sm:$0xff]
    %v770 = vld [vmem:[#allocation11 + $0x130] sm:$0xff]
    %v771 = vld [vmem:[#allocation11 + $0x138] sm:$0xff]
    %v772 = vld [vmem:[#allocation11 + $0x140] sm:$0xff]
    %v773 = vld [vmem:[#allocation11 + $0x148] sm:$0xff]
    %v774 = vld [vmem:[#allocation11 + $0x150] sm:$0xff]
    %v775 = vld [vmem:[#allocation11 + $0x158] sm:$0xff]
    %v776 = vld [vmem:[#allocation11 + $0x160] sm:$0xff]
    %v777 = vld [vmem:[#allocation11 + $0x168] sm:$0xff]
    %v778 = vld [vmem:[#allocation11 + $0x170] sm:$0xff]
    %v779 = vld [vmem:[#allocation11 + $0x178] sm:$0xff]
    %v780 = vld [vmem:[#allocation11 + $0x180] sm:$0xff]
    %v781 = vld [vmem:[#allocation11 + $0x188] sm:$0xff]
    %v782 = vld [vmem:[#allocation11 + $0x190] sm:$0xff]
    %v783 = vld [vmem:[#allocation11 + $0x198] sm:$0xff]
    %v784 = vld [vmem:[#allocation11 + $0x1a0] sm:$0xff]
    %v785 = vld [vmem:[#allocation11 + $0x1a8] sm:$0xff]
    %v786 = vld [vmem:[#allocation11 + $0x1b0] sm:$0xff]
    %v787 = vld [vmem:[#allocation11 + $0x1b8] sm:$0xff]
    %v788 = vld [vmem:[#allocation11 + $0x1c0] sm:$0xff]
    %v789 = vld [vmem:[#allocation11 + $0x1c8] sm:$0xff]
    %v790 = vld [vmem:[#allocation11 + $0x1d0] sm:$0xff]
    %v791 = vld [vmem:[#allocation11 + $0x1d8] sm:$0xff]
    %v792 = vld [vmem:[#allocation11 + $0x1e0] sm:$0xff]
    %v793 = vld [vmem:[#allocation11 + $0x1e8] sm:$0xff]
    %v794 = vld [vmem:[#allocation11 + $0x1f0] sm:$0xff]
    %v795 = vld [vmem:[#allocation11 + $0x1f8] sm:$0xff]
    %v796 = vld [vmem:[%s13] sm:$0x3]
    %v798 = vperm.slane %v796, 0
    %v799 = vperm.slane %v796, 1
    %v866 = vunpack.c.l.b16 %v732
    %v867 = vunpack.c.h.b16 %v732
    %v868 = vunpack.c.l.b16 %v733
    %v869 = vunpack.c.h.b16 %v733
    %v870 = vunpack.c.l.b16 %v734
    %v871 = vunpack.c.h.b16 %v734
    %v872 = vunpack.c.l.b16 %v735
    %v873 = vunpack.c.h.b16 %v735
    %v874 = vunpack.c.l.b16 %v736
    %v875 = vunpack.c.h.b16 %v736
    %v876 = vunpack.c.l.b16 %v737
    %v877 = vunpack.c.h.b16 %v737
    %v878 = vunpack.c.l.b16 %v738
    %v879 = vunpack.c.h.b16 %v738
    %v880 = vunpack.c.l.b16 %v739
    %v881 = vunpack.c.h.b16 %v739
    %v882 = vunpack.c.l.b16 %v740
    %v883 = vunpack.c.h.b16 %v740
    %v884 = vunpack.c.l.b16 %v741
    %v885 = vunpack.c.h.b16 %v741
    %v886 = vunpack.c.l.b16 %v742
    %v887 = vunpack.c.h.b16 %v742
    %v888 = vunpack.c.l.b16 %v743
    %v889 = vunpack.c.h.b16 %v743
    %v890 = vunpack.c.l.b16 %v744
    %v891 = vunpack.c.h.b16 %v744
    %v892 = vunpack.c.l.b16 %v745
    %v893 = vunpack.c.h.b16 %v745
    %v894 = vunpack.c.l.b16 %v746
    %v895 = vunpack.c.h.b16 %v746
    %v896 = vunpack.c.l.b16 %v747
    %v897 = vunpack.c.h.b16 %v747
    %v898 = vunpack.c.l.b16 %v748
    %v899 = vunpack.c.h.b16 %v748
    %v900 = vunpack.c.l.b16 %v749
    %v901 = vunpack.c.h.b16 %v749
    %v902 = vunpack.c.l.b16 %v750
    %v903 = vunpack.c.h.b16 %v750
    %v904 = vunpack.c.l.b16 %v751
    %v905 = vunpack.c.h.b16 %v751
    %v906 = vunpack.c.l.b16 %v752
    %v907 = vunpack.c.h.b16 %v752
    %v908 = vunpack.c.l.b16 %v753
    %v909 = vunpack.c.h.b16 %v753
    %v910 = vunpack.c.l.b16 %v754
    %v911 = vunpack.c.h.b16 %v754
    %v912 = vunpack.c.l.b16 %v755
    %v913 = vunpack.c.h.b16 %v755
    %v914 = vunpack.c.l.b16 %v756
    %v915 = vunpack.c.h.b16 %v756
    %v916 = vunpack.c.l.b16 %v757
    %v917 = vunpack.c.h.b16 %v757
    %v918 = vunpack.c.l.b16 %v758
    %v919 = vunpack.c.h.b16 %v758
    %v920 = vunpack.c.l.b16 %v759
    %v921 = vunpack.c.h.b16 %v759
    %v922 = vunpack.c.l.b16 %v760
    %v923 = vunpack.c.h.b16 %v760
    %v924 = vunpack.c.l.b16 %v761
    %v925 = vunpack.c.h.b16 %v761
    %v926 = vunpack.c.l.b16 %v762
    %v927 = vunpack.c.h.b16 %v762
    %v928 = vunpack.c.l.b16 %v763
    %v929 = vunpack.c.h.b16 %v763
    %v930 = vunpack.c.l.b16 %v764
    %v931 = vunpack.c.h.b16 %v764
    %v932 = vunpack.c.l.b16 %v765
    %v933 = vunpack.c.h.b16 %v765
    %v934 = vunpack.c.l.b16 %v766
    %v935 = vunpack.c.h.b16 %v766
    %v936 = vunpack.c.l.b16 %v767
    %v937 = vunpack.c.h.b16 %v767
    %v938 = vunpack.c.l.b16 %v768
    %v939 = vunpack.c.h.b16 %v768
    %v940 = vunpack.c.l.b16 %v769
    %v941 = vunpack.c.h.b16 %v769
    %v942 = vunpack.c.l.b16 %v770
    %v943 = vunpack.c.h.b16 %v770
    %v944 = vunpack.c.l.b16 %v771
    %v945 = vunpack.c.h.b16 %v771
    %v946 = vunpack.c.l.b16 %v772
    %v947 = vunpack.c.h.b16 %v772
    %v948 = vunpack.c.l.b16 %v773
    %v949 = vunpack.c.h.b16 %v773
    %v950 = vunpack.c.l.b16 %v774
    %v951 = vunpack.c.h.b16 %v774
    %v952 = vunpack.c.l.b16 %v775
    %v953 = vunpack.c.h.b16 %v775
    %v954 = vunpack.c.l.b16 %v776
    %v955 = vunpack.c.h.b16 %v776
    %v956 = vunpack.c.l.b16 %v777
    %v957 = vunpack.c.h.b16 %v777
    %v958 = vunpack.c.l.b16 %v778
    %v959 = vunpack.c.h.b16 %v778
    %v960 = vunpack.c.l.b16 %v779
    %v961 = vunpack.c.h.b16 %v779
    %v962 = vunpack.c.l.b16 %v780
    %v963 = vunpack.c.h.b16 %v780
    %v964 = vunpack.c.l.b16 %v781
    %v965 = vunpack.c.h.b16 %v781
    %v966 = vunpack.c.l.b16 %v782
    %v967 = vunpack.c.h.b16 %v782
    %v968 = vunpack.c.l.b16 %v783
    %v969 = vunpack.c.h.b16 %v783
    %v970 = vunpack.c.l.b16 %v784
    %v971 = vunpack.c.h.b16 %v784
    %v972 = vunpack.c.l.b16 %v785
    %v973 = vunpack.c.h.b16 %v785
    %v974 = vunpack.c.l.b16 %v786
    %v975 = vunpack.c.h.b16 %v786
    %v976 = vunpack.c.l.b16 %v787
    %v977 = vunpack.c.h.b16 %v787
    %v978 = vunpack.c.l.b16 %v788
    %v979 = vunpack.c.h.b16 %v788
    %v980 = vunpack.c.l.b16 %v789
    %v981 = vunpack.c.h.b16 %v789
    %v982 = vunpack.c.l.b16 %v790
    %v983 = vunpack.c.h.b16 %v790
    %v984 = vunpack.c.l.b16 %v791
    %v985 = vunpack.c.h.b16 %v791
    %v986 = vunpack.c.l.b16 %v792
    %v987 = vunpack.c.h.b16 %v792
    %v988 = vunpack.c.l.b16 %v793
    %v989 = vunpack.c.h.b16 %v793
    %v990 = vunpack.c.l.b16 %v794
    %v991 = vunpack.c.h.b16 %v794
    %v992 = vunpack.c.l.b16 %v795
    %v993 = vunpack.c.h.b16 %v795
    %v994 = vpack.c.b16 %v868, %v866
    %v995 = vpack.c.b16 %v869, %v867
    %v996 = vpack.c.b16 %v872, %v870
    %v997 = vpack.c.b16 %v873, %v871
    %v998 = vpack.c.b16 %v876, %v874
    %v999 = vpack.c.b16 %v877, %v875
    %v1000 = vpack.c.b16 %v880, %v878
    %v1001 = vpack.c.b16 %v881, %v879
    %v1002 = vpack.c.b16 %v884, %v882
    %v1003 = vpack.c.b16 %v885, %v883
    %v1004 = vpack.c.b16 %v888, %v886
    %v1005 = vpack.c.b16 %v889, %v887
    %v1006 = vpack.c.b16 %v892, %v890
    %v1007 = vpack.c.b16 %v893, %v891
    %v1008 = vpack.c.b16 %v896, %v894
    %v1009 = vpack.c.b16 %v897, %v895
    %v1010 = vpack.c.b16 %v900, %v898
    %v1011 = vpack.c.b16 %v901, %v899
    %v1012 = vpack.c.b16 %v904, %v902
    %v1013 = vpack.c.b16 %v905, %v903
    %v1014 = vpack.c.b16 %v908, %v906
    %v1015 = vpack.c.b16 %v909, %v907
    %v1016 = vpack.c.b16 %v912, %v910
    %v1017 = vpack.c.b16 %v913, %v911
    %v1018 = vpack.c.b16 %v916, %v914
    %v1019 = vpack.c.b16 %v917, %v915
    %v1020 = vpack.c.b16 %v920, %v918
    %v1021 = vpack.c.b16 %v921, %v919
    %v1022 = vpack.c.b16 %v924, %v922
    %v1023 = vpack.c.b16 %v925, %v923
    %v1024 = vpack.c.b16 %v928, %v926
    %v1025 = vpack.c.b16 %v929, %v927
    %v1026 = vpack.c.b16 %v932, %v930
    %v1027 = vpack.c.b16 %v933, %v931
    %v1028 = vpack.c.b16 %v936, %v934
    %v1029 = vpack.c.b16 %v937, %v935
    %v1030 = vpack.c.b16 %v940, %v938
    %v1031 = vpack.c.b16 %v941, %v939
    %v1032 = vpack.c.b16 %v944, %v942
    %v1033 = vpack.c.b16 %v945, %v943
    %v1034 = vpack.c.b16 %v948, %v946
    %v1035 = vpack.c.b16 %v949, %v947
    %v1036 = vpack.c.b16 %v952, %v950
    %v1037 = vpack.c.b16 %v953, %v951
    %v1038 = vpack.c.b16 %v956, %v954
    %v1039 = vpack.c.b16 %v957, %v955
    %v1040 = vpack.c.b16 %v960, %v958
    %v1041 = vpack.c.b16 %v961, %v959
    %v1042 = vpack.c.b16 %v964, %v962
    %v1043 = vpack.c.b16 %v965, %v963
    %v1044 = vpack.c.b16 %v968, %v966
    %v1045 = vpack.c.b16 %v969, %v967
    %v1046 = vpack.c.b16 %v972, %v970
    %v1047 = vpack.c.b16 %v973, %v971
    %v1048 = vpack.c.b16 %v976, %v974
    %v1049 = vpack.c.b16 %v977, %v975
    %v1050 = vpack.c.b16 %v980, %v978
    %v1051 = vpack.c.b16 %v981, %v979
    %v1052 = vpack.c.b16 %v984, %v982
    %v1053 = vpack.c.b16 %v985, %v983
    %v1054 = vpack.c.b16 %v988, %v986
    %v1055 = vpack.c.b16 %v989, %v987
    %v1056 = vpack.c.b16 %v992, %v990
    %v1057 = vpack.c.b16 %v993, %v991
    %1122 = vmatpush.bf16.msra.mxu0 %v1008
    %1123 = vmatpush.bf16.msra.mxu0 %v1006
    %1124 = vmatpush.bf16.msra.mxu0 %v1004
    %1125 = vmatpush.bf16.msra.mxu0 %v1002
    %1126 = vmatpush.bf16.msra.mxu0 %v1000
    %1127 = vmatpush.bf16.msra.mxu0 %v998
    %1128 = vmatpush.bf16.msra.mxu0 %v996
    %1129 = vmatpush.bf16.msra.mxu0 %v994
    %1130 = vmatmul.bf16.gmra.mxu0 %v728
    %v1131 = vpop.f32.mrf.mxu0
    %v1132 = vadd.f32 %v798, %v1131
    %v1133 = vpop.f32.mrf.mxu0
    %1134 = vdwg.mxu0
    %1135 = vmatpush.bf16.msra.mxu0 %v1024
    %1136 = vmatpush.bf16.msra.mxu0 %v1022
    %1137 = vmatpush.bf16.msra.mxu0 %v1020
    %1138 = vmatpush.bf16.msra.mxu0 %v1018
    %1139 = vmatpush.bf16.msra.mxu0 %v1016
    %1140 = vmatpush.bf16.msra.mxu0 %v1014
    %1141 = vmatpush.bf16.msra.mxu0 %v1012
    %1142 = vmatpush.bf16.msra.mxu0 %v1010
    %1143 = vmatmul.bf16.gmra.mxu0 %v729
    %v1144 = vpop.f32.mrf.mxu0
    %v1145 = vadd.f32 %v1132, %v1144
    %v1146 = vpop.f32.mrf.mxu0
    %1147 = vdwg.mxu0
    %1148 = vmatpush.bf16.msra.mxu0 %v1040
    %1149 = vmatpush.bf16.msra.mxu0 %v1038
    %1150 = vmatpush.bf16.msra.mxu0 %v1036
    %1151 = vmatpush.bf16.msra.mxu0 %v1034
    %1152 = vmatpush.bf16.msra.mxu0 %v1032
    %1153 = vmatpush.bf16.msra.mxu0 %v1030
    %1154 = vmatpush.bf16.msra.mxu0 %v1028
    %1155 = vmatpush.bf16.msra.mxu0 %v1026
    %1156 = vmatmul.bf16.gmra.mxu0 %v730
    %v1157 = vpop.f32.mrf.mxu0
    %v1158 = vadd.f32 %v1145, %v1157
    %v1159 = vpop.f32.mrf.mxu0
    %1160 = vdwg.mxu0
    %1161 = vmatpush.bf16.msra.mxu0 %v1056
    %1162 = vmatpush.bf16.msra.mxu0 %v1054
    %1163 = vmatpush.bf16.msra.mxu0 %v1052
    %1164 = vmatpush.bf16.msra.mxu0 %v1050
    %1165 = vmatpush.bf16.msra.mxu0 %v1048
    %1166 = vmatpush.bf16.msra.mxu0 %v1046
    %1167 = vmatpush.bf16.msra.mxu0 %v1044
    %1168 = vmatpush.bf16.msra.mxu0 %v1042
    %1169 = vmatmul.bf16.gmra.mxu0 %v731
    %v1170 = vpop.f32.mrf.mxu0
    %v1171 = vadd.f32 %v1158, %v1170
    %v1172 = vpop.f32.mrf.mxu0
    %1173 = vdwg.mxu0
    %1174 = vmatpush.bf16.msra.mxu0 %v1009
    %1175 = vmatpush.bf16.msra.mxu0 %v1007
    %1176 = vmatpush.bf16.msra.mxu0 %v1005
    %1177 = vmatpush.bf16.msra.mxu0 %v1003
    %1178 = vmatpush.bf16.msra.mxu0 %v1001
    %1179 = vmatpush.bf16.msra.mxu0 %v999
    %1180 = vmatpush.bf16.msra.mxu0 %v997
    %1181 = vmatpush.bf16.msra.mxu0 %v995
    %1182 = vmatmul.bf16.gmra.mxu0 %v728
    %v1183 = vpop.f32.mrf.mxu0
    %v1184 = vadd.f32 %v799, %v1183
    %v1185 = vpop.f32.mrf.mxu0
    %1186 = vdwg.mxu0
    %1187 = vmatpush.bf16.msra.mxu0 %v1025
    %1188 = vmatpush.bf16.msra.mxu0 %v1023
    %1189 = vmatpush.bf16.msra.mxu0 %v1021
    %1190 = vmatpush.bf16.msra.mxu0 %v1019
    %1191 = vmatpush.bf16.msra.mxu0 %v1017
    %1192 = vmatpush.bf16.msra.mxu0 %v1015
    %1193 = vmatpush.bf16.msra.mxu0 %v1013
    %1194 = vmatpush.bf16.msra.mxu0 %v1011
    %1195 = vmatmul.bf16.gmra.mxu0 %v729
    %v1196 = vpop.f32.mrf.mxu0
    %v1197 = vadd.f32 %v1184, %v1196
    %v1198 = vpop.f32.mrf.mxu0
    %1199 = vdwg.mxu0
    %1200 = vmatpush.bf16.msra.mxu0 %v1041
    %1201 = vmatpush.bf16.msra.mxu0 %v1039
    %1202 = vmatpush.bf16.msra.mxu0 %v1037
    %1203 = vmatpush.bf16.msra.mxu0 %v1035
    %1204 = vmatpush.bf16.msra.mxu0 %v1033
    %1205 = vmatpush.bf16.msra.mxu0 %v1031
    %1206 = vmatpush.bf16.msra.mxu0 %v1029
    %1207 = vmatpush.bf16.msra.mxu0 %v1027
    %1208 = vmatmul.bf16.gmra.mxu0 %v730
    %v1209 = vpop.f32.mrf.mxu0
    %v1210 = vadd.f32 %v1197, %v1209
    %v1211 = vpop.f32.mrf.mxu0
    %1212 = vdwg.mxu0
    %1213 = vmatpush.bf16.msra.mxu0 %v1057
    %1214 = vmatpush.bf16.msra.mxu0 %v1055
    %1215 = vmatpush.bf16.msra.mxu0 %v1053
    %1216 = vmatpush.bf16.msra.mxu0 %v1051
    %1217 = vmatpush.bf16.msra.mxu0 %v1049
    %1218 = vmatpush.bf16.msra.mxu0 %v1047
    %1219 = vmatpush.bf16.msra.mxu0 %v1045
    %1220 = vmatpush.bf16.msra.mxu0 %v1043
    %1221 = vmatmul.bf16.gmra.mxu0 %v731
    %v1222 = vpop.f32.mrf.mxu0
    %v1223 = vadd.f32 %v1210, %v1222
    %v1224 = vpop.f32.mrf.mxu0
    %1225 = vdwg.mxu0
    %v1226 = vmax.f32 %v1171, 0.0
    %v1227 = vmax.f32 %v1223, 0.0
    %v1228 = vpack.c.bf16 %v1226, %v1226
    %v1229 = vpack.c.bf16 %v1227, %v1227
    %v1230 = vld [vmem:[#allocation13] sm:$0xf]
    %v1231 = vld [vmem:[#allocation13 + $0x4] sm:$0xf]
    %v1232 = vld [vmem:[#allocation13 + $0x8] sm:$0xf]
    %v1233 = vld [vmem:[#allocation13 + $0xc] sm:$0xf]
    %v1234 = vld [vmem:[#allocation13 + $0x10] sm:$0xf]
    %v1235 = vld [vmem:[#allocation13 + $0x14] sm:$0xf]
    %v1236 = vld [vmem:[#allocation13 + $0x18] sm:$0xf]
    %v1237 = vld [vmem:[#allocation13 + $0x1c] sm:$0xf]
    %v1238 = vld [vmem:[#allocation13 + $0x20] sm:$0xf]
    %v1239 = vld [vmem:[#allocation13 + $0x24] sm:$0xf]
    %v1240 = vld [vmem:[#allocation13 + $0x28] sm:$0xf]
    %v1241 = vld [vmem:[#allocation13 + $0x2c] sm:$0xf]
    %v1242 = vld [vmem:[#allocation13 + $0x30] sm:$0xf]
    %v1243 = vld [vmem:[#allocation13 + $0x34] sm:$0xf]
    %v1244 = vld [vmem:[#allocation13 + $0x38] sm:$0xf]
    %v1245 = vld [vmem:[#allocation13 + $0x3c] sm:$0xf]
    %v1246 = vld [vmem:[#allocation13 + $0x40] sm:$0xf]
    %v1247 = vld [vmem:[#allocation13 + $0x44] sm:$0xf]
    %v1248 = vld [vmem:[#allocation13 + $0x48] sm:$0xf]
    %v1249 = vld [vmem:[#allocation13 + $0x4c] sm:$0xf]
    %v1250 = vld [vmem:[#allocation13 + $0x50] sm:$0xf]
    %v1251 = vld [vmem:[#allocation13 + $0x54] sm:$0xf]
    %v1252 = vld [vmem:[#allocation13 + $0x58] sm:$0xf]
    %v1253 = vld [vmem:[#allocation13 + $0x5c] sm:$0xf]
    %v1254 = vld [vmem:[#allocation13 + $0x60] sm:$0xf]
    %v1255 = vld [vmem:[#allocation13 + $0x64] sm:$0xf]
    %v1256 = vld [vmem:[#allocation13 + $0x68] sm:$0xf]
    %v1257 = vld [vmem:[#allocation13 + $0x6c] sm:$0xf]
    %v1258 = vld [vmem:[#allocation13 + $0x70] sm:$0xf]
    %v1259 = vld [vmem:[#allocation13 + $0x74] sm:$0xf]
    %v1260 = vld [vmem:[#allocation13 + $0x78] sm:$0xf]
    %v1261 = vld [vmem:[#allocation13 + $0x7c] sm:$0xf]
    %v1262 = vld [vmem:[#allocation14] sm:$0x1]
    %v1264 = vperm.slane %v1262, 0
    %v1298 = vunpack.c.l.b16 %v1230
    %v1299 = vunpack.c.l.b16 %v1231
    %v1300 = vunpack.c.l.b16 %v1232
    %v1301 = vunpack.c.l.b16 %v1233
    %v1302 = vunpack.c.l.b16 %v1234
    %v1303 = vunpack.c.l.b16 %v1235
    %v1304 = vunpack.c.l.b16 %v1236
    %v1305 = vunpack.c.l.b16 %v1237
    %v1306 = vunpack.c.l.b16 %v1238
    %v1307 = vunpack.c.l.b16 %v1239
    %v1308 = vunpack.c.l.b16 %v1240
    %v1309 = vunpack.c.l.b16 %v1241
    %v1310 = vunpack.c.l.b16 %v1242
    %v1311 = vunpack.c.l.b16 %v1243
    %v1312 = vunpack.c.l.b16 %v1244
    %v1313 = vunpack.c.l.b16 %v1245
    %v1314 = vunpack.c.l.b16 %v1246
    %v1315 = vunpack.c.l.b16 %v1247
    %v1316 = vunpack.c.l.b16 %v1248
    %v1317 = vunpack.c.l.b16 %v1249
    %v1318 = vunpack.c.l.b16 %v1250
    %v1319 = vunpack.c.l.b16 %v1251
    %v1320 = vunpack.c.l.b16 %v1252
    %v1321 = vunpack.c.l.b16 %v1253
    %v1322 = vunpack.c.l.b16 %v1254
    %v1323 = vunpack.c.l.b16 %v1255
    %v1324 = vunpack.c.l.b16 %v1256
    %v1325 = vunpack.c.l.b16 %v1257
    %v1326 = vunpack.c.l.b16 %v1258
    %v1327 = vunpack.c.l.b16 %v1259
    %v1328 = vunpack.c.l.b16 %v1260
    %v1329 = vunpack.c.l.b16 %v1261
    %v1330 = vpack.c.b16 %v1299, %v1298
    %v1331 = vpack.c.b16 %v1301, %v1300
    %v1332 = vpack.c.b16 %v1303, %v1302
    %v1333 = vpack.c.b16 %v1305, %v1304
    %v1334 = vpack.c.b16 %v1307, %v1306
    %v1335 = vpack.c.b16 %v1309, %v1308
    %v1336 = vpack.c.b16 %v1311, %v1310
    %v1337 = vpack.c.b16 %v1313, %v1312
    %v1338 = vpack.c.b16 %v1315, %v1314
    %v1339 = vpack.c.b16 %v1317, %v1316
    %v1340 = vpack.c.b16 %v1319, %v1318
    %v1341 = vpack.c.b16 %v1321, %v1320
    %v1342 = vpack.c.b16 %v1323, %v1322
    %v1343 = vpack.c.b16 %v1325, %v1324
    %v1344 = vpack.c.b16 %v1327, %v1326
    %v1345 = vpack.c.b16 %v1329, %v1328
    %1362 = vmatpush.bf16.msra.mxu0 %v1337
    %1363 = vmatpush.bf16.msra.mxu0 %v1336
    %1364 = vmatpush.bf16.msra.mxu0 %v1335
    %1365 = vmatpush.bf16.msra.mxu0 %v1334
    %1366 = vmatpush.bf16.msra.mxu0 %v1333
    %1367 = vmatpush.bf16.msra.mxu0 %v1332
    %1368 = vmatpush.bf16.msra.mxu0 %v1331
    %1369 = vmatpush.bf16.msra.mxu0 %v1330
    %1370 = vmatmul.bf16.gmra.mxu0 %v1228
    %v1371 = vpop.f32.mrf.mxu0
    %v1372 = vadd.f32 %v1264, %v1371
    %v1373 = vpop.f32.mrf.mxu0
    %1374 = vdwg.mxu0
    %1375 = vmatpush.bf16.msra.mxu0 %v1345
    %1376 = vmatpush.bf16.msra.mxu0 %v1344
    %1377 = vmatpush.bf16.msra.mxu0 %v1343
    %1378 = vmatpush.bf16.msra.mxu0 %v1342
    %1379 = vmatpush.bf16.msra.mxu0 %v1341
    %1380 = vmatpush.bf16.msra.mxu0 %v1340
    %1381 = vmatpush.bf16.msra.mxu0 %v1339
    %1382 = vmatpush.bf16.msra.mxu0 %v1338
    %1383 = vmatmul.bf16.gmra.mxu0 %v1229
    %v1384 = vpop.f32.mrf.mxu0
    %v1385 = vadd.f32 %v1372, %v1384
    %v1386 = vpop.f32.mrf.mxu0
    %1387 = vdwg.mxu0
    %v1388 = vmax.f32 %v1385, 0.0
    %v1389 = vpack.c.bf16 %v1388, %v1388
    %v1390 = vld [vmem:[#allocation16] sm:$0xf]
    %v1391 = vld [vmem:[#allocation16 + $0x4] sm:$0xf]
    %v1392 = vld [vmem:[#allocation16 + $0x8] sm:$0xf]
    %v1393 = vld [vmem:[#allocation16 + $0xc] sm:$0xf]
    %v1394 = vld [vmem:[#allocation16 + $0x10] sm:$0xf]
    %v1395 = vld [vmem:[#allocation16 + $0x14] sm:$0xf]
    %v1396 = vld [vmem:[#allocation16 + $0x18] sm:$0xf]
    %v1397 = vld [vmem:[#allocation16 + $0x1c] sm:$0xf]
    %v1398 = vld [vmem:[#allocation16 + $0x20] sm:$0xf]
    %v1399 = vld [vmem:[#allocation16 + $0x24] sm:$0xf]
    %v1400 = vld [vmem:[#allocation16 + $0x28] sm:$0xf]
    %v1401 = vld [vmem:[#allocation16 + $0x2c] sm:$0xf]
    %v1402 = vld [vmem:[#allocation16 + $0x30] sm:$0xf]
    %v1403 = vld [vmem:[#allocation16 + $0x34] sm:$0xf]
    %v1404 = vld [vmem:[#allocation16 + $0x38] sm:$0xf]
    %v1405 = vld [vmem:[#allocation16 + $0x3c] sm:$0xf]
    %v1406 = vld [vmem:[#allocation17] sm:$0x1]
    %v1408 = vperm.slane %v1406, 0
    %v1426 = vunpack.c.l.b16 %v1390
    %v1427 = vunpack.c.l.b16 %v1391
    %v1428 = vunpack.c.l.b16 %v1392
    %v1429 = vunpack.c.l.b16 %v1393
    %v1430 = vunpack.c.l.b16 %v1394
    %v1431 = vunpack.c.l.b16 %v1395
    %v1432 = vunpack.c.l.b16 %v1396
    %v1433 = vunpack.c.l.b16 %v1397
    %v1434 = vunpack.c.l.b16 %v1398
    %v1435 = vunpack.c.l.b16 %v1399
    %v1436 = vunpack.c.l.b16 %v1400
    %v1437 = vunpack.c.l.b16 %v1401
    %v1438 = vunpack.c.l.b16 %v1402
    %v1439 = vunpack.c.l.b16 %v1403
    %v1440 = vunpack.c.l.b16 %v1404
    %v1441 = vunpack.c.l.b16 %v1405
    %v1442 = vpack.c.b16 %v1427, %v1426
    %v1443 = vpack.c.b16 %v1429, %v1428
    %v1444 = vpack.c.b16 %v1431, %v1430
    %v1445 = vpack.c.b16 %v1433, %v1432
    %v1446 = vpack.c.b16 %v1435, %v1434
    %v1447 = vpack.c.b16 %v1437, %v1436
    %v1448 = vpack.c.b16 %v1439, %v1438
    %v1449 = vpack.c.b16 %v1441, %v1440
    %1458 = vmatpush.bf16.msra.mxu0 %v1449
    %1459 = vmatpush.bf16.msra.mxu0 %v1448
    %1460 = vmatpush.bf16.msra.mxu0 %v1447
    %1461 = vmatpush.bf16.msra.mxu0 %v1446
    %1462 = vmatpush.bf16.msra.mxu0 %v1445
    %1463 = vmatpush.bf16.msra.mxu0 %v1444
    %1464 = vmatpush.bf16.msra.mxu0 %v1443
    %1465 = vmatpush.bf16.msra.mxu0 %v1442
    %1466 = vmatmul.bf16.gmra.mxu0 %v1389
    %v1467 = vpop.f32.mrf.mxu0
    %v1468 = vadd.f32 %v1408, %v1467
    %v1469 = vpop.f32.mrf.mxu0
    %1470 = vdwg.mxu0
    %v1471 = vmax.f32 %v1468, 0.0
    %v1472 = vld [vmem:[#allocation7] sm:$0xff]
    %v1473 = vld [vmem:[#allocation19] sm:$0xff]
    %v1474 = vld [vmem:[#allocation19 + $0x8] sm:$0xff]
    %v1475 = vld [vmem:[#allocation19 + $0x10] sm:$0xff]
    %v1476 = vld [vmem:[#allocation19 + $0x18] sm:$0xff]
    %v1477 = vld [vmem:[#allocation19 + $0x20] sm:$0xff]
    %v1478 = vld [vmem:[#allocation19 + $0x28] sm:$0xff]
    %v1479 = vld [vmem:[#allocation19 + $0x30] sm:$0xff]
    %v1480 = vld [vmem:[#allocation19 + $0x38] sm:$0xff]
    %v1481 = vld [vmem:[#allocation19 + $0x40] sm:$0xff]
    %v1482 = vld [vmem:[#allocation19 + $0x48] sm:$0xff]
    %v1483 = vld [vmem:[#allocation19 + $0x50] sm:$0xff]
    %v1484 = vld [vmem:[#allocation19 + $0x58] sm:$0xff]
    %v1485 = vld [vmem:[#allocation19 + $0x60] sm:$0xff]
    %v1486 = vld [vmem:[#allocation19 + $0x68] sm:$0xff]
    %v1487 = vld [vmem:[#allocation19 + $0x70] sm:$0xff]
    %v1488 = vld [vmem:[#allocation19 + $0x78] sm:$0xff]
    %v1489 = vld [vmem:[#allocation19 + $0x80] sm:$0xff]
    %v1490 = vld [vmem:[#allocation19 + $0x88] sm:$0xff]
    %v1491 = vld [vmem:[#allocation19 + $0x90] sm:$0xff]
    %v1492 = vld [vmem:[#allocation19 + $0x98] sm:$0xff]
    %v1493 = vld [vmem:[#allocation19 + $0xa0] sm:$0xff]
    %v1494 = vld [vmem:[#allocation19 + $0xa8] sm:$0xff]
    %v1495 = vld [vmem:[#allocation19 + $0xb0] sm:$0xff]
    %v1496 = vld [vmem:[#allocation19 + $0xb8] sm:$0xff]
    %v1497 = vld [vmem:[#allocation19 + $0xc0] sm:$0xff]
    %v1498 = vld [vmem:[#allocation19 + $0xc8] sm:$0xff]
    %v1499 = vld [vmem:[#allocation19 + $0xd0] sm:$0xff]
    %v1500 = vld [vmem:[#allocation19 + $0xd8] sm:$0xff]
    %v1501 = vld [vmem:[#allocation19 + $0xe0] sm:$0xff]
    %v1502 = vld [vmem:[#allocation19 + $0xe8] sm:$0xff]
    %v1503 = vld [vmem:[#allocation19 + $0xf0] sm:$0xff]
    %v1504 = vld [vmem:[#allocation19 + $0xf8] sm:$0xff]
    %v1505 = vld [vmem:[#allocation19 + $0x100] sm:$0xff]
    %v1506 = vld [vmem:[#allocation19 + $0x108] sm:$0xff]
    %v1507 = vld [vmem:[#allocation19 + $0x110] sm:$0xff]
    %v1508 = vld [vmem:[#allocation19 + $0x118] sm:$0xff]
    %v1509 = vld [vmem:[#allocation19 + $0x120] sm:$0xff]
    %v1510 = vld [vmem:[#allocation19 + $0x128] sm:$0xff]
    %v1511 = vld [vmem:[#allocation19 + $0x130] sm:$0xff]
    %v1512 = vld [vmem:[#allocation19 + $0x138] sm:$0xff]
    %v1513 = vld [vmem:[#allocation19 + $0x140] sm:$0xff]
    %v1514 = vld [vmem:[#allocation19 + $0x148] sm:$0xff]
    %v1515 = vld [vmem:[#allocation19 + $0x150] sm:$0xff]
    %v1516 = vld [vmem:[#allocation19 + $0x158] sm:$0xff]
    %v1517 = vld [vmem:[#allocation19 + $0x160] sm:$0xff]
    %v1518 = vld [vmem:[#allocation19 + $0x168] sm:$0xff]
    %v1519 = vld [vmem:[#allocation19 + $0x170] sm:$0xff]
    %v1520 = vld [vmem:[#allocation19 + $0x178] sm:$0xff]
    %v1521 = vld [vmem:[#allocation19 + $0x180] sm:$0xff]
    %v1522 = vld [vmem:[#allocation19 + $0x188] sm:$0xff]
    %v1523 = vld [vmem:[#allocation19 + $0x190] sm:$0xff]
    %v1524 = vld [vmem:[#allocation19 + $0x198] sm:$0xff]
    %v1525 = vld [vmem:[#allocation19 + $0x1a0] sm:$0xff]
    %v1526 = vld [vmem:[#allocation19 + $0x1a8] sm:$0xff]
    %v1527 = vld [vmem:[#allocation19 + $0x1b0] sm:$0xff]
    %v1528 = vld [vmem:[#allocation19 + $0x1b8] sm:$0xff]
    %v1529 = vld [vmem:[#allocation19 + $0x1c0] sm:$0xff]
    %v1530 = vld [vmem:[#allocation19 + $0x1c8] sm:$0xff]
    %v1531 = vld [vmem:[#allocation19 + $0x1d0] sm:$0xff]
    %v1532 = vld [vmem:[#allocation19 + $0x1d8] sm:$0xff]
    %v1533 = vld [vmem:[#allocation19 + $0x1e0] sm:$0xff]
    %v1534 = vld [vmem:[#allocation19 + $0x1e8] sm:$0xff]
    %v1535 = vld [vmem:[#allocation19 + $0x1f0] sm:$0xff]
    %v1536 = vld [vmem:[#allocation19 + $0x1f8] sm:$0xff]
    %v1537 = vld [vmem:[%s25] sm:$0xf]
    %v1539 = vperm.slane %v1537, 0
    %v1540 = vperm.slane %v1537, 1
    %v1541 = vperm.slane %v1537, 2
    %v1542 = vperm.slane %v1537, 3
    %v1548 = vunpack.c.l.b16 %v1472
    %v1549 = vunpack.c.h.b16 %v1472
    %v1550 = vpack.c.b16 %v1548, %v1548
    %v1551 = vpack.c.b16 %v1549, %v1549
    %v1618 = vunpack.c.l.b16 %v1473
    %v1619 = vunpack.c.h.b16 %v1473
    %v1620 = vunpack.c.l.b16 %v1474
    %v1621 = vunpack.c.h.b16 %v1474
    %v1622 = vunpack.c.l.b16 %v1475
    %v1623 = vunpack.c.h.b16 %v1475
    %v1624 = vunpack.c.l.b16 %v1476
    %v1625 = vunpack.c.h.b16 %v1476
    %v1626 = vunpack.c.l.b16 %v1477
    %v1627 = vunpack.c.h.b16 %v1477
    %v1628 = vunpack.c.l.b16 %v1478
    %v1629 = vunpack.c.h.b16 %v1478
    %v1630 = vunpack.c.l.b16 %v1479
    %v1631 = vunpack.c.h.b16 %v1479
    %v1632 = vunpack.c.l.b16 %v1480
    %v1633 = vunpack.c.h.b16 %v1480
    %v1634 = vunpack.c.l.b16 %v1481
    %v1635 = vunpack.c.h.b16 %v1481
    %v1636 = vunpack.c.l.b16 %v1482
    %v1637 = vunpack.c.h.b16 %v1482
    %v1638 = vunpack.c.l.b16 %v1483
    %v1639 = vunpack.c.h.b16 %v1483
    %v1640 = vunpack.c.l.b16 %v1484
    %v1641 = vunpack.c.h.b16 %v1484
    %v1642 = vunpack.c.l.b16 %v1485
    %v1643 = vunpack.c.h.b16 %v1485
    %v1644 = vunpack.c.l.b16 %v1486
    %v1645 = vunpack.c.h.b16 %v1486
    %v1646 = vunpack.c.l.b16 %v1487
    %v1647 = vunpack.c.h.b16 %v1487
    %v1648 = vunpack.c.l.b16 %v1488
    %v1649 = vunpack.c.h.b16 %v1488
    %v1650 = vunpack.c.l.b16 %v1489
    %v1651 = vunpack.c.h.b16 %v1489
    %v1652 = vunpack.c.l.b16 %v1490
    %v1653 = vunpack.c.h.b16 %v1490
    %v1654 = vunpack.c.l.b16 %v1491
    %v1655 = vunpack.c.h.b16 %v1491
    %v1656 = vunpack.c.l.b16 %v1492
    %v1657 = vunpack.c.h.b16 %v1492
    %v1658 = vunpack.c.l.b16 %v1493
    %v1659 = vunpack.c.h.b16 %v1493
    %v1660 = vunpack.c.l.b16 %v1494
    %v1661 = vunpack.c.h.b16 %v1494
    %v1662 = vunpack.c.l.b16 %v1495
    %v1663 = vunpack.c.h.b16 %v1495
    %v1664 = vunpack.c.l.b16 %v1496
    %v1665 = vunpack.c.h.b16 %v1496
    %v1666 = vunpack.c.l.b16 %v1497
    %v1667 = vunpack.c.h.b16 %v1497
    %v1668 = vunpack.c.l.b16 %v1498
    %v1669 = vunpack.c.h.b16 %v1498
    %v1670 = vunpack.c.l.b16 %v1499
    %v1671 = vunpack.c.h.b16 %v1499
    %v1672 = vunpack.c.l.b16 %v1500
    %v1673 = vunpack.c.h.b16 %v1500
    %v1674 = vunpack.c.l.b16 %v1501
    %v1675 = vunpack.c.h.b16 %v1501
    %v1676 = vunpack.c.l.b16 %v1502
    %v1677 = vunpack.c.h.b16 %v1502
    %v1678 = vunpack.c.l.b16 %v1503
    %v1679 = vunpack.c.h.b16 %v1503
    %v1680 = vunpack.c.l.b16 %v1504
    %v1681 = vunpack.c.h.b16 %v1504
    %v1682 = vunpack.c.l.b16 %v1505
    %v1683 = vunpack.c.h.b16 %v1505
    %v1684 = vunpack.c.l.b16 %v1506
    %v1685 = vunpack.c.h.b16 %v1506
    %v1686 = vunpack.c.l.b16 %v1507
    %v1687 = vunpack.c.h.b16 %v1507
    %v1688 = vunpack.c.l.b16 %v1508
    %v1689 = vunpack.c.h.b16 %v1508
    %v1690 = vunpack.c.l.b16 %v1509
    %v1691 = vunpack.c.h.b16 %v1509
    %v1692 = vunpack.c.l.b16 %v1510
    %v1693 = vunpack.c.h.b16 %v1510
    %v1694 = vunpack.c.l.b16 %v1511
    %v1695 = vunpack.c.h.b16 %v1511
    %v1696 = vunpack.c.l.b16 %v1512
    %v1697 = vunpack.c.h.b16 %v1512
    %v1698 = vunpack.c.l.b16 %v1513
    %v1699 = vunpack.c.h.b16 %v1513
    %v1700 = vunpack.c.l.b16 %v1514
    %v1701 = vunpack.c.h.b16 %v1514
    %v1702 = vunpack.c.l.b16 %v1515
    %v1703 = vunpack.c.h.b16 %v1515
    %v1704 = vunpack.c.l.b16 %v1516
    %v1705 = vunpack.c.h.b16 %v1516
    %v1706 = vunpack.c.l.b16 %v1517
    %v1707 = vunpack.c.h.b16 %v1517
    %v1708 = vunpack.c.l.b16 %v1518
    %v1709 = vunpack.c.h.b16 %v1518
    %v1710 = vunpack.c.l.b16 %v1519
    %v1711 = vunpack.c.h.b16 %v1519
    %v1712 = vunpack.c.l.b16 %v1520
    %v1713 = vunpack.c.h.b16 %v1520
    %v1714 = vunpack.c.l.b16 %v1521
    %v1715 = vunpack.c.h.b16 %v1521
    %v1716 = vunpack.c.l.b16 %v1522
    %v1717 = vunpack.c.h.b16 %v1522
    %v1718 = vunpack.c.l.b16 %v1523
    %v1719 = vunpack.c.h.b16 %v1523
    %v1720 = vunpack.c.l.b16 %v1524
    %v1721 = vunpack.c.h.b16 %v1524
    %v1722 = vunpack.c.l.b16 %v1525
    %v1723 = vunpack.c.h.b16 %v1525
    %v1724 = vunpack.c.l.b16 %v1526
    %v1725 = vunpack.c.h.b16 %v1526
    %v1726 = vunpack.c.l.b16 %v1527
    %v1727 = vunpack.c.h.b16 %v1527
    %v1728 = vunpack.c.l.b16 %v1528
    %v1729 = vunpack.c.h.b16 %v1528
    %v1730 = vunpack.c.l.b16 %v1529
    %v1731 = vunpack.c.h.b16 %v1529
    %v1732 = vunpack.c.l.b16 %v1530
    %v1733 = vunpack.c.h.b16 %v1530
    %v1734 = vunpack.c.l.b16 %v1531
    %v1735 = vunpack.c.h.b16 %v1531
    %v1736 = vunpack.c.l.b16 %v1532
    %v1737 = vunpack.c.h.b16 %v1532
    %v1738 = vunpack.c.l.b16 %v1533
    %v1739 = vunpack.c.h.b16 %v1533
    %v1740 = vunpack.c.l.b16 %v1534
    %v1741 = vunpack.c.h.b16 %v1534
    %v1742 = vunpack.c.l.b16 %v1535
    %v1743 = vunpack.c.h.b16 %v1535
    %v1744 = vunpack.c.l.b16 %v1536
    %v1745 = vunpack.c.h.b16 %v1536
    %v1746 = vpack.c.b16 %v1622, %v1618
    %v1747 = vpack.c.b16 %v1623, %v1619
    %v1748 = vpack.c.b16 %v1624, %v1620
    %v1749 = vpack.c.b16 %v1625, %v1621
    %v1750 = vpack.c.b16 %v1630, %v1626
    %v1751 = vpack.c.b16 %v1631, %v1627
    %v1752 = vpack.c.b16 %v1632, %v1628
    %v1753 = vpack.c.b16 %v1633, %v1629
    %v1754 = vpack.c.b16 %v1638, %v1634
    %v1755 = vpack.c.b16 %v1639, %v1635
    %v1756 = vpack.c.b16 %v1640, %v1636
    %v1757 = vpack.c.b16 %v1641, %v1637
    %v1758 = vpack.c.b16 %v1646, %v1642
    %v1759 = vpack.c.b16 %v1647, %v1643
    %v1760 = vpack.c.b16 %v1648, %v1644
    %v1761 = vpack.c.b16 %v1649, %v1645
    %v1762 = vpack.c.b16 %v1654, %v1650
    %v1763 = vpack.c.b16 %v1655, %v1651
    %v1764 = vpack.c.b16 %v1656, %v1652
    %v1765 = vpack.c.b16 %v1657, %v1653
    %v1766 = vpack.c.b16 %v1662, %v1658
    %v1767 = vpack.c.b16 %v1663, %v1659
    %v1768 = vpack.c.b16 %v1664, %v1660
    %v1769 = vpack.c.b16 %v1665, %v1661
    %v1770 = vpack.c.b16 %v1670, %v1666
    %v1771 = vpack.c.b16 %v1671, %v1667
    %v1772 = vpack.c.b16 %v1672, %v1668
    %v1773 = vpack.c.b16 %v1673, %v1669
    %v1774 = vpack.c.b16 %v1678, %v1674
    %v1775 = vpack.c.b16 %v1679, %v1675
    %v1776 = vpack.c.b16 %v1680, %v1676
    %v1777 = vpack.c.b16 %v1681, %v1677
    %v1778 = vpack.c.b16 %v1686, %v1682
    %v1779 = vpack.c.b16 %v1687, %v1683
    %v1780 = vpack.c.b16 %v1688, %v1684
    %v1781 = vpack.c.b16 %v1689, %v1685
    %v1782 = vpack.c.b16 %v1694, %v1690
    %v1783 = vpack.c.b16 %v1695, %v1691
    %v1784 = vpack.c.b16 %v1696, %v1692
    %v1785 = vpack.c.b16 %v1697, %v1693
    %v1786 = vpack.c.b16 %v1702, %v1698
    %v1787 = vpack.c.b16 %v1703, %v1699
    %v1788 = vpack.c.b16 %v1704, %v1700
    %v1789 = vpack.c.b16 %v1705, %v1701
    %v1790 = vpack.c.b16 %v1710, %v1706
    %v1791 = vpack.c.b16 %v1711, %v1707
    %v1792 = vpack.c.b16 %v1712, %v1708
    %v1793 = vpack.c.b16 %v1713, %v1709
    %v1794 = vpack.c.b16 %v1718, %v1714
    %v1795 = vpack.c.b16 %v1719, %v1715
    %v1796 = vpack.c.b16 %v1720, %v1716
    %v1797 = vpack.c.b16 %v1721, %v1717
    %v1798 = vpack.c.b16 %v1726, %v1722
    %v1799 = vpack.c.b16 %v1727, %v1723
    %v1800 = vpack.c.b16 %v1728, %v1724
    %v1801 = vpack.c.b16 %v1729, %v1725
    %v1802 = vpack.c.b16 %v1734, %v1730
    %v1803 = vpack.c.b16 %v1735, %v1731
    %v1804 = vpack.c.b16 %v1736, %v1732
    %v1805 = vpack.c.b16 %v1737, %v1733
    %v1806 = vpack.c.b16 %v1742, %v1738
    %v1807 = vpack.c.b16 %v1743, %v1739
    %v1808 = vpack.c.b16 %v1744, %v1740
    %v1809 = vpack.c.b16 %v1745, %v1741
    %1874 = vmatpush.bf16.msra.mxu0 %v1774
    %1875 = vmatpush.bf16.msra.mxu0 %v1770
    %1876 = vmatpush.bf16.msra.mxu0 %v1766
    %1877 = vmatpush.bf16.msra.mxu0 %v1762
    %1878 = vmatpush.bf16.msra.mxu0 %v1758
    %1879 = vmatpush.bf16.msra.mxu0 %v1754
    %1880 = vmatpush.bf16.msra.mxu0 %v1750
    %1881 = vmatpush.bf16.msra.mxu0 %v1746
    %1882 = vmatmul.bf16.gmra.mxu0 %v1550
    %v1883 = vpop.f32.mrf.mxu0
    %v1884 = vadd.f32 %v1539, %v1883
    %v1885 = vpop.f32.mrf.mxu0
    %1886 = vdwg.mxu0
    %1887 = vmatpush.bf16.msra.mxu0 %v1806
    %1888 = vmatpush.bf16.msra.mxu0 %v1802
    %1889 = vmatpush.bf16.msra.mxu0 %v1798
    %1890 = vmatpush.bf16.msra.mxu0 %v1794
    %1891 = vmatpush.bf16.msra.mxu0 %v1790
    %1892 = vmatpush.bf16.msra.mxu0 %v1786
    %1893 = vmatpush.bf16.msra.mxu0 %v1782
    %1894 = vmatpush.bf16.msra.mxu0 %v1778
    %1895 = vmatmul.bf16.gmra.mxu0 %v1551
    %v1896 = vpop.f32.mrf.mxu0
    %v1897 = vadd.f32 %v1884, %v1896
    %v1898 = vpop.f32.mrf.mxu0
    %1899 = vdwg.mxu0
    %1900 = vmatpush.bf16.msra.mxu0 %v1775
    %1901 = vmatpush.bf16.msra.mxu0 %v1771
    %1902 = vmatpush.bf16.msra.mxu0 %v1767
    %1903 = vmatpush.bf16.msra.mxu0 %v1763
    %1904 = vmatpush.bf16.msra.mxu0 %v1759
    %1905 = vmatpush.bf16.msra.mxu0 %v1755
    %1906 = vmatpush.bf16.msra.mxu0 %v1751
    %1907 = vmatpush.bf16.msra.mxu0 %v1747
    %1908 = vmatmul.bf16.gmra.mxu0 %v1550
    %v1909 = vpop.f32.mrf.mxu0
    %v1910 = vadd.f32 %v1540, %v1909
    %v1911 = vpop.f32.mrf.mxu0
    %1912 = vdwg.mxu0
    %1913 = vmatpush.bf16.msra.mxu0 %v1807
    %1914 = vmatpush.bf16.msra.mxu0 %v1803
    %1915 = vmatpush.bf16.msra.mxu0 %v1799
    %1916 = vmatpush.bf16.msra.mxu0 %v1795
    %1917 = vmatpush.bf16.msra.mxu0 %v1791
    %1918 = vmatpush.bf16.msra.mxu0 %v1787
    %1919 = vmatpush.bf16.msra.mxu0 %v1783
    %1920 = vmatpush.bf16.msra.mxu0 %v1779
    %1921 = vmatmul.bf16.gmra.mxu0 %v1551
    %v1922 = vpop.f32.mrf.mxu0
    %v1923 = vadd.f32 %v1910, %v1922
    %v1924 = vpop.f32.mrf.mxu0
    %1925 = vdwg.mxu0
    %1926 = vmatpush.bf16.msra.mxu0 %v1776
    %1927 = vmatpush.bf16.msra.mxu0 %v1772
    %1928 = vmatpush.bf16.msra.mxu0 %v1768
    %1929 = vmatpush.bf16.msra.mxu0 %v1764
    %1930 = vmatpush.bf16.msra.mxu0 %v1760
    %1931 = vmatpush.bf16.msra.mxu0 %v1756
    %1932 = vmatpush.bf16.msra.mxu0 %v1752
    %1933 = vmatpush.bf16.msra.mxu0 %v1748
    %1934 = vmatmul.bf16.gmra.mxu0 %v1550
    %v1935 = vpop.f32.mrf.mxu0
    %v1936 = vadd.f32 %v1541, %v1935
    %v1937 = vpop.f32.mrf.mxu0
    %1938 = vdwg.mxu0
    %1939 = vmatpush.bf16.msra.mxu0 %v1808
    %1940 = vmatpush.bf16.msra.mxu0 %v1804
    %1941 = vmatpush.bf16.msra.mxu0 %v1800
    %1942 = vmatpush.bf16.msra.mxu0 %v1796
    %1943 = vmatpush.bf16.msra.mxu0 %v1792
    %1944 = vmatpush.bf16.msra.mxu0 %v1788
    %1945 = vmatpush.bf16.msra.mxu0 %v1784
    %1946 = vmatpush.bf16.msra.mxu0 %v1780
    %1947 = vmatmul.bf16.gmra.mxu0 %v1551
    %v1948 = vpop.f32.mrf.mxu0
    %v1949 = vadd.f32 %v1936, %v1948
    %v1950 = vpop.f32.mrf.mxu0
    %1951 = vdwg.mxu0
    %1952 = vmatpush.bf16.msra.mxu0 %v1777
    %1953 = vmatpush.bf16.msra.mxu0 %v1773
    %1954 = vmatpush.bf16.msra.mxu0 %v1769
    %1955 = vmatpush.bf16.msra.mxu0 %v1765
    %1956 = vmatpush.bf16.msra.mxu0 %v1761
    %1957 = vmatpush.bf16.msra.mxu0 %v1757
    %1958 = vmatpush.bf16.msra.mxu0 %v1753
    %1959 = vmatpush.bf16.msra.mxu0 %v1749
    %1960 = vmatmul.bf16.gmra.mxu0 %v1550
    %v1961 = vpop.f32.mrf.mxu0
    %v1962 = vadd.f32 %v1542, %v1961
    %v1963 = vpop.f32.mrf.mxu0
    %1964 = vdwg.mxu0
    %1965 = vmatpush.bf16.msra.mxu0 %v1809
    %1966 = vmatpush.bf16.msra.mxu0 %v1805
    %1967 = vmatpush.bf16.msra.mxu0 %v1801
    %1968 = vmatpush.bf16.msra.mxu0 %v1797
    %1969 = vmatpush.bf16.msra.mxu0 %v1793
    %1970 = vmatpush.bf16.msra.mxu0 %v1789
    %1971 = vmatpush.bf16.msra.mxu0 %v1785
    %1972 = vmatpush.bf16.msra.mxu0 %v1781
    %1973 = vmatmul.bf16.gmra.mxu0 %v1551
    %v1974 = vpop.f32.mrf.mxu0
    %v1975 = vadd.f32 %v1962, %v1974
    %v1976 = vpop.f32.mrf.mxu0
    %1977 = vdwg.mxu0
    %v1978 = vmax.f32 %v1897, 0.0
    %v1979 = vmax.f32 %v1923, 0.0
    %v1980 = vmax.f32 %v1949, 0.0
    %v1981 = vmax.f32 %v1975, 0.0
    %v1982 = vpack.c.bf16 %v1978, %v1978
    %v1983 = vpack.c.bf16 %v1979, %v1979
    %v1984 = vpack.c.bf16 %v1980, %v1980
    %v1985 = vpack.c.bf16 %v1981, %v1981
    %v1986 = vld [vmem:[#allocation20] sm:$0xff]
    %v1987 = vld [vmem:[#allocation20 + $0x8] sm:$0xff]
    %v1988 = vld [vmem:[#allocation20 + $0x10] sm:$0xff]
    %v1989 = vld [vmem:[#allocation20 + $0x18] sm:$0xff]
    %v1990 = vld [vmem:[#allocation20 + $0x20] sm:$0xff]
    %v1991 = vld [vmem:[#allocation20 + $0x28] sm:$0xff]
    %v1992 = vld [vmem:[#allocation20 + $0x30] sm:$0xff]
    %v1993 = vld [vmem:[#allocation20 + $0x38] sm:$0xff]
    %v1994 = vld [vmem:[#allocation20 + $0x40] sm:$0xff]
    %v1995 = vld [vmem:[#allocation20 + $0x48] sm:$0xff]
    %v1996 = vld [vmem:[#allocation20 + $0x50] sm:$0xff]
    %v1997 = vld [vmem:[#allocation20 + $0x58] sm:$0xff]
    %v1998 = vld [vmem:[#allocation20 + $0x60] sm:$0xff]
    %v1999 = vld [vmem:[#allocation20 + $0x68] sm:$0xff]
    %v2000 = vld [vmem:[#allocation20 + $0x70] sm:$0xff]
    %v2001 = vld [vmem:[#allocation20 + $0x78] sm:$0xff]
    %v2002 = vld [vmem:[#allocation20 + $0x80] sm:$0xff]
    %v2003 = vld [vmem:[#allocation20 + $0x88] sm:$0xff]
    %v2004 = vld [vmem:[#allocation20 + $0x90] sm:$0xff]
    %v2005 = vld [vmem:[#allocation20 + $0x98] sm:$0xff]
    %v2006 = vld [vmem:[#allocation20 + $0xa0] sm:$0xff]
    %v2007 = vld [vmem:[#allocation20 + $0xa8] sm:$0xff]
    %v2008 = vld [vmem:[#allocation20 + $0xb0] sm:$0xff]
    %v2009 = vld [vmem:[#allocation20 + $0xb8] sm:$0xff]
    %v2010 = vld [vmem:[#allocation20 + $0xc0] sm:$0xff]
    %v2011 = vld [vmem:[#allocation20 + $0xc8] sm:$0xff]
    %v2012 = vld [vmem:[#allocation20 + $0xd0] sm:$0xff]
    %v2013 = vld [vmem:[#allocation20 + $0xd8] sm:$0xff]
    %v2014 = vld [vmem:[#allocation20 + $0xe0] sm:$0xff]
    %v2015 = vld [vmem:[#allocation20 + $0xe8] sm:$0xff]
    %v2016 = vld [vmem:[#allocation20 + $0xf0] sm:$0xff]
    %v2017 = vld [vmem:[#allocation20 + $0xf8] sm:$0xff]
    %v2018 = vld [vmem:[#allocation20 + $0x100] sm:$0xff]
    %v2019 = vld [vmem:[#allocation20 + $0x108] sm:$0xff]
    %v2020 = vld [vmem:[#allocation20 + $0x110] sm:$0xff]
    %v2021 = vld [vmem:[#allocation20 + $0x118] sm:$0xff]
    %v2022 = vld [vmem:[#allocation20 + $0x120] sm:$0xff]
    %v2023 = vld [vmem:[#allocation20 + $0x128] sm:$0xff]
    %v2024 = vld [vmem:[#allocation20 + $0x130] sm:$0xff]
    %v2025 = vld [vmem:[#allocation20 + $0x138] sm:$0xff]
    %v2026 = vld [vmem:[#allocation20 + $0x140] sm:$0xff]
    %v2027 = vld [vmem:[#allocation20 + $0x148] sm:$0xff]
    %v2028 = vld [vmem:[#allocation20 + $0x150] sm:$0xff]
    %v2029 = vld [vmem:[#allocation20 + $0x158] sm:$0xff]
    %v2030 = vld [vmem:[#allocation20 + $0x160] sm:$0xff]
    %v2031 = vld [vmem:[#allocation20 + $0x168] sm:$0xff]
    %v2032 = vld [vmem:[#allocation20 + $0x170] sm:$0xff]
    %v2033 = vld [vmem:[#allocation20 + $0x178] sm:$0xff]
    %v2034 = vld [vmem:[#allocation20 + $0x180] sm:$0xff]
    %v2035 = vld [vmem:[#allocation20 + $0x188] sm:$0xff]
    %v2036 = vld [vmem:[#allocation20 + $0x190] sm:$0xff]
    %v2037 = vld [vmem:[#allocation20 + $0x198] sm:$0xff]
    %v2038 = vld [vmem:[#allocation20 + $0x1a0] sm:$0xff]
    %v2039 = vld [vmem:[#allocation20 + $0x1a8] sm:$0xff]
    %v2040 = vld [vmem:[#allocation20 + $0x1b0] sm:$0xff]
    %v2041 = vld [vmem:[#allocation20 + $0x1b8] sm:$0xff]
    %v2042 = vld [vmem:[#allocation20 + $0x1c0] sm:$0xff]
    %v2043 = vld [vmem:[#allocation20 + $0x1c8] sm:$0xff]
    %v2044 = vld [vmem:[#allocation20 + $0x1d0] sm:$0xff]
    %v2045 = vld [vmem:[#allocation20 + $0x1d8] sm:$0xff]
    %v2046 = vld [vmem:[#allocation20 + $0x1e0] sm:$0xff]
    %v2047 = vld [vmem:[#allocation20 + $0x1e8] sm:$0xff]
    %v2048 = vld [vmem:[#allocation20 + $0x1f0] sm:$0xff]
    %v2049 = vld [vmem:[#allocation20 + $0x1f8] sm:$0xff]
    %v2050 = vld [vmem:[%s29] sm:$0x3]
    %v2052 = vperm.slane %v2050, 0
    %v2053 = vperm.slane %v2050, 1
    %v2120 = vunpack.c.l.b16 %v1986
    %v2121 = vunpack.c.h.b16 %v1986
    %v2122 = vunpack.c.l.b16 %v1987
    %v2123 = vunpack.c.h.b16 %v1987
    %v2124 = vunpack.c.l.b16 %v1988
    %v2125 = vunpack.c.h.b16 %v1988
    %v2126 = vunpack.c.l.b16 %v1989
    %v2127 = vunpack.c.h.b16 %v1989
    %v2128 = vunpack.c.l.b16 %v1990
    %v2129 = vunpack.c.h.b16 %v1990
    %v2130 = vunpack.c.l.b16 %v1991
    %v2131 = vunpack.c.h.b16 %v1991
    %v2132 = vunpack.c.l.b16 %v1992
    %v2133 = vunpack.c.h.b16 %v1992
    %v2134 = vunpack.c.l.b16 %v1993
    %v2135 = vunpack.c.h.b16 %v1993
    %v2136 = vunpack.c.l.b16 %v1994
    %v2137 = vunpack.c.h.b16 %v1994
    %v2138 = vunpack.c.l.b16 %v1995
    %v2139 = vunpack.c.h.b16 %v1995
    %v2140 = vunpack.c.l.b16 %v1996
    %v2141 = vunpack.c.h.b16 %v1996
    %v2142 = vunpack.c.l.b16 %v1997
    %v2143 = vunpack.c.h.b16 %v1997
    %v2144 = vunpack.c.l.b16 %v1998
    %v2145 = vunpack.c.h.b16 %v1998
    %v2146 = vunpack.c.l.b16 %v1999
    %v2147 = vunpack.c.h.b16 %v1999
    %v2148 = vunpack.c.l.b16 %v2000
    %v2149 = vunpack.c.h.b16 %v2000
    %v2150 = vunpack.c.l.b16 %v2001
    %v2151 = vunpack.c.h.b16 %v2001
    %v2152 = vunpack.c.l.b16 %v2002
    %v2153 = vunpack.c.h.b16 %v2002
    %v2154 = vunpack.c.l.b16 %v2003
    %v2155 = vunpack.c.h.b16 %v2003
    %v2156 = vunpack.c.l.b16 %v2004
    %v2157 = vunpack.c.h.b16 %v2004
    %v2158 = vunpack.c.l.b16 %v2005
    %v2159 = vunpack.c.h.b16 %v2005
    %v2160 = vunpack.c.l.b16 %v2006
    %v2161 = vunpack.c.h.b16 %v2006
    %v2162 = vunpack.c.l.b16 %v2007
    %v2163 = vunpack.c.h.b16 %v2007
    %v2164 = vunpack.c.l.b16 %v2008
    %v2165 = vunpack.c.h.b16 %v2008
    %v2166 = vunpack.c.l.b16 %v2009
    %v2167 = vunpack.c.h.b16 %v2009
    %v2168 = vunpack.c.l.b16 %v2010
    %v2169 = vunpack.c.h.b16 %v2010
    %v2170 = vunpack.c.l.b16 %v2011
    %v2171 = vunpack.c.h.b16 %v2011
    %v2172 = vunpack.c.l.b16 %v2012
    %v2173 = vunpack.c.h.b16 %v2012
    %v2174 = vunpack.c.l.b16 %v2013
    %v2175 = vunpack.c.h.b16 %v2013
    %v2176 = vunpack.c.l.b16 %v2014
    %v2177 = vunpack.c.h.b16 %v2014
    %v2178 = vunpack.c.l.b16 %v2015
    %v2179 = vunpack.c.h.b16 %v2015
    %v2180 = vunpack.c.l.b16 %v2016
    %v2181 = vunpack.c.h.b16 %v2016
    %v2182 = vunpack.c.l.b16 %v2017
    %v2183 = vunpack.c.h.b16 %v2017
    %v2184 = vunpack.c.l.b16 %v2018
    %v2185 = vunpack.c.h.b16 %v2018
    %v2186 = vunpack.c.l.b16 %v2019
    %v2187 = vunpack.c.h.b16 %v2019
    %v2188 = vunpack.c.l.b16 %v2020
    %v2189 = vunpack.c.h.b16 %v2020
    %v2190 = vunpack.c.l.b16 %v2021
    %v2191 = vunpack.c.h.b16 %v2021
    %v2192 = vunpack.c.l.b16 %v2022
    %v2193 = vunpack.c.h.b16 %v2022
    %v2194 = vunpack.c.l.b16 %v2023
    %v2195 = vunpack.c.h.b16 %v2023
    %v2196 = vunpack.c.l.b16 %v2024
    %v2197 = vunpack.c.h.b16 %v2024
    %v2198 = vunpack.c.l.b16 %v2025
    %v2199 = vunpack.c.h.b16 %v2025
    %v2200 = vunpack.c.l.b16 %v2026
    %v2201 = vunpack.c.h.b16 %v2026
    %v2202 = vunpack.c.l.b16 %v2027
    %v2203 = vunpack.c.h.b16 %v2027
    %v2204 = vunpack.c.l.b16 %v2028
    %v2205 = vunpack.c.h.b16 %v2028
    %v2206 = vunpack.c.l.b16 %v2029
    %v2207 = vunpack.c.h.b16 %v2029
    %v2208 = vunpack.c.l.b16 %v2030
    %v2209 = vunpack.c.h.b16 %v2030
    %v2210 = vunpack.c.l.b16 %v2031
    %v2211 = vunpack.c.h.b16 %v2031
    %v2212 = vunpack.c.l.b16 %v2032
    %v2213 = vunpack.c.h.b16 %v2032
    %v2214 = vunpack.c.l.b16 %v2033
    %v2215 = vunpack.c.h.b16 %v2033
    %v2216 = vunpack.c.l.b16 %v2034
    %v2217 = vunpack.c.h.b16 %v2034
    %v2218 = vunpack.c.l.b16 %v2035
    %v2219 = vunpack.c.h.b16 %v2035
    %v2220 = vunpack.c.l.b16 %v2036
    %v2221 = vunpack.c.h.b16 %v2036
    %v2222 = vunpack.c.l.b16 %v2037
    %v2223 = vunpack.c.h.b16 %v2037
    %v2224 = vunpack.c.l.b16 %v2038
    %v2225 = vunpack.c.h.b16 %v2038
    %v2226 = vunpack.c.l.b16 %v2039
    %v2227 = vunpack.c.h.b16 %v2039
    %v2228 = vunpack.c.l.b16 %v2040
    %v2229 = vunpack.c.h.b16 %v2040
    %v2230 = vunpack.c.l.b16 %v2041
    %v2231 = vunpack.c.h.b16 %v2041
    %v2232 = vunpack.c.l.b16 %v2042
    %v2233 = vunpack.c.h.b16 %v2042
    %v2234 = vunpack.c.l.b16 %v2043
    %v2235 = vunpack.c.h.b16 %v2043
    %v2236 = vunpack.c.l.b16 %v2044
    %v2237 = vunpack.c.h.b16 %v2044
    %v2238 = vunpack.c.l.b16 %v2045
    %v2239 = vunpack.c.h.b16 %v2045
    %v2240 = vunpack.c.l.b16 %v2046
    %v2241 = vunpack.c.h.b16 %v2046
    %v2242 = vunpack.c.l.b16 %v2047
    %v2243 = vunpack.c.h.b16 %v2047
    %v2244 = vunpack.c.l.b16 %v2048
    %v2245 = vunpack.c.h.b16 %v2048
    %v2246 = vunpack.c.l.b16 %v2049
    %v2247 = vunpack.c.h.b16 %v2049
    %v2248 = vpack.c.b16 %v2122, %v2120
    %v2249 = vpack.c.b16 %v2123, %v2121
    %v2250 = vpack.c.b16 %v2126, %v2124
    %v2251 = vpack.c.b16 %v2127, %v2125
    %v2252 = vpack.c.b16 %v2130, %v2128
    %v2253 = vpack.c.b16 %v2131, %v2129
    %v2254 = vpack.c.b16 %v2134, %v2132
    %v2255 = vpack.c.b16 %v2135, %v2133
    %v2256 = vpack.c.b16 %v2138, %v2136
    %v2257 = vpack.c.b16 %v2139, %v2137
    %v2258 = vpack.c.b16 %v2142, %v2140
    %v2259 = vpack.c.b16 %v2143, %v2141
    %v2260 = vpack.c.b16 %v2146, %v2144
    %v2261 = vpack.c.b16 %v2147, %v2145
    %v2262 = vpack.c.b16 %v2150, %v2148
    %v2263 = vpack.c.b16 %v2151, %v2149
    %v2264 = vpack.c.b16 %v2154, %v2152
    %v2265 = vpack.c.b16 %v2155, %v2153
    %v2266 = vpack.c.b16 %v2158, %v2156
    %v2267 = vpack.c.b16 %v2159, %v2157
    %v2268 = vpack.c.b16 %v2162, %v2160
    %v2269 = vpack.c.b16 %v2163, %v2161
    %v2270 = vpack.c.b16 %v2166, %v2164
    %v2271 = vpack.c.b16 %v2167, %v2165
    %v2272 = vpack.c.b16 %v2170, %v2168
    %v2273 = vpack.c.b16 %v2171, %v2169
    %v2274 = vpack.c.b16 %v2174, %v2172
    %v2275 = vpack.c.b16 %v2175, %v2173
    %v2276 = vpack.c.b16 %v2178, %v2176
    %v2277 = vpack.c.b16 %v2179, %v2177
    %v2278 = vpack.c.b16 %v2182, %v2180
    %v2279 = vpack.c.b16 %v2183, %v2181
    %v2280 = vpack.c.b16 %v2186, %v2184
    %v2281 = vpack.c.b16 %v2187, %v2185
    %v2282 = vpack.c.b16 %v2190, %v2188
    %v2283 = vpack.c.b16 %v2191, %v2189
    %v2284 = vpack.c.b16 %v2194, %v2192
    %v2285 = vpack.c.b16 %v2195, %v2193
    %v2286 = vpack.c.b16 %v2198, %v2196
    %v2287 = vpack.c.b16 %v2199, %v2197
    %v2288 = vpack.c.b16 %v2202, %v2200
    %v2289 = vpack.c.b16 %v2203, %v2201
    %v2290 = vpack.c.b16 %v2206, %v2204
    %v2291 = vpack.c.b16 %v2207, %v2205
    %v2292 = vpack.c.b16 %v2210, %v2208
    %v2293 = vpack.c.b16 %v2211, %v2209
    %v2294 = vpack.c.b16 %v2214, %v2212
    %v2295 = vpack.c.b16 %v2215, %v2213
    %v2296 = vpack.c.b16 %v2218, %v2216
    %v2297 = vpack.c.b16 %v2219, %v2217
    %v2298 = vpack.c.b16 %v2222, %v2220
    %v2299 = vpack.c.b16 %v2223, %v2221
    %v2300 = vpack.c.b16 %v2226, %v2224
    %v2301 = vpack.c.b16 %v2227, %v2225
    %v2302 = vpack.c.b16 %v2230, %v2228
    %v2303 = vpack.c.b16 %v2231, %v2229
    %v2304 = vpack.c.b16 %v2234, %v2232
    %v2305 = vpack.c.b16 %v2235, %v2233
    %v2306 = vpack.c.b16 %v2238, %v2236
    %v2307 = vpack.c.b16 %v2239, %v2237
    %v2308 = vpack.c.b16 %v2242, %v2240
    %v2309 = vpack.c.b16 %v2243, %v2241
    %v2310 = vpack.c.b16 %v2246, %v2244
    %v2311 = vpack.c.b16 %v2247, %v2245
    %2376 = vmatpush.bf16.msra.mxu0 %v2262
    %2377 = vmatpush.bf16.msra.mxu0 %v2260
    %2378 = vmatpush.bf16.msra.mxu0 %v2258
    %2379 = vmatpush.bf16.msra.mxu0 %v2256
    %2380 = vmatpush.bf16.msra.mxu0 %v2254
    %2381 = vmatpush.bf16.msra.mxu0 %v2252
    %2382 = vmatpush.bf16.msra.mxu0 %v2250
    %2383 = vmatpush.bf16.msra.mxu0 %v2248
    %2384 = vmatmul.bf16.gmra.mxu0 %v1982
    %v2385 = vpop.f32.mrf.mxu0
    %v2386 = vadd.f32 %v2052, %v2385
    %v2387 = vpop.f32.mrf.mxu0
    %2388 = vdwg.mxu0
    %2389 = vmatpush.bf16.msra.mxu0 %v2278
    %2390 = vmatpush.bf16.msra.mxu0 %v2276
    %2391 = vmatpush.bf16.msra.mxu0 %v2274
    %2392 = vmatpush.bf16.msra.mxu0 %v2272
    %2393 = vmatpush.bf16.msra.mxu0 %v2270
    %2394 = vmatpush.bf16.msra.mxu0 %v2268
    %2395 = vmatpush.bf16.msra.mxu0 %v2266
    %2396 = vmatpush.bf16.msra.mxu0 %v2264
    %2397 = vmatmul.bf16.gmra.mxu0 %v1983
    %v2398 = vpop.f32.mrf.mxu0
    %v2399 = vadd.f32 %v2386, %v2398
    %v2400 = vpop.f32.mrf.mxu0
    %2401 = vdwg.mxu0
    %2402 = vmatpush.bf16.msra.mxu0 %v2294
    %2403 = vmatpush.bf16.msra.mxu0 %v2292
    %2404 = vmatpush.bf16.msra.mxu0 %v2290
    %2405 = vmatpush.bf16.msra.mxu0 %v2288
    %2406 = vmatpush.bf16.msra.mxu0 %v2286
    %2407 = vmatpush.bf16.msra.mxu0 %v2284
    %2408 = vmatpush.bf16.msra.mxu0 %v2282
    %2409 = vmatpush.bf16.msra.mxu0 %v2280
    %2410 = vmatmul.bf16.gmra.mxu0 %v1984
    %v2411 = vpop.f32.mrf.mxu0
    %v2412 = vadd.f32 %v2399, %v2411
    %v2413 = vpop.f32.mrf.mxu0
    %2414 = vdwg.mxu0
    %2415 = vmatpush.bf16.msra.mxu0 %v2310
    %2416 = vmatpush.bf16.msra.mxu0 %v2308
    %2417 = vmatpush.bf16.msra.mxu0 %v2306
    %2418 = vmatpush.bf16.msra.mxu0 %v2304
    %2419 = vmatpush.bf16.msra.mxu0 %v2302
    %2420 = vmatpush.bf16.msra.mxu0 %v2300
    %2421 = vmatpush.bf16.msra.mxu0 %v2298
    %2422 = vmatpush.bf16.msra.mxu0 %v2296
    %2423 = vmatmul.bf16.gmra.mxu0 %v1985
    %v2424 = vpop.f32.mrf.mxu0
    %v2425 = vadd.f32 %v2412, %v2424
    %v2426 = vpop.f32.mrf.mxu0
    %2427 = vdwg.mxu0
    %2428 = vmatpush.bf16.msra.mxu0 %v2263
    %2429 = vmatpush.bf16.msra.mxu0 %v2261
    %2430 = vmatpush.bf16.msra.mxu0 %v2259
    %2431 = vmatpush.bf16.msra.mxu0 %v2257
    %2432 = vmatpush.bf16.msra.mxu0 %v2255
    %2433 = vmatpush.bf16.msra.mxu0 %v2253
    %2434 = vmatpush.bf16.msra.mxu0 %v2251
    %2435 = vmatpush.bf16.msra.mxu0 %v2249
    %2436 = vmatmul.bf16.gmra.mxu0 %v1982
    %v2437 = vpop.f32.mrf.mxu0
    %v2438 = vadd.f32 %v2053, %v2437
    %v2439 = vpop.f32.mrf.mxu0
    %2440 = vdwg.mxu0
    %2441 = vmatpush.bf16.msra.mxu0 %v2279
    %2442 = vmatpush.bf16.msra.mxu0 %v2277
    %2443 = vmatpush.bf16.msra.mxu0 %v2275
    %2444 = vmatpush.bf16.msra.mxu0 %v2273
    %2445 = vmatpush.bf16.msra.mxu0 %v2271
    %2446 = vmatpush.bf16.msra.mxu0 %v2269
    %2447 = vmatpush.bf16.msra.mxu0 %v2267
    %2448 = vmatpush.bf16.msra.mxu0 %v2265
    %2449 = vmatmul.bf16.gmra.mxu0 %v1983
    %v2450 = vpop.f32.mrf.mxu0
    %v2451 = vadd.f32 %v2438, %v2450
    %v2452 = vpop.f32.mrf.mxu0
    %2453 = vdwg.mxu0
    %2454 = vmatpush.bf16.msra.mxu0 %v2295
    %2455 = vmatpush.bf16.msra.mxu0 %v2293
    %2456 = vmatpush.bf16.msra.mxu0 %v2291
    %2457 = vmatpush.bf16.msra.mxu0 %v2289
    %2458 = vmatpush.bf16.msra.mxu0 %v2287
    %2459 = vmatpush.bf16.msra.mxu0 %v2285
    %2460 = vmatpush.bf16.msra.mxu0 %v2283
    %2461 = vmatpush.bf16.msra.mxu0 %v2281
    %2462 = vmatmul.bf16.gmra.mxu0 %v1984
    %v2463 = vpop.f32.mrf.mxu0
    %v2464 = vadd.f32 %v2451, %v2463
    %v2465 = vpop.f32.mrf.mxu0
    %2466 = vdwg.mxu0
    %2467 = vmatpush.bf16.msra.mxu0 %v2311
    %2468 = vmatpush.bf16.msra.mxu0 %v2309
    %2469 = vmatpush.bf16.msra.mxu0 %v2307
    %2470 = vmatpush.bf16.msra.mxu0 %v2305
    %2471 = vmatpush.bf16.msra.mxu0 %v2303
    %2472 = vmatpush.bf16.msra.mxu0 %v2301
    %2473 = vmatpush.bf16.msra.mxu0 %v2299
    %2474 = vmatpush.bf16.msra.mxu0 %v2297
    %2475 = vmatmul.bf16.gmra.mxu0 %v1985
    %v2476 = vpop.f32.mrf.mxu0
    %v2477 = vadd.f32 %v2464, %v2476
    %v2478 = vpop.f32.mrf.mxu0
    %2479 = vdwg.mxu0
    %v2480 = vmax.f32 %v2425, 0.0
    %v2481 = vmax.f32 %v2477, 0.0
    %v2482 = vpack.c.bf16 %v2480, %v2480
    %v2483 = vpack.c.bf16 %v2481, %v2481
    %v2484 = vld [vmem:[#allocation22] sm:$0xf]
    %v2485 = vld [vmem:[#allocation22 + $0x4] sm:$0xf]
    %v2486 = vld [vmem:[#allocation22 + $0x8] sm:$0xf]
    %v2487 = vld [vmem:[#allocation22 + $0xc] sm:$0xf]
    %v2488 = vld [vmem:[#allocation22 + $0x10] sm:$0xf]
    %v2489 = vld [vmem:[#allocation22 + $0x14] sm:$0xf]
    %v2490 = vld [vmem:[#allocation22 + $0x18] sm:$0xf]
    %v2491 = vld [vmem:[#allocation22 + $0x1c] sm:$0xf]
    %v2492 = vld [vmem:[#allocation22 + $0x20] sm:$0xf]
    %v2493 = vld [vmem:[#allocation22 + $0x24] sm:$0xf]
    %v2494 = vld [vmem:[#allocation22 + $0x28] sm:$0xf]
    %v2495 = vld [vmem:[#allocation22 + $0x2c] sm:$0xf]
    %v2496 = vld [vmem:[#allocation22 + $0x30] sm:$0xf]
    %v2497 = vld [vmem:[#allocation22 + $0x34] sm:$0xf]
    %v2498 = vld [vmem:[#allocation22 + $0x38] sm:$0xf]
    %v2499 = vld [vmem:[#allocation22 + $0x3c] sm:$0xf]
    %v2500 = vld [vmem:[#allocation22 + $0x40] sm:$0xf]
    %v2501 = vld [vmem:[#allocation22 + $0x44] sm:$0xf]
    %v2502 = vld [vmem:[#allocation22 + $0x48] sm:$0xf]
    %v2503 = vld [vmem:[#allocation22 + $0x4c] sm:$0xf]
    %v2504 = vld [vmem:[#allocation22 + $0x50] sm:$0xf]
    %v2505 = vld [vmem:[#allocation22 + $0x54] sm:$0xf]
    %v2506 = vld [vmem:[#allocation22 + $0x58] sm:$0xf]
    %v2507 = vld [vmem:[#allocation22 + $0x5c] sm:$0xf]
    %v2508 = vld [vmem:[#allocation22 + $0x60] sm:$0xf]
    %v2509 = vld [vmem:[#allocation22 + $0x64] sm:$0xf]
    %v2510 = vld [vmem:[#allocation22 + $0x68] sm:$0xf]
    %v2511 = vld [vmem:[#allocation22 + $0x6c] sm:$0xf]
    %v2512 = vld [vmem:[#allocation22 + $0x70] sm:$0xf]
    %v2513 = vld [vmem:[#allocation22 + $0x74] sm:$0xf]
    %v2514 = vld [vmem:[#allocation22 + $0x78] sm:$0xf]
    %v2515 = vld [vmem:[#allocation22 + $0x7c] sm:$0xf]
    %v2516 = vld [vmem:[%s33] sm:$0x1]
    %v2518 = vperm.slane %v2516, 0
    %v2552 = vunpack.c.l.b16 %v2484
    %v2553 = vunpack.c.l.b16 %v2485
    %v2554 = vunpack.c.l.b16 %v2486
    %v2555 = vunpack.c.l.b16 %v2487
    %v2556 = vunpack.c.l.b16 %v2488
    %v2557 = vunpack.c.l.b16 %v2489
    %v2558 = vunpack.c.l.b16 %v2490
    %v2559 = vunpack.c.l.b16 %v2491
    %v2560 = vunpack.c.l.b16 %v2492
    %v2561 = vunpack.c.l.b16 %v2493
    %v2562 = vunpack.c.l.b16 %v2494
    %v2563 = vunpack.c.l.b16 %v2495
    %v2564 = vunpack.c.l.b16 %v2496
    %v2565 = vunpack.c.l.b16 %v2497
    %v2566 = vunpack.c.l.b16 %v2498
    %v2567 = vunpack.c.l.b16 %v2499
    %v2568 = vunpack.c.l.b16 %v2500
    %v2569 = vunpack.c.l.b16 %v2501
    %v2570 = vunpack.c.l.b16 %v2502
    %v2571 = vunpack.c.l.b16 %v2503
    %v2572 = vunpack.c.l.b16 %v2504
    %v2573 = vunpack.c.l.b16 %v2505
    %v2574 = vunpack.c.l.b16 %v2506
    %v2575 = vunpack.c.l.b16 %v2507
    %v2576 = vunpack.c.l.b16 %v2508
    %v2577 = vunpack.c.l.b16 %v2509
    %v2578 = vunpack.c.l.b16 %v2510
    %v2579 = vunpack.c.l.b16 %v2511
    %v2580 = vunpack.c.l.b16 %v2512
    %v2581 = vunpack.c.l.b16 %v2513
    %v2582 = vunpack.c.l.b16 %v2514
    %v2583 = vunpack.c.l.b16 %v2515
    %v2584 = vpack.c.b16 %v2553, %v2552
    %v2585 = vpack.c.b16 %v2555, %v2554
    %v2586 = vpack.c.b16 %v2557, %v2556
    %v2587 = vpack.c.b16 %v2559, %v2558
    %v2588 = vpack.c.b16 %v2561, %v2560
    %v2589 = vpack.c.b16 %v2563, %v2562
    %v2590 = vpack.c.b16 %v2565, %v2564
    %v2591 = vpack.c.b16 %v2567, %v2566
    %v2592 = vpack.c.b16 %v2569, %v2568
    %v2593 = vpack.c.b16 %v2571, %v2570
    %v2594 = vpack.c.b16 %v2573, %v2572
    %v2595 = vpack.c.b16 %v2575, %v2574
    %v2596 = vpack.c.b16 %v2577, %v2576
    %v2597 = vpack.c.b16 %v2579, %v2578
    %v2598 = vpack.c.b16 %v2581, %v2580
    %v2599 = vpack.c.b16 %v2583, %v2582
    %2616 = vmatpush.bf16.msra.mxu0 %v2591
    %2617 = vmatpush.bf16.msra.mxu0 %v2590
    %2618 = vmatpush.bf16.msra.mxu0 %v2589
    %2619 = vmatpush.bf16.msra.mxu0 %v2588
    %2620 = vmatpush.bf16.msra.mxu0 %v2587
    %2621 = vmatpush.bf16.msra.mxu0 %v2586
    %2622 = vmatpush.bf16.msra.mxu0 %v2585
    %2623 = vmatpush.bf16.msra.mxu0 %v2584
    %2624 = vmatmul.bf16.gmra.mxu0 %v2482
    %v2625 = vpop.f32.mrf.mxu0
    %v2626 = vadd.f32 %v2518, %v2625
    %v2627 = vpop.f32.mrf.mxu0
    %2628 = vdwg.mxu0
    %2629 = vmatpush.bf16.msra.mxu0 %v2599
    %2630 = vmatpush.bf16.msra.mxu0 %v2598
    %2631 = vmatpush.bf16.msra.mxu0 %v2597
    %2632 = vmatpush.bf16.msra.mxu0 %v2596
    %2633 = vmatpush.bf16.msra.mxu0 %v2595
    %2634 = vmatpush.bf16.msra.mxu0 %v2594
    %2635 = vmatpush.bf16.msra.mxu0 %v2593
    %2636 = vmatpush.bf16.msra.mxu0 %v2592
    %2637 = vmatmul.bf16.gmra.mxu0 %v2483
    %v2638 = vpop.f32.mrf.mxu0
    %v2639 = vadd.f32 %v2626, %v2638
    %v2640 = vpop.f32.mrf.mxu0
    %2641 = vdwg.mxu0
    %v2642 = vmax.f32 %v2639, 0.0
    %v2643 = vpack.c.bf16 %v2642, %v2642
    %v2644 = vld [vmem:[#allocation23] sm:$0xf]
    %v2645 = vld [vmem:[#allocation23 + $0x4] sm:$0xf]
    %v2646 = vld [vmem:[#allocation23 + $0x8] sm:$0xf]
    %v2647 = vld [vmem:[#allocation23 + $0xc] sm:$0xf]
    %v2648 = vld [vmem:[#allocation23 + $0x10] sm:$0xf]
    %v2649 = vld [vmem:[#allocation23 + $0x14] sm:$0xf]
    %v2650 = vld [vmem:[#allocation23 + $0x18] sm:$0xf]
    %v2651 = vld [vmem:[#allocation23 + $0x1c] sm:$0xf]
    %v2652 = vld [vmem:[#allocation23 + $0x20] sm:$0xf]
    %v2653 = vld [vmem:[#allocation23 + $0x24] sm:$0xf]
    %v2654 = vld [vmem:[#allocation23 + $0x28] sm:$0xf]
    %v2655 = vld [vmem:[#allocation23 + $0x2c] sm:$0xf]
    %v2656 = vld [vmem:[#allocation23 + $0x30] sm:$0xf]
    %v2657 = vld [vmem:[#allocation23 + $0x34] sm:$0xf]
    %v2658 = vld [vmem:[#allocation23 + $0x38] sm:$0xf]
    %v2659 = vld [vmem:[#allocation23 + $0x3c] sm:$0xf]
    %v2660 = vld [vmem:[%s37] sm:$0x1]
    %v2662 = vperm.slane %v2660, 0
    %v2680 = vunpack.c.l.b16 %v2644
    %v2681 = vunpack.c.l.b16 %v2645
    %v2682 = vunpack.c.l.b16 %v2646
    %v2683 = vunpack.c.l.b16 %v2647
    %v2684 = vunpack.c.l.b16 %v2648
    %v2685 = vunpack.c.l.b16 %v2649
    %v2686 = vunpack.c.l.b16 %v2650
    %v2687 = vunpack.c.l.b16 %v2651
    %v2688 = vunpack.c.l.b16 %v2652
    %v2689 = vunpack.c.l.b16 %v2653
    %v2690 = vunpack.c.l.b16 %v2654
    %v2691 = vunpack.c.l.b16 %v2655
    %v2692 = vunpack.c.l.b16 %v2656
    %v2693 = vunpack.c.l.b16 %v2657
    %v2694 = vunpack.c.l.b16 %v2658
    %v2695 = vunpack.c.l.b16 %v2659
    %v2696 = vpack.c.b16 %v2681, %v2680
    %v2697 = vpack.c.b16 %v2683, %v2682
    %v2698 = vpack.c.b16 %v2685, %v2684
    %v2699 = vpack.c.b16 %v2687, %v2686
    %v2700 = vpack.c.b16 %v2689, %v2688
    %v2701 = vpack.c.b16 %v2691, %v2690
    %v2702 = vpack.c.b16 %v2693, %v2692
    %v2703 = vpack.c.b16 %v2695, %v2694
    %2712 = vmatpush.bf16.msra.mxu0 %v2703
    %2713 = vmatpush.bf16.msra.mxu0 %v2702
    %2714 = vmatpush.bf16.msra.mxu0 %v2701
    %2715 = vmatpush.bf16.msra.mxu0 %v2700
    %2716 = vmatpush.bf16.msra.mxu0 %v2699
    %2717 = vmatpush.bf16.msra.mxu0 %v2698
    %2718 = vmatpush.bf16.msra.mxu0 %v2697
    %2719 = vmatpush.bf16.msra.mxu0 %v2696
    %2720 = vmatmul.bf16.gmra.mxu0 %v2643
    %v2721 = vpop.f32.mrf.mxu0
    %v2722 = vadd.f32 %v2662, %v2721
    %v2723 = vpop.f32.mrf.mxu0
    %2724 = vdwg.mxu0
    %v2725 = vmax.f32 %v2722, 0.0
    %v2726 = vld [vmem:[#allocation2] sm:$0xf]
    %v2727 = vld [vmem:[#allocation25] sm:$0xff]
    %v2728 = vld [vmem:[#allocation25 + $0x8] sm:$0xff]
    %v2729 = vld [vmem:[#allocation25 + $0x10] sm:$0xff]
    %v2730 = vld [vmem:[#allocation25 + $0x18] sm:$0xff]
    %v2731 = vld [vmem:[#allocation25 + $0x20] sm:$0xff]
    %v2732 = vld [vmem:[#allocation25 + $0x28] sm:$0xff]
    %v2733 = vld [vmem:[#allocation25 + $0x30] sm:$0xff]
    %v2734 = vld [vmem:[#allocation25 + $0x38] sm:$0xff]
    %v2735 = vld [vmem:[#allocation25 + $0x40] sm:$0xff]
    %v2736 = vld [vmem:[#allocation25 + $0x48] sm:$0xff]
    %v2737 = vld [vmem:[#allocation25 + $0x50] sm:$0xff]
    %v2738 = vld [vmem:[#allocation25 + $0x58] sm:$0xff]
    %v2739 = vld [vmem:[#allocation25 + $0x60] sm:$0xff]
    %v2740 = vld [vmem:[#allocation25 + $0x68] sm:$0xff]
    %v2741 = vld [vmem:[#allocation25 + $0x70] sm:$0xff]
    %v2742 = vld [vmem:[#allocation25 + $0x78] sm:$0xff]
    %v2743 = vpack.c.bf16 %v1471, %v1471
    %v2744 = vld [vmem:[#allocation26] sm:$0xff]
    %v2745 = vld [vmem:[#allocation26 + $0x8] sm:$0xff]
    %v2746 = vld [vmem:[#allocation26 + $0x10] sm:$0xff]
    %v2747 = vld [vmem:[#allocation26 + $0x18] sm:$0xff]
    %v2748 = vld [vmem:[#allocation26 + $0x20] sm:$0xff]
    %v2749 = vld [vmem:[#allocation26 + $0x28] sm:$0xff]
    %v2750 = vld [vmem:[#allocation26 + $0x30] sm:$0xff]
    %v2751 = vld [vmem:[#allocation26 + $0x38] sm:$0xff]
    %v2752 = vld [vmem:[#allocation26 + $0x40] sm:$0xff]
    %v2753 = vld [vmem:[#allocation26 + $0x48] sm:$0xff]
    %v2754 = vld [vmem:[#allocation26 + $0x50] sm:$0xff]
    %v2755 = vld [vmem:[#allocation26 + $0x58] sm:$0xff]
    %v2756 = vld [vmem:[#allocation26 + $0x60] sm:$0xff]
    %v2757 = vld [vmem:[#allocation26 + $0x68] sm:$0xff]
    %v2758 = vld [vmem:[#allocation26 + $0x70] sm:$0xff]
    %v2759 = vld [vmem:[#allocation26 + $0x78] sm:$0xff]
    %v2776 = vunpack.c.l.b16 %v2744
    %v2777 = vunpack.c.h.b16 %v2744
    %v2778 = vunpack.c.l.b16 %v2745
    %v2779 = vunpack.c.h.b16 %v2745
    %v2780 = vunpack.c.l.b16 %v2746
    %v2781 = vunpack.c.h.b16 %v2746
    %v2782 = vunpack.c.l.b16 %v2747
    %v2783 = vunpack.c.h.b16 %v2747
    %v2784 = vunpack.c.l.b16 %v2748
    %v2785 = vunpack.c.h.b16 %v2748
    %v2786 = vunpack.c.l.b16 %v2749
    %v2787 = vunpack.c.h.b16 %v2749
    %v2788 = vunpack.c.l.b16 %v2750
    %v2789 = vunpack.c.h.b16 %v2750
    %v2790 = vunpack.c.l.b16 %v2751
    %v2791 = vunpack.c.h.b16 %v2751
    %v2792 = vunpack.c.l.b16 %v2752
    %v2793 = vunpack.c.h.b16 %v2752
    %v2794 = vunpack.c.l.b16 %v2753
    %v2795 = vunpack.c.h.b16 %v2753
    %v2796 = vunpack.c.l.b16 %v2754
    %v2797 = vunpack.c.h.b16 %v2754
    %v2798 = vunpack.c.l.b16 %v2755
    %v2799 = vunpack.c.h.b16 %v2755
    %v2800 = vunpack.c.l.b16 %v2756
    %v2801 = vunpack.c.h.b16 %v2756
    %v2802 = vunpack.c.l.b16 %v2757
    %v2803 = vunpack.c.h.b16 %v2757
    %v2804 = vunpack.c.l.b16 %v2758
    %v2805 = vunpack.c.h.b16 %v2758
    %v2806 = vunpack.c.l.b16 %v2759
    %v2807 = vunpack.c.h.b16 %v2759
    %v2808 = vpack.c.b16 %v2778, %v2776
    %v2809 = vpack.c.b16 %v2779, %v2777
    %v2810 = vpack.c.b16 %v2782, %v2780
    %v2811 = vpack.c.b16 %v2783, %v2781
    %v2812 = vpack.c.b16 %v2786, %v2784
    %v2813 = vpack.c.b16 %v2787, %v2785
    %v2814 = vpack.c.b16 %v2790, %v2788
    %v2815 = vpack.c.b16 %v2791, %v2789
    %v2816 = vpack.c.b16 %v2794, %v2792
    %v2817 = vpack.c.b16 %v2795, %v2793
    %v2818 = vpack.c.b16 %v2798, %v2796
    %v2819 = vpack.c.b16 %v2799, %v2797
    %v2820 = vpack.c.b16 %v2802, %v2800
    %v2821 = vpack.c.b16 %v2803, %v2801
    %v2822 = vpack.c.b16 %v2806, %v2804
    %v2823 = vpack.c.b16 %v2807, %v2805
    %2840 = vmatpush.bf16.msra.mxu0 %v2822
    %2841 = vmatpush.bf16.msra.mxu0 %v2820
    %2842 = vmatpush.bf16.msra.mxu0 %v2818
    %2843 = vmatpush.bf16.msra.mxu0 %v2816
    %2844 = vmatpush.bf16.msra.mxu0 %v2814
    %2845 = vmatpush.bf16.msra.mxu0 %v2812
    %2846 = vmatpush.bf16.msra.mxu0 %v2810
    %2847 = vmatpush.bf16.msra.mxu0 %v2808
    %2848 = vmatmul.bf16.gmra.mxu0 %v2743
    %v2849 = vpop.f32.mrf.mxu0
    %v2850 = vadd.f32 0.0, %v2849
    %v2851 = vpop.f32.mrf.mxu0
    %2852 = vdwg.mxu0
    %2853 = vmatpush.bf16.msra.mxu0 %v2823
    %2854 = vmatpush.bf16.msra.mxu0 %v2821
    %2855 = vmatpush.bf16.msra.mxu0 %v2819
    %2856 = vmatpush.bf16.msra.mxu0 %v2817
    %2857 = vmatpush.bf16.msra.mxu0 %v2815
    %2858 = vmatpush.bf16.msra.mxu0 %v2813
    %2859 = vmatpush.bf16.msra.mxu0 %v2811
    %2860 = vmatpush.bf16.msra.mxu0 %v2809
    %2861 = vmatmul.bf16.gmra.mxu0 %v2743
    %v2862 = vpop.f32.mrf.mxu0
    %v2863 = vadd.f32 0.0, %v2862
    %v2864 = vpop.f32.mrf.mxu0
    %2865 = vdwg.mxu0
    %v2882 = vunpack.c.l.b16 %v2727
    %v2883 = vunpack.c.h.b16 %v2727
    %v2884 = vunpack.c.l.b16 %v2728
    %v2885 = vunpack.c.h.b16 %v2728
    %v2886 = vunpack.c.l.b16 %v2729
    %v2887 = vunpack.c.h.b16 %v2729
    %v2888 = vunpack.c.l.b16 %v2730
    %v2889 = vunpack.c.h.b16 %v2730
    %v2890 = vunpack.c.l.b16 %v2731
    %v2891 = vunpack.c.h.b16 %v2731
    %v2892 = vunpack.c.l.b16 %v2732
    %v2893 = vunpack.c.h.b16 %v2732
    %v2894 = vunpack.c.l.b16 %v2733
    %v2895 = vunpack.c.h.b16 %v2733
    %v2896 = vunpack.c.l.b16 %v2734
    %v2897 = vunpack.c.h.b16 %v2734
    %v2898 = vunpack.c.l.b16 %v2735
    %v2899 = vunpack.c.h.b16 %v2735
    %v2900 = vunpack.c.l.b16 %v2736
    %v2901 = vunpack.c.h.b16 %v2736
    %v2902 = vunpack.c.l.b16 %v2737
    %v2903 = vunpack.c.h.b16 %v2737
    %v2904 = vunpack.c.l.b16 %v2738
    %v2905 = vunpack.c.h.b16 %v2738
    %v2906 = vunpack.c.l.b16 %v2739
    %v2907 = vunpack.c.h.b16 %v2739
    %v2908 = vunpack.c.l.b16 %v2740
    %v2909 = vunpack.c.h.b16 %v2740
    %v2910 = vunpack.c.l.b16 %v2741
    %v2911 = vunpack.c.h.b16 %v2741
    %v2912 = vunpack.c.l.b16 %v2742
    %v2913 = vunpack.c.h.b16 %v2742
    %v2914 = vpack.c.b16 %v2884, %v2882
    %v2915 = vpack.c.b16 %v2885, %v2883
    %v2916 = vpack.c.b16 %v2888, %v2886
    %v2917 = vpack.c.b16 %v2889, %v2887
    %v2918 = vpack.c.b16 %v2892, %v2890
    %v2919 = vpack.c.b16 %v2893, %v2891
    %v2920 = vpack.c.b16 %v2896, %v2894
    %v2921 = vpack.c.b16 %v2897, %v2895
    %v2922 = vpack.c.b16 %v2900, %v2898
    %v2923 = vpack.c.b16 %v2901, %v2899
    %v2924 = vpack.c.b16 %v2904, %v2902
    %v2925 = vpack.c.b16 %v2905, %v2903
    %v2926 = vpack.c.b16 %v2908, %v2906
    %v2927 = vpack.c.b16 %v2909, %v2907
    %v2928 = vpack.c.b16 %v2912, %v2910
    %v2929 = vpack.c.b16 %v2913, %v2911
    %2946 = vmatpush.bf16.msra.mxu0 %v2928
    %2947 = vmatpush.bf16.msra.mxu0 %v2926
    %2948 = vmatpush.bf16.msra.mxu0 %v2924
    %2949 = vmatpush.bf16.msra.mxu0 %v2922
    %2950 = vmatpush.bf16.msra.mxu0 %v2920
    %2951 = vmatpush.bf16.msra.mxu0 %v2918
    %2952 = vmatpush.bf16.msra.mxu0 %v2916
    %2953 = vmatpush.bf16.msra.mxu0 %v2914
    %2954 = vmatmul.bf16.gmra.mxu0 %v2726
    %v2955 = vpop.f32.mrf.mxu0
    %v2956 = vadd.f32 %v2850, %v2955
    %v2957 = vpop.f32.mrf.mxu0
    %2958 = vdwg.mxu0
    %2959 = vmatpush.bf16.msra.mxu0 %v2929
    %2960 = vmatpush.bf16.msra.mxu0 %v2927
    %2961 = vmatpush.bf16.msra.mxu0 %v2925
    %2962 = vmatpush.bf16.msra.mxu0 %v2923
    %2963 = vmatpush.bf16.msra.mxu0 %v2921
    %2964 = vmatpush.bf16.msra.mxu0 %v2919
    %2965 = vmatpush.bf16.msra.mxu0 %v2917
    %2966 = vmatpush.bf16.msra.mxu0 %v2915
    %2967 = vmatmul.bf16.gmra.mxu0 %v2726
    %v2968 = vpop.f32.mrf.mxu0
    %v2969 = vadd.f32 %v2863, %v2968
    %v2970 = vpop.f32.mrf.mxu0
    %2971 = vdwg.mxu0
    %v2972 = vpack.c.bf16 %v2725, %v2725
    %v2973 = vld [vmem:[#allocation28] sm:$0xff]
    %v2974 = vld [vmem:[#allocation28 + $0x8] sm:$0xff]
    %v2975 = vld [vmem:[#allocation28 + $0x10] sm:$0xff]
    %v2976 = vld [vmem:[#allocation28 + $0x18] sm:$0xff]
    %v2977 = vld [vmem:[#allocation28 + $0x20] sm:$0xff]
    %v2978 = vld [vmem:[#allocation28 + $0x28] sm:$0xff]
    %v2979 = vld [vmem:[#allocation28 + $0x30] sm:$0xff]
    %v2980 = vld [vmem:[#allocation28 + $0x38] sm:$0xff]
    %v2981 = vld [vmem:[#allocation28 + $0x40] sm:$0xff]
    %v2982 = vld [vmem:[#allocation28 + $0x48] sm:$0xff]
    %v2983 = vld [vmem:[#allocation28 + $0x50] sm:$0xff]
    %v2984 = vld [vmem:[#allocation28 + $0x58] sm:$0xff]
    %v2985 = vld [vmem:[#allocation28 + $0x60] sm:$0xff]
    %v2986 = vld [vmem:[#allocation28 + $0x68] sm:$0xff]
    %v2987 = vld [vmem:[#allocation28 + $0x70] sm:$0xff]
    %v2988 = vld [vmem:[#allocation28 + $0x78] sm:$0xff]
    %v3005 = vunpack.c.l.b16 %v2973
    %v3006 = vunpack.c.h.b16 %v2973
    %v3007 = vunpack.c.l.b16 %v2974
    %v3008 = vunpack.c.h.b16 %v2974
    %v3009 = vunpack.c.l.b16 %v2975
    %v3010 = vunpack.c.h.b16 %v2975
    %v3011 = vunpack.c.l.b16 %v2976
    %v3012 = vunpack.c.h.b16 %v2976
    %v3013 = vunpack.c.l.b16 %v2977
    %v3014 = vunpack.c.h.b16 %v2977
    %v3015 = vunpack.c.l.b16 %v2978
    %v3016 = vunpack.c.h.b16 %v2978
    %v3017 = vunpack.c.l.b16 %v2979
    %v3018 = vunpack.c.h.b16 %v2979
    %v3019 = vunpack.c.l.b16 %v2980
    %v3020 = vunpack.c.h.b16 %v2980
    %v3021 = vunpack.c.l.b16 %v2981
    %v3022 = vunpack.c.h.b16 %v2981
    %v3023 = vunpack.c.l.b16 %v2982
    %v3024 = vunpack.c.h.b16 %v2982
    %v3025 = vunpack.c.l.b16 %v2983
    %v3026 = vunpack.c.h.b16 %v2983
    %v3027 = vunpack.c.l.b16 %v2984
    %v3028 = vunpack.c.h.b16 %v2984
    %v3029 = vunpack.c.l.b16 %v2985
    %v3030 = vunpack.c.h.b16 %v2985
    %v3031 = vunpack.c.l.b16 %v2986
    %v3032 = vunpack.c.h.b16 %v2986
    %v3033 = vunpack.c.l.b16 %v2987
    %v3034 = vunpack.c.h.b16 %v2987
    %v3035 = vunpack.c.l.b16 %v2988
    %v3036 = vunpack.c.h.b16 %v2988
    %v3037 = vpack.c.b16 %v3007, %v3005
    %v3038 = vpack.c.b16 %v3008, %v3006
    %v3039 = vpack.c.b16 %v3011, %v3009
    %v3040 = vpack.c.b16 %v3012, %v3010
    %v3041 = vpack.c.b16 %v3015, %v3013
    %v3042 = vpack.c.b16 %v3016, %v3014
    %v3043 = vpack.c.b16 %v3019, %v3017
    %v3044 = vpack.c.b16 %v3020, %v3018
    %v3045 = vpack.c.b16 %v3023, %v3021
    %v3046 = vpack.c.b16 %v3024, %v3022
    %v3047 = vpack.c.b16 %v3027, %v3025
    %v3048 = vpack.c.b16 %v3028, %v3026
    %v3049 = vpack.c.b16 %v3031, %v3029
    %v3050 = vpack.c.b16 %v3032, %v3030
    %v3051 = vpack.c.b16 %v3035, %v3033
    %v3052 = vpack.c.b16 %v3036, %v3034
    %3069 = vmatpush.bf16.msra.mxu0 %v3051
    %3070 = vmatpush.bf16.msra.mxu0 %v3049
    %3071 = vmatpush.bf16.msra.mxu0 %v3047
    %3072 = vmatpush.bf16.msra.mxu0 %v3045
    %3073 = vmatpush.bf16.msra.mxu0 %v3043
    %3074 = vmatpush.bf16.msra.mxu0 %v3041
    %3075 = vmatpush.bf16.msra.mxu0 %v3039
    %3076 = vmatpush.bf16.msra.mxu0 %v3037
    %3077 = vmatmul.bf16.gmra.mxu0 %v2972
    %v3078 = vpop.f32.mrf.mxu0
    %v3079 = vadd.f32 0.0, %v3078
    %v3080 = vpop.f32.mrf.mxu0
    %3081 = vdwg.mxu0
    %3082 = vmatpush.bf16.msra.mxu0 %v3052
    %3083 = vmatpush.bf16.msra.mxu0 %v3050
    %3084 = vmatpush.bf16.msra.mxu0 %v3048
    %3085 = vmatpush.bf16.msra.mxu0 %v3046
    %3086 = vmatpush.bf16.msra.mxu0 %v3044
    %3087 = vmatpush.bf16.msra.mxu0 %v3042
    %3088 = vmatpush.bf16.msra.mxu0 %v3040
    %3089 = vmatpush.bf16.msra.mxu0 %v3038
    %3090 = vmatmul.bf16.gmra.mxu0 %v2972
    %v3091 = vpop.f32.mrf.mxu0
    %v3092 = vadd.f32 0.0, %v3091
    %v3093 = vpop.f32.mrf.mxu0
    %3094 = vdwg.mxu0
    %v3095 = vadd.f32 %v2956, %v3079
    %v3096 = vadd.f32 %v2969, %v3092
    %v3097 = vld [vmem:[%s45] sm:$0x3]
    %v3099 = vperm.slane %v3097, 0
    %v3100 = vperm.slane %v3097, 1
    %v3103 = vadd.f32 %v3095, %v3099
    %v3104 = vadd.f32 %v3096, %v3100
    %v3105 = vmax.f32 %v3103, 0.0
    %v3106 = vmax.f32 %v3104, 0.0
    %v3107 = vpack.c.bf16 %v3105, %v3105
    %v3108 = vpack.c.bf16 %v3106, %v3106
    %v3109 = vld [vmem:[#allocation29] sm:$0xf]
    %v3110 = vld [vmem:[#allocation29 + $0x4] sm:$0xf]
    %v3111 = vld [vmem:[#allocation29 + $0x8] sm:$0xf]
    %v3112 = vld [vmem:[#allocation29 + $0xc] sm:$0xf]
    %v3113 = vld [vmem:[#allocation29 + $0x10] sm:$0xf]
    %v3114 = vld [vmem:[#allocation29 + $0x14] sm:$0xf]
    %v3115 = vld [vmem:[#allocation29 + $0x18] sm:$0xf]
    %v3116 = vld [vmem:[#allocation29 + $0x1c] sm:$0xf]
    %v3117 = vld [vmem:[#allocation29 + $0x20] sm:$0xf]
    %v3118 = vld [vmem:[#allocation29 + $0x24] sm:$0xf]
    %v3119 = vld [vmem:[#allocation29 + $0x28] sm:$0xf]
    %v3120 = vld [vmem:[#allocation29 + $0x2c] sm:$0xf]
    %v3121 = vld [vmem:[#allocation29 + $0x30] sm:$0xf]
    %v3122 = vld [vmem:[#allocation29 + $0x34] sm:$0xf]
    %v3123 = vld [vmem:[#allocation29 + $0x38] sm:$0xf]
    %v3124 = vld [vmem:[#allocation29 + $0x3c] sm:$0xf]
    %v3125 = vld [vmem:[#allocation29 + $0x40] sm:$0xf]
    %v3126 = vld [vmem:[#allocation29 + $0x44] sm:$0xf]
    %v3127 = vld [vmem:[#allocation29 + $0x48] sm:$0xf]
    %v3128 = vld [vmem:[#allocation29 + $0x4c] sm:$0xf]
    %v3129 = vld [vmem:[#allocation29 + $0x50] sm:$0xf]
    %v3130 = vld [vmem:[#allocation29 + $0x54] sm:$0xf]
    %v3131 = vld [vmem:[#allocation29 + $0x58] sm:$0xf]
    %v3132 = vld [vmem:[#allocation29 + $0x5c] sm:$0xf]
    %v3133 = vld [vmem:[#allocation29 + $0x60] sm:$0xf]
    %v3134 = vld [vmem:[#allocation29 + $0x64] sm:$0xf]
    %v3135 = vld [vmem:[#allocation29 + $0x68] sm:$0xf]
    %v3136 = vld [vmem:[#allocation29 + $0x6c] sm:$0xf]
    %v3137 = vld [vmem:[#allocation29 + $0x70] sm:$0xf]
    %v3138 = vld [vmem:[#allocation29 + $0x74] sm:$0xf]
    %v3139 = vld [vmem:[#allocation29 + $0x78] sm:$0xf]
    %v3140 = vld [vmem:[#allocation29 + $0x7c] sm:$0xf]
    %v3141 = vld [vmem:[%s49] sm:$0x1]
    %v3143 = vperm.slane %v3141, 0
    %v3177 = vunpack.c.l.b16 %v3109
    %v3178 = vunpack.c.l.b16 %v3110
    %v3179 = vunpack.c.l.b16 %v3111
    %v3180 = vunpack.c.l.b16 %v3112
    %v3181 = vunpack.c.l.b16 %v3113
    %v3182 = vunpack.c.l.b16 %v3114
    %v3183 = vunpack.c.l.b16 %v3115
    %v3184 = vunpack.c.l.b16 %v3116
    %v3185 = vunpack.c.l.b16 %v3117
    %v3186 = vunpack.c.l.b16 %v3118
    %v3187 = vunpack.c.l.b16 %v3119
    %v3188 = vunpack.c.l.b16 %v3120
    %v3189 = vunpack.c.l.b16 %v3121
    %v3190 = vunpack.c.l.b16 %v3122
    %v3191 = vunpack.c.l.b16 %v3123
    %v3192 = vunpack.c.l.b16 %v3124
    %v3193 = vunpack.c.l.b16 %v3125
    %v3194 = vunpack.c.l.b16 %v3126
    %v3195 = vunpack.c.l.b16 %v3127
    %v3196 = vunpack.c.l.b16 %v3128
    %v3197 = vunpack.c.l.b16 %v3129
    %v3198 = vunpack.c.l.b16 %v3130
    %v3199 = vunpack.c.l.b16 %v3131
    %v3200 = vunpack.c.l.b16 %v3132
    %v3201 = vunpack.c.l.b16 %v3133
    %v3202 = vunpack.c.l.b16 %v3134
    %v3203 = vunpack.c.l.b16 %v3135
    %v3204 = vunpack.c.l.b16 %v3136
    %v3205 = vunpack.c.l.b16 %v3137
    %v3206 = vunpack.c.l.b16 %v3138
    %v3207 = vunpack.c.l.b16 %v3139
    %v3208 = vunpack.c.l.b16 %v3140
    %v3209 = vpack.c.b16 %v3178, %v3177
    %v3210 = vpack.c.b16 %v3180, %v3179
    %v3211 = vpack.c.b16 %v3182, %v3181
    %v3212 = vpack.c.b16 %v3184, %v3183
    %v3213 = vpack.c.b16 %v3186, %v3185
    %v3214 = vpack.c.b16 %v3188, %v3187
    %v3215 = vpack.c.b16 %v3190, %v3189
    %v3216 = vpack.c.b16 %v3192, %v3191
    %v3217 = vpack.c.b16 %v3194, %v3193
    %v3218 = vpack.c.b16 %v3196, %v3195
    %v3219 = vpack.c.b16 %v3198, %v3197
    %v3220 = vpack.c.b16 %v3200, %v3199
    %v3221 = vpack.c.b16 %v3202, %v3201
    %v3222 = vpack.c.b16 %v3204, %v3203
    %v3223 = vpack.c.b16 %v3206, %v3205
    %v3224 = vpack.c.b16 %v3208, %v3207
    %3241 = vmatpush.bf16.msra.mxu0 %v3216
    %3242 = vmatpush.bf16.msra.mxu0 %v3215
    %3243 = vmatpush.bf16.msra.mxu0 %v3214
    %3244 = vmatpush.bf16.msra.mxu0 %v3213
    %3245 = vmatpush.bf16.msra.mxu0 %v3212
    %3246 = vmatpush.bf16.msra.mxu0 %v3211
    %3247 = vmatpush.bf16.msra.mxu0 %v3210
    %3248 = vmatpush.bf16.msra.mxu0 %v3209
    %3249 = vmatmul.bf16.gmra.mxu0 %v3107
    %v3250 = vpop.f32.mrf.mxu0
    %v3251 = vadd.f32 %v3143, %v3250
    %v3252 = vpop.f32.mrf.mxu0
    %3253 = vdwg.mxu0
    %3254 = vmatpush.bf16.msra.mxu0 %v3224
    %3255 = vmatpush.bf16.msra.mxu0 %v3223
    %3256 = vmatpush.bf16.msra.mxu0 %v3222
    %3257 = vmatpush.bf16.msra.mxu0 %v3221
    %3258 = vmatpush.bf16.msra.mxu0 %v3220
    %3259 = vmatpush.bf16.msra.mxu0 %v3219
    %3260 = vmatpush.bf16.msra.mxu0 %v3218
    %3261 = vmatpush.bf16.msra.mxu0 %v3217
    %3262 = vmatmul.bf16.gmra.mxu0 %v3108
    %v3263 = vpop.f32.mrf.mxu0
    %v3264 = vadd.f32 %v3251, %v3263
    %v3265 = vpop.f32.mrf.mxu0
    %3266 = vdwg.mxu0
    %v3267 = vmax.f32 %v3264, 0.0
    %v3268 = vpack.c.bf16 %v3267, %v3267
    %v3269 = vld [vmem:[#allocation31] sm:$0xf]
    %v3270 = vld [vmem:[#allocation31 + $0x4] sm:$0xf]
    %v3271 = vld [vmem:[#allocation31 + $0x8] sm:$0xf]
    %v3272 = vld [vmem:[#allocation31 + $0xc] sm:$0xf]
    %v3273 = vld [vmem:[#allocation31 + $0x10] sm:$0xf]
    %v3274 = vld [vmem:[#allocation31 + $0x14] sm:$0xf]
    %v3275 = vld [vmem:[#allocation31 + $0x18] sm:$0xf]
    %v3276 = vld [vmem:[#allocation31 + $0x1c] sm:$0xf]
    %v3277 = vld [vmem:[#allocation31 + $0x20] sm:$0xf]
    %v3278 = vld [vmem:[#allocation31 + $0x24] sm:$0xf]
    %v3279 = vld [vmem:[#allocation31 + $0x28] sm:$0xf]
    %v3280 = vld [vmem:[#allocation31 + $0x2c] sm:$0xf]
    %v3281 = vld [vmem:[#allocation31 + $0x30] sm:$0xf]
    %v3282 = vld [vmem:[#allocation31 + $0x34] sm:$0xf]
    %v3283 = vld [vmem:[#allocation31 + $0x38] sm:$0xf]
    %v3284 = vld [vmem:[#allocation31 + $0x3c] sm:$0xf]
    %v3285 = vld [vmem:[%s53] sm:$0x1]
    %v3287 = vperm.slane %v3285, 0
    %v3305 = vunpack.c.l.b16 %v3269
    %v3306 = vunpack.c.l.b16 %v3270
    %v3307 = vunpack.c.l.b16 %v3271
    %v3308 = vunpack.c.l.b16 %v3272
    %v3309 = vunpack.c.l.b16 %v3273
    %v3310 = vunpack.c.l.b16 %v3274
    %v3311 = vunpack.c.l.b16 %v3275
    %v3312 = vunpack.c.l.b16 %v3276
    %v3313 = vunpack.c.l.b16 %v3277
    %v3314 = vunpack.c.l.b16 %v3278
    %v3315 = vunpack.c.l.b16 %v3279
    %v3316 = vunpack.c.l.b16 %v3280
    %v3317 = vunpack.c.l.b16 %v3281
    %v3318 = vunpack.c.l.b16 %v3282
    %v3319 = vunpack.c.l.b16 %v3283
    %v3320 = vunpack.c.l.b16 %v3284
    %v3321 = vpack.c.b16 %v3306, %v3305
    %v3322 = vpack.c.b16 %v3308, %v3307
    %v3323 = vpack.c.b16 %v3310, %v3309
    %v3324 = vpack.c.b16 %v3312, %v3311
    %v3325 = vpack.c.b16 %v3314, %v3313
    %v3326 = vpack.c.b16 %v3316, %v3315
    %v3327 = vpack.c.b16 %v3318, %v3317
    %v3328 = vpack.c.b16 %v3320, %v3319
    %3337 = vmatpush.bf16.msra.mxu0 %v3328
    %3338 = vmatpush.bf16.msra.mxu0 %v3327
    %3339 = vmatpush.bf16.msra.mxu0 %v3326
    %3340 = vmatpush.bf16.msra.mxu0 %v3325
    %3341 = vmatpush.bf16.msra.mxu0 %v3324
    %3342 = vmatpush.bf16.msra.mxu0 %v3323
    %3343 = vmatpush.bf16.msra.mxu0 %v3322
    %3344 = vmatpush.bf16.msra.mxu0 %v3321
    %3345 = vmatmul.bf16.gmra.mxu0 %v3268
    %v3346 = vpop.f32.mrf.mxu0
    %v3347 = vadd.f32 %v3287, %v3346
    %v3348 = vpop.f32.mrf.mxu0
    %3349 = vdwg.mxu0
    %v3350 = vmax.f32 %v3347, 0.0
    %v3351 = vpack.c.bf16 %v3350, %v3350
    %v3352 = vld [vmem:[#allocation32] sm:$0xf]
    %v3353 = vld [vmem:[#allocation32 + $0x4] sm:$0xf]
    %v3354 = vld [vmem:[#allocation32 + $0x8] sm:$0xf]
    %v3355 = vld [vmem:[#allocation32 + $0xc] sm:$0xf]
    %v3356 = vld [vmem:[#allocation32 + $0x10] sm:$0xf]
    %v3357 = vld [vmem:[#allocation32 + $0x14] sm:$0xf]
    %v3358 = vld [vmem:[#allocation32 + $0x18] sm:$0xf]
    %v3359 = vld [vmem:[#allocation32 + $0x1c] sm:$0xf]
    %v3360 = vld [vmem:[#allocation32 + $0x20] sm:$0xf]
    %v3361 = vld [vmem:[#allocation32 + $0x24] sm:$0xf]
    %v3362 = vld [vmem:[#allocation32 + $0x28] sm:$0xf]
    %v3363 = vld [vmem:[#allocation32 + $0x2c] sm:$0xf]
    %v3364 = vld [vmem:[#allocation32 + $0x30] sm:$0xf]
    %v3365 = vld [vmem:[#allocation32 + $0x34] sm:$0xf]
    %v3366 = vld [vmem:[#allocation32 + $0x38] sm:$0xf]
    %v3367 = vld [vmem:[#allocation32 + $0x3c] sm:$0xf]
    %v3368 = vld [vmem:[%s57] sm:$0x1]
    %v3370 = vperm.slane %v3368, 0
    %v3388 = vunpack.c.l.b16 %v3352
    %v3389 = vunpack.c.l.b16 %v3353
    %v3390 = vunpack.c.l.b16 %v3354
    %v3391 = vunpack.c.l.b16 %v3355
    %v3392 = vunpack.c.l.b16 %v3356
    %v3393 = vunpack.c.l.b16 %v3357
    %v3394 = vunpack.c.l.b16 %v3358
    %v3395 = vunpack.c.l.b16 %v3359
    %v3396 = vunpack.c.l.b16 %v3360
    %v3397 = vunpack.c.l.b16 %v3361
    %v3398 = vunpack.c.l.b16 %v3362
    %v3399 = vunpack.c.l.b16 %v3363
    %v3400 = vunpack.c.l.b16 %v3364
    %v3401 = vunpack.c.l.b16 %v3365
    %v3402 = vunpack.c.l.b16 %v3366
    %v3403 = vunpack.c.l.b16 %v3367
    %v3404 = vpack.c.b16 %v3389, %v3388
    %v3405 = vpack.c.b16 %v3391, %v3390
    %v3406 = vpack.c.b16 %v3393, %v3392
    %v3407 = vpack.c.b16 %v3395, %v3394
    %v3408 = vpack.c.b16 %v3397, %v3396
    %v3409 = vpack.c.b16 %v3399, %v3398
    %v3410 = vpack.c.b16 %v3401, %v3400
    %v3411 = vpack.c.b16 %v3403, %v3402
    %3420 = vmatpush.bf16.msra.mxu0 %v3411
    %3421 = vmatpush.bf16.msra.mxu0 %v3410
    %3422 = vmatpush.bf16.msra.mxu0 %v3409
    %3423 = vmatpush.bf16.msra.mxu0 %v3408
    %3424 = vmatpush.bf16.msra.mxu0 %v3407
    %3425 = vmatpush.bf16.msra.mxu0 %v3406
    %3426 = vmatpush.bf16.msra.mxu0 %v3405
    %3427 = vmatpush.bf16.msra.mxu0 %v3404
    %3428 = vmatmul.bf16.gmra.mxu0 %v3351
    %v3429 = vpop.f32.mrf.mxu0
    %v3430 = vadd.f32 %v3370, %v3429
    %v3431 = vpop.f32.mrf.mxu0
    %3432 = vdwg.mxu0
    %v3433 = vmax.f32 %v3430, 0.0
    %v3434 = vpack.c.bf16 %v3433, %v3433
    %v3435 = vld [vmem:[#allocation34] sm:$0xf]
    %v3436 = vld [vmem:[#allocation34 + $0x4] sm:$0xf]
    %v3437 = vld [vmem:[#allocation34 + $0x8] sm:$0xf]
    %v3438 = vld [vmem:[#allocation34 + $0xc] sm:$0xf]
    %v3439 = vld [vmem:[#allocation34 + $0x10] sm:$0xf]
    %v3440 = vld [vmem:[#allocation34 + $0x14] sm:$0xf]
    %v3441 = vld [vmem:[#allocation34 + $0x18] sm:$0xf]
    %v3442 = vld [vmem:[#allocation34 + $0x1c] sm:$0xf]
    %v3443 = vld [vmem:[#allocation34 + $0x20] sm:$0xf]
    %v3444 = vld [vmem:[#allocation34 + $0x24] sm:$0xf]
    %v3445 = vld [vmem:[#allocation34 + $0x28] sm:$0xf]
    %v3446 = vld [vmem:[#allocation34 + $0x2c] sm:$0xf]
    %v3447 = vld [vmem:[#allocation34 + $0x30] sm:$0xf]
    %v3448 = vld [vmem:[#allocation34 + $0x34] sm:$0xf]
    %v3449 = vld [vmem:[#allocation34 + $0x38] sm:$0xf]
    %v3450 = vld [vmem:[#allocation34 + $0x3c] sm:$0xf]
    %v3451 = vld [vmem:[%s61] sm:$0x1]
    %v3453 = vperm.slane %v3451, 0
    %v3471 = vunpack.c.l.b16 %v3435
    %v3472 = vunpack.c.l.b16 %v3436
    %v3473 = vunpack.c.l.b16 %v3437
    %v3474 = vunpack.c.l.b16 %v3438
    %v3475 = vunpack.c.l.b16 %v3439
    %v3476 = vunpack.c.l.b16 %v3440
    %v3477 = vunpack.c.l.b16 %v3441
    %v3478 = vunpack.c.l.b16 %v3442
    %v3479 = vunpack.c.l.b16 %v3443
    %v3480 = vunpack.c.l.b16 %v3444
    %v3481 = vunpack.c.l.b16 %v3445
    %v3482 = vunpack.c.l.b16 %v3446
    %v3483 = vunpack.c.l.b16 %v3447
    %v3484 = vunpack.c.l.b16 %v3448
    %v3485 = vunpack.c.l.b16 %v3449
    %v3486 = vunpack.c.l.b16 %v3450
    %v3487 = vpack.c.b16 %v3472, %v3471
    %v3488 = vpack.c.b16 %v3474, %v3473
    %v3489 = vpack.c.b16 %v3476, %v3475
    %v3490 = vpack.c.b16 %v3478, %v3477
    %v3491 = vpack.c.b16 %v3480, %v3479
    %v3492 = vpack.c.b16 %v3482, %v3481
    %v3493 = vpack.c.b16 %v3484, %v3483
    %v3494 = vpack.c.b16 %v3486, %v3485
    %3503 = vmatpush.bf16.msra.mxu0 %v3494
    %3504 = vmatpush.bf16.msra.mxu0 %v3493
    %3505 = vmatpush.bf16.msra.mxu0 %v3492
    %3506 = vmatpush.bf16.msra.mxu0 %v3491
    %3507 = vmatpush.bf16.msra.mxu0 %v3490
    %3508 = vmatpush.bf16.msra.mxu0 %v3489
    %3509 = vmatpush.bf16.msra.mxu0 %v3488
    %3510 = vmatpush.bf16.msra.mxu0 %v3487
    %3511 = vmatmul.bf16.gmra.mxu0 %v3434
    %v3512 = vpop.f32.mrf.mxu0
    %v3513 = vadd.f32 %v3453, %v3512
    %v3514 = vpop.f32.mrf.mxu0
    %3515 = vdwg.mxu0
    %v3516 = vmax.f32 %v3513, 0.0
    %v3517 = vpack.c.bf16 %v3516, %v3516
    %v3518 = vld [vmem:[#allocation35] sm:$0xf]
    %v3519 = vld [vmem:[#allocation35 + $0x4] sm:$0xf]
    %v3520 = vld [vmem:[#allocation35 + $0x8] sm:$0xf]
    %v3521 = vld [vmem:[#allocation35 + $0xc] sm:$0xf]
    %v3522 = vld [vmem:[#allocation35 + $0x10] sm:$0xf]
    %v3523 = vld [vmem:[#allocation35 + $0x14] sm:$0xf]
    %v3524 = vld [vmem:[#allocation35 + $0x18] sm:$0xf]
    %v3525 = vld [vmem:[#allocation35 + $0x1c] sm:$0xf]
    %v3526 = vld [vmem:[#allocation35 + $0x20] sm:$0xf]
    %v3527 = vld [vmem:[#allocation35 + $0x24] sm:$0xf]
    %v3528 = vld [vmem:[#allocation35 + $0x28] sm:$0xf]
    %v3529 = vld [vmem:[#allocation35 + $0x2c] sm:$0xf]
    %v3530 = vld [vmem:[#allocation35 + $0x30] sm:$0xf]
    %v3531 = vld [vmem:[#allocation35 + $0x34] sm:$0xf]
    %v3532 = vld [vmem:[#allocation35 + $0x38] sm:$0xf]
    %v3533 = vld [vmem:[#allocation35 + $0x3c] sm:$0xf]
    %v3534 = vld [vmem:[%s65] sm:$0x1]
    %v3536 = vperm.slane %v3534, 0
    %v3554 = vunpack.c.l.b16 %v3518
    %v3555 = vunpack.c.l.b16 %v3519
    %v3556 = vunpack.c.l.b16 %v3520
    %v3557 = vunpack.c.l.b16 %v3521
    %v3558 = vunpack.c.l.b16 %v3522
    %v3559 = vunpack.c.l.b16 %v3523
    %v3560 = vunpack.c.l.b16 %v3524
    %v3561 = vunpack.c.l.b16 %v3525
    %v3562 = vunpack.c.l.b16 %v3526
    %v3563 = vunpack.c.l.b16 %v3527
    %v3564 = vunpack.c.l.b16 %v3528
    %v3565 = vunpack.c.l.b16 %v3529
    %v3566 = vunpack.c.l.b16 %v3530
    %v3567 = vunpack.c.l.b16 %v3531
    %v3568 = vunpack.c.l.b16 %v3532
    %v3569 = vunpack.c.l.b16 %v3533
    %v3570 = vpack.c.b16 %v3555, %v3554
    %v3571 = vpack.c.b16 %v3557, %v3556
    %v3572 = vpack.c.b16 %v3559, %v3558
    %v3573 = vpack.c.b16 %v3561, %v3560
    %v3574 = vpack.c.b16 %v3563, %v3562
    %v3575 = vpack.c.b16 %v3565, %v3564
    %v3576 = vpack.c.b16 %v3567, %v3566
    %v3577 = vpack.c.b16 %v3569, %v3568
    %3586 = vmatpush.bf16.msra.mxu0 %v3577
    %3587 = vmatpush.bf16.msra.mxu0 %v3576
    %3588 = vmatpush.bf16.msra.mxu0 %v3575
    %3589 = vmatpush.bf16.msra.mxu0 %v3574
    %3590 = vmatpush.bf16.msra.mxu0 %v3573
    %3591 = vmatpush.bf16.msra.mxu0 %v3572
    %3592 = vmatpush.bf16.msra.mxu0 %v3571
    %3593 = vmatpush.bf16.msra.mxu0 %v3570
    %3594 = vmatmul.bf16.gmra.mxu0 %v3517
    %v3595 = vpop.f32.mrf.mxu0
    %v3596 = vadd.f32 %v3536, %v3595
    %v3597 = vpop.f32.mrf.mxu0
    %3598 = vdwg.mxu0
    %v3599 = vlaneseq
    %v3600 = vand.u32 %v3599, 127
    %vm3601 = vcmp.ge.s32.totalorder %v3600, 2
    %vm3602 = vcmp.lt.s32.totalorder %v3600, 9
    %vm3603 = vmand %vm3601, %vm3602
    %v3604 = vsel %vm3603, %v3596, -inf
    %3605 = vmax.xlane.f32.xlu0 %v3604
    %v3606 = vpop.xlane.xlu0 %3605
    %v3607 = vsub.f32 %v3596, %v3606
    %v3608 = vsel %vm3603, %v3607, -inf
    %v3609 = vmul.f32 %v3608, 1.442695
    %v3610 = vpow.pop %v3609
    %3611 = vadd.xlane.f32.xlu0 %v3610
    %v3612 = vpop.xlane.xlu0 %3611
    %v3613 = vrcp.pop %v3612
    %v3614 = vmul.f32 %v3612, %v3613
    %v3615 = vsub.f32 1.0, %v3614
    %v3616 = vmul.f32 %v3613, %v3615
    %v3617 = vadd.f32 %v3613, %v3616
    %vm3618 = vweird.f32 %v3612
    %vm3619 = vweird.f32 %v3613
    %vm3620 = vmor %vm3618, %vm3619
    %v3621 = vsel %vm3620, %v3613, %v3617
    %v3622 = vand.u32 2147483647, %v3612
    %vm3623 = vcmp.eq.f32.partialorder %v3622, 8.507059e+37
    %v3624 = vand.u32 %v3612, 2147483648
    %v3625 = vor.u32 1.1754944e-38, %v3624
    %v3626 = vsel %vm3623, %v3625, %v3621
    %v3627 = vmul.f32 %v3610, %v3626
    %v3628 = vsel %vm3603, %v3627, %v3596
    %3629 = vst [vmem:[#allocation37] sm:$0xff] %v3628
    // Predicated region
    $region222: #{tpu_custom_call.1} parent=1 // pred_check
      _
    $region223: #{tpu_custom_call.1} parent=1 // pred_check_branch
      %3631 = sbr.rel (0) target = $region225
    $region224: #{tpu_custom_call.1} parent=1 // pred_region
      %3633 = vsyncadd [#allocation4], 0
      %s3635 = sshll.u32 [#allocation37], 4
      %s3636 = int_to_ptr.vmem [resolvable:$true] %s3635
      %s3637 = sshll.u32 %s67, 4
      %s3638 = int_to_ptr.hbm [resolvable:$true] %s3637
      %3640 = dma.vmem_to_hbm [thread:$0]  %s3636, 128, %s3638, [#allocation4]
    $region225: #{tpu_custom_call.1} parent=1 // pred_fallthru
      _
    // Predicated region
    $region226: #{tpu_custom_call.1} parent=1 // pred_check
      _
    $region227: #{tpu_custom_call.1} parent=1 // pred_check_branch
      %3642 = sbr.rel (0) target = $region229
    $region228: #{tpu_custom_call.1} parent=1 // pred_region
      %3644 = dma.done [#allocation4], 128
    $region229: #{tpu_custom_call.1} parent=1 // pred_fallthru
      _
    %3645 = vsyncpa [#allocation3], 1
    %3646 = vsyncpa [#allocation6], 1
    %3647 = vsyncpa [#allocation9], 1
    %3648 = vsyncpa [#allocation12], 1
    %3649 = vsyncpa [#allocation15], 1
    %3650 = vsyncpa [#allocation18], 1
    %3651 = vsyncpa [#allocation21], 1
    %3652 = vsyncpa [#allocation24], 1
    %3653 = vsyncpa [#allocation27], 1
    %3654 = vsyncpa [#allocation30], 1
    %3655 = vsyncpa [#allocation33], 1
    %3656 = vsyncpa [#allocation36], 1
    %3657 = vsyncpa [#allocation4], 1

</llo_original>
